<compile_context>
chip_gen: v7x
topology: tpu7x:2x2x1
jax: 0.10.0
libtpu: 0.0.40
codegen_flags: <defaults>
</compile_context>

<pallas_src>
import math
import functools

import jax
import jax.numpy as jnp
from jax import lax
from jax.experimental import pallas as pl
from jax.experimental.pallas import tpu as pltpu


MM_DTYPE = jnp.bfloat16   # native MXU dtype on v5e/v6e/v7x


# ------------------------------ fused kernel ------------------------------

def _decoder_block_kernel(x_ref, enc_ref, la_ref, pad_ref,
                          w_qkv1_ref, b_qkv1_ref,
                          w_q2_ref, b_q2_ref, w_kv2_ref, b_kv2_ref,
                          w_o_ref, b_o_ref,
                          w_ff1_ref, b_ff1_ref, w_ff2_ref, b_ff2_ref,
                          ln_g_ref, ln_b_ref,
                          o_ref,
                          *, num_heads, depth, bblk, sd, se, d_model, mm_dtype):
    f32 = jnp.float32
    scale = 1.0 / math.sqrt(depth)
    m_rows = bblk * sd

    def mm(a, w):
        # 2-D matmul: bf16 operands on the MXU, f32 accumulation.
        return jnp.dot(a.astype(mm_dtype), w.astype(mm_dtype),
                       preferred_element_type=f32)

    def add_ln(a, b, idx):
        s = a + b                                     # residual in f32
        mean = jnp.mean(s, axis=-1, keepdims=True)
        c = s - mean
        var = jnp.mean(c * c, axis=-1, keepdims=True)
        n = c * lax.rsqrt(var + 1e-5)                 # PyTorch LayerNorm eps
        return n * ln_g_ref[idx:idx + 1, :] + ln_b_ref[idx:idx + 1, :]

    def mha(q2d, k2d, v2d, bias, sk, a):
        """Batched multi-head attention core.

        q2d: (Bblk*Sd, D), k2d/v2d: (Bblk*Sk, D), bias: additive mask bias
        broadcastable to (Bblk, Sd, Sk) — computed once, shared by all heads.
        a = 0 -> self-attn output projection, a = 1 -> cross-attn.
        """
        q3 = q2d.astype(mm_dtype).reshape(bblk, sd, d_model)
        k3 = k2d.astype(mm_dtype).reshape(bblk, sk, d_model)
        v3 = v2d.astype(mm_dtype).reshape(bblk, sk, d_model)
        heads = []
        for h in range(num_heads):                    # H is small: static unroll
            lo = h * depth
            qh = q3[:, :, lo:lo + depth]              # (Bblk, Sd, dh)
            kh = k3[:, :, lo:lo + depth]              # (Bblk, Sk, dh)
            vh = v3[:, :, lo:lo + depth]              # (Bblk, Sk, dh)
            logits = lax.dot_general(                 # q @ k^T, batched over Bblk
                qh, kh, (((2,), (2,)), ((0,), (0,))),
                preferred_element_type=f32) * scale   # (Bblk, Sd, Sk)
            logits = logits + bias
            mx = jnp.max(logits, axis=-1, keepdims=True)
            e = jnp.exp(logits - mx)
            p = e * pl.reciprocal(jnp.sum(e, axis=-1, keepdims=True),
                                  approx=True)
            ho = lax.dot_general(                     # p @ v, batched over Bblk
                p.astype(mm_dtype), vh, (((2,), (1,)), ((0,), (0,))),
                preferred_element_type=f32)           # (Bblk, Sd, dh)
            heads.append(ho)
        concat = jnp.concatenate(heads, axis=-1).reshape(m_rows, d_model)
        return mm(concat, w_o_ref[a]) + b_o_ref[a]    # single dense W_o matmul

    x2d = x_ref[...].reshape(m_rows, d_model)                 # (M, D)  f32
    enc2d = enc_ref[...].reshape(bblk * se, d_model)          # (Me, D) f32

    # ---- self-attention (look-ahead mask), fused QKV projection ----
    qkv1 = mm(x2d, w_qkv1_ref[...]) + b_qkv1_ref[...]         # (M, 3D)
    q1 = qkv1[:, :d_model]
    k1 = qkv1[:, d_model:2 * d_model]
    v1 = qkv1[:, 2 * d_model:]
    bias1 = la_ref[...] * (-1e9)                              # (Bblk, Sd, Sd)
    a1 = mha(q1, k1, v1, bias1, sd, 0)
    x1 = add_ln(x2d, a1, 0)                                   # norm_1

    # ---- cross-attention (encoder padding mask), fused KV projection ----
    q2 = mm(x1, w_q2_ref[...]) + b_q2_ref[...]                # (M, D)
    kv2 = mm(enc2d, w_kv2_ref[...]) + b_kv2_ref[...]          # (Me, 2D)
    k2 = kv2[:, :d_model]
    v2 = kv2[:, d_model:]
    bias2 = pad_ref[...] * (-1e9)                             # (Bblk, 1, Se)
    a2 = mha(q2, k2, v2, bias2, se, 1)
    x2 = add_ln(x1, a2, 1)                                    # norm_2

    # ---- position-wise feed-forward (ReLU) ----
    hdn = jnp.maximum(mm(x2, w_ff1_ref[...]) + b_ff1_ref[...], 0.0)
    ff = mm(hdn, w_ff2_ref[...]) + b_ff2_ref[...]
    out = add_ln(x2, ff, 2)                                   # norm_3
    o_ref[...] = out.reshape(bblk, sd, d_model).astype(o_ref.dtype)


# ------------------------------ host wrapper -------------------------------

def _pick_bblk(batch, sd, target_rows=128):
    """Largest divisor of `batch` whose flattened row count stays near
    `target_rows`, preferring an even number of grid steps (v7x megacore)."""
    want = max(1, target_rows // max(sd, 1))
    divs = [d for d in range(1, batch + 1) if batch % d == 0]
    even = [d for d in divs if d <= want and (batch // d) % 2 == 0]
    if even:
        return max(even)
    ok = [d for d in divs if d <= want]
    return max(ok) if ok else 1


def decoder_block_forward(params, inputs, enc_outputs, padding_mask,
                          look_ahead_mask, *, num_heads, bblk=None,
                          mm_dtype=MM_DTYPE):
    """inputs: (B,Sd,D), enc_outputs: (B,Se,D),
    padding_mask: (B,1,1,Se), look_ahead_mask: (B or 1,1,Sd,Sd) (float masks)."""
    B, Sd, D = inputs.shape
    Se = enc_outputs.shape[1]
    depth = D // num_heads
    d_ff = params["w_ff1"].shape[1]
    if bblk is None:
        bblk = _pick_bblk(B, Sd)
    assert B % bblk == 0

    # Compact masks — never materialize the per-head broadcast in HBM.
    pad = padding_mask.reshape(B, 1, Se).astype(jnp.float32)
    la = jnp.broadcast_to(look_ahead_mask, (B, 1, Sd, Sd)
                          ).reshape(B, Sd, Sd).astype(jnp.float32)
    # TODO(synk): for long Sd, build the causal part of the look-ahead mask
    # in-kernel (broadcasted_iota) and DMA only a (B,1,Sd) decoder pad mask.

    kernel = functools.partial(
        _decoder_block_kernel, num_heads=num_heads, depth=depth,
        bblk=bblk, sd=Sd, se=Se, d_model=D, mm_dtype=mm_dtype)

    const2 = lambda b: (0, 0)
    const3 = lambda b: (0, 0, 0)
    batched = lambda b: (b, 0, 0)

    return pl.pallas_call(
        kernel,
        out_shape=jax.ShapeDtypeStruct((B, Sd, D), jnp.float32),
        grid=(B // bblk,),
        in_specs=[
            pl.BlockSpec((bblk, Sd, D), batched),        # x
            pl.BlockSpec((bblk, Se, D), batched),        # enc_out
            pl.BlockSpec((bblk, Sd, Sd), batched),       # look-ahead mask
            pl.BlockSpec((bblk, 1, Se), batched),        # enc padding mask
            # Weights: constant index_map -> fetched once, VMEM-resident.
            pl.BlockSpec((D, 3 * D), const2),            # W_q|W_k|W_v (self)
            pl.BlockSpec((1, 3 * D), const2),            # b_q|b_k|b_v (self)
            pl.BlockSpec((D, D), const2),                # W_q (cross)
            pl.BlockSpec((1, D), const2),                # b_q (cross)
            pl.BlockSpec((D, 2 * D), const2),            # W_k|W_v (cross)
            pl.BlockSpec((1, 2 * D), const2),            # b_k|b_v (cross)
            pl.BlockSpec((2, D, D), const3),             # W_o (self, cross)
            pl.BlockSpec((2, 1, D), const3),             # b_o (self, cross)
            pl.BlockSpec((D, d_ff), const2),             # W_ff1
            pl.BlockSpec((1, d_ff), const2),             # b_ff1
            pl.BlockSpec((d_ff, D), const2),             # W_ff2
            pl.BlockSpec((1, D), const2),                # b_ff2
            pl.BlockSpec((3, D), const2),                # LN gamma (1,2,3)
            pl.BlockSpec((3, D), const2),                # LN beta  (1,2,3)
        ],
        out_specs=pl.BlockSpec((bblk, Sd, D), batched),
        compiler_params=pltpu.CompilerParams(
            dimension_semantics=("parallel",),
            vmem_limit_bytes=48 * 1024 * 1024),
    )(inputs, enc_outputs, la, pad,
      params["w_qkv1"], params["b_qkv1"],
      params["w_q2"], params["b_q2"], params["w_kv2"], params["b_kv2"],
      params["w_o"], params["b_o"],
      params["w_ff1"], params["b_ff1"], params["w_ff2"], params["b_ff2"],
      params["ln_g"], params["ln_b"])


# --------------------------- params (PyTorch-like) --------------------------

def init_raw_params(key, d_model, d_ff):
    keys = iter(jax.random.split(key, 32))

    def lin(in_d, out_d):
        lim = 1.0 / math.sqrt(in_d)
        w = jax.random.uniform(next(keys), (in_d, out_d), jnp.float32, -lim, lim)
        b = jax.random.uniform(next(keys), (out_d,), jnp.float32, -lim, lim)
        return w, b

    def mha_p():
        return {n: lin(d_model, d_model) for n in ("q", "k", "v", "o")}

    ones = jnp.ones((d_model,), jnp.float32)
    zeros = jnp.zeros((d_model,), jnp.float32)
    return {
        "attn1": mha_p(), "attn2": mha_p(),
        "ff1": lin(d_model, d_ff), "ff2": lin(d_ff, d_model),
        "ln1": (ones, zeros), "ln2": (ones, zeros), "ln3": (ones, zeros),
    }


def pack_params(raw, *, mm_dtype=MM_DTYPE):
    """Lane-dense packing: fused QKV / KV weight slabs, dense bias rows,
    matmul weights cast to the MXU dtype (bf16)."""
    def w_(x): return jnp.asarray(x, dtype=mm_dtype)
    def b_(x): return jnp.asarray(x, dtype=jnp.float32)

    a1, a2 = raw["attn1"], raw["attn2"]
    d_model = a1["q"][0].shape[0]
    d_ff = raw["ff1"][0].shape[1]
    return {
        "w_qkv1": w_(jnp.concatenate([a1["q"][0], a1["k"][0], a1["v"][0]], axis=1)),
        "b_qkv1": b_(jnp.concatenate([a1["q"][1], a1["k"][1], a1["v"][1]]
                                     ).reshape(1, 3 * d_model)),
        "w_q2": w_(a2["q"][0]),
        "b_q2": b_(a2["q"][1].reshape(1, d_model)),
        "w_kv2": w_(jnp.concatenate([a2["k"][0], a2["v"][0]], axis=1)),
        "b_kv2": b_(jnp.concatenate([a2["k"][1], a2["v"][1]]).reshape(1, 2 * d_model)),
        "w_o": w_(jnp.stack([a1["o"][0], a2["o"][0]])),
        "b_o": b_(jnp.stack([a1["o"][1], a2["o"][1]]).reshape(2, 1, d_model)),
        "w_ff1": w_(raw["ff1"][0]), "b_ff1": b_(raw["ff1"][1].reshape(1, d_ff)),
        "w_ff2": w_(raw["ff2"][0]), "b_ff2": b_(raw["ff2"][1].reshape(1, d_model)),
        "ln_g": b_(jnp.stack([raw["ln1"][0], raw["ln2"][0], raw["ln3"][0]])),
        "ln_b": b_(jnp.stack([raw["ln1"][1], raw["ln2"][1], raw["ln3"][1]])),
    }


# ----------------------- pure-JAX reference (for check) ---------------------

def _mha_ref(p, q_in, k_in, v_in, mask, num_heads):
    B, Sq, D = q_in.shape
    Sk = k_in.shape[1]
    depth = D // num_heads
    q = q_in @ p["q"][0] + p["q"][1]
    k = k_in @ p["k"][0] + p["k"][1]
    v = v_in @ p["v"][0] + p["v"][1]
    split = lambda t, S: t.reshape(B, S, num_heads, depth).transpose(0, 2, 1, 3)
    q, k, v = split(q, Sq), split(k, Sk), split(v, Sk)
    logits = jnp.einsum("bhqd,bhkd->bhqk", q, k) / math.sqrt(depth)
    logits = logits + mask * -1e9
    w = jax.nn.softmax(logits, axis=-1)
    out = jnp.einsum("bhqk,bhkd->bhqd", w, v)
    out = out.transpose(0, 2, 1, 3).reshape(B, Sq, D)
    return out @ p["o"][0] + p["o"][1]


def _ln_ref(x, g, b):
    mean = x.mean(-1, keepdims=True)
    var = ((x - mean) ** 2).mean(-1, keepdims=True)
    return (x - mean) / jnp.sqrt(var + 1e-5) * g + b


def decoder_block_ref(raw, x, enc, padding_mask, look_ahead_mask, num_heads):
    a1 = _mha_ref(raw["attn1"], x, x, x, look_ahead_mask, num_heads)
    x1 = _ln_ref(x + a1, *raw["ln1"])
    a2 = _mha_ref(raw["attn2"], x1, enc, enc, padding_mask, num_heads)
    x2 = _ln_ref(x1 + a2, *raw["ln2"])
    h = jax.nn.relu(x2 @ raw["ff1"][0] + raw["ff1"][1])
    ff = h @ raw["ff2"][0] + raw["ff2"][1]
    return _ln_ref(x2 + ff, *raw["ln3"])


# ---------------------------------- main ------------------------------------

if __name__ == "__main__":
    B, Sd, Se = 8, 8, 16
    d_model, num_heads, d_ff = 128, 4, 256    # d_model multiple of 128: lane-dense
    dropout = 0.1                             # identity at inference (no-op)

    key = jax.random.PRNGKey(0)
    kp, kx, ke, kt1, kt2 = jax.random.split(key, 5)

    raw = init_raw_params(kp, d_model, d_ff)
    params = pack_params(raw)

    x = jax.random.normal(kx, (B, Sd, d_model), jnp.float32)
    enc_out = jax.random.normal(ke, (B, Se, d_model), jnp.float32)

    # Masks exactly as the surrounding transformer builds them (0/1 floats).
    enc_tokens = jax.random.randint(kt1, (B, Se), 0, 50, dtype=jnp.int32)
    dec_tokens = jax.random.randint(kt2, (B, Sd), 0, 50, dtype=jnp.int32)
    enc_tokens = enc_tokens.at[:, -3:].set(0)
    dec_tokens = dec_tokens.at[:, -1:].set(0)
    padding_mask = (enc_tokens == 0).astype(jnp.float32)[:, None, None, :]  # (B,1,1,Se)
    causal = jnp.triu(jnp.ones((Sd, Sd), jnp.float32), k=1)
    dec_pad = (dec_tokens == 0).astype(jnp.float32)[:, None, None, :]        # (B,1,1,Sd)
    look_ahead_mask = jnp.maximum(causal, dec_pad)                           # (B,1,Sd,Sd)

    fwd = jax.jit(functools.partial(decoder_block_forward, num_heads=num_heads))
    out = fwd(params, x, enc_out, padding_mask, look_ahead_mask)
    jax.block_until_ready(out)

    assert out.shape == (B, Sd, d_model)
    assert out.dtype == jnp.float32
    assert bool(jnp.all(jnp.isfinite(out)))

    # Correctness check against a pure-JAX f32 reference of the PyTorch module
    # (kernel uses bf16 MXU operands with f32 accumulation -> loose-ish tol).
    ref = decoder_block_ref(raw, x, enc_out, padding_mask, look_ahead_mask,
                            num_heads)
    max_err = float(jnp.max(jnp.abs(out - ref)))
    mean_err = float(jnp.mean(jnp.abs(out - ref)))
    assert max_err < 5e-2, f"max abs error vs reference: {max_err}"
    assert mean_err < 1e-2, f"mean abs error vs reference: {mean_err}"

    print("KERNEL_OK")
</pallas_src>

<mosaic_0001>
module attributes {stable_mosaic.version = 11 : i64} {
  func.func @_decoder_block_kernel(%arg0: i32, %arg1: memref<4x8x128xf32, #tpu.memory_space<vmem>>, %arg2: memref<4x16x128xf32, #tpu.memory_space<vmem>>, %arg3: memref<4x8x8xf32, #tpu.memory_space<vmem>>, %arg4: memref<4x1x16xf32, #tpu.memory_space<vmem>>, %arg5: memref<128x384xbf16, #tpu.memory_space<vmem>>, %arg6: memref<1x384xf32, #tpu.memory_space<vmem>>, %arg7: memref<128x128xbf16, #tpu.memory_space<vmem>>, %arg8: memref<1x128xf32, #tpu.memory_space<vmem>>, %arg9: memref<128x256xbf16, #tpu.memory_space<vmem>>, %arg10: memref<1x256xf32, #tpu.memory_space<vmem>>, %arg11: memref<2x128x128xbf16, #tpu.memory_space<vmem>>, %arg12: memref<2x1x128xf32, #tpu.memory_space<vmem>>, %arg13: memref<128x256xbf16, #tpu.memory_space<vmem>>, %arg14: memref<1x256xf32, #tpu.memory_space<vmem>>, %arg15: memref<256x128xbf16, #tpu.memory_space<vmem>>, %arg16: memref<1x128xf32, #tpu.memory_space<vmem>>, %arg17: memref<3x128xf32, #tpu.memory_space<vmem>>, %arg18: memref<3x128xf32, #tpu.memory_space<vmem>>, %arg19: memref<4x8x128xf32, #tpu.memory_space<vmem>>) attributes {dimension_semantics = [#tpu.dimension_semantics<parallel>], iteration_bounds = array<i64: 2>, scalar_prefetch = 0 : i64, scratch_operands = 0 : i64, tpu.core_type = #tpu.core_type<tc>, window_params = [{transform_indices = @transform_0, window_bounds = array<i64: 4, 8, 128>}, {transform_indices = @transform_1, window_bounds = array<i64: 4, 16, 128>}, {transform_indices = @transform_2, window_bounds = array<i64: 4, 8, 8>}, {transform_indices = @transform_3, window_bounds = array<i64: 4, 1, 16>}, {pipeline_mode = #tpu.pipeline_mode<synchronous>, transform_indices = @transform_4, window_bounds = array<i64: 128, 384>}, {pipeline_mode = #tpu.pipeline_mode<synchronous>, transform_indices = @transform_5, window_bounds = array<i64: 1, 384>}, {pipeline_mode = #tpu.pipeline_mode<synchronous>, transform_indices = @transform_6, window_bounds = array<i64: 128, 128>}, {pipeline_mode = #tpu.pipeline_mode<synchronous>, transform_indices = @transform_7, window_bounds = array<i64: 1, 128>}, {pipeline_mode = #tpu.pipeline_mode<synchronous>, transform_indices = @transform_8, window_bounds = array<i64: 128, 256>}, {pipeline_mode = #tpu.pipeline_mode<synchronous>, transform_indices = @transform_9, window_bounds = array<i64: 1, 256>}, {pipeline_mode = #tpu.pipeline_mode<synchronous>, transform_indices = @transform_10, window_bounds = array<i64: 2, 128, 128>}, {pipeline_mode = #tpu.pipeline_mode<synchronous>, transform_indices = @transform_11, window_bounds = array<i64: 2, 1, 128>}, {pipeline_mode = #tpu.pipeline_mode<synchronous>, transform_indices = @transform_12, window_bounds = array<i64: 128, 256>}, {pipeline_mode = #tpu.pipeline_mode<synchronous>, transform_indices = @transform_13, window_bounds = array<i64: 1, 256>}, {pipeline_mode = #tpu.pipeline_mode<synchronous>, transform_indices = @transform_14, window_bounds = array<i64: 256, 128>}, {pipeline_mode = #tpu.pipeline_mode<synchronous>, transform_indices = @transform_15, window_bounds = array<i64: 1, 128>}, {pipeline_mode = #tpu.pipeline_mode<synchronous>, transform_indices = @transform_16, window_bounds = array<i64: 3, 128>}, {pipeline_mode = #tpu.pipeline_mode<synchronous>, transform_indices = @transform_17, window_bounds = array<i64: 3, 128>}, {transform_indices = @transform_18, window_bounds = array<i64: 4, 8, 128>}]} {
    %c0 = arith.constant 0 : index
    %c0_0 = arith.constant 0 : index
    %c0_1 = arith.constant 0 : index
    %0 = vector.load %arg1[%c0, %c0_0, %c0_1] : memref<4x8x128xf32, #tpu.memory_space<vmem>>, vector<4x8x128xf32>
    %1 = vector.shape_cast %0 : vector<4x8x128xf32> to vector<32x128xf32>
    %c0_2 = arith.constant 0 : index
    %c0_3 = arith.constant 0 : index
    %c0_4 = arith.constant 0 : index
    %2 = vector.load %arg2[%c0_2, %c0_3, %c0_4] : memref<4x16x128xf32, #tpu.memory_space<vmem>>, vector<4x16x128xf32>
    %3 = vector.shape_cast %2 : vector<4x16x128xf32> to vector<64x128xf32>
    %c0_5 = arith.constant 0 : index
    %c0_6 = arith.constant 0 : index
    %4 = vector.load %arg5[%c0_5, %c0_6] : memref<128x384xbf16, #tpu.memory_space<vmem>>, vector<128x384xbf16>
    %5 = arith.truncf %1 : vector<32x128xf32> to vector<32x128xbf16>
    %cst = arith.constant dense<0.000000e+00> : vector<32x384xf32>
    %6 = tpu.matmul %5, %4, %cst {dimension_numbers = #tpu.dot_dimension_numbers<[1], [0], [0], [1], [0, 0, 1, 1], [], []>} : vector<32x128xbf16>, vector<128x384xbf16>, vector<32x384xf32> -> vector<32x384xf32>
    %c0_7 = arith.constant 0 : index
    %c0_8 = arith.constant 0 : index
    %7 = vector.load %arg6[%c0_7, %c0_8] : memref<1x384xf32, #tpu.memory_space<vmem>>, vector<1x384xf32>
    %8 = vector.broadcast %7 : vector<1x384xf32> to vector<32x384xf32>
    %9 = arith.addf %6, %8 : vector<32x384xf32>
    %10 = vector.extract_strided_slice %9 {offsets = [0, 0], sizes = [32, 128], strides = [1, 1]} : vector<32x384xf32> to vector<32x128xf32>
    %11 = vector.extract_strided_slice %9 {offsets = [0, 128], sizes = [32, 128], strides = [1, 1]} : vector<32x384xf32> to vector<32x128xf32>
    %12 = vector.extract_strided_slice %9 {offsets = [0, 256], sizes = [32, 128], strides = [1, 1]} : vector<32x384xf32> to vector<32x128xf32>
    %c0_9 = arith.constant 0 : index
    %c0_10 = arith.constant 0 : index
    %c0_11 = arith.constant 0 : index
    %13 = vector.load %arg3[%c0_9, %c0_10, %c0_11] : memref<4x8x8xf32, #tpu.memory_space<vmem>>, vector<4x8x8xf32>
    %cst_12 = arith.constant -1.000000e+09 : f32
    %14 = vector.broadcast %cst_12 : f32 to vector<4x8x8xf32>
    %15 = arith.mulf %13, %14 : vector<4x8x8xf32>
    %16 = arith.truncf %10 : vector<32x128xf32> to vector<32x128xbf16>
    %17 = vector.shape_cast %16 : vector<32x128xbf16> to vector<4x8x128xbf16>
    %18 = arith.truncf %11 : vector<32x128xf32> to vector<32x128xbf16>
    %19 = vector.shape_cast %18 : vector<32x128xbf16> to vector<4x8x128xbf16>
    %20 = arith.truncf %12 : vector<32x128xf32> to vector<32x128xbf16>
    %21 = vector.shape_cast %20 : vector<32x128xbf16> to vector<4x8x128xbf16>
    %22 = vector.extract_strided_slice %17 {offsets = [0, 0, 0], sizes = [4, 8, 32], strides = [1, 1, 1]} : vector<4x8x128xbf16> to vector<4x8x32xbf16>
    %23 = vector.extract_strided_slice %19 {offsets = [0, 0, 0], sizes = [4, 8, 32], strides = [1, 1, 1]} : vector<4x8x128xbf16> to vector<4x8x32xbf16>
    %24 = vector.extract_strided_slice %21 {offsets = [0, 0, 0], sizes = [4, 8, 32], strides = [1, 1, 1]} : vector<4x8x128xbf16> to vector<4x8x32xbf16>
    %cst_13 = arith.constant dense<0.000000e+00> : vector<4x8x8xf32>
    %25 = tpu.matmul %22, %23, %cst_13 {dimension_numbers = #tpu.dot_dimension_numbers<[2], [2], [1], [1], [0, 0, 0, 1, 1, 1], [0], [0]>} : vector<4x8x32xbf16>, vector<4x8x32xbf16>, vector<4x8x8xf32> -> vector<4x8x8xf32>
    %cst_14 = arith.constant 0.176776692 : f32
    %26 = vector.broadcast %cst_14 : f32 to vector<4x8x8xf32>
    %27 = arith.mulf %25, %26 : vector<4x8x8xf32>
    %28 = arith.addf %27, %15 : vector<4x8x8xf32>
    %cst_15 = arith.constant dense<0xFF800000> : vector<4x8xf32>
    %29 = vector.multi_reduction <maximumf>, %28, %cst_15 [2] : vector<4x8x8xf32> to vector<4x8xf32>
    %30 = vector.shape_cast %29 : vector<4x8xf32> to vector<4x8x1xf32>
    %31 = vector.broadcast %30 : vector<4x8x1xf32> to vector<4x8x8xf32>
    %32 = arith.subf %28, %31 : vector<4x8x8xf32>
    %33 = math.exp %32 : vector<4x8x8xf32>
    %cst_16 = arith.constant dense<0.000000e+00> : vector<4x8xf32>
    %34 = vector.multi_reduction <add>, %33, %cst_16 [2] : vector<4x8x8xf32> to vector<4x8xf32>
    %35 = vector.shape_cast %34 : vector<4x8xf32> to vector<4x8x1xf32>
    %36 = tpu.reciprocal %35 {approx = true} : vector<4x8x1xf32> -> vector<4x8x1xf32>
    %37 = vector.broadcast %36 : vector<4x8x1xf32> to vector<4x8x8xf32>
    %38 = arith.mulf %33, %37 : vector<4x8x8xf32>
    %39 = arith.truncf %38 : vector<4x8x8xf32> to vector<4x8x8xbf16>
    %cst_17 = arith.constant dense<0.000000e+00> : vector<4x8x32xf32>
    %40 = tpu.matmul %39, %24, %cst_17 {dimension_numbers = #tpu.dot_dimension_numbers<[2], [1], [1], [2], [0, 0, 0, 1, 1, 2], [0], [0]>} : vector<4x8x8xbf16>, vector<4x8x32xbf16>, vector<4x8x32xf32> -> vector<4x8x32xf32>
    %41 = vector.extract_strided_slice %17 {offsets = [0, 0, 32], sizes = [4, 8, 32], strides = [1, 1, 1]} : vector<4x8x128xbf16> to vector<4x8x32xbf16>
    %42 = vector.extract_strided_slice %19 {offsets = [0, 0, 32], sizes = [4, 8, 32], strides = [1, 1, 1]} : vector<4x8x128xbf16> to vector<4x8x32xbf16>
    %43 = vector.extract_strided_slice %21 {offsets = [0, 0, 32], sizes = [4, 8, 32], strides = [1, 1, 1]} : vector<4x8x128xbf16> to vector<4x8x32xbf16>
    %cst_18 = arith.constant dense<0.000000e+00> : vector<4x8x8xf32>
    %44 = tpu.matmul %41, %42, %cst_18 {dimension_numbers = #tpu.dot_dimension_numbers<[2], [2], [1], [1], [0, 0, 0, 1, 1, 1], [0], [0]>} : vector<4x8x32xbf16>, vector<4x8x32xbf16>, vector<4x8x8xf32> -> vector<4x8x8xf32>
    %cst_19 = arith.constant 0.176776692 : f32
    %45 = vector.broadcast %cst_19 : f32 to vector<4x8x8xf32>
    %46 = arith.mulf %44, %45 : vector<4x8x8xf32>
    %47 = arith.addf %46, %15 : vector<4x8x8xf32>
    %cst_20 = arith.constant dense<0xFF800000> : vector<4x8xf32>
    %48 = vector.multi_reduction <maximumf>, %47, %cst_20 [2] : vector<4x8x8xf32> to vector<4x8xf32>
    %49 = vector.shape_cast %48 : vector<4x8xf32> to vector<4x8x1xf32>
    %50 = vector.broadcast %49 : vector<4x8x1xf32> to vector<4x8x8xf32>
    %51 = arith.subf %47, %50 : vector<4x8x8xf32>
    %52 = math.exp %51 : vector<4x8x8xf32>
    %cst_21 = arith.constant dense<0.000000e+00> : vector<4x8xf32>
    %53 = vector.multi_reduction <add>, %52, %cst_21 [2] : vector<4x8x8xf32> to vector<4x8xf32>
    %54 = vector.shape_cast %53 : vector<4x8xf32> to vector<4x8x1xf32>
    %55 = tpu.reciprocal %54 {approx = true} : vector<4x8x1xf32> -> vector<4x8x1xf32>
    %56 = vector.broadcast %55 : vector<4x8x1xf32> to vector<4x8x8xf32>
    %57 = arith.mulf %52, %56 : vector<4x8x8xf32>
    %58 = arith.truncf %57 : vector<4x8x8xf32> to vector<4x8x8xbf16>
    %cst_22 = arith.constant dense<0.000000e+00> : vector<4x8x32xf32>
    %59 = tpu.matmul %58, %43, %cst_22 {dimension_numbers = #tpu.dot_dimension_numbers<[2], [1], [1], [2], [0, 0, 0, 1, 1, 2], [0], [0]>} : vector<4x8x8xbf16>, vector<4x8x32xbf16>, vector<4x8x32xf32> -> vector<4x8x32xf32>
    %60 = vector.extract_strided_slice %17 {offsets = [0, 0, 64], sizes = [4, 8, 32], strides = [1, 1, 1]} : vector<4x8x128xbf16> to vector<4x8x32xbf16>
    %61 = vector.extract_strided_slice %19 {offsets = [0, 0, 64], sizes = [4, 8, 32], strides = [1, 1, 1]} : vector<4x8x128xbf16> to vector<4x8x32xbf16>
    %62 = vector.extract_strided_slice %21 {offsets = [0, 0, 64], sizes = [4, 8, 32], strides = [1, 1, 1]} : vector<4x8x128xbf16> to vector<4x8x32xbf16>
    %cst_23 = arith.constant dense<0.000000e+00> : vector<4x8x8xf32>
    %63 = tpu.matmul %60, %61, %cst_23 {dimension_numbers = #tpu.dot_dimension_numbers<[2], [2], [1], [1], [0, 0, 0, 1, 1, 1], [0], [0]>} : vector<4x8x32xbf16>, vector<4x8x32xbf16>, vector<4x8x8xf32> -> vector<4x8x8xf32>
    %cst_24 = arith.constant 0.176776692 : f32
    %64 = vector.broadcast %cst_24 : f32 to vector<4x8x8xf32>
    %65 = arith.mulf %63, %64 : vector<4x8x8xf32>
    %66 = arith.addf %65, %15 : vector<4x8x8xf32>
    %cst_25 = arith.constant dense<0xFF800000> : vector<4x8xf32>
    %67 = vector.multi_reduction <maximumf>, %66, %cst_25 [2] : vector<4x8x8xf32> to vector<4x8xf32>
    %68 = vector.shape_cast %67 : vector<4x8xf32> to vector<4x8x1xf32>
    %69 = vector.broadcast %68 : vector<4x8x1xf32> to vector<4x8x8xf32>
    %70 = arith.subf %66, %69 : vector<4x8x8xf32>
    %71 = math.exp %70 : vector<4x8x8xf32>
    %cst_26 = arith.constant dense<0.000000e+00> : vector<4x8xf32>
    %72 = vector.multi_reduction <add>, %71, %cst_26 [2] : vector<4x8x8xf32> to vector<4x8xf32>
    %73 = vector.shape_cast %72 : vector<4x8xf32> to vector<4x8x1xf32>
    %74 = tpu.reciprocal %73 {approx = true} : vector<4x8x1xf32> -> vector<4x8x1xf32>
    %75 = vector.broadcast %74 : vector<4x8x1xf32> to vector<4x8x8xf32>
    %76 = arith.mulf %71, %75 : vector<4x8x8xf32>
    %77 = arith.truncf %76 : vector<4x8x8xf32> to vector<4x8x8xbf16>
    %cst_27 = arith.constant dense<0.000000e+00> : vector<4x8x32xf32>
    %78 = tpu.matmul %77, %62, %cst_27 {dimension_numbers = #tpu.dot_dimension_numbers<[2], [1], [1], [2], [0, 0, 0, 1, 1, 2], [0], [0]>} : vector<4x8x8xbf16>, vector<4x8x32xbf16>, vector<4x8x32xf32> -> vector<4x8x32xf32>
    %79 = vector.extract_strided_slice %17 {offsets = [0, 0, 96], sizes = [4, 8, 32], strides = [1, 1, 1]} : vector<4x8x128xbf16> to vector<4x8x32xbf16>
    %80 = vector.extract_strided_slice %19 {offsets = [0, 0, 96], sizes = [4, 8, 32], strides = [1, 1, 1]} : vector<4x8x128xbf16> to vector<4x8x32xbf16>
    %81 = vector.extract_strided_slice %21 {offsets = [0, 0, 96], sizes = [4, 8, 32], strides = [1, 1, 1]} : vector<4x8x128xbf16> to vector<4x8x32xbf16>
    %cst_28 = arith.constant dense<0.000000e+00> : vector<4x8x8xf32>
    %82 = tpu.matmul %79, %80, %cst_28 {dimension_numbers = #tpu.dot_dimension_numbers<[2], [2], [1], [1], [0, 0, 0, 1, 1, 1], [0], [0]>} : vector<4x8x32xbf16>, vector<4x8x32xbf16>, vector<4x8x8xf32> -> vector<4x8x8xf32>
    %cst_29 = arith.constant 0.176776692 : f32
    %83 = vector.broadcast %cst_29 : f32 to vector<4x8x8xf32>
    %84 = arith.mulf %82, %83 : vector<4x8x8xf32>
    %85 = arith.addf %84, %15 : vector<4x8x8xf32>
    %cst_30 = arith.constant dense<0xFF800000> : vector<4x8xf32>
    %86 = vector.multi_reduction <maximumf>, %85, %cst_30 [2] : vector<4x8x8xf32> to vector<4x8xf32>
    %87 = vector.shape_cast %86 : vector<4x8xf32> to vector<4x8x1xf32>
    %88 = vector.broadcast %87 : vector<4x8x1xf32> to vector<4x8x8xf32>
    %89 = arith.subf %85, %88 : vector<4x8x8xf32>
    %90 = math.exp %89 : vector<4x8x8xf32>
    %cst_31 = arith.constant dense<0.000000e+00> : vector<4x8xf32>
    %91 = vector.multi_reduction <add>, %90, %cst_31 [2] : vector<4x8x8xf32> to vector<4x8xf32>
    %92 = vector.shape_cast %91 : vector<4x8xf32> to vector<4x8x1xf32>
    %93 = tpu.reciprocal %92 {approx = true} : vector<4x8x1xf32> -> vector<4x8x1xf32>
    %94 = vector.broadcast %93 : vector<4x8x1xf32> to vector<4x8x8xf32>
    %95 = arith.mulf %90, %94 : vector<4x8x8xf32>
    %96 = arith.truncf %95 : vector<4x8x8xf32> to vector<4x8x8xbf16>
    %cst_32 = arith.constant dense<0.000000e+00> : vector<4x8x32xf32>
    %97 = tpu.matmul %96, %81, %cst_32 {dimension_numbers = #tpu.dot_dimension_numbers<[2], [1], [1], [2], [0, 0, 0, 1, 1, 2], [0], [0]>} : vector<4x8x8xbf16>, vector<4x8x32xbf16>, vector<4x8x32xf32> -> vector<4x8x32xf32>
    %98 = tpu.concatenate %40, %59, %78, %97 in 2 : vector<4x8x32xf32>, vector<4x8x32xf32>, vector<4x8x32xf32>, vector<4x8x32xf32> -> vector<4x8x128xf32>
    %99 = vector.shape_cast %98 : vector<4x8x128xf32> to vector<32x128xf32>
    %c0_33 = arith.constant 0 : index
    %c0_34 = arith.constant 0 : index
    %c0_35 = arith.constant 0 : index
    %100 = vector.load %arg11[%c0_33, %c0_34, %c0_35] : memref<2x128x128xbf16, #tpu.memory_space<vmem>>, vector<1x128x128xbf16>
    %101 = vector.shape_cast %100 : vector<1x128x128xbf16> to vector<128x128xbf16>
    %102 = arith.truncf %99 : vector<32x128xf32> to vector<32x128xbf16>
    %cst_36 = arith.constant dense<0.000000e+00> : vector<32x128xf32>
    %103 = tpu.matmul %102, %101, %cst_36 {dimension_numbers = #tpu.dot_dimension_numbers<[1], [0], [0], [1], [0, 0, 1, 1], [], []>} : vector<32x128xbf16>, vector<128x128xbf16>, vector<32x128xf32> -> vector<32x128xf32>
    %c0_37 = arith.constant 0 : index
    %c0_38 = arith.constant 0 : index
    %c0_39 = arith.constant 0 : index
    %104 = vector.load %arg12[%c0_37, %c0_38, %c0_39] : memref<2x1x128xf32, #tpu.memory_space<vmem>>, vector<1x1x128xf32>
    %105 = vector.shape_cast %104 : vector<1x1x128xf32> to vector<1x128xf32>
    %106 = vector.broadcast %105 : vector<1x128xf32> to vector<32x128xf32>
    %107 = arith.addf %103, %106 : vector<32x128xf32>
    %108 = arith.addf %1, %107 : vector<32x128xf32>
    %cst_40 = arith.constant dense<0.000000e+00> : vector<32xf32>
    %109 = vector.multi_reduction <add>, %108, %cst_40 [1] : vector<32x128xf32> to vector<32xf32>
    %110 = vector.shape_cast %109 : vector<32xf32> to vector<32x1xf32>
    %cst_41 = arith.constant 1.280000e+02 : f32
    %111 = vector.broadcast %cst_41 : f32 to vector<32x1xf32>
    %112 = arith.divf %110, %111 : vector<32x1xf32>
    %113 = vector.broadcast %112 : vector<32x1xf32> to vector<32x128xf32>
    %114 = arith.subf %108, %113 : vector<32x128xf32>
    %115 = arith.mulf %114, %114 : vector<32x128xf32>
    %cst_42 = arith.constant dense<0.000000e+00> : vector<32xf32>
    %116 = vector.multi_reduction <add>, %115, %cst_42 [1] : vector<32x128xf32> to vector<32xf32>
    %117 = vector.shape_cast %116 : vector<32xf32> to vector<32x1xf32>
    %cst_43 = arith.constant 1.280000e+02 : f32
    %118 = vector.broadcast %cst_43 : f32 to vector<32x1xf32>
    %119 = arith.divf %117, %118 : vector<32x1xf32>
    %cst_44 = arith.constant 9.99999974E-6 : f32
    %120 = vector.broadcast %cst_44 : f32 to vector<32x1xf32>
    %121 = arith.addf %119, %120 : vector<32x1xf32>
    %122 = math.rsqrt %121 : vector<32x1xf32>
    %123 = vector.broadcast %122 : vector<32x1xf32> to vector<32x128xf32>
    %124 = arith.mulf %114, %123 : vector<32x128xf32>
    %c0_45 = arith.constant 0 : index
    %c0_46 = arith.constant 0 : index
    %125 = vector.load %arg17[%c0_45, %c0_46] : memref<3x128xf32, #tpu.memory_space<vmem>>, vector<1x128xf32>
    %126 = vector.broadcast %125 : vector<1x128xf32> to vector<32x128xf32>
    %127 = arith.mulf %124, %126 : vector<32x128xf32>
    %c0_47 = arith.constant 0 : index
    %c0_48 = arith.constant 0 : index
    %128 = vector.load %arg18[%c0_47, %c0_48] : memref<3x128xf32, #tpu.memory_space<vmem>>, vector<1x128xf32>
    %129 = vector.broadcast %128 : vector<1x128xf32> to vector<32x128xf32>
    %130 = arith.addf %127, %129 : vector<32x128xf32>
    %c0_49 = arith.constant 0 : index
    %c0_50 = arith.constant 0 : index
    %131 = vector.load %arg7[%c0_49, %c0_50] : memref<128x128xbf16, #tpu.memory_space<vmem>>, vector<128x128xbf16>
    %132 = arith.truncf %130 : vector<32x128xf32> to vector<32x128xbf16>
    %cst_51 = arith.constant dense<0.000000e+00> : vector<32x128xf32>
    %133 = tpu.matmul %132, %131, %cst_51 {dimension_numbers = #tpu.dot_dimension_numbers<[1], [0], [0], [1], [0, 0, 1, 1], [], []>} : vector<32x128xbf16>, vector<128x128xbf16>, vector<32x128xf32> -> vector<32x128xf32>
    %c0_52 = arith.constant 0 : index
    %c0_53 = arith.constant 0 : index
    %134 = vector.load %arg8[%c0_52, %c0_53] : memref<1x128xf32, #tpu.memory_space<vmem>>, vector<1x128xf32>
    %135 = vector.broadcast %134 : vector<1x128xf32> to vector<32x128xf32>
    %136 = arith.addf %133, %135 : vector<32x128xf32>
    %c0_54 = arith.constant 0 : index
    %c0_55 = arith.constant 0 : index
    %137 = vector.load %arg9[%c0_54, %c0_55] : memref<128x256xbf16, #tpu.memory_space<vmem>>, vector<128x256xbf16>
    %138 = arith.truncf %3 : vector<64x128xf32> to vector<64x128xbf16>
    %cst_56 = arith.constant dense<0.000000e+00> : vector<64x256xf32>
    %139 = tpu.matmul %138, %137, %cst_56 {dimension_numbers = #tpu.dot_dimension_numbers<[1], [0], [0], [1], [0, 0, 1, 1], [], []>} : vector<64x128xbf16>, vector<128x256xbf16>, vector<64x256xf32> -> vector<64x256xf32>
    %c0_57 = arith.constant 0 : index
    %c0_58 = arith.constant 0 : index
    %140 = vector.load %arg10[%c0_57, %c0_58] : memref<1x256xf32, #tpu.memory_space<vmem>>, vector<1x256xf32>
    %141 = vector.broadcast %140 : vector<1x256xf32> to vector<64x256xf32>
    %142 = arith.addf %139, %141 : vector<64x256xf32>
    %143 = vector.extract_strided_slice %142 {offsets = [0, 0], sizes = [64, 128], strides = [1, 1]} : vector<64x256xf32> to vector<64x128xf32>
    %144 = vector.extract_strided_slice %142 {offsets = [0, 128], sizes = [64, 128], strides = [1, 1]} : vector<64x256xf32> to vector<64x128xf32>
    %c0_59 = arith.constant 0 : index
    %c0_60 = arith.constant 0 : index
    %c0_61 = arith.constant 0 : index
    %145 = vector.load %arg4[%c0_59, %c0_60, %c0_61] : memref<4x1x16xf32, #tpu.memory_space<vmem>>, vector<4x1x16xf32>
    %cst_62 = arith.constant -1.000000e+09 : f32
    %146 = vector.broadcast %cst_62 : f32 to vector<4x1x16xf32>
    %147 = arith.mulf %145, %146 : vector<4x1x16xf32>
    %148 = arith.truncf %136 : vector<32x128xf32> to vector<32x128xbf16>
    %149 = vector.shape_cast %148 : vector<32x128xbf16> to vector<4x8x128xbf16>
    %150 = arith.truncf %143 : vector<64x128xf32> to vector<64x128xbf16>
    %151 = vector.shape_cast %150 : vector<64x128xbf16> to vector<4x16x128xbf16>
    %152 = arith.truncf %144 : vector<64x128xf32> to vector<64x128xbf16>
    %153 = vector.shape_cast %152 : vector<64x128xbf16> to vector<4x16x128xbf16>
    %154 = vector.extract_strided_slice %149 {offsets = [0, 0, 0], sizes = [4, 8, 32], strides = [1, 1, 1]} : vector<4x8x128xbf16> to vector<4x8x32xbf16>
    %155 = vector.extract_strided_slice %151 {offsets = [0, 0, 0], sizes = [4, 16, 32], strides = [1, 1, 1]} : vector<4x16x128xbf16> to vector<4x16x32xbf16>
    %156 = vector.extract_strided_slice %153 {offsets = [0, 0, 0], sizes = [4, 16, 32], strides = [1, 1, 1]} : vector<4x16x128xbf16> to vector<4x16x32xbf16>
    %cst_63 = arith.constant dense<0.000000e+00> : vector<4x8x16xf32>
    %157 = tpu.matmul %154, %155, %cst_63 {dimension_numbers = #tpu.dot_dimension_numbers<[2], [2], [1], [1], [0, 0, 0, 1, 1, 1], [0], [0]>} : vector<4x8x32xbf16>, vector<4x16x32xbf16>, vector<4x8x16xf32> -> vector<4x8x16xf32>
    %cst_64 = arith.constant 0.176776692 : f32
    %158 = vector.broadcast %cst_64 : f32 to vector<4x8x16xf32>
    %159 = arith.mulf %157, %158 : vector<4x8x16xf32>
    %160 = vector.broadcast %147 : vector<4x1x16xf32> to vector<4x8x16xf32>
    %161 = arith.addf %159, %160 : vector<4x8x16xf32>
    %cst_65 = arith.constant dense<0xFF800000> : vector<4x8xf32>
    %162 = vector.multi_reduction <maximumf>, %161, %cst_65 [2] : vector<4x8x16xf32> to vector<4x8xf32>
    %163 = vector.shape_cast %162 : vector<4x8xf32> to vector<4x8x1xf32>
    %164 = vector.broadcast %163 : vector<4x8x1xf32> to vector<4x8x16xf32>
    %165 = arith.subf %161, %164 : vector<4x8x16xf32>
    %166 = math.exp %165 : vector<4x8x16xf32>
    %cst_66 = arith.constant dense<0.000000e+00> : vector<4x8xf32>
    %167 = vector.multi_reduction <add>, %166, %cst_66 [2] : vector<4x8x16xf32> to vector<4x8xf32>
    %168 = vector.shape_cast %167 : vector<4x8xf32> to vector<4x8x1xf32>
    %169 = tpu.reciprocal %168 {approx = true} : vector<4x8x1xf32> -> vector<4x8x1xf32>
    %170 = vector.broadcast %169 : vector<4x8x1xf32> to vector<4x8x16xf32>
    %171 = arith.mulf %166, %170 : vector<4x8x16xf32>
    %172 = arith.truncf %171 : vector<4x8x16xf32> to vector<4x8x16xbf16>
    %cst_67 = arith.constant dense<0.000000e+00> : vector<4x8x32xf32>
    %173 = tpu.matmul %172, %156, %cst_67 {dimension_numbers = #tpu.dot_dimension_numbers<[2], [1], [1], [2], [0, 0, 0, 1, 1, 2], [0], [0]>} : vector<4x8x16xbf16>, vector<4x16x32xbf16>, vector<4x8x32xf32> -> vector<4x8x32xf32>
    %174 = vector.extract_strided_slice %149 {offsets = [0, 0, 32], sizes = [4, 8, 32], strides = [1, 1, 1]} : vector<4x8x128xbf16> to vector<4x8x32xbf16>
    %175 = vector.extract_strided_slice %151 {offsets = [0, 0, 32], sizes = [4, 16, 32], strides = [1, 1, 1]} : vector<4x16x128xbf16> to vector<4x16x32xbf16>
    %176 = vector.extract_strided_slice %153 {offsets = [0, 0, 32], sizes = [4, 16, 32], strides = [1, 1, 1]} : vector<4x16x128xbf16> to vector<4x16x32xbf16>
    %cst_68 = arith.constant dense<0.000000e+00> : vector<4x8x16xf32>
    %177 = tpu.matmul %174, %175, %cst_68 {dimension_numbers = #tpu.dot_dimension_numbers<[2], [2], [1], [1], [0, 0, 0, 1, 1, 1], [0], [0]>} : vector<4x8x32xbf16>, vector<4x16x32xbf16>, vector<4x8x16xf32> -> vector<4x8x16xf32>
    %cst_69 = arith.constant 0.176776692 : f32
    %178 = vector.broadcast %cst_69 : f32 to vector<4x8x16xf32>
    %179 = arith.mulf %177, %178 : vector<4x8x16xf32>
    %180 = vector.broadcast %147 : vector<4x1x16xf32> to vector<4x8x16xf32>
    %181 = arith.addf %179, %180 : vector<4x8x16xf32>
    %cst_70 = arith.constant dense<0xFF800000> : vector<4x8xf32>
    %182 = vector.multi_reduction <maximumf>, %181, %cst_70 [2] : vector<4x8x16xf32> to vector<4x8xf32>
    %183 = vector.shape_cast %182 : vector<4x8xf32> to vector<4x8x1xf32>
    %184 = vector.broadcast %183 : vector<4x8x1xf32> to vector<4x8x16xf32>
    %185 = arith.subf %181, %184 : vector<4x8x16xf32>
    %186 = math.exp %185 : vector<4x8x16xf32>
    %cst_71 = arith.constant dense<0.000000e+00> : vector<4x8xf32>
    %187 = vector.multi_reduction <add>, %186, %cst_71 [2] : vector<4x8x16xf32> to vector<4x8xf32>
    %188 = vector.shape_cast %187 : vector<4x8xf32> to vector<4x8x1xf32>
    %189 = tpu.reciprocal %188 {approx = true} : vector<4x8x1xf32> -> vector<4x8x1xf32>
    %190 = vector.broadcast %189 : vector<4x8x1xf32> to vector<4x8x16xf32>
    %191 = arith.mulf %186, %190 : vector<4x8x16xf32>
    %192 = arith.truncf %191 : vector<4x8x16xf32> to vector<4x8x16xbf16>
    %cst_72 = arith.constant dense<0.000000e+00> : vector<4x8x32xf32>
    %193 = tpu.matmul %192, %176, %cst_72 {dimension_numbers = #tpu.dot_dimension_numbers<[2], [1], [1], [2], [0, 0, 0, 1, 1, 2], [0], [0]>} : vector<4x8x16xbf16>, vector<4x16x32xbf16>, vector<4x8x32xf32> -> vector<4x8x32xf32>
    %194 = vector.extract_strided_slice %149 {offsets = [0, 0, 64], sizes = [4, 8, 32], strides = [1, 1, 1]} : vector<4x8x128xbf16> to vector<4x8x32xbf16>
    %195 = vector.extract_strided_slice %151 {offsets = [0, 0, 64], sizes = [4, 16, 32], strides = [1, 1, 1]} : vector<4x16x128xbf16> to vector<4x16x32xbf16>
    %196 = vector.extract_strided_slice %153 {offsets = [0, 0, 64], sizes = [4, 16, 32], strides = [1, 1, 1]} : vector<4x16x128xbf16> to vector<4x16x32xbf16>
    %cst_73 = arith.constant dense<0.000000e+00> : vector<4x8x16xf32>
    %197 = tpu.matmul %194, %195, %cst_73 {dimension_numbers = #tpu.dot_dimension_numbers<[2], [2], [1], [1], [0, 0, 0, 1, 1, 1], [0], [0]>} : vector<4x8x32xbf16>, vector<4x16x32xbf16>, vector<4x8x16xf32> -> vector<4x8x16xf32>
    %cst_74 = arith.constant 0.176776692 : f32
    %198 = vector.broadcast %cst_74 : f32 to vector<4x8x16xf32>
    %199 = arith.mulf %197, %198 : vector<4x8x16xf32>
    %200 = vector.broadcast %147 : vector<4x1x16xf32> to vector<4x8x16xf32>
    %201 = arith.addf %199, %200 : vector<4x8x16xf32>
    %cst_75 = arith.constant dense<0xFF800000> : vector<4x8xf32>
    %202 = vector.multi_reduction <maximumf>, %201, %cst_75 [2] : vector<4x8x16xf32> to vector<4x8xf32>
    %203 = vector.shape_cast %202 : vector<4x8xf32> to vector<4x8x1xf32>
    %204 = vector.broadcast %203 : vector<4x8x1xf32> to vector<4x8x16xf32>
    %205 = arith.subf %201, %204 : vector<4x8x16xf32>
    %206 = math.exp %205 : vector<4x8x16xf32>
    %cst_76 = arith.constant dense<0.000000e+00> : vector<4x8xf32>
    %207 = vector.multi_reduction <add>, %206, %cst_76 [2] : vector<4x8x16xf32> to vector<4x8xf32>
    %208 = vector.shape_cast %207 : vector<4x8xf32> to vector<4x8x1xf32>
    %209 = tpu.reciprocal %208 {approx = true} : vector<4x8x1xf32> -> vector<4x8x1xf32>
    %210 = vector.broadcast %209 : vector<4x8x1xf32> to vector<4x8x16xf32>
    %211 = arith.mulf %206, %210 : vector<4x8x16xf32>
    %212 = arith.truncf %211 : vector<4x8x16xf32> to vector<4x8x16xbf16>
    %cst_77 = arith.constant dense<0.000000e+00> : vector<4x8x32xf32>
    %213 = tpu.matmul %212, %196, %cst_77 {dimension_numbers = #tpu.dot_dimension_numbers<[2], [1], [1], [2], [0, 0, 0, 1, 1, 2], [0], [0]>} : vector<4x8x16xbf16>, vector<4x16x32xbf16>, vector<4x8x32xf32> -> vector<4x8x32xf32>
    %214 = vector.extract_strided_slice %149 {offsets = [0, 0, 96], sizes = [4, 8, 32], strides = [1, 1, 1]} : vector<4x8x128xbf16> to vector<4x8x32xbf16>
    %215 = vector.extract_strided_slice %151 {offsets = [0, 0, 96], sizes = [4, 16, 32], strides = [1, 1, 1]} : vector<4x16x128xbf16> to vector<4x16x32xbf16>
    %216 = vector.extract_strided_slice %153 {offsets = [0, 0, 96], sizes = [4, 16, 32], strides = [1, 1, 1]} : vector<4x16x128xbf16> to vector<4x16x32xbf16>
    %cst_78 = arith.constant dense<0.000000e+00> : vector<4x8x16xf32>
    %217 = tpu.matmul %214, %215, %cst_78 {dimension_numbers = #tpu.dot_dimension_numbers<[2], [2], [1], [1], [0, 0, 0, 1, 1, 1], [0], [0]>} : vector<4x8x32xbf16>, vector<4x16x32xbf16>, vector<4x8x16xf32> -> vector<4x8x16xf32>
    %cst_79 = arith.constant 0.176776692 : f32
    %218 = vector.broadcast %cst_79 : f32 to vector<4x8x16xf32>
    %219 = arith.mulf %217, %218 : vector<4x8x16xf32>
    %220 = vector.broadcast %147 : vector<4x1x16xf32> to vector<4x8x16xf32>
    %221 = arith.addf %219, %220 : vector<4x8x16xf32>
    %cst_80 = arith.constant dense<0xFF800000> : vector<4x8xf32>
    %222 = vector.multi_reduction <maximumf>, %221, %cst_80 [2] : vector<4x8x16xf32> to vector<4x8xf32>
    %223 = vector.shape_cast %222 : vector<4x8xf32> to vector<4x8x1xf32>
    %224 = vector.broadcast %223 : vector<4x8x1xf32> to vector<4x8x16xf32>
    %225 = arith.subf %221, %224 : vector<4x8x16xf32>
    %226 = math.exp %225 : vector<4x8x16xf32>
    %cst_81 = arith.constant dense<0.000000e+00> : vector<4x8xf32>
    %227 = vector.multi_reduction <add>, %226, %cst_81 [2] : vector<4x8x16xf32> to vector<4x8xf32>
    %228 = vector.shape_cast %227 : vector<4x8xf32> to vector<4x8x1xf32>
    %229 = tpu.reciprocal %228 {approx = true} : vector<4x8x1xf32> -> vector<4x8x1xf32>
    %230 = vector.broadcast %229 : vector<4x8x1xf32> to vector<4x8x16xf32>
    %231 = arith.mulf %226, %230 : vector<4x8x16xf32>
    %232 = arith.truncf %231 : vector<4x8x16xf32> to vector<4x8x16xbf16>
    %cst_82 = arith.constant dense<0.000000e+00> : vector<4x8x32xf32>
    %233 = tpu.matmul %232, %216, %cst_82 {dimension_numbers = #tpu.dot_dimension_numbers<[2], [1], [1], [2], [0, 0, 0, 1, 1, 2], [0], [0]>} : vector<4x8x16xbf16>, vector<4x16x32xbf16>, vector<4x8x32xf32> -> vector<4x8x32xf32>
    %234 = tpu.concatenate %173, %193, %213, %233 in 2 : vector<4x8x32xf32>, vector<4x8x32xf32>, vector<4x8x32xf32>, vector<4x8x32xf32> -> vector<4x8x128xf32>
    %235 = vector.shape_cast %234 : vector<4x8x128xf32> to vector<32x128xf32>
    %c1 = arith.constant 1 : index
    %c0_83 = arith.constant 0 : index
    %c0_84 = arith.constant 0 : index
    %236 = vector.load %arg11[%c1, %c0_83, %c0_84] : memref<2x128x128xbf16, #tpu.memory_space<vmem>>, vector<1x128x128xbf16>
    %237 = vector.shape_cast %236 : vector<1x128x128xbf16> to vector<128x128xbf16>
    %238 = arith.truncf %235 : vector<32x128xf32> to vector<32x128xbf16>
    %cst_85 = arith.constant dense<0.000000e+00> : vector<32x128xf32>
    %239 = tpu.matmul %238, %237, %cst_85 {dimension_numbers = #tpu.dot_dimension_numbers<[1], [0], [0], [1], [0, 0, 1, 1], [], []>} : vector<32x128xbf16>, vector<128x128xbf16>, vector<32x128xf32> -> vector<32x128xf32>
    %c1_86 = arith.constant 1 : index
    %c0_87 = arith.constant 0 : index
    %c0_88 = arith.constant 0 : index
    %240 = vector.load %arg12[%c1_86, %c0_87, %c0_88] : memref<2x1x128xf32, #tpu.memory_space<vmem>>, vector<1x1x128xf32>
    %241 = vector.shape_cast %240 : vector<1x1x128xf32> to vector<1x128xf32>
    %242 = vector.broadcast %241 : vector<1x128xf32> to vector<32x128xf32>
    %243 = arith.addf %239, %242 : vector<32x128xf32>
    %244 = arith.addf %130, %243 : vector<32x128xf32>
    %cst_89 = arith.constant dense<0.000000e+00> : vector<32xf32>
    %245 = vector.multi_reduction <add>, %244, %cst_89 [1] : vector<32x128xf32> to vector<32xf32>
    %246 = vector.shape_cast %245 : vector<32xf32> to vector<32x1xf32>
    %cst_90 = arith.constant 1.280000e+02 : f32
    %247 = vector.broadcast %cst_90 : f32 to vector<32x1xf32>
    %248 = arith.divf %246, %247 : vector<32x1xf32>
    %249 = vector.broadcast %248 : vector<32x1xf32> to vector<32x128xf32>
    %250 = arith.subf %244, %249 : vector<32x128xf32>
    %251 = arith.mulf %250, %250 : vector<32x128xf32>
    %cst_91 = arith.constant dense<0.000000e+00> : vector<32xf32>
    %252 = vector.multi_reduction <add>, %251, %cst_91 [1] : vector<32x128xf32> to vector<32xf32>
    %253 = vector.shape_cast %252 : vector<32xf32> to vector<32x1xf32>
    %cst_92 = arith.constant 1.280000e+02 : f32
    %254 = vector.broadcast %cst_92 : f32 to vector<32x1xf32>
    %255 = arith.divf %253, %254 : vector<32x1xf32>
    %cst_93 = arith.constant 9.99999974E-6 : f32
    %256 = vector.broadcast %cst_93 : f32 to vector<32x1xf32>
    %257 = arith.addf %255, %256 : vector<32x1xf32>
    %258 = math.rsqrt %257 : vector<32x1xf32>
    %259 = vector.broadcast %258 : vector<32x1xf32> to vector<32x128xf32>
    %260 = arith.mulf %250, %259 : vector<32x128xf32>
    %c1_94 = arith.constant 1 : index
    %c0_95 = arith.constant 0 : index
    %261 = vector.load %arg17[%c1_94, %c0_95] : memref<3x128xf32, #tpu.memory_space<vmem>>, vector<1x128xf32>
    %262 = vector.broadcast %261 : vector<1x128xf32> to vector<32x128xf32>
    %263 = arith.mulf %260, %262 : vector<32x128xf32>
    %c1_96 = arith.constant 1 : index
    %c0_97 = arith.constant 0 : index
    %264 = vector.load %arg18[%c1_96, %c0_97] : memref<3x128xf32, #tpu.memory_space<vmem>>, vector<1x128xf32>
    %265 = vector.broadcast %264 : vector<1x128xf32> to vector<32x128xf32>
    %266 = arith.addf %263, %265 : vector<32x128xf32>
    %c0_98 = arith.constant 0 : index
    %c0_99 = arith.constant 0 : index
    %267 = vector.load %arg13[%c0_98, %c0_99] : memref<128x256xbf16, #tpu.memory_space<vmem>>, vector<128x256xbf16>
    %268 = arith.truncf %266 : vector<32x128xf32> to vector<32x128xbf16>
    %cst_100 = arith.constant dense<0.000000e+00> : vector<32x256xf32>
    %269 = tpu.matmul %268, %267, %cst_100 {dimension_numbers = #tpu.dot_dimension_numbers<[1], [0], [0], [1], [0, 0, 1, 1], [], []>} : vector<32x128xbf16>, vector<128x256xbf16>, vector<32x256xf32> -> vector<32x256xf32>
    %c0_101 = arith.constant 0 : index
    %c0_102 = arith.constant 0 : index
    %270 = vector.load %arg14[%c0_101, %c0_102] : memref<1x256xf32, #tpu.memory_space<vmem>>, vector<1x256xf32>
    %271 = vector.broadcast %270 : vector<1x256xf32> to vector<32x256xf32>
    %272 = arith.addf %269, %271 : vector<32x256xf32>
    %cst_103 = arith.constant 0.000000e+00 : f32
    %273 = vector.broadcast %cst_103 : f32 to vector<32x256xf32>
    %274 = arith.maximumf %272, %273 : vector<32x256xf32>
    %c0_104 = arith.constant 0 : index
    %c0_105 = arith.constant 0 : index
    %275 = vector.load %arg15[%c0_104, %c0_105] : memref<256x128xbf16, #tpu.memory_space<vmem>>, vector<256x128xbf16>
    %276 = arith.truncf %274 : vector<32x256xf32> to vector<32x256xbf16>
    %cst_106 = arith.constant dense<0.000000e+00> : vector<32x128xf32>
    %277 = tpu.matmul %276, %275, %cst_106 {dimension_numbers = #tpu.dot_dimension_numbers<[1], [0], [0], [1], [0, 0, 1, 1], [], []>} : vector<32x256xbf16>, vector<256x128xbf16>, vector<32x128xf32> -> vector<32x128xf32>
    %c0_107 = arith.constant 0 : index
    %c0_108 = arith.constant 0 : index
    %278 = vector.load %arg16[%c0_107, %c0_108] : memref<1x128xf32, #tpu.memory_space<vmem>>, vector<1x128xf32>
    %279 = vector.broadcast %278 : vector<1x128xf32> to vector<32x128xf32>
    %280 = arith.addf %277, %279 : vector<32x128xf32>
    %281 = arith.addf %266, %280 : vector<32x128xf32>
    %cst_109 = arith.constant dense<0.000000e+00> : vector<32xf32>
    %282 = vector.multi_reduction <add>, %281, %cst_109 [1] : vector<32x128xf32> to vector<32xf32>
    %283 = vector.shape_cast %282 : vector<32xf32> to vector<32x1xf32>
    %cst_110 = arith.constant 1.280000e+02 : f32
    %284 = vector.broadcast %cst_110 : f32 to vector<32x1xf32>
    %285 = arith.divf %283, %284 : vector<32x1xf32>
    %286 = vector.broadcast %285 : vector<32x1xf32> to vector<32x128xf32>
    %287 = arith.subf %281, %286 : vector<32x128xf32>
    %288 = arith.mulf %287, %287 : vector<32x128xf32>
    %cst_111 = arith.constant dense<0.000000e+00> : vector<32xf32>
    %289 = vector.multi_reduction <add>, %288, %cst_111 [1] : vector<32x128xf32> to vector<32xf32>
    %290 = vector.shape_cast %289 : vector<32xf32> to vector<32x1xf32>
    %cst_112 = arith.constant 1.280000e+02 : f32
    %291 = vector.broadcast %cst_112 : f32 to vector<32x1xf32>
    %292 = arith.divf %290, %291 : vector<32x1xf32>
    %cst_113 = arith.constant 9.99999974E-6 : f32
    %293 = vector.broadcast %cst_113 : f32 to vector<32x1xf32>
    %294 = arith.addf %292, %293 : vector<32x1xf32>
    %295 = math.rsqrt %294 : vector<32x1xf32>
    %296 = vector.broadcast %295 : vector<32x1xf32> to vector<32x128xf32>
    %297 = arith.mulf %287, %296 : vector<32x128xf32>
    %c2 = arith.constant 2 : index
    %c0_114 = arith.constant 0 : index
    %298 = vector.load %arg17[%c2, %c0_114] : memref<3x128xf32, #tpu.memory_space<vmem>>, vector<1x128xf32>
    %299 = vector.broadcast %298 : vector<1x128xf32> to vector<32x128xf32>
    %300 = arith.mulf %297, %299 : vector<32x128xf32>
    %c2_115 = arith.constant 2 : index
    %c0_116 = arith.constant 0 : index
    %301 = vector.load %arg18[%c2_115, %c0_116] : memref<3x128xf32, #tpu.memory_space<vmem>>, vector<1x128xf32>
    %302 = vector.broadcast %301 : vector<1x128xf32> to vector<32x128xf32>
    %303 = arith.addf %300, %302 : vector<32x128xf32>
    %304 = vector.shape_cast %303 : vector<32x128xf32> to vector<4x8x128xf32>
    %c0_117 = arith.constant 0 : index
    %c0_118 = arith.constant 0 : index
    %c0_119 = arith.constant 0 : index
    %305 = vector.load %arg19[%c0_117, %c0_118, %c0_119] : memref<4x8x128xf32, #tpu.memory_space<vmem>>, vector<4x8x128xf32>
    tpu.vector_store %arg19[%c0_117, %c0_118, %c0_119], %304 {strides = array<i32>} : memref<4x8x128xf32, #tpu.memory_space<vmem>>, vector<4x8x128xf32>,
    return
  }
  func.func @transform_0(%arg0: i32) -> (i32, i32, i32) {
    %c0_i32 = arith.constant 0 : i32
    %c0_i32_0 = arith.constant 0 : i32
    %c0_i32_1 = arith.constant 0 : i32
    return %arg0, %c0_i32, %c0_i32_0 : i32, i32, i32
  }
  func.func @transform_1(%arg0: i32) -> (i32, i32, i32) {
    %c0_i32 = arith.constant 0 : i32
    %c0_i32_0 = arith.constant 0 : i32
    %c0_i32_1 = arith.constant 0 : i32
    return %arg0, %c0_i32, %c0_i32_0 : i32, i32, i32
  }
  func.func @transform_2(%arg0: i32) -> (i32, i32, i32) {
    %c0_i32 = arith.constant 0 : i32
    %c0_i32_0 = arith.constant 0 : i32
    %c0_i32_1 = arith.constant 0 : i32
    return %arg0, %c0_i32, %c0_i32_0 : i32, i32, i32
  }
  func.func @transform_3(%arg0: i32) -> (i32, i32, i32) {
    %c0_i32 = arith.constant 0 : i32
    %c0_i32_0 = arith.constant 0 : i32
    %c0_i32_1 = arith.constant 0 : i32
    return %arg0, %c0_i32, %c0_i32_0 : i32, i32, i32
  }
  func.func @transform_4(%arg0: i32) -> (i32, i32) {
    %c0_i32 = arith.constant 0 : i32
    %c0_i32_0 = arith.constant 0 : i32
    %c0_i32_1 = arith.constant 0 : i32
    return %c0_i32, %c0_i32_0 : i32, i32
  }
  func.func @transform_5(%arg0: i32) -> (i32, i32) {
    %c0_i32 = arith.constant 0 : i32
    %c0_i32_0 = arith.constant 0 : i32
    %c0_i32_1 = arith.constant 0 : i32
    return %c0_i32, %c0_i32_0 : i32, i32
  }
  func.func @transform_6(%arg0: i32) -> (i32, i32) {
    %c0_i32 = arith.constant 0 : i32
    %c0_i32_0 = arith.constant 0 : i32
    %c0_i32_1 = arith.constant 0 : i32
    return %c0_i32, %c0_i32_0 : i32, i32
  }
  func.func @transform_7(%arg0: i32) -> (i32, i32) {
    %c0_i32 = arith.constant 0 : i32
    %c0_i32_0 = arith.constant 0 : i32
    %c0_i32_1 = arith.constant 0 : i32
    return %c0_i32, %c0_i32_0 : i32, i32
  }
  func.func @transform_8(%arg0: i32) -> (i32, i32) {
    %c0_i32 = arith.constant 0 : i32
    %c0_i32_0 = arith.constant 0 : i32
    %c0_i32_1 = arith.constant 0 : i32
    return %c0_i32, %c0_i32_0 : i32, i32
  }
  func.func @transform_9(%arg0: i32) -> (i32, i32) {
    %c0_i32 = arith.constant 0 : i32
    %c0_i32_0 = arith.constant 0 : i32
    %c0_i32_1 = arith.constant 0 : i32
    return %c0_i32, %c0_i32_0 : i32, i32
  }
  func.func @transform_10(%arg0: i32) -> (i32, i32, i32) {
    %c0_i32 = arith.constant 0 : i32
    %c0_i32_0 = arith.constant 0 : i32
    %c0_i32_1 = arith.constant 0 : i32
    %c0_i32_2 = arith.constant 0 : i32
    return %c0_i32, %c0_i32_0, %c0_i32_1 : i32, i32, i32
  }
  func.func @transform_11(%arg0: i32) -> (i32, i32, i32) {
    %c0_i32 = arith.constant 0 : i32
    %c0_i32_0 = arith.constant 0 : i32
    %c0_i32_1 = arith.constant 0 : i32
    %c0_i32_2 = arith.constant 0 : i32
    return %c0_i32, %c0_i32_0, %c0_i32_1 : i32, i32, i32
  }
  func.func @transform_12(%arg0: i32) -> (i32, i32) {
    %c0_i32 = arith.constant 0 : i32
    %c0_i32_0 = arith.constant 0 : i32
    %c0_i32_1 = arith.constant 0 : i32
    return %c0_i32, %c0_i32_0 : i32, i32
  }
  func.func @transform_13(%arg0: i32) -> (i32, i32) {
    %c0_i32 = arith.constant 0 : i32
    %c0_i32_0 = arith.constant 0 : i32
    %c0_i32_1 = arith.constant 0 : i32
    return %c0_i32, %c0_i32_0 : i32, i32
  }
  func.func @transform_14(%arg0: i32) -> (i32, i32) {
    %c0_i32 = arith.constant 0 : i32
    %c0_i32_0 = arith.constant 0 : i32
    %c0_i32_1 = arith.constant 0 : i32
    return %c0_i32, %c0_i32_0 : i32, i32
  }
  func.func @transform_15(%arg0: i32) -> (i32, i32) {
    %c0_i32 = arith.constant 0 : i32
    %c0_i32_0 = arith.constant 0 : i32
    %c0_i32_1 = arith.constant 0 : i32
    return %c0_i32, %c0_i32_0 : i32, i32
  }
  func.func @transform_16(%arg0: i32) -> (i32, i32) {
    %c0_i32 = arith.constant 0 : i32
    %c0_i32_0 = arith.constant 0 : i32
    %c0_i32_1 = arith.constant 0 : i32
    return %c0_i32, %c0_i32_0 : i32, i32
  }
  func.func @transform_17(%arg0: i32) -> (i32, i32) {
    %c0_i32 = arith.constant 0 : i32
    %c0_i32_0 = arith.constant 0 : i32
    %c0_i32_1 = arith.constant 0 : i32
    return %c0_i32, %c0_i32_0 : i32, i32
  }
  func.func @transform_18(%arg0: i32) -> (i32, i32, i32) {
    %c0_i32 = arith.constant 0 : i32
    %c0_i32_0 = arith.constant 0 : i32
    %c0_i32_1 = arith.constant 0 : i32
    return %arg0, %c0_i32, %c0_i32_0 : i32, i32, i32
  }
}

</mosaic_0001>

<llo_original>
// kernel: decoder_block_forward.1
$region0: #{decoder_block_forward.1}
  #allocation0 [shape = 'u32[]', space=smem, size = 0x4, offset = 0x4, fixed_abs, tag = 'smem constant byte address 0x4 - core index']
  #allocation1 [shape = 'u32[144,128]{1,0:T(1,128)}', space=vmem, size = 0x12000, scoped, tag = 'internal scratch']
  %s0 = inlined_call_operand.hbm [shape: f32[8,8,128], index: 0, kind: input, shape index: {}]
  %s1 = inlined_call_operand.hbm [shape: f32[8,16,128], index: 1, kind: input, shape index: {}]
  %s2 = inlined_call_operand.vmem [shape: f32[8,8,8], index: 2, kind: input, shape index: {}]
  %s3 = inlined_call_operand.hbm [shape: f32[8,1,16], index: 3, kind: input, shape index: {}]
  %s4 = inlined_call_operand.hbm [shape: bf16[128,384], index: 4, kind: input, shape index: {}]
  %s5 = inlined_call_operand.vmem [shape: f32[1,384], index: 5, kind: input, shape index: {}]
  %s6 = inlined_call_operand.hbm [shape: bf16[128,128], index: 6, kind: input, shape index: {}]
  %s7 = inlined_call_operand.hbm [shape: f32[1,128], index: 7, kind: input, shape index: {}]
  %s8 = inlined_call_operand.hbm [shape: bf16[128,256], index: 8, kind: input, shape index: {}]
  %s9 = inlined_call_operand.hbm [shape: f32[1,256], index: 9, kind: input, shape index: {}]
  %s10 = inlined_call_operand.hbm [shape: bf16[2,128,128], index: 10, kind: input, shape index: {}]
  %s11 = inlined_call_operand.hbm [shape: f32[2,1,128], index: 11, kind: input, shape index: {}]
  %s12 = inlined_call_operand.hbm [shape: bf16[128,256], index: 12, kind: input, shape index: {}]
  %s13 = inlined_call_operand.hbm [shape: f32[1,256], index: 13, kind: input, shape index: {}]
  %s14 = inlined_call_operand.hbm [shape: bf16[256,128], index: 14, kind: input, shape index: {}]
  %s15 = inlined_call_operand.hbm [shape: f32[1,128], index: 15, kind: input, shape index: {}]
  %s16 = inlined_call_operand.vmem [shape: f32[3,128], index: 16, kind: input, shape index: {}]
  %s17 = inlined_call_operand.hbm [shape: f32[3,128], index: 17, kind: input, shape index: {}]
  %s18 = inlined_call_operand.hbm [shape: f32[8,8,128], index: 18, kind: output, shape index: {}]
  %s19 = sld [smem:[#allocation0]]
  $region165: #{decoder_block_forward.1} parent=0
    _
  %s21 = ssub.s32 1, %s19
  %s22 = scalar_select 0, %s21, %s19
  $region1: #{decoder_block_forward.1} parent=0
    #allocation2 [shape = 'u8[32768]{0}', space=vmem, size = 0x8000, scoped, tag = 'input window, operand 0']
    #allocation3 [shape = 's32[2]{0}', space=sflag, size = 0x8, scoped, tag = 'scoped memory for decoder_block_forward.1']
    #allocation4 [shape = 's32[2]{0}', space=sflag, size = 0x8, scoped, tag = 'scoped memory for decoder_block_forward.1']
    #allocation5 [shape = 'u8[65536]{0}', space=vmem, size = 0x10000, scoped, tag = 'input window, operand 1']
    #allocation6 [shape = 's32[2]{0}', space=sflag, size = 0x8, scoped, tag = 'scoped memory for decoder_block_forward.1']
    #allocation7 [shape = 'u8[4096]{0}', space=vmem, size = 0x1000, scoped, tag = 'input window, operand 3']
    #allocation8 [shape = 'u8[98304]{0}', space=vmem, size = 0x18000, scoped, tag = 'input window, operand 4, single buffered']
    #allocation9 [shape = 's32[1]{0}', space=sflag, size = 0x4, scoped, tag = 'scoped memory for decoder_block_forward.1']
    #allocation10 [shape = 'u8[32768]{0}', space=vmem, size = 0x8000, scoped, tag = 'input window, operand 6, single buffered']
    #allocation11 [shape = 'u8[512]{0}', space=vmem, size = 0x400, scoped, tag = 'input window, operand 7, single buffered']
    #allocation12 [shape = 's32[1]{0}', space=sflag, size = 0x4, scoped, tag = 'scoped memory for decoder_block_forward.1']
    #allocation13 [shape = 'u8[65536]{0}', space=vmem, size = 0x10000, scoped, tag = 'input window, operand 8, single buffered']
    #allocation14 [shape = 'u8[1024]{0}', space=vmem, size = 0x400, scoped, tag = 'input window, operand 9, single buffered']
    #allocation15 [shape = 's32[1]{0}', space=sflag, size = 0x4, scoped, tag = 'scoped memory for decoder_block_forward.1']
    #allocation16 [shape = 'u8[65536]{0}', space=vmem, size = 0x10000, scoped, tag = 'input window, operand 10, single buffered']
    #allocation17 [shape = 'u8[1024]{0}', space=vmem, size = 0x400, scoped, tag = 'input window, operand 11, single buffered']
    #allocation18 [shape = 's32[1]{0}', space=sflag, size = 0x4, scoped, tag = 'scoped memory for decoder_block_forward.1']
    #allocation19 [shape = 'u8[65536]{0}', space=vmem, size = 0x10000, scoped, tag = 'input window, operand 12, single buffered']
    #allocation20 [shape = 'u8[1024]{0}', space=vmem, size = 0x400, scoped, tag = 'input window, operand 13, single buffered']
    #allocation21 [shape = 's32[1]{0}', space=sflag, size = 0x4, scoped, tag = 'scoped memory for decoder_block_forward.1']
    #allocation22 [shape = 'u8[65536]{0}', space=vmem, size = 0x10000, scoped, tag = 'input window, operand 14, single buffered']
    #allocation23 [shape = 'u8[512]{0}', space=vmem, size = 0x400, scoped, tag = 'input window, operand 15, single buffered']
    #allocation24 [shape = 's32[1]{0}', space=sflag, size = 0x4, scoped, tag = 'scoped memory for decoder_block_forward.1']
    #allocation25 [shape = 'u8[2048]{0}', space=vmem, size = 0x800, scoped, tag = 'input window, operand 17, single buffered']
    #allocation26 [shape = 'u8[32768]{0}', space=vmem, size = 0x8000, scoped, tag = 'output window, operand 0']
    %23 = vsyncpa [#allocation3], 0
    %s24 = scalar_lea.sflag [#allocation3], 1
    %25 = vsyncpa %s24, 0
    %26 = vsyncpa [#allocation6], 0
    %s27 = scalar_lea.sflag [#allocation6], 1
    %28 = vsyncpa %s27, 0
    %29 = vsyncpa [#allocation9], 0
    %30 = vsyncpa [#allocation12], 0
    %31 = vsyncpa [#allocation15], 0
    %32 = vsyncpa [#allocation18], 0
    %33 = vsyncpa [#allocation21], 0
    %34 = vsyncpa [#allocation24], 0
    %35 = vsyncpa [#allocation4], 0
    %s36 = scalar_lea.sflag [#allocation4], 1
    %37 = vsyncpa %s36, 0
    loop: start=0, step=1, limit=4
    $region2: #{decoder_block_forward.1} parent=1 // loop_pre_header
      _
    $region3: #{decoder_block_forward.1} parent=1 // loop_header
      %s39 = sphi 0, %s43
      %p40 = scmp.ge.s32.totalorder %s39, 4
      %s49 = sphi 0, %s51
      %s52 = sphi 0, %s49
      %s53 = sphi 0, %s52
      %s69 = sphi 0, %s53
      %s75 = sphi 0, %s77
      %s78 = sphi 0, %s75
      %s79 = sphi 0, %s78
      %s95 = sphi 0, %s79
      %s101 = sphi 0, %s103
      %s104 = sphi 0, %s101
      %s105 = sphi 0, %s104
      %s121 = sphi 0, %s105
      %s127 = sphi 0, %s129
      %s130 = sphi 0, %s127
      %s131 = sphi 0, %s130
      %s147 = sphi 0, %s131
      %s151 = sphi 0, %s151
      %s153 = sphi 0, %s151
      %s154 = sphi 0, %s153
      %s168 = sphi 0, %s154
      %s172 = sphi 0, %s172
      %s174 = sphi 0, %s172
      %s175 = sphi 0, %s174
      %s189 = sphi 0, %s175
      %s193 = sphi 0, %s193
      %s195 = sphi 0, %s193
      %s196 = sphi 0, %s195
      %s210 = sphi 0, %s196
      %s214 = sphi 0, %s214
      %s216 = sphi 0, %s214
      %s217 = sphi 0, %s216
      %s231 = sphi 0, %s217
      %s235 = sphi 0, %s235
      %s237 = sphi 0, %s235
      %s238 = sphi 0, %s237
      %s252 = sphi 0, %s238
      %s256 = sphi 0, %s256
      %s258 = sphi 0, %s256
      %s259 = sphi 0, %s258
      %s273 = sphi 0, %s259
      %s277 = sphi 0, %s277
      %s279 = sphi 0, %s277
      %s280 = sphi 0, %s279
      %s294 = sphi 0, %s280
      %s298 = sphi 0, %s298
      %s300 = sphi 0, %s298
      %s301 = sphi 0, %s300
      %s315 = sphi 0, %s301
      %s319 = sphi 0, %s319
      %s321 = sphi 0, %s319
      %s322 = sphi 0, %s321
      %s336 = sphi 0, %s322
      %s340 = sphi 0, %s340
      %s342 = sphi 0, %s340
      %s343 = sphi 0, %s342
      %s357 = sphi 0, %s343
      %s361 = sphi 0, %s361
      %s363 = sphi 0, %s361
      %s364 = sphi 0, %s363
      %s378 = sphi 0, %s364
      %s382 = sphi 0, %s382
      %s384 = sphi 0, %s382
      %s385 = sphi 0, %s384
      %s399 = sphi 0, %s385
      %s403 = sphi 0, %s403
      %s405 = sphi 0, %s403
      %s406 = sphi 0, %s405
      %s420 = sphi 0, %s406
      %s424 = sphi 0, %s424
      %s426 = sphi 0, %s424
      %s427 = sphi 0, %s426
      %s441 = sphi 0, %s427
      %s447 = sphi 0, %s449
      %s450 = sphi 0, %s447
      %s451 = sphi 0, %s450
      %s467 = sphi 0, %s451
    $region4: #{decoder_block_forward.1} parent=1 // loop_header_branch
      %42 = sbr.rel (%p40) target = $region8
    $region5: #{decoder_block_forward.1} parent=1 // loop_body
      %s44 = ssub.s32 %s39, 1
      %s45 = ssub.s32 %s39, 2
      %s46 = sadd.s32 %s39, 1
      %s47 = ssub.s32 %s39, %s46
      %p48 = scmp.eq.s32.totalorder %s47, 0
      %s50 = sadd.s32 %s49, 1
      %s51 = scalar_select %p48, %s49, %s50
      %p54 = pneg %p48
      %p55 = scmp.eq.s32.totalorder %s39, 1
      %p56 = por %p54, %p55
      %p57 = scmp.ne.s32.totalorder %s49, %s52
      %p58 = scmp.eq.s32.totalorder %s39, 0
      %p59 = por %p57, %p58
      %p60 = scmp.ne.s32.totalorder %s49, %s52
      %p61 = scmp.eq.s32.totalorder %s44, 1
      %p62 = por %p60, %p61
      %p63 = scmp.ne.s32.totalorder %s52, %s53
      %p64 = scmp.eq.s32.totalorder %s44, 0
      %p65 = por %p63, %p64
      %p66 = scmp.ne.s32.totalorder %s52, %s53
      %p67 = scmp.eq.s32.totalorder %s45, 1
      %p68 = por %p66, %p67
      %p70 = scmp.ne.s32.totalorder %s53, %s69
      %p71 = scmp.eq.s32.totalorder %s45, 0
      %p72 = por %p70, %p71
      %s73 = ssub.s32 %s39, %s46
      %p74 = scmp.eq.s32.totalorder %s73, 0
      %s76 = sadd.s32 %s75, 1
      %s77 = scalar_select %p74, %s75, %s76
      %p80 = pneg %p74
      %p81 = scmp.eq.s32.totalorder %s39, 1
      %p82 = por %p80, %p81
      %p83 = scmp.ne.s32.totalorder %s75, %s78
      %p84 = scmp.eq.s32.totalorder %s39, 0
      %p85 = por %p83, %p84
      %p86 = scmp.ne.s32.totalorder %s75, %s78
      %p87 = scmp.eq.s32.totalorder %s44, 1
      %p88 = por %p86, %p87
      %p89 = scmp.ne.s32.totalorder %s78, %s79
      %p90 = scmp.eq.s32.totalorder %s44, 0
      %p91 = por %p89, %p90
      %p92 = scmp.ne.s32.totalorder %s78, %s79
      %p93 = scmp.eq.s32.totalorder %s45, 1
      %p94 = por %p92, %p93
      %p96 = scmp.ne.s32.totalorder %s79, %s95
      %p97 = scmp.eq.s32.totalorder %s45, 0
      %p98 = por %p96, %p97
      %s99 = ssub.s32 %s39, %s46
      %p100 = scmp.eq.s32.totalorder %s99, 0
      %s102 = sadd.s32 %s101, 1
      %s103 = scalar_select %p100, %s101, %s102
      %p106 = pneg %p100
      %p107 = scmp.eq.s32.totalorder %s39, 1
      %p108 = por %p106, %p107
      %p109 = scmp.ne.s32.totalorder %s101, %s104
      %p110 = scmp.eq.s32.totalorder %s39, 0
      %p111 = por %p109, %p110
      %p112 = scmp.ne.s32.totalorder %s101, %s104
      %p113 = scmp.eq.s32.totalorder %s44, 1
      %p114 = por %p112, %p113
      %p115 = scmp.ne.s32.totalorder %s104, %s105
      %p116 = scmp.eq.s32.totalorder %s44, 0
      %p117 = por %p115, %p116
      %p118 = scmp.ne.s32.totalorder %s104, %s105
      %p119 = scmp.eq.s32.totalorder %s45, 1
      %p120 = por %p118, %p119
      %p122 = scmp.ne.s32.totalorder %s105, %s121
      %p123 = scmp.eq.s32.totalorder %s45, 0
      %p124 = por %p122, %p123
      %s125 = ssub.s32 %s39, %s46
      %p126 = scmp.eq.s32.totalorder %s125, 0
      %s128 = sadd.s32 %s127, 1
      %s129 = scalar_select %p126, %s127, %s128
      %p132 = pneg %p126
      %p133 = scmp.eq.s32.totalorder %s39, 1
      %p134 = por %p132, %p133
      %p135 = scmp.ne.s32.totalorder %s127, %s130
      %p136 = scmp.eq.s32.totalorder %s39, 0
      %p137 = por %p135, %p136
      %p138 = scmp.ne.s32.totalorder %s127, %s130
      %p139 = scmp.eq.s32.totalorder %s44, 1
      %p140 = por %p138, %p139
      %p141 = scmp.ne.s32.totalorder %s130, %s131
      %p142 = scmp.eq.s32.totalorder %s44, 0
      %p143 = por %p141, %p142
      %p144 = scmp.ne.s32.totalorder %s130, %s131
      %p145 = scmp.eq.s32.totalorder %s45, 1
      %p146 = por %p144, %p145
      %p148 = scmp.ne.s32.totalorder %s131, %s147
      %p149 = scmp.eq.s32.totalorder %s45, 0
      %p150 = por %p148, %p149
      %s152 = sadd.s32 %s151, 1
      %p155 = scmp.eq.s32.totalorder %s39, 1
      %p156 = scmp.ne.s32.totalorder %s151, %s153
      %p157 = scmp.eq.s32.totalorder %s39, 0
      %p158 = por %p156, %p157
      %p159 = scmp.ne.s32.totalorder %s151, %s153
      %p160 = scmp.eq.s32.totalorder %s44, 1
      %p161 = por %p159, %p160
      %p162 = scmp.ne.s32.totalorder %s153, %s154
      %p163 = scmp.eq.s32.totalorder %s44, 0
      %p164 = por %p162, %p163
      %p165 = scmp.ne.s32.totalorder %s153, %s154
      %p166 = scmp.eq.s32.totalorder %s45, 1
      %p167 = por %p165, %p166
      %p169 = scmp.ne.s32.totalorder %s154, %s168
      %p170 = scmp.eq.s32.totalorder %s45, 0
      %p171 = por %p169, %p170
      %s173 = sadd.s32 %s172, 1
      %p176 = scmp.eq.s32.totalorder %s39, 1
      %p177 = scmp.ne.s32.totalorder %s172, %s174
      %p178 = scmp.eq.s32.totalorder %s39, 0
      %p179 = por %p177, %p178
      %p180 = scmp.ne.s32.totalorder %s172, %s174
      %p181 = scmp.eq.s32.totalorder %s44, 1
      %p182 = por %p180, %p181
      %p183 = scmp.ne.s32.totalorder %s174, %s175
      %p184 = scmp.eq.s32.totalorder %s44, 0
      %p185 = por %p183, %p184
      %p186 = scmp.ne.s32.totalorder %s174, %s175
      %p187 = scmp.eq.s32.totalorder %s45, 1
      %p188 = por %p186, %p187
      %p190 = scmp.ne.s32.totalorder %s175, %s189
      %p191 = scmp.eq.s32.totalorder %s45, 0
      %p192 = por %p190, %p191
      %s194 = sadd.s32 %s193, 1
      %p197 = scmp.eq.s32.totalorder %s39, 1
      %p198 = scmp.ne.s32.totalorder %s193, %s195
      %p199 = scmp.eq.s32.totalorder %s39, 0
      %p200 = por %p198, %p199
      %p201 = scmp.ne.s32.totalorder %s193, %s195
      %p202 = scmp.eq.s32.totalorder %s44, 1
      %p203 = por %p201, %p202
      %p204 = scmp.ne.s32.totalorder %s195, %s196
      %p205 = scmp.eq.s32.totalorder %s44, 0
      %p206 = por %p204, %p205
      %p207 = scmp.ne.s32.totalorder %s195, %s196
      %p208 = scmp.eq.s32.totalorder %s45, 1
      %p209 = por %p207, %p208
      %p211 = scmp.ne.s32.totalorder %s196, %s210
      %p212 = scmp.eq.s32.totalorder %s45, 0
      %p213 = por %p211, %p212
      %s215 = sadd.s32 %s214, 1
      %p218 = scmp.eq.s32.totalorder %s39, 1
      %p219 = scmp.ne.s32.totalorder %s214, %s216
      %p220 = scmp.eq.s32.totalorder %s39, 0
      %p221 = por %p219, %p220
      %p222 = scmp.ne.s32.totalorder %s214, %s216
      %p223 = scmp.eq.s32.totalorder %s44, 1
      %p224 = por %p222, %p223
      %p225 = scmp.ne.s32.totalorder %s216, %s217
      %p226 = scmp.eq.s32.totalorder %s44, 0
      %p227 = por %p225, %p226
      %p228 = scmp.ne.s32.totalorder %s216, %s217
      %p229 = scmp.eq.s32.totalorder %s45, 1
      %p230 = por %p228, %p229
      %p232 = scmp.ne.s32.totalorder %s217, %s231
      %p233 = scmp.eq.s32.totalorder %s45, 0
      %p234 = por %p232, %p233
      %s236 = sadd.s32 %s235, 1
      %p239 = scmp.eq.s32.totalorder %s39, 1
      %p240 = scmp.ne.s32.totalorder %s235, %s237
      %p241 = scmp.eq.s32.totalorder %s39, 0
      %p242 = por %p240, %p241
      %p243 = scmp.ne.s32.totalorder %s235, %s237
      %p244 = scmp.eq.s32.totalorder %s44, 1
      %p245 = por %p243, %p244
      %p246 = scmp.ne.s32.totalorder %s237, %s238
      %p247 = scmp.eq.s32.totalorder %s44, 0
      %p248 = por %p246, %p247
      %p249 = scmp.ne.s32.totalorder %s237, %s238
      %p250 = scmp.eq.s32.totalorder %s45, 1
      %p251 = por %p249, %p250
      %p253 = scmp.ne.s32.totalorder %s238, %s252
      %p254 = scmp.eq.s32.totalorder %s45, 0
      %p255 = por %p253, %p254
      %s257 = sadd.s32 %s256, 1
      %p260 = scmp.eq.s32.totalorder %s39, 1
      %p261 = scmp.ne.s32.totalorder %s256, %s258
      %p262 = scmp.eq.s32.totalorder %s39, 0
      %p263 = por %p261, %p262
      %p264 = scmp.ne.s32.totalorder %s256, %s258
      %p265 = scmp.eq.s32.totalorder %s44, 1
      %p266 = por %p264, %p265
      %p267 = scmp.ne.s32.totalorder %s258, %s259
      %p268 = scmp.eq.s32.totalorder %s44, 0
      %p269 = por %p267, %p268
      %p270 = scmp.ne.s32.totalorder %s258, %s259
      %p271 = scmp.eq.s32.totalorder %s45, 1
      %p272 = por %p270, %p271
      %p274 = scmp.ne.s32.totalorder %s259, %s273
      %p275 = scmp.eq.s32.totalorder %s45, 0
      %p276 = por %p274, %p275
      %s278 = sadd.s32 %s277, 1
      %p281 = scmp.eq.s32.totalorder %s39, 1
      %p282 = scmp.ne.s32.totalorder %s277, %s279
      %p283 = scmp.eq.s32.totalorder %s39, 0
      %p284 = por %p282, %p283
      %p285 = scmp.ne.s32.totalorder %s277, %s279
      %p286 = scmp.eq.s32.totalorder %s44, 1
      %p287 = por %p285, %p286
      %p288 = scmp.ne.s32.totalorder %s279, %s280
      %p289 = scmp.eq.s32.totalorder %s44, 0
      %p290 = por %p288, %p289
      %p291 = scmp.ne.s32.totalorder %s279, %s280
      %p292 = scmp.eq.s32.totalorder %s45, 1
      %p293 = por %p291, %p292
      %p295 = scmp.ne.s32.totalorder %s280, %s294
      %p296 = scmp.eq.s32.totalorder %s45, 0
      %p297 = por %p295, %p296
      %s299 = sadd.s32 %s298, 1
      %p302 = scmp.eq.s32.totalorder %s39, 1
      %p303 = scmp.ne.s32.totalorder %s298, %s300
      %p304 = scmp.eq.s32.totalorder %s39, 0
      %p305 = por %p303, %p304
      %p306 = scmp.ne.s32.totalorder %s298, %s300
      %p307 = scmp.eq.s32.totalorder %s44, 1
      %p308 = por %p306, %p307
      %p309 = scmp.ne.s32.totalorder %s300, %s301
      %p310 = scmp.eq.s32.totalorder %s44, 0
      %p311 = por %p309, %p310
      %p312 = scmp.ne.s32.totalorder %s300, %s301
      %p313 = scmp.eq.s32.totalorder %s45, 1
      %p314 = por %p312, %p313
      %p316 = scmp.ne.s32.totalorder %s301, %s315
      %p317 = scmp.eq.s32.totalorder %s45, 0
      %p318 = por %p316, %p317
      %s320 = sadd.s32 %s319, 1
      %p323 = scmp.eq.s32.totalorder %s39, 1
      %p324 = scmp.ne.s32.totalorder %s319, %s321
      %p325 = scmp.eq.s32.totalorder %s39, 0
      %p326 = por %p324, %p325
      %p327 = scmp.ne.s32.totalorder %s319, %s321
      %p328 = scmp.eq.s32.totalorder %s44, 1
      %p329 = por %p327, %p328
      %p330 = scmp.ne.s32.totalorder %s321, %s322
      %p331 = scmp.eq.s32.totalorder %s44, 0
      %p332 = por %p330, %p331
      %p333 = scmp.ne.s32.totalorder %s321, %s322
      %p334 = scmp.eq.s32.totalorder %s45, 1
      %p335 = por %p333, %p334
      %p337 = scmp.ne.s32.totalorder %s322, %s336
      %p338 = scmp.eq.s32.totalorder %s45, 0
      %p339 = por %p337, %p338
      %s341 = sadd.s32 %s340, 1
      %p344 = scmp.eq.s32.totalorder %s39, 1
      %p345 = scmp.ne.s32.totalorder %s340, %s342
      %p346 = scmp.eq.s32.totalorder %s39, 0
      %p347 = por %p345, %p346
      %p348 = scmp.ne.s32.totalorder %s340, %s342
      %p349 = scmp.eq.s32.totalorder %s44, 1
      %p350 = por %p348, %p349
      %p351 = scmp.ne.s32.totalorder %s342, %s343
      %p352 = scmp.eq.s32.totalorder %s44, 0
      %p353 = por %p351, %p352
      %p354 = scmp.ne.s32.totalorder %s342, %s343
      %p355 = scmp.eq.s32.totalorder %s45, 1
      %p356 = por %p354, %p355
      %p358 = scmp.ne.s32.totalorder %s343, %s357
      %p359 = scmp.eq.s32.totalorder %s45, 0
      %p360 = por %p358, %p359
      %s362 = sadd.s32 %s361, 1
      %p365 = scmp.eq.s32.totalorder %s39, 1
      %p366 = scmp.ne.s32.totalorder %s361, %s363
      %p367 = scmp.eq.s32.totalorder %s39, 0
      %p368 = por %p366, %p367
      %p369 = scmp.ne.s32.totalorder %s361, %s363
      %p370 = scmp.eq.s32.totalorder %s44, 1
      %p371 = por %p369, %p370
      %p372 = scmp.ne.s32.totalorder %s363, %s364
      %p373 = scmp.eq.s32.totalorder %s44, 0
      %p374 = por %p372, %p373
      %p375 = scmp.ne.s32.totalorder %s363, %s364
      %p376 = scmp.eq.s32.totalorder %s45, 1
      %p377 = por %p375, %p376
      %p379 = scmp.ne.s32.totalorder %s364, %s378
      %p380 = scmp.eq.s32.totalorder %s45, 0
      %p381 = por %p379, %p380
      %s383 = sadd.s32 %s382, 1
      %p386 = scmp.eq.s32.totalorder %s39, 1
      %p387 = scmp.ne.s32.totalorder %s382, %s384
      %p388 = scmp.eq.s32.totalorder %s39, 0
      %p389 = por %p387, %p388
      %p390 = scmp.ne.s32.totalorder %s382, %s384
      %p391 = scmp.eq.s32.totalorder %s44, 1
      %p392 = por %p390, %p391
      %p393 = scmp.ne.s32.totalorder %s384, %s385
      %p394 = scmp.eq.s32.totalorder %s44, 0
      %p395 = por %p393, %p394
      %p396 = scmp.ne.s32.totalorder %s384, %s385
      %p397 = scmp.eq.s32.totalorder %s45, 1
      %p398 = por %p396, %p397
      %p400 = scmp.ne.s32.totalorder %s385, %s399
      %p401 = scmp.eq.s32.totalorder %s45, 0
      %p402 = por %p400, %p401
      %s404 = sadd.s32 %s403, 1
      %p407 = scmp.eq.s32.totalorder %s39, 1
      %p408 = scmp.ne.s32.totalorder %s403, %s405
      %p409 = scmp.eq.s32.totalorder %s39, 0
      %p410 = por %p408, %p409
      %p411 = scmp.ne.s32.totalorder %s403, %s405
      %p412 = scmp.eq.s32.totalorder %s44, 1
      %p413 = por %p411, %p412
      %p414 = scmp.ne.s32.totalorder %s405, %s406
      %p415 = scmp.eq.s32.totalorder %s44, 0
      %p416 = por %p414, %p415
      %p417 = scmp.ne.s32.totalorder %s405, %s406
      %p418 = scmp.eq.s32.totalorder %s45, 1
      %p419 = por %p417, %p418
      %p421 = scmp.ne.s32.totalorder %s406, %s420
      %p422 = scmp.eq.s32.totalorder %s45, 0
      %p423 = por %p421, %p422
      %s425 = sadd.s32 %s424, 1
      %p428 = scmp.eq.s32.totalorder %s39, 1
      %p429 = scmp.ne.s32.totalorder %s424, %s426
      %p430 = scmp.eq.s32.totalorder %s39, 0
      %p431 = por %p429, %p430
      %p432 = scmp.ne.s32.totalorder %s424, %s426
      %p433 = scmp.eq.s32.totalorder %s44, 1
      %p434 = por %p432, %p433
      %p435 = scmp.ne.s32.totalorder %s426, %s427
      %p436 = scmp.eq.s32.totalorder %s44, 0
      %p437 = por %p435, %p436
      %p438 = scmp.ne.s32.totalorder %s426, %s427
      %p439 = scmp.eq.s32.totalorder %s45, 1
      %p440 = por %p438, %p439
      %p442 = scmp.ne.s32.totalorder %s427, %s441
      %p443 = scmp.eq.s32.totalorder %s45, 0
      %p444 = por %p442, %p443
      %s445 = ssub.s32 %s39, %s46
      %p446 = scmp.eq.s32.totalorder %s445, 0
      %s448 = sadd.s32 %s447, 1
      %s449 = scalar_select %p446, %s447, %s448
      %p452 = pneg %p446
      %p453 = scmp.eq.s32.totalorder %s39, 1
      %p454 = por %p452, %p453
      %p455 = scmp.ne.s32.totalorder %s447, %s450
      %p456 = scmp.eq.s32.totalorder %s39, 0
      %p457 = por %p455, %p456
      %p458 = scmp.ne.s32.totalorder %s447, %s450
      %p459 = scmp.eq.s32.totalorder %s44, 1
      %p460 = por %p458, %p459
      %p461 = scmp.ne.s32.totalorder %s450, %s451
      %p462 = scmp.eq.s32.totalorder %s44, 0
      %p463 = por %p461, %p462
      %p464 = scmp.ne.s32.totalorder %s450, %s451
      %p465 = scmp.eq.s32.totalorder %s45, 1
      %p466 = por %p464, %p465
      %p468 = scmp.ne.s32.totalorder %s451, %s467
      %p469 = scmp.eq.s32.totalorder %s45, 0
      %p470 = por %p468, %p469
      %p471 = scmp.le.s32.totalorder 1, %s39
      %p472 = scmp.lt.s32.totalorder %s39, 3
      %p473 = pnand %p471, %p472
      %p474 = pneg %p473
      // Predicated region
      $region9: #{decoder_block_forward.1} parent=5 // pred_check
        _
      $region10: #{decoder_block_forward.1} parent=5 // pred_check_branch
        %476 = sbr.rel (%p473) target = $region12
      $region11: #{decoder_block_forward.1} parent=5 // pred_region
        %s477 = ssub.s32 %s39, 1
        // Predicated region
        $region13: #{decoder_block_forward.1} parent=11 // pred_check
          %p478 = pneg %p164
        $region14: #{decoder_block_forward.1} parent=11 // pred_check_branch
          %480 = sbr.rel (%p478) target = $region16
        $region15: #{decoder_block_forward.1} parent=11 // pred_region
          %s482 = ssub.s32 3072, 3072
          %483 = vsyncadd [#allocation9], %s482
          %s484 = sshll.u32 [#allocation8], 4
          %s485 = int_to_ptr.vmem [resolvable:$true] %s484
          %490 = dma.hbm_to_vmem [thread:$0]  %s4, 3072, %s485, [#allocation9], 192, 192, 12
        $region16: #{decoder_block_forward.1} parent=11 // pred_fallthru
          _
        // Predicated region
        $region17: #{decoder_block_forward.1} parent=11 // pred_check
          %p491 = pneg %p185
        $region18: #{decoder_block_forward.1} parent=11 // pred_check_branch
          %493 = sbr.rel (%p491) target = $region20
        $region19: #{decoder_block_forward.1} parent=11 // pred_region
          _
        $region20: #{decoder_block_forward.1} parent=11 // pred_fallthru
          _
        // Predicated region
        $region21: #{decoder_block_forward.1} parent=11 // pred_check
          %p494 = pneg %p206
        $region22: #{decoder_block_forward.1} parent=11 // pred_check_branch
          %496 = sbr.rel (%p494) target = $region24
        $region23: #{decoder_block_forward.1} parent=11 // pred_region
          %s498 = ssub.s32 1024, 1024
          %499 = vsyncadd [#allocation9], %s498
          %s500 = sshll.u32 [#allocation10], 4
          %s501 = int_to_ptr.vmem [resolvable:$true] %s500
          %506 = dma.hbm_to_vmem [thread:$0]  %s6, 1024, %s501, [#allocation9], 64, 64, 4
        $region24: #{decoder_block_forward.1} parent=11 // pred_fallthru
          _
        // Predicated region
        $region25: #{decoder_block_forward.1} parent=11 // pred_check
          %p507 = pneg %p227
        $region26: #{decoder_block_forward.1} parent=11 // pred_check_branch
          %509 = sbr.rel (%p507) target = $region28
        $region27: #{decoder_block_forward.1} parent=11 // pred_region
          %s511 = ssub.s32 16, 16
          %512 = vsyncadd [#allocation12], %s511
          %s514 = sshll.u32 [#allocation11], 4
          %s515 = int_to_ptr.vmem [resolvable:$true] %s514
          %517 = dma.hbm_to_vmem [thread:$0]  %s7, 16, %s515, [#allocation12]
        $region28: #{decoder_block_forward.1} parent=11 // pred_fallthru
          _
        // Predicated region
        $region29: #{decoder_block_forward.1} parent=11 // pred_check
          %p518 = pneg %p248
        $region30: #{decoder_block_forward.1} parent=11 // pred_check_branch
          %520 = sbr.rel (%p518) target = $region32
        $region31: #{decoder_block_forward.1} parent=11 // pred_region
          %s522 = ssub.s32 2048, 2048
          %523 = vsyncadd [#allocation12], %s522
          %s524 = sshll.u32 [#allocation13], 4
          %s525 = int_to_ptr.vmem [resolvable:$true] %s524
          %530 = dma.hbm_to_vmem [thread:$0]  %s8, 2048, %s525, [#allocation12], 128, 128, 8
        $region32: #{decoder_block_forward.1} parent=11 // pred_fallthru
          _
        // Predicated region
        $region33: #{decoder_block_forward.1} parent=11 // pred_check
          %p531 = pneg %p269
        $region34: #{decoder_block_forward.1} parent=11 // pred_check_branch
          %533 = sbr.rel (%p531) target = $region36
        $region35: #{decoder_block_forward.1} parent=11 // pred_region
          %s535 = ssub.s32 32, 32
          %536 = vsyncadd [#allocation15], %s535
          %s538 = sshll.u32 [#allocation14], 4
          %s539 = int_to_ptr.vmem [resolvable:$true] %s538
          %541 = dma.hbm_to_vmem [thread:$0]  %s9, 32, %s539, [#allocation15]
        $region36: #{decoder_block_forward.1} parent=11 // pred_fallthru
          _
        // Predicated region
        $region37: #{decoder_block_forward.1} parent=11 // pred_check
          %p542 = pneg %p290
        $region38: #{decoder_block_forward.1} parent=11 // pred_check_branch
          %544 = sbr.rel (%p542) target = $region40
        $region39: #{decoder_block_forward.1} parent=11 // pred_region
          %s546 = ssub.s32 2048, 2048
          %547 = vsyncadd [#allocation15], %s546
          %s548 = sshll.u32 [#allocation16], 4
          %s549 = int_to_ptr.vmem [resolvable:$true] %s548
          %554 = dma.hbm_to_vmem [thread:$0]  %s10, 2048, %s549, [#allocation15], 64, 64, 4
        $region40: #{decoder_block_forward.1} parent=11 // pred_fallthru
          _
        // Predicated region
        $region41: #{decoder_block_forward.1} parent=11 // pred_check
          %p555 = pneg %p311
        $region42: #{decoder_block_forward.1} parent=11 // pred_check_branch
          %557 = sbr.rel (%p555) target = $region44
        $region43: #{decoder_block_forward.1} parent=11 // pred_region
          %s559 = ssub.s32 32, 32
          %560 = vsyncadd [#allocation18], %s559
          %s561 = sshll.u32 [#allocation17], 4
          %s562 = int_to_ptr.vmem [resolvable:$true] %s561
          %567 = dma.hbm_to_vmem [thread:$0]  %s11, 32, %s562, [#allocation18], 16, 16, 1
        $region44: #{decoder_block_forward.1} parent=11 // pred_fallthru
          _
        // Predicated region
        $region45: #{decoder_block_forward.1} parent=11 // pred_check
          %p568 = pneg %p332
        $region46: #{decoder_block_forward.1} parent=11 // pred_check_branch
          %570 = sbr.rel (%p568) target = $region48
        $region47: #{decoder_block_forward.1} parent=11 // pred_region
          %s572 = ssub.s32 2048, 2048
          %573 = vsyncadd [#allocation18], %s572
          %s574 = sshll.u32 [#allocation19], 4
          %s575 = int_to_ptr.vmem [resolvable:$true] %s574
          %580 = dma.hbm_to_vmem [thread:$0]  %s12, 2048, %s575, [#allocation18], 128, 128, 8
        $region48: #{decoder_block_forward.1} parent=11 // pred_fallthru
          _
        // Predicated region
        $region49: #{decoder_block_forward.1} parent=11 // pred_check
          %p581 = pneg %p353
        $region50: #{decoder_block_forward.1} parent=11 // pred_check_branch
          %583 = sbr.rel (%p581) target = $region52
        $region51: #{decoder_block_forward.1} parent=11 // pred_region
          %s585 = ssub.s32 32, 32
          %586 = vsyncadd [#allocation21], %s585
          %s588 = sshll.u32 [#allocation20], 4
          %s589 = int_to_ptr.vmem [resolvable:$true] %s588
          %591 = dma.hbm_to_vmem [thread:$0]  %s13, 32, %s589, [#allocation21]
        $region52: #{decoder_block_forward.1} parent=11 // pred_fallthru
          _
        // Predicated region
        $region53: #{decoder_block_forward.1} parent=11 // pred_check
          %p592 = pneg %p374
        $region54: #{decoder_block_forward.1} parent=11 // pred_check_branch
          %594 = sbr.rel (%p592) target = $region56
        $region55: #{decoder_block_forward.1} parent=11 // pred_region
          %s596 = ssub.s32 2048, 2048
          %597 = vsyncadd [#allocation21], %s596
          %s598 = sshll.u32 [#allocation22], 4
          %s599 = int_to_ptr.vmem [resolvable:$true] %s598
          %604 = dma.hbm_to_vmem [thread:$0]  %s14, 2048, %s599, [#allocation21], 64, 64, 4
        $region56: #{decoder_block_forward.1} parent=11 // pred_fallthru
          _
        // Predicated region
        $region57: #{decoder_block_forward.1} parent=11 // pred_check
          %p605 = pneg %p395
        $region58: #{decoder_block_forward.1} parent=11 // pred_check_branch
          %607 = sbr.rel (%p605) target = $region60
        $region59: #{decoder_block_forward.1} parent=11 // pred_region
          %s609 = ssub.s32 16, 16
          %610 = vsyncadd [#allocation24], %s609
          %s612 = sshll.u32 [#allocation23], 4
          %s613 = int_to_ptr.vmem [resolvable:$true] %s612
          %615 = dma.hbm_to_vmem [thread:$0]  %s15, 16, %s613, [#allocation24]
        $region60: #{decoder_block_forward.1} parent=11 // pred_fallthru
          _
        // Predicated region
        $region61: #{decoder_block_forward.1} parent=11 // pred_check
          %p616 = pneg %p416
        $region62: #{decoder_block_forward.1} parent=11 // pred_check_branch
          %618 = sbr.rel (%p616) target = $region64
        $region63: #{decoder_block_forward.1} parent=11 // pred_region
          _
        $region64: #{decoder_block_forward.1} parent=11 // pred_fallthru
          _
        // Predicated region
        $region65: #{decoder_block_forward.1} parent=11 // pred_check
          %p619 = pneg %p437
        $region66: #{decoder_block_forward.1} parent=11 // pred_check_branch
          %621 = sbr.rel (%p619) target = $region68
        $region67: #{decoder_block_forward.1} parent=11 // pred_region
          %s623 = ssub.s32 64, 64
          %624 = vsyncadd [#allocation24], %s623
          %s626 = sshll.u32 [#allocation25], 4
          %s627 = int_to_ptr.vmem [resolvable:$true] %s626
          %629 = dma.hbm_to_vmem [thread:$0]  %s17, 64, %s627, [#allocation24]
        $region68: #{decoder_block_forward.1} parent=11 // pred_fallthru
          _
      $region12: #{decoder_block_forward.1} parent=5 // pred_fallthru
        _
      %p630 = scmp.lt.s32.totalorder %s39, 2
      // Predicated region
      $region69: #{decoder_block_forward.1} parent=5 // pred_check
        %p631 = pneg %p630
      $region70: #{decoder_block_forward.1} parent=5 // pred_check_branch
        %633 = sbr.rel (%p631) target = $region72
      $region71: #{decoder_block_forward.1} parent=5 // pred_region
        // Predicated region
        $region73: #{decoder_block_forward.1} parent=71 // pred_check
          %p634 = pneg %p59
        $region74: #{decoder_block_forward.1} parent=71 // pred_check_branch
          %636 = sbr.rel (%p634) target = $region76
        $region75: #{decoder_block_forward.1} parent=71 // pred_region
          %s637 = sand.u32 %s49, 1
          %s638 = scalar_lea.sflag [#allocation3], %s637
          %s639 = sand.u32 %s49, 1
          %s640 = smul.addr %s639, 32
          %s641 = scalar_lea.vmem [#allocation2], %s640
          %s642 = smul.u32 4, %s39
          %s644 = ssub.s32 512, 512
          %645 = vsyncadd %s638, %s644
          %s646 = smul.addr %s642, 128
          %s647 = scalar_lea.hbm %s0, %s646
          %s648 = sshll.u32 %s641, 4
          %s649 = int_to_ptr.vmem [resolvable:$true] %s648
          %654 = dma.hbm_to_vmem [thread:$0]  %s647, 512, %s649, %s638, 128, 128, 8
        $region76: #{decoder_block_forward.1} parent=71 // pred_fallthru
          _
        // Predicated region
        $region77: #{decoder_block_forward.1} parent=71 // pred_check
          %p655 = pneg %p85
        $region78: #{decoder_block_forward.1} parent=71 // pred_check_branch
          %657 = sbr.rel (%p655) target = $region80
        $region79: #{decoder_block_forward.1} parent=71 // pred_region
          %s658 = sand.u32 %s39, 1
          %s659 = scalar_lea.sflag [#allocation6], %s658
          %s660 = sand.u32 %s75, 1
          %s661 = smul.addr %s660, 64
          %s662 = scalar_lea.vmem [#allocation5], %s661
          %s663 = smul.u32 4, %s39
          %s665 = ssub.s32 1024, 1024
          %666 = vsyncadd %s659, %s665
          %s667 = smul.addr %s663, 2
          %s668 = smul.addr %s667, 128
          %s669 = scalar_lea.hbm %s1, %s668
          %s670 = sshll.u32 %s662, 4
          %s671 = int_to_ptr.vmem [resolvable:$true] %s670
          %676 = dma.hbm_to_vmem [thread:$0]  %s669, 1024, %s671, %s659, 128, 128, 8
        $region80: #{decoder_block_forward.1} parent=71 // pred_fallthru
          _
        // Predicated region
        $region81: #{decoder_block_forward.1} parent=71 // pred_check
          %p677 = pneg %p111
        $region82: #{decoder_block_forward.1} parent=71 // pred_check_branch
          %679 = sbr.rel (%p677) target = $region84
        $region83: #{decoder_block_forward.1} parent=71 // pred_region
          %s680 = smul.u32 4, %s39
          %p681 = scmp.lt.s32.totalorder %s680, 7
          %s682 = scalar_select %p681, %s680, 7
          %s683 = smul.addr %s682, 8
          %s684 = scalar_lea.vmem %s2, %s683
          %s685 = smul.u32 4, %s39
        $region84: #{decoder_block_forward.1} parent=71 // pred_fallthru
          _
        // Predicated region
        $region85: #{decoder_block_forward.1} parent=71 // pred_check
          %p686 = pneg %p137
        $region86: #{decoder_block_forward.1} parent=71 // pred_check_branch
          %688 = sbr.rel (%p686) target = $region88
        $region87: #{decoder_block_forward.1} parent=71 // pred_region
          %s689 = sand.u32 %s39, 1
          %s690 = scalar_lea.sflag [#allocation6], %s689
          %s691 = sand.u32 %s127, 1
          %s692 = smul.addr %s691, 4
          %s693 = scalar_lea.vmem [#allocation7], %s692
          %s694 = smul.u32 4, %s39
          %s696 = ssub.s32 64, 64
          %697 = vsyncadd %s690, %s696
          %s698 = smul.addr %s694, 16
          %s699 = scalar_lea.hbm %s3, %s698
          %s700 = sshll.u32 %s693, 4
          %s701 = int_to_ptr.vmem [resolvable:$true] %s700
          %706 = dma.hbm_to_vmem [thread:$0]  %s699, 64, %s701, %s690, 16, 16, 1
        $region88: #{decoder_block_forward.1} parent=71 // pred_fallthru
          _
      $region72: #{decoder_block_forward.1} parent=5 // pred_fallthru
        _
      %p707 = scmp.le.s32.totalorder 1, %s39
      %p708 = scmp.lt.s32.totalorder %s39, 3
      %p709 = pnand %p707, %p708
      %p710 = pneg %p709
      // Predicated region
      $region89: #{decoder_block_forward.1} parent=5 // pred_check
        _
      $region90: #{decoder_block_forward.1} parent=5 // pred_check_branch
        %712 = sbr.rel (%p709) target = $region92
      $region91: #{decoder_block_forward.1} parent=5 // pred_region
        %s713 = ssub.s32 %s39, 1
        %s714 = sand.u32 %s52, 1
        %s715 = scalar_lea.sflag [#allocation3], %s714
        %s716 = sand.u32 %s52, 1
        %s717 = smul.addr %s716, 32
        %s718 = scalar_lea.vmem [#allocation2], %s717
        // Predicated region
        $region93: #{decoder_block_forward.1} parent=91 // pred_check
          %p719 = pneg %p65
        $region94: #{decoder_block_forward.1} parent=91 // pred_check_branch
          %721 = sbr.rel (%p719) target = $region96
        $region95: #{decoder_block_forward.1} parent=91 // pred_region
          %722 = dma.done %s715, 512
        $region96: #{decoder_block_forward.1} parent=91 // pred_fallthru
          _
        %s723 = sand.u32 %s44, 1
        %s724 = scalar_lea.sflag [#allocation6], %s723
        %s725 = sand.u32 %s78, 1
        %s726 = smul.addr %s725, 64
        %s727 = scalar_lea.vmem [#allocation5], %s726
        // Predicated region
        $region97: #{decoder_block_forward.1} parent=91 // pred_check
          %p728 = pneg %p91
        $region98: #{decoder_block_forward.1} parent=91 // pred_check_branch
          %730 = sbr.rel (%p728) target = $region100
        $region99: #{decoder_block_forward.1} parent=91 // pred_region
          %731 = dma.done %s724, 1024
        $region100: #{decoder_block_forward.1} parent=91 // pred_fallthru
          _
        %s732 = sand.u32 %s44, 1
        %s733 = scalar_lea.sflag [#allocation6], %s732
        %s734 = sand.u32 %s130, 1
        %s735 = smul.addr %s734, 4
        %s736 = scalar_lea.vmem [#allocation7], %s735
        // Predicated region
        $region101: #{decoder_block_forward.1} parent=91 // pred_check
          %p737 = pneg %p143
        $region102: #{decoder_block_forward.1} parent=91 // pred_check_branch
          %739 = sbr.rel (%p737) target = $region104
        $region103: #{decoder_block_forward.1} parent=91 // pred_region
          %740 = dma.done %s733, 64
        $region104: #{decoder_block_forward.1} parent=91 // pred_fallthru
          _
        // Predicated region
        $region105: #{decoder_block_forward.1} parent=91 // pred_check
          %p741 = pneg %p164
        $region106: #{decoder_block_forward.1} parent=91 // pred_check_branch
          %743 = sbr.rel (%p741) target = $region108
        $region107: #{decoder_block_forward.1} parent=91 // pred_region
          %744 = dma.done [#allocation9], 3072
        $region108: #{decoder_block_forward.1} parent=91 // pred_fallthru
          _
        // Predicated region
        $region109: #{decoder_block_forward.1} parent=91 // pred_check
          %p745 = pneg %p206
        $region110: #{decoder_block_forward.1} parent=91 // pred_check_branch
          %747 = sbr.rel (%p745) target = $region112
        $region111: #{decoder_block_forward.1} parent=91 // pred_region
          %748 = dma.done [#allocation9], 1024
        $region112: #{decoder_block_forward.1} parent=91 // pred_fallthru
          _
        // Predicated region
        $region113: #{decoder_block_forward.1} parent=91 // pred_check
          %p749 = pneg %p227
        $region114: #{decoder_block_forward.1} parent=91 // pred_check_branch
          %751 = sbr.rel (%p749) target = $region116
        $region115: #{decoder_block_forward.1} parent=91 // pred_region
          %752 = dma.done [#allocation12], 16
        $region116: #{decoder_block_forward.1} parent=91 // pred_fallthru
          _
        // Predicated region
        $region117: #{decoder_block_forward.1} parent=91 // pred_check
          %p753 = pneg %p248
        $region118: #{decoder_block_forward.1} parent=91 // pred_check_branch
          %755 = sbr.rel (%p753) target = $region120
        $region119: #{decoder_block_forward.1} parent=91 // pred_region
          %756 = dma.done [#allocation12], 2048
        $region120: #{decoder_block_forward.1} parent=91 // pred_fallthru
          _
        // Predicated region
        $region121: #{decoder_block_forward.1} parent=91 // pred_check
          %p757 = pneg %p269
        $region122: #{decoder_block_forward.1} parent=91 // pred_check_branch
          %759 = sbr.rel (%p757) target = $region124
        $region123: #{decoder_block_forward.1} parent=91 // pred_region
          %760 = dma.done [#allocation15], 32
        $region124: #{decoder_block_forward.1} parent=91 // pred_fallthru
          _
        // Predicated region
        $region125: #{decoder_block_forward.1} parent=91 // pred_check
          %p761 = pneg %p290
        $region126: #{decoder_block_forward.1} parent=91 // pred_check_branch
          %763 = sbr.rel (%p761) target = $region128
        $region127: #{decoder_block_forward.1} parent=91 // pred_region
          %764 = dma.done [#allocation15], 2048
        $region128: #{decoder_block_forward.1} parent=91 // pred_fallthru
          _
        // Predicated region
        $region129: #{decoder_block_forward.1} parent=91 // pred_check
          %p765 = pneg %p311
        $region130: #{decoder_block_forward.1} parent=91 // pred_check_branch
          %767 = sbr.rel (%p765) target = $region132
        $region131: #{decoder_block_forward.1} parent=91 // pred_region
          %768 = dma.done [#allocation18], 32
        $region132: #{decoder_block_forward.1} parent=91 // pred_fallthru
          _
        // Predicated region
        $region133: #{decoder_block_forward.1} parent=91 // pred_check
          %p769 = pneg %p332
        $region134: #{decoder_block_forward.1} parent=91 // pred_check_branch
          %771 = sbr.rel (%p769) target = $region136
        $region135: #{decoder_block_forward.1} parent=91 // pred_region
          %772 = dma.done [#allocation18], 2048
        $region136: #{decoder_block_forward.1} parent=91 // pred_fallthru
          _
        // Predicated region
        $region137: #{decoder_block_forward.1} parent=91 // pred_check
          %p773 = pneg %p353
        $region138: #{decoder_block_forward.1} parent=91 // pred_check_branch
          %775 = sbr.rel (%p773) target = $region140
        $region139: #{decoder_block_forward.1} parent=91 // pred_region
          %776 = dma.done [#allocation21], 32
        $region140: #{decoder_block_forward.1} parent=91 // pred_fallthru
          _
        // Predicated region
        $region141: #{decoder_block_forward.1} parent=91 // pred_check
          %p777 = pneg %p374
        $region142: #{decoder_block_forward.1} parent=91 // pred_check_branch
          %779 = sbr.rel (%p777) target = $region144
        $region143: #{decoder_block_forward.1} parent=91 // pred_region
          %780 = dma.done [#allocation21], 2048
        $region144: #{decoder_block_forward.1} parent=91 // pred_fallthru
          _
        // Predicated region
        $region145: #{decoder_block_forward.1} parent=91 // pred_check
          %p781 = pneg %p395
        $region146: #{decoder_block_forward.1} parent=91 // pred_check_branch
          %783 = sbr.rel (%p781) target = $region148
        $region147: #{decoder_block_forward.1} parent=91 // pred_region
          %784 = dma.done [#allocation24], 16
        $region148: #{decoder_block_forward.1} parent=91 // pred_fallthru
          _
        // Predicated region
        $region149: #{decoder_block_forward.1} parent=91 // pred_check
          %p785 = pneg %p437
        $region150: #{decoder_block_forward.1} parent=91 // pred_check_branch
          %787 = sbr.rel (%p785) target = $region152
        $region151: #{decoder_block_forward.1} parent=91 // pred_region
          %788 = dma.done [#allocation24], 64
        $region152: #{decoder_block_forward.1} parent=91 // pred_fallthru
          _
        %s789 = sand.u32 %s52, 1
        %s790 = scalar_lea.sflag [#allocation3], %s789
        %s791 = sand.u32 %s52, 1
        %s792 = smul.addr %s791, 32
        %s793 = scalar_lea.vmem [#allocation2], %s792
        %p794 = pneg %p65
        %p795 = pneg %p62
        %s796 = sand.u32 %s44, 1
        %s797 = scalar_lea.sflag [#allocation6], %s796
        %s798 = sand.u32 %s78, 1
        %s799 = smul.addr %s798, 64
        %s800 = scalar_lea.vmem [#allocation5], %s799
        %p801 = pneg %p91
        %p802 = pneg %p88
        %s803 = smul.u32 4, %s44
        %p804 = scmp.lt.s32.totalorder %s803, 7
        %s805 = scalar_select %p804, %s803, 7
        %s806 = smul.addr %s805, 8
        %s807 = scalar_lea.vmem %s2, %s806
        %p808 = pneg %p117
        %p809 = pneg %p114
        %s810 = sand.u32 %s44, 1
        %s811 = scalar_lea.sflag [#allocation6], %s810
        %s812 = sand.u32 %s130, 1
        %s813 = smul.addr %s812, 4
        %s814 = scalar_lea.vmem [#allocation7], %s813
        %p815 = pneg %p143
        %p816 = pneg %p140
        %p817 = pneg %p164
        %p818 = pneg %p161
        %p819 = pneg %p185
        %p820 = pneg %p182
        %p821 = pneg %p206
        %p822 = pneg %p203
        %p823 = pneg %p227
        %p824 = pneg %p224
        %p825 = pneg %p248
        %p826 = pneg %p245
        %p827 = pneg %p269
        %p828 = pneg %p266
        %p829 = pneg %p290
        %p830 = pneg %p287
        %p831 = pneg %p311
        %p832 = pneg %p308
        %p833 = pneg %p332
        %p834 = pneg %p329
        %p835 = pneg %p353
        %p836 = pneg %p350
        %p837 = pneg %p374
        %p838 = pneg %p371
        %p839 = pneg %p395
        %p840 = pneg %p392
        %p841 = pneg %p416
        %p842 = pneg %p413
        %p843 = pneg %p437
        %p844 = pneg %p434
        %p845 = pneg %p463
        %p846 = pneg %p460
        %s847 = sand.u32 %s450, 1
        %s848 = scalar_lea.sflag [#allocation4], %s847
        %s849 = sand.u32 %s450, 1
        %s850 = smul.addr %s849, 32
        %s851 = scalar_lea.vmem [#allocation26], %s850
        %s852 = smul.u32 4, %s44
        %s853 = smul.u32 4, %s44
        %s854 = smul.u32 4, %s44
        %p855 = scmp.lt.s32.totalorder %s854, 7
        %s856 = scalar_select %p855, %s854, 7
        %s857 = smul.addr %s856, 8
        %s858 = scalar_lea.vmem %s2, %s857
        %s859 = smul.u32 4, %s44
        %s860 = smul.u32 4, %s44
        %s861 = smul.u32 4, %s44
        %v863 = vld [vmem:[%s718] sm:$0xff]
        %v864 = vld [vmem:[%s718 + $0x8] sm:$0xff]
        %v865 = vld [vmem:[%s718 + $0x10] sm:$0xff]
        %v866 = vld [vmem:[%s718 + $0x18] sm:$0xff]
        %v867 = vld [vmem:[%s727] sm:$0xff]
        %v868 = vld [vmem:[%s727 + $0x8] sm:$0xff]
        %v869 = vld [vmem:[%s727 + $0x10] sm:$0xff]
        %v870 = vld [vmem:[%s727 + $0x18] sm:$0xff]
        %v871 = vld [vmem:[%s727 + $0x20] sm:$0xff]
        %v872 = vld [vmem:[%s727 + $0x28] sm:$0xff]
        %v873 = vld [vmem:[%s727 + $0x30] sm:$0xff]
        %v874 = vld [vmem:[%s727 + $0x38] sm:$0xff]
        %v875 = vld [vmem:[#allocation8] sm:$0xff]
        %v876 = vld [vmem:[#allocation8 + $0x8] sm:$0xf]
        %v877 = vld [vmem:[#allocation8 + $0xc] sm:$0xff]
        %v878 = vld [vmem:[#allocation8 + $0x14] sm:$0xf]
        %v879 = vld [vmem:[#allocation8 + $0x18] sm:$0xff]
        %v880 = vld [vmem:[#allocation8 + $0x20] sm:$0xf]
        %v881 = vld [vmem:[#allocation8 + $0x24] sm:$0xff]
        %v882 = vld [vmem:[#allocation8 + $0x2c] sm:$0xf]
        %v883 = vld [vmem:[#allocation8 + $0x30] sm:$0xff]
        %v884 = vld [vmem:[#allocation8 + $0x38] sm:$0xf]
        %v885 = vld [vmem:[#allocation8 + $0x3c] sm:$0xff]
        %v886 = vld [vmem:[#allocation8 + $0x44] sm:$0xf]
        %v887 = vld [vmem:[#allocation8 + $0x48] sm:$0xff]
        %v888 = vld [vmem:[#allocation8 + $0x50] sm:$0xf]
        %v889 = vld [vmem:[#allocation8 + $0x54] sm:$0xff]
        %v890 = vld [vmem:[#allocation8 + $0x5c] sm:$0xf]
        %v891 = vld [vmem:[#allocation8 + $0x60] sm:$0xff]
        %v892 = vld [vmem:[#allocation8 + $0x68] sm:$0xf]
        %v893 = vld [vmem:[#allocation8 + $0x6c] sm:$0xff]
        %v894 = vld [vmem:[#allocation8 + $0x74] sm:$0xf]
        %v895 = vld [vmem:[#allocation8 + $0x78] sm:$0xff]
        %v896 = vld [vmem:[#allocation8 + $0x80] sm:$0xf]
        %v897 = vld [vmem:[#allocation8 + $0x84] sm:$0xff]
        %v898 = vld [vmem:[#allocation8 + $0x8c] sm:$0xf]
        %v899 = vld [vmem:[#allocation8 + $0x90] sm:$0xff]
        %v900 = vld [vmem:[#allocation8 + $0x98] sm:$0xf]
        %v901 = vld [vmem:[#allocation8 + $0x9c] sm:$0xff]
        %v902 = vld [vmem:[#allocation8 + $0xa4] sm:$0xf]
        %v903 = vld [vmem:[#allocation8 + $0xa8] sm:$0xff]
        %v904 = vld [vmem:[#allocation8 + $0xb0] sm:$0xf]
        %v905 = vld [vmem:[#allocation8 + $0xb4] sm:$0xff]
        %v906 = vld [vmem:[#allocation8 + $0xbc] sm:$0xf]
        %v907 = vpack.c.bf16 %v864, %v863
        %v908 = vpack.c.bf16 %v866, %v865
        %v909 = vld [vmem:[%s5] sm:$0x7]
        %v911 = vlaneseq
        %v912 = vshrl.u32 %v911, 7
        %v913 = vsub.s32 0, %v912
        %v914 = vrot.slane %v909, %v913
        %v915 = vlaneseq
        %v916 = vshrl.u32 %v915, 7
        %v917 = vsub.s32 1, %v916
        %v918 = vrot.slane %v909, %v917
        %v919 = vlaneseq
        %v920 = vshrl.u32 %v919, 7
        %v921 = vsub.s32 2, %v920
        %v922 = vrot.slane %v909, %v921
        %v958 = vunpack.c.l.b16 %v875
        %v959 = vunpack.c.h.b16 %v875
        %v960 = vunpack.c.l.b16 %v876
        %v961 = vunpack.c.l.b16 %v877
        %v962 = vunpack.c.h.b16 %v877
        %v963 = vunpack.c.l.b16 %v878
        %v964 = vunpack.c.l.b16 %v879
        %v965 = vunpack.c.h.b16 %v879
        %v966 = vunpack.c.l.b16 %v880
        %v967 = vunpack.c.l.b16 %v881
        %v968 = vunpack.c.h.b16 %v881
        %v969 = vunpack.c.l.b16 %v882
        %v970 = vunpack.c.l.b16 %v883
        %v971 = vunpack.c.h.b16 %v883
        %v972 = vunpack.c.l.b16 %v884
        %v973 = vunpack.c.l.b16 %v885
        %v974 = vunpack.c.h.b16 %v885
        %v975 = vunpack.c.l.b16 %v886
        %v976 = vunpack.c.l.b16 %v887
        %v977 = vunpack.c.h.b16 %v887
        %v978 = vunpack.c.l.b16 %v888
        %v979 = vunpack.c.l.b16 %v889
        %v980 = vunpack.c.h.b16 %v889
        %v981 = vunpack.c.l.b16 %v890
        %v982 = vunpack.c.l.b16 %v891
        %v983 = vunpack.c.h.b16 %v891
        %v984 = vunpack.c.l.b16 %v892
        %v985 = vunpack.c.l.b16 %v893
        %v986 = vunpack.c.h.b16 %v893
        %v987 = vunpack.c.l.b16 %v894
        %v988 = vunpack.c.l.b16 %v895
        %v989 = vunpack.c.h.b16 %v895
        %v990 = vunpack.c.l.b16 %v896
        %v991 = vunpack.c.l.b16 %v897
        %v992 = vunpack.c.h.b16 %v897
        %v993 = vunpack.c.l.b16 %v898
        %v994 = vunpack.c.l.b16 %v899
        %v995 = vunpack.c.h.b16 %v899
        %v996 = vunpack.c.l.b16 %v900
        %v997 = vunpack.c.l.b16 %v901
        %v998 = vunpack.c.h.b16 %v901
        %v999 = vunpack.c.l.b16 %v902
        %v1000 = vunpack.c.l.b16 %v903
        %v1001 = vunpack.c.h.b16 %v903
        %v1002 = vunpack.c.l.b16 %v904
        %v1003 = vunpack.c.l.b16 %v905
        %v1004 = vunpack.c.h.b16 %v905
        %v1005 = vunpack.c.l.b16 %v906
        %v1006 = vpack.c.b16 %v961, %v958
        %v1007 = vpack.c.b16 %v962, %v959
        %v1008 = vpack.c.b16 %v963, %v960
        %v1009 = vpack.c.b16 %v967, %v964
        %v1010 = vpack.c.b16 %v968, %v965
        %v1011 = vpack.c.b16 %v969, %v966
        %v1012 = vpack.c.b16 %v973, %v970
        %v1013 = vpack.c.b16 %v974, %v971
        %v1014 = vpack.c.b16 %v975, %v972
        %v1015 = vpack.c.b16 %v979, %v976
        %v1016 = vpack.c.b16 %v980, %v977
        %v1017 = vpack.c.b16 %v981, %v978
        %v1018 = vpack.c.b16 %v985, %v982
        %v1019 = vpack.c.b16 %v986, %v983
        %v1020 = vpack.c.b16 %v987, %v984
        %v1021 = vpack.c.b16 %v991, %v988
        %v1022 = vpack.c.b16 %v992, %v989
        %v1023 = vpack.c.b16 %v993, %v990
        %v1024 = vpack.c.b16 %v997, %v994
        %v1025 = vpack.c.b16 %v998, %v995
        %v1026 = vpack.c.b16 %v999, %v996
        %v1027 = vpack.c.b16 %v1003, %v1000
        %v1028 = vpack.c.b16 %v1004, %v1001
        %v1029 = vpack.c.b16 %v1005, %v1002
        %1054 = vmatprep.subr.bf16.mxu0 %v1007
        %1055 = vmatpush1.bf16.msra.mxu0 %v1006
        %1056 = vmatprep.subr.bf16.mxu0 %v1010
        %1057 = vmatpush1.bf16.msra.mxu0 %v1009
        %1058 = vmatprep.subr.bf16.mxu0 %v1013
        %1059 = vmatpush1.bf16.msra.mxu0 %v1012
        %1060 = vmatprep.subr.bf16.mxu0 %v1016
        %1061 = vmatpush1.bf16.msra.mxu0 %v1015
        %1062 = vmatprep.subr.bf16.mxu0 %v1019
        %1063 = vmatpush1.bf16.msra.mxu0 %v1018
        %1064 = vmatprep.subr.bf16.mxu0 %v1022
        %1065 = vmatpush1.bf16.msra.mxu0 %v1021
        %1066 = vmatprep.subr.bf16.mxu0 %v1025
        %1067 = vmatpush1.bf16.msra.mxu0 %v1024
        %1068 = vmatprep.subr.bf16.mxu0 %v1028
        %1069 = vmatpush1.bf16.msra.mxu0 %v1027
        %1070 = vmatprep.subr.bf16.mxu0 0
        %1071 = vmatpush1.bf16.msra.mxu0 0
        %1072 = vmatprep.subr.bf16.mxu0 0
        %1073 = vmatpush1.bf16.msra.mxu0 0
        %1074 = vmatprep.subr.bf16.mxu0 0
        %1075 = vmatpush1.bf16.msra.mxu0 0
        %1076 = vmatprep.subr.bf16.mxu0 0
        %1077 = vmatpush1.bf16.msra.mxu0 0
        %1078 = vmatprep.subr.bf16.mxu0 0
        %1079 = vmatpush1.bf16.msra.mxu0 0
        %1080 = vmatprep.subr.bf16.mxu0 0
        %1081 = vmatpush1.bf16.msra.mxu0 0
        %1082 = vmatprep.subr.bf16.mxu0 0
        %1083 = vmatpush1.bf16.msra.mxu0 0
        %1084 = vmatprep.subr.bf16.mxu0 0
        %1085 = vmatpush1.bf16.msra.mxu0 0
        %1086 = vmatprep.mubr.bf16.mxu0 0
        %1087 = vmatmul.mubr.bf16.gmra.mrb[0].mxu0 %v907
        %v1088 = vpop.f32.mrb[0].mxu0
        %v1089 = vadd.f32 %v914, %v1088
        %v1090 = vpop.f32.mrb[0].mxu0
        %v1091 = vadd.f32 %v918, %v1090
        %v1092 = vpop.f32.mrb[0].mxu0
        %v1093 = vadd.f32 %v914, %v1092
        %v1094 = vpop.f32.mrb[0].mxu0
        %v1095 = vadd.f32 %v918, %v1094
        %1096 = vmatprep.mubr.bf16.mxu0 0
        %1097 = vmatmul.mubr.bf16.gmra.mrb[0].mxu0 %v908
        %v1098 = vpop.f32.mrb[0].mxu0
        %v1099 = vadd.f32 %v914, %v1098
        %v1100 = vpop.f32.mrb[0].mxu0
        %v1101 = vadd.f32 %v918, %v1100
        %v1102 = vpop.f32.mrb[0].mxu0
        %v1103 = vadd.f32 %v914, %v1102
        %v1104 = vpop.f32.mrb[0].mxu0
        %v1105 = vadd.f32 %v918, %v1104
        %1106 = vdwg.mxu0
        %1107 = vmatprep.subr.bf16.mxu0 0
        %1108 = vmatpush1.bf16.msra.mxu0 %v1008
        %1109 = vmatprep.subr.bf16.mxu0 0
        %1110 = vmatpush1.bf16.msra.mxu0 %v1011
        %1111 = vmatprep.subr.bf16.mxu0 0
        %1112 = vmatpush1.bf16.msra.mxu0 %v1014
        %1113 = vmatprep.subr.bf16.mxu0 0
        %1114 = vmatpush1.bf16.msra.mxu0 %v1017
        %1115 = vmatprep.subr.bf16.mxu0 0
        %1116 = vmatpush1.bf16.msra.mxu0 %v1020
        %1117 = vmatprep.subr.bf16.mxu0 0
        %1118 = vmatpush1.bf16.msra.mxu0 %v1023
        %1119 = vmatprep.subr.bf16.mxu0 0
        %1120 = vmatpush1.bf16.msra.mxu0 %v1026
        %1121 = vmatprep.subr.bf16.mxu0 0
        %1122 = vmatpush1.bf16.msra.mxu0 %v1029
        %1123 = vmatprep.subr.bf16.mxu0 0
        %1124 = vmatpush1.bf16.msra.mxu0 0
        %1125 = vmatprep.subr.bf16.mxu0 0
        %1126 = vmatpush1.bf16.msra.mxu0 0
        %1127 = vmatprep.subr.bf16.mxu0 0
        %1128 = vmatpush1.bf16.msra.mxu0 0
        %1129 = vmatprep.subr.bf16.mxu0 0
        %1130 = vmatpush1.bf16.msra.mxu0 0
        %1131 = vmatprep.subr.bf16.mxu0 0
        %1132 = vmatpush1.bf16.msra.mxu0 0
        %1133 = vmatprep.subr.bf16.mxu0 0
        %1134 = vmatpush1.bf16.msra.mxu0 0
        %1135 = vmatprep.subr.bf16.mxu0 0
        %1136 = vmatpush1.bf16.msra.mxu0 0
        %1137 = vmatprep.subr.bf16.mxu0 0
        %1138 = vmatpush1.bf16.msra.mxu0 0
        %1139 = vmatprep.mubr.bf16.mxu0 0
        %1140 = vmatmul.mubr.bf16.gmra.mrb[0].mxu0 %v907
        %v1141 = vpop.f32.mrb[0].mxu0
        %v1142 = vadd.f32 %v922, %v1141
        %v1143 = vpop.f32.mrb[0].mxu0
        %v1144 = vpop.f32.mrb[0].mxu0
        %v1145 = vadd.f32 %v922, %v1144
        %v1146 = vpop.f32.mrb[0].mxu0
        %1147 = vmatprep.mubr.bf16.mxu0 0
        %1148 = vmatmul.mubr.bf16.gmra.mrb[0].mxu0 %v908
        %v1149 = vpop.f32.mrb[0].mxu0
        %v1150 = vadd.f32 %v922, %v1149
        %v1151 = vpop.f32.mrb[0].mxu0
        %v1152 = vpop.f32.mrb[0].mxu0
        %v1153 = vadd.f32 %v922, %v1152
        %v1154 = vpop.f32.mrb[0].mxu0
        %1155 = vdwg.mxu0
        %v1156 = vld [vmem:[%s858] sm:$0xff]
        %v1157 = vld [vmem:[%s858 + $0x8] sm:$0xff]
        %v1158 = vld [vmem:[%s858 + $0x10] sm:$0xff]
        %v1159 = vld [vmem:[%s858 + $0x18] sm:$0xff]
        %v1160 = vmul.f32 %v1156, -1e+09
        %v1161 = vmul.f32 %v1157, -1e+09
        %v1162 = vmul.f32 %v1158, -1e+09
        %v1163 = vmul.f32 %v1159, -1e+09
        %v1164 = vpack.c.bf16 %v1093, %v1089
        %v1165 = vpack.c.bf16 %v1103, %v1099
        %v1168 = vunpack.c.l.b16 %v1164
        %v1169 = vunpack.c.h.b16 %v1164
        %v1170 = vunpack.c.l.b16 %v1165
        %v1171 = vunpack.c.h.b16 %v1165
        %v1172 = vpack.c.b16 %v1168, %v1168
        %v1173 = vpack.c.b16 %v1169, %v1169
        %v1174 = vpack.c.b16 %v1170, %v1170
        %v1175 = vpack.c.b16 %v1171, %v1171
        %v1176 = vpack.c.bf16 %v1095, %v1091
        %v1177 = vpack.c.bf16 %v1105, %v1101
        %v1180 = vunpack.c.l.b16 %v1176
        %v1181 = vunpack.c.h.b16 %v1176
        %v1182 = vunpack.c.l.b16 %v1177
        %v1183 = vunpack.c.h.b16 %v1177
        %v1184 = vpack.c.b16 %v1180, %v1180
        %v1185 = vpack.c.b16 %v1181, %v1181
        %v1186 = vpack.c.b16 %v1182, %v1182
        %v1187 = vpack.c.b16 %v1183, %v1183
        %v1188 = vpack.c.bf16 %v1145, %v1142
        %v1189 = vpack.c.bf16 %v1153, %v1150
        %v1192 = vunpack.c.l.b16 %v1188
        %v1193 = vunpack.c.h.b16 %v1188
        %v1194 = vunpack.c.l.b16 %v1189
        %v1195 = vunpack.c.h.b16 %v1189
        %v1196 = vpack.c.b16 %v1192, %v1192
        %v1197 = vpack.c.b16 %v1193, %v1193
        %v1198 = vpack.c.b16 %v1194, %v1194
        %v1199 = vpack.c.b16 %v1195, %v1195
        %vm1200 = vcmask 261120
        %v1202 = vsel %vm1200, %v1172, 0
        %v1205 = vsel %vm1200, %v1184, 0
        %1207 = vmatprep.subr.bf16.mxu0 0
        %1208 = vmatpush1.bf16.xpose.msra.mxu0 %v1205
        %1209 = vmatprep.subr.bf16.mxu0 0
        %1210 = vmatpush1.bf16.xpose.msra.mxu0 0
        %1211 = vmatprep.subr.bf16.mxu0 0
        %1212 = vmatpush1.bf16.xpose.msra.mxu0 0
        %1213 = vmatprep.subr.bf16.mxu0 0
        %1214 = vmatpush1.bf16.xpose.msra.mxu0 0
        %1215 = vmatprep.subr.bf16.mxu0 0
        %1216 = vmatpush1.bf16.xpose.msra.mxu0 0
        %1217 = vmatprep.subr.bf16.mxu0 0
        %1218 = vmatpush1.bf16.xpose.msra.mxu0 0
        %1219 = vmatprep.subr.bf16.mxu0 0
        %1220 = vmatpush1.bf16.xpose.msra.mxu0 0
        %1221 = vmatprep.subr.bf16.mxu0 0
        %1222 = vmatpush1.bf16.xpose.msra.mxu0 0
        %1223 = vmatprep.subr.bf16.mxu0 0
        %1224 = vmatpush1.bf16.xpose.msra.mxu0 0
        %1225 = vmatprep.subr.bf16.mxu0 0
        %1226 = vmatpush1.bf16.xpose.msra.mxu0 0
        %1227 = vmatprep.subr.bf16.mxu0 0
        %1228 = vmatpush1.bf16.xpose.msra.mxu0 0
        %1229 = vmatprep.subr.bf16.mxu0 0
        %1230 = vmatpush1.bf16.xpose.msra.mxu0 0
        %1231 = vmatprep.subr.bf16.mxu0 0
        %1232 = vmatpush1.bf16.xpose.msra.mxu0 0
        %1233 = vmatprep.subr.bf16.mxu0 0
        %1234 = vmatpush1.bf16.xpose.msra.mxu0 0
        %1235 = vmatprep.subr.bf16.mxu0 0
        %1236 = vmatpush1.bf16.xpose.msra.mxu0 0
        %1237 = vmatprep.subr.bf16.mxu0 0
        %1238 = vmatpush1.bf16.xpose.msra.mxu0 0
        %1239 = vmatprep.mubr.bf16.mxu0 0
        %1240 = vmatmul.mubr.bf16.gmra.mrb[0].mxu0 %v1202
        %v1241 = vpop.f32.mrb[0].mxu0
        %v1242 = vadd.f32 0.0, %v1241
        %v1243 = vpop.f32.mrb[0].mxu0
        %v1244 = vpop.f32.mrb[0].mxu0
        %v1245 = vpop.f32.mrb[0].mxu0
        %1246 = vdwg.mxu0
        %v1248 = vsel %vm1200, %v1173, 0
        %v1251 = vsel %vm1200, %v1185, 0
        %1253 = vmatprep.subr.bf16.mxu0 0
        %1254 = vmatpush1.bf16.xpose.msra.mxu0 %v1251
        %1255 = vmatprep.subr.bf16.mxu0 0
        %1256 = vmatpush1.bf16.xpose.msra.mxu0 0
        %1257 = vmatprep.subr.bf16.mxu0 0
        %1258 = vmatpush1.bf16.xpose.msra.mxu0 0
        %1259 = vmatprep.subr.bf16.mxu0 0
        %1260 = vmatpush1.bf16.xpose.msra.mxu0 0
        %1261 = vmatprep.subr.bf16.mxu0 0
        %1262 = vmatpush1.bf16.xpose.msra.mxu0 0
        %1263 = vmatprep.subr.bf16.mxu0 0
        %1264 = vmatpush1.bf16.xpose.msra.mxu0 0
        %1265 = vmatprep.subr.bf16.mxu0 0
        %1266 = vmatpush1.bf16.xpose.msra.mxu0 0
        %1267 = vmatprep.subr.bf16.mxu0 0
        %1268 = vmatpush1.bf16.xpose.msra.mxu0 0
        %1269 = vmatprep.subr.bf16.mxu0 0
        %1270 = vmatpush1.bf16.xpose.msra.mxu0 0
        %1271 = vmatprep.subr.bf16.mxu0 0
        %1272 = vmatpush1.bf16.xpose.msra.mxu0 0
        %1273 = vmatprep.subr.bf16.mxu0 0
        %1274 = vmatpush1.bf16.xpose.msra.mxu0 0
        %1275 = vmatprep.subr.bf16.mxu0 0
        %1276 = vmatpush1.bf16.xpose.msra.mxu0 0
        %1277 = vmatprep.subr.bf16.mxu0 0
        %1278 = vmatpush1.bf16.xpose.msra.mxu0 0
        %1279 = vmatprep.subr.bf16.mxu0 0
        %1280 = vmatpush1.bf16.xpose.msra.mxu0 0
        %1281 = vmatprep.subr.bf16.mxu0 0
        %1282 = vmatpush1.bf16.xpose.msra.mxu0 0
        %1283 = vmatprep.subr.bf16.mxu0 0
        %1284 = vmatpush1.bf16.xpose.msra.mxu0 0
        %1285 = vmatprep.mubr.bf16.mxu0 0
        %1286 = vmatmul.mubr.bf16.gmra.mrb[0].mxu0 %v1248
        %v1287 = vpop.f32.mrb[0].mxu0
        %v1288 = vadd.f32 0.0, %v1287
        %v1289 = vpop.f32.mrb[0].mxu0
        %v1290 = vpop.f32.mrb[0].mxu0
        %v1291 = vpop.f32.mrb[0].mxu0
        %1292 = vdwg.mxu0
        %v1294 = vsel %vm1200, %v1174, 0
        %v1297 = vsel %vm1200, %v1186, 0
        %1299 = vmatprep.subr.bf16.mxu0 0
        %1300 = vmatpush1.bf16.xpose.msra.mxu0 %v1297
        %1301 = vmatprep.subr.bf16.mxu0 0
        %1302 = vmatpush1.bf16.xpose.msra.mxu0 0
        %1303 = vmatprep.subr.bf16.mxu0 0
        %1304 = vmatpush1.bf16.xpose.msra.mxu0 0
        %1305 = vmatprep.subr.bf16.mxu0 0
        %1306 = vmatpush1.bf16.xpose.msra.mxu0 0
        %1307 = vmatprep.subr.bf16.mxu0 0
        %1308 = vmatpush1.bf16.xpose.msra.mxu0 0
        %1309 = vmatprep.subr.bf16.mxu0 0
        %1310 = vmatpush1.bf16.xpose.msra.mxu0 0
        %1311 = vmatprep.subr.bf16.mxu0 0
        %1312 = vmatpush1.bf16.xpose.msra.mxu0 0
        %1313 = vmatprep.subr.bf16.mxu0 0
        %1314 = vmatpush1.bf16.xpose.msra.mxu0 0
        %1315 = vmatprep.subr.bf16.mxu0 0
        %1316 = vmatpush1.bf16.xpose.msra.mxu0 0
        %1317 = vmatprep.subr.bf16.mxu0 0
        %1318 = vmatpush1.bf16.xpose.msra.mxu0 0
        %1319 = vmatprep.subr.bf16.mxu0 0
        %1320 = vmatpush1.bf16.xpose.msra.mxu0 0
        %1321 = vmatprep.subr.bf16.mxu0 0
        %1322 = vmatpush1.bf16.xpose.msra.mxu0 0
        %1323 = vmatprep.subr.bf16.mxu0 0
        %1324 = vmatpush1.bf16.xpose.msra.mxu0 0
        %1325 = vmatprep.subr.bf16.mxu0 0
        %1326 = vmatpush1.bf16.xpose.msra.mxu0 0
        %1327 = vmatprep.subr.bf16.mxu0 0
        %1328 = vmatpush1.bf16.xpose.msra.mxu0 0
        %1329 = vmatprep.subr.bf16.mxu0 0
        %1330 = vmatpush1.bf16.xpose.msra.mxu0 0
        %1331 = vmatprep.mubr.bf16.mxu0 0
        %1332 = vmatmul.mubr.bf16.gmra.mrb[0].mxu0 %v1294
        %v1333 = vpop.f32.mrb[0].mxu0
        %v1334 = vadd.f32 0.0, %v1333
        %v1335 = vpop.f32.mrb[0].mxu0
        %v1336 = vpop.f32.mrb[0].mxu0
        %v1337 = vpop.f32.mrb[0].mxu0
        %1338 = vdwg.mxu0
        %v1340 = vsel %vm1200, %v1175, 0
        %v1343 = vsel %vm1200, %v1187, 0
        %1345 = vmatprep.subr.bf16.mxu0 0
        %1346 = vmatpush1.bf16.xpose.msra.mxu0 %v1343
        %1347 = vmatprep.subr.bf16.mxu0 0
        %1348 = vmatpush1.bf16.xpose.msra.mxu0 0
        %1349 = vmatprep.subr.bf16.mxu0 0
        %1350 = vmatpush1.bf16.xpose.msra.mxu0 0
        %1351 = vmatprep.subr.bf16.mxu0 0
        %1352 = vmatpush1.bf16.xpose.msra.mxu0 0
        %1353 = vmatprep.subr.bf16.mxu0 0
        %1354 = vmatpush1.bf16.xpose.msra.mxu0 0
        %1355 = vmatprep.subr.bf16.mxu0 0
        %1356 = vmatpush1.bf16.xpose.msra.mxu0 0
        %1357 = vmatprep.subr.bf16.mxu0 0
        %1358 = vmatpush1.bf16.xpose.msra.mxu0 0
        %1359 = vmatprep.subr.bf16.mxu0 0
        %1360 = vmatpush1.bf16.xpose.msra.mxu0 0
        %1361 = vmatprep.subr.bf16.mxu0 0
        %1362 = vmatpush1.bf16.xpose.msra.mxu0 0
        %1363 = vmatprep.subr.bf16.mxu0 0
        %1364 = vmatpush1.bf16.xpose.msra.mxu0 0
        %1365 = vmatprep.subr.bf16.mxu0 0
        %1366 = vmatpush1.bf16.xpose.msra.mxu0 0
        %1367 = vmatprep.subr.bf16.mxu0 0
        %1368 = vmatpush1.bf16.xpose.msra.mxu0 0
        %1369 = vmatprep.subr.bf16.mxu0 0
        %1370 = vmatpush1.bf16.xpose.msra.mxu0 0
        %1371 = vmatprep.subr.bf16.mxu0 0
        %1372 = vmatpush1.bf16.xpose.msra.mxu0 0
        %1373 = vmatprep.subr.bf16.mxu0 0
        %1374 = vmatpush1.bf16.xpose.msra.mxu0 0
        %1375 = vmatprep.subr.bf16.mxu0 0
        %1376 = vmatpush1.bf16.xpose.msra.mxu0 0
        %1377 = vmatprep.mubr.bf16.mxu0 0
        %1378 = vmatmul.mubr.bf16.gmra.mrb[0].mxu0 %v1340
        %v1379 = vpop.f32.mrb[0].mxu0
        %v1380 = vadd.f32 0.0, %v1379
        %v1381 = vpop.f32.mrb[0].mxu0
        %v1382 = vpop.f32.mrb[0].mxu0
        %v1383 = vpop.f32.mrb[0].mxu0
        %1384 = vdwg.mxu0
        %v1385 = vmul.f32 %v1242, 0.17677669
        %v1386 = vmul.f32 %v1288, 0.17677669
        %v1387 = vmul.f32 %v1334, 0.17677669
        %v1388 = vmul.f32 %v1380, 0.17677669
        %v1389 = vadd.f32 %v1385, %v1160
        %v1390 = vadd.f32 %v1386, %v1161
        %v1391 = vadd.f32 %v1387, %v1162
        %v1392 = vadd.f32 %v1388, %v1163
        %vm1393 = vcmask 64512
        %v1394 = vsel %vm1393, %v1389, -inf
        %1395 = vmax.xlane.f32.xlu0 %v1394
        %v1396 = vpop.xlane.xlu0 %1395
        %v1397 = vsel %vm1393, %v1390, -inf
        %1398 = vmax.xlane.f32.xlu0 %v1397
        %v1399 = vpop.xlane.xlu0 %1398
        %v1400 = vsel %vm1393, %v1391, -inf
        %1401 = vmax.xlane.f32.xlu0 %v1400
        %v1402 = vpop.xlane.xlu0 %1401
        %v1403 = vsel %vm1393, %v1392, -inf
        %1404 = vmax.xlane.f32.xlu0 %v1403
        %v1405 = vpop.xlane.xlu0 %1404
        %v1406 = vsub.f32 %v1389, %v1396
        %v1407 = vsub.f32 %v1390, %v1399
        %v1408 = vsub.f32 %v1391, %v1402
        %v1409 = vsub.f32 %v1392, %v1405
        %v1410 = vmul.f32 %v1406, 1.442695
        %v1411 = vpow.pop %v1410
        %v1412 = vmul.f32 %v1407, 1.442695
        %v1413 = vpow.pop %v1412
        %v1414 = vmul.f32 %v1408, 1.442695
        %v1415 = vpow.pop %v1414
        %v1416 = vmul.f32 %v1409, 1.442695
        %v1417 = vpow.pop %v1416
        %v1418 = vsel %vm1393, %v1411, 0.0
        %1419 = vadd.xlane.f32.xlu0 %v1418
        %v1420 = vpop.xlane.xlu0 %1419
        %v1421 = vsel %vm1393, %v1413, 0.0
        %1422 = vadd.xlane.f32.xlu0 %v1421
        %v1423 = vpop.xlane.xlu0 %1422
        %v1424 = vsel %vm1393, %v1415, 0.0
        %1425 = vadd.xlane.f32.xlu0 %v1424
        %v1426 = vpop.xlane.xlu0 %1425
        %v1427 = vsel %vm1393, %v1417, 0.0
        %1428 = vadd.xlane.f32.xlu0 %v1427
        %v1429 = vpop.xlane.xlu0 %1428
        %v1430 = vrcp.pop %v1420
        %v1431 = vrcp.pop %v1423
        %v1432 = vrcp.pop %v1426
        %v1433 = vrcp.pop %v1429
        %v1434 = vmul.f32 %v1411, %v1430
        %v1435 = vmul.f32 %v1413, %v1431
        %v1436 = vmul.f32 %v1415, %v1432
        %v1437 = vmul.f32 %v1417, %v1433
        %v1438 = vpack.c.bf16 %v1434, %v1434
        %v1439 = vpack.c.bf16 %v1435, %v1435
        %v1440 = vpack.c.bf16 %v1436, %v1436
        %v1441 = vpack.c.bf16 %v1437, %v1437
        %v1443 = vsel %vm1393, %v1438, 0
        %vm1445 = vcmask 1043456
        %v1447 = vsel %vm1445, %v1196, 0
        %1449 = vmatprep.subr.bf16.mxu0 0
        %1450 = vmatpush1.bf16.msra.mxu0 %v1447
        %1451 = vmatprep.subr.bf16.mxu0 0
        %1452 = vmatpush1.bf16.msra.mxu0 0
        %1453 = vmatprep.subr.bf16.mxu0 0
        %1454 = vmatpush1.bf16.msra.mxu0 0
        %1455 = vmatprep.subr.bf16.mxu0 0
        %1456 = vmatpush1.bf16.msra.mxu0 0
        %1457 = vmatprep.subr.bf16.mxu0 0
        %1458 = vmatpush1.bf16.msra.mxu0 0
        %1459 = vmatprep.subr.bf16.mxu0 0
        %1460 = vmatpush1.bf16.msra.mxu0 0
        %1461 = vmatprep.subr.bf16.mxu0 0
        %1462 = vmatpush1.bf16.msra.mxu0 0
        %1463 = vmatprep.subr.bf16.mxu0 0
        %1464 = vmatpush1.bf16.msra.mxu0 0
        %1465 = vmatprep.subr.bf16.mxu0 0
        %1466 = vmatpush1.bf16.msra.mxu0 0
        %1467 = vmatprep.subr.bf16.mxu0 0
        %1468 = vmatpush1.bf16.msra.mxu0 0
        %1469 = vmatprep.subr.bf16.mxu0 0
        %1470 = vmatpush1.bf16.msra.mxu0 0
        %1471 = vmatprep.subr.bf16.mxu0 0
        %1472 = vmatpush1.bf16.msra.mxu0 0
        %1473 = vmatprep.subr.bf16.mxu0 0
        %1474 = vmatpush1.bf16.msra.mxu0 0
        %1475 = vmatprep.subr.bf16.mxu0 0
        %1476 = vmatpush1.bf16.msra.mxu0 0
        %1477 = vmatprep.subr.bf16.mxu0 0
        %1478 = vmatpush1.bf16.msra.mxu0 0
        %1479 = vmatprep.subr.bf16.mxu0 0
        %1480 = vmatpush1.bf16.msra.mxu0 0
        %1481 = vmatprep.mubr.bf16.mxu0 0
        %1482 = vmatmul.mubr.bf16.gmra.mrb[0].mxu0 %v1443
        %v1483 = vpop.f32.mrb[0].mxu0
        %v1484 = vadd.f32 0.0, %v1483
        %v1485 = vpop.f32.mrb[0].mxu0
        %v1486 = vpop.f32.mrb[0].mxu0
        %v1487 = vpop.f32.mrb[0].mxu0
        %1488 = vdwg.mxu0
        %v1490 = vsel %vm1393, %v1439, 0
        %v1493 = vsel %vm1445, %v1197, 0
        %1495 = vmatprep.subr.bf16.mxu0 0
        %1496 = vmatpush1.bf16.msra.mxu0 %v1493
        %1497 = vmatprep.subr.bf16.mxu0 0
        %1498 = vmatpush1.bf16.msra.mxu0 0
        %1499 = vmatprep.subr.bf16.mxu0 0
        %1500 = vmatpush1.bf16.msra.mxu0 0
        %1501 = vmatprep.subr.bf16.mxu0 0
        %1502 = vmatpush1.bf16.msra.mxu0 0
        %1503 = vmatprep.subr.bf16.mxu0 0
        %1504 = vmatpush1.bf16.msra.mxu0 0
        %1505 = vmatprep.subr.bf16.mxu0 0
        %1506 = vmatpush1.bf16.msra.mxu0 0
        %1507 = vmatprep.subr.bf16.mxu0 0
        %1508 = vmatpush1.bf16.msra.mxu0 0
        %1509 = vmatprep.subr.bf16.mxu0 0
        %1510 = vmatpush1.bf16.msra.mxu0 0
        %1511 = vmatprep.subr.bf16.mxu0 0
        %1512 = vmatpush1.bf16.msra.mxu0 0
        %1513 = vmatprep.subr.bf16.mxu0 0
        %1514 = vmatpush1.bf16.msra.mxu0 0
        %1515 = vmatprep.subr.bf16.mxu0 0
        %1516 = vmatpush1.bf16.msra.mxu0 0
        %1517 = vmatprep.subr.bf16.mxu0 0
        %1518 = vmatpush1.bf16.msra.mxu0 0
        %1519 = vmatprep.subr.bf16.mxu0 0
        %1520 = vmatpush1.bf16.msra.mxu0 0
        %1521 = vmatprep.subr.bf16.mxu0 0
        %1522 = vmatpush1.bf16.msra.mxu0 0
        %1523 = vmatprep.subr.bf16.mxu0 0
        %1524 = vmatpush1.bf16.msra.mxu0 0
        %1525 = vmatprep.subr.bf16.mxu0 0
        %1526 = vmatpush1.bf16.msra.mxu0 0
        %1527 = vmatprep.mubr.bf16.mxu0 0
        %1528 = vmatmul.mubr.bf16.gmra.mrb[0].mxu0 %v1490
        %v1529 = vpop.f32.mrb[0].mxu0
        %v1530 = vadd.f32 0.0, %v1529
        %v1531 = vpop.f32.mrb[0].mxu0
        %v1532 = vpop.f32.mrb[0].mxu0
        %v1533 = vpop.f32.mrb[0].mxu0
        %1534 = vdwg.mxu0
        %v1536 = vsel %vm1393, %v1440, 0
        %v1539 = vsel %vm1445, %v1198, 0
        %1541 = vmatprep.subr.bf16.mxu0 0
        %1542 = vmatpush1.bf16.msra.mxu0 %v1539
        %1543 = vmatprep.subr.bf16.mxu0 0
        %1544 = vmatpush1.bf16.msra.mxu0 0
        %1545 = vmatprep.subr.bf16.mxu0 0
        %1546 = vmatpush1.bf16.msra.mxu0 0
        %1547 = vmatprep.subr.bf16.mxu0 0
        %1548 = vmatpush1.bf16.msra.mxu0 0
        %1549 = vmatprep.subr.bf16.mxu0 0
        %1550 = vmatpush1.bf16.msra.mxu0 0
        %1551 = vmatprep.subr.bf16.mxu0 0
        %1552 = vmatpush1.bf16.msra.mxu0 0
        %1553 = vmatprep.subr.bf16.mxu0 0
        %1554 = vmatpush1.bf16.msra.mxu0 0
        %1555 = vmatprep.subr.bf16.mxu0 0
        %1556 = vmatpush1.bf16.msra.mxu0 0
        %1557 = vmatprep.subr.bf16.mxu0 0
        %1558 = vmatpush1.bf16.msra.mxu0 0
        %1559 = vmatprep.subr.bf16.mxu0 0
        %1560 = vmatpush1.bf16.msra.mxu0 0
        %1561 = vmatprep.subr.bf16.mxu0 0
        %1562 = vmatpush1.bf16.msra.mxu0 0
        %1563 = vmatprep.subr.bf16.mxu0 0
        %1564 = vmatpush1.bf16.msra.mxu0 0
        %1565 = vmatprep.subr.bf16.mxu0 0
        %1566 = vmatpush1.bf16.msra.mxu0 0
        %1567 = vmatprep.subr.bf16.mxu0 0
        %1568 = vmatpush1.bf16.msra.mxu0 0
        %1569 = vmatprep.subr.bf16.mxu0 0
        %1570 = vmatpush1.bf16.msra.mxu0 0
        %1571 = vmatprep.subr.bf16.mxu0 0
        %1572 = vmatpush1.bf16.msra.mxu0 0
        %1573 = vmatprep.mubr.bf16.mxu0 0
        %1574 = vmatmul.mubr.bf16.gmra.mrb[0].mxu0 %v1536
        %v1575 = vpop.f32.mrb[0].mxu0
        %v1576 = vadd.f32 0.0, %v1575
        %v1577 = vpop.f32.mrb[0].mxu0
        %v1578 = vpop.f32.mrb[0].mxu0
        %v1579 = vpop.f32.mrb[0].mxu0
        %1580 = vdwg.mxu0
        %v1582 = vsel %vm1393, %v1441, 0
        %v1585 = vsel %vm1445, %v1199, 0
        %1587 = vmatprep.subr.bf16.mxu0 0
        %1588 = vmatpush1.bf16.msra.mxu0 %v1585
        %1589 = vmatprep.subr.bf16.mxu0 0
        %1590 = vmatpush1.bf16.msra.mxu0 0
        %1591 = vmatprep.subr.bf16.mxu0 0
        %1592 = vmatpush1.bf16.msra.mxu0 0
        %1593 = vmatprep.subr.bf16.mxu0 0
        %1594 = vmatpush1.bf16.msra.mxu0 0
        %1595 = vmatprep.subr.bf16.mxu0 0
        %1596 = vmatpush1.bf16.msra.mxu0 0
        %1597 = vmatprep.subr.bf16.mxu0 0
        %1598 = vmatpush1.bf16.msra.mxu0 0
        %1599 = vmatprep.subr.bf16.mxu0 0
        %1600 = vmatpush1.bf16.msra.mxu0 0
        %1601 = vmatprep.subr.bf16.mxu0 0
        %1602 = vmatpush1.bf16.msra.mxu0 0
        %1603 = vmatprep.subr.bf16.mxu0 0
        %1604 = vmatpush1.bf16.msra.mxu0 0
        %1605 = vmatprep.subr.bf16.mxu0 0
        %1606 = vmatpush1.bf16.msra.mxu0 0
        %1607 = vmatprep.subr.bf16.mxu0 0
        %1608 = vmatpush1.bf16.msra.mxu0 0
        %1609 = vmatprep.subr.bf16.mxu0 0
        %1610 = vmatpush1.bf16.msra.mxu0 0
        %1611 = vmatprep.subr.bf16.mxu0 0
        %1612 = vmatpush1.bf16.msra.mxu0 0
        %1613 = vmatprep.subr.bf16.mxu0 0
        %1614 = vmatpush1.bf16.msra.mxu0 0
        %1615 = vmatprep.subr.bf16.mxu0 0
        %1616 = vmatpush1.bf16.msra.mxu0 0
        %1617 = vmatprep.subr.bf16.mxu0 0
        %1618 = vmatpush1.bf16.msra.mxu0 0
        %1619 = vmatprep.mubr.bf16.mxu0 0
        %1620 = vmatmul.mubr.bf16.gmra.mrb[0].mxu0 %v1582
        %v1621 = vpop.f32.mrb[0].mxu0
        %v1622 = vadd.f32 0.0, %v1621
        %v1623 = vpop.f32.mrb[0].mxu0
        %v1624 = vpop.f32.mrb[0].mxu0
        %v1625 = vpop.f32.mrb[0].mxu0
        %1626 = vdwg.mxu0
        %1627 = vrot.lane.b32.xlu0 %v1172, 96
        %v1628 = vpop.permute.xlu0 %1627
        %1629 = vrot.lane.b32.xlu0 %v1184, 96
        %v1630 = vpop.permute.xlu0 %1629
        %v1632 = vsel %vm1200, %v1628, 0
        %v1635 = vsel %vm1200, %v1630, 0
        %1637 = vmatprep.subr.bf16.mxu0 0
        %1638 = vmatpush1.bf16.xpose.msra.mxu0 %v1635
        %1639 = vmatprep.subr.bf16.mxu0 0
        %1640 = vmatpush1.bf16.xpose.msra.mxu0 0
        %1641 = vmatprep.subr.bf16.mxu0 0
        %1642 = vmatpush1.bf16.xpose.msra.mxu0 0
        %1643 = vmatprep.subr.bf16.mxu0 0
        %1644 = vmatpush1.bf16.xpose.msra.mxu0 0
        %1645 = vmatprep.subr.bf16.mxu0 0
        %1646 = vmatpush1.bf16.xpose.msra.mxu0 0
        %1647 = vmatprep.subr.bf16.mxu0 0
        %1648 = vmatpush1.bf16.xpose.msra.mxu0 0
        %1649 = vmatprep.subr.bf16.mxu0 0
        %1650 = vmatpush1.bf16.xpose.msra.mxu0 0
        %1651 = vmatprep.subr.bf16.mxu0 0
        %1652 = vmatpush1.bf16.xpose.msra.mxu0 0
        %1653 = vmatprep.subr.bf16.mxu0 0
        %1654 = vmatpush1.bf16.xpose.msra.mxu0 0
        %1655 = vmatprep.subr.bf16.mxu0 0
        %1656 = vmatpush1.bf16.xpose.msra.mxu0 0
        %1657 = vmatprep.subr.bf16.mxu0 0
        %1658 = vmatpush1.bf16.xpose.msra.mxu0 0
        %1659 = vmatprep.subr.bf16.mxu0 0
        %1660 = vmatpush1.bf16.xpose.msra.mxu0 0
        %1661 = vmatprep.subr.bf16.mxu0 0
        %1662 = vmatpush1.bf16.xpose.msra.mxu0 0
        %1663 = vmatprep.subr.bf16.mxu0 0
        %1664 = vmatpush1.bf16.xpose.msra.mxu0 0
        %1665 = vmatprep.subr.bf16.mxu0 0
        %1666 = vmatpush1.bf16.xpose.msra.mxu0 0
        %1667 = vmatprep.subr.bf16.mxu0 0
        %1668 = vmatpush1.bf16.xpose.msra.mxu0 0
        %1669 = vmatprep.mubr.bf16.mxu0 0
        %1670 = vmatmul.mubr.bf16.gmra.mrb[0].mxu0 %v1632
        %v1671 = vpop.f32.mrb[0].mxu0
        %v1672 = vadd.f32 0.0, %v1671
        %v1673 = vpop.f32.mrb[0].mxu0
        %v1674 = vpop.f32.mrb[0].mxu0
        %v1675 = vpop.f32.mrb[0].mxu0
        %1676 = vdwg.mxu0
        %1677 = vrot.lane.b32.xlu0 %v1173, 96
        %v1678 = vpop.permute.xlu0 %1677
        %1679 = vrot.lane.b32.xlu0 %v1185, 96
        %v1680 = vpop.permute.xlu0 %1679
        %v1682 = vsel %vm1200, %v1678, 0
        %v1685 = vsel %vm1200, %v1680, 0
        %1687 = vmatprep.subr.bf16.mxu0 0
        %1688 = vmatpush1.bf16.xpose.msra.mxu0 %v1685
        %1689 = vmatprep.subr.bf16.mxu0 0
        %1690 = vmatpush1.bf16.xpose.msra.mxu0 0
        %1691 = vmatprep.subr.bf16.mxu0 0
        %1692 = vmatpush1.bf16.xpose.msra.mxu0 0
        %1693 = vmatprep.subr.bf16.mxu0 0
        %1694 = vmatpush1.bf16.xpose.msra.mxu0 0
        %1695 = vmatprep.subr.bf16.mxu0 0
        %1696 = vmatpush1.bf16.xpose.msra.mxu0 0
        %1697 = vmatprep.subr.bf16.mxu0 0
        %1698 = vmatpush1.bf16.xpose.msra.mxu0 0
        %1699 = vmatprep.subr.bf16.mxu0 0
        %1700 = vmatpush1.bf16.xpose.msra.mxu0 0
        %1701 = vmatprep.subr.bf16.mxu0 0
        %1702 = vmatpush1.bf16.xpose.msra.mxu0 0
        %1703 = vmatprep.subr.bf16.mxu0 0
        %1704 = vmatpush1.bf16.xpose.msra.mxu0 0
        %1705 = vmatprep.subr.bf16.mxu0 0
        %1706 = vmatpush1.bf16.xpose.msra.mxu0 0
        %1707 = vmatprep.subr.bf16.mxu0 0
        %1708 = vmatpush1.bf16.xpose.msra.mxu0 0
        %1709 = vmatprep.subr.bf16.mxu0 0
        %1710 = vmatpush1.bf16.xpose.msra.mxu0 0
        %1711 = vmatprep.subr.bf16.mxu0 0
        %1712 = vmatpush1.bf16.xpose.msra.mxu0 0
        %1713 = vmatprep.subr.bf16.mxu0 0
        %1714 = vmatpush1.bf16.xpose.msra.mxu0 0
        %1715 = vmatprep.subr.bf16.mxu0 0
        %1716 = vmatpush1.bf16.xpose.msra.mxu0 0
        %1717 = vmatprep.subr.bf16.mxu0 0
        %1718 = vmatpush1.bf16.xpose.msra.mxu0 0
        %1719 = vmatprep.mubr.bf16.mxu0 0
        %1720 = vmatmul.mubr.bf16.gmra.mrb[0].mxu0 %v1682
        %v1721 = vpop.f32.mrb[0].mxu0
        %v1722 = vadd.f32 0.0, %v1721
        %v1723 = vpop.f32.mrb[0].mxu0
        %v1724 = vpop.f32.mrb[0].mxu0
        %v1725 = vpop.f32.mrb[0].mxu0
        %1726 = vdwg.mxu0
        %1727 = vrot.lane.b32.xlu0 %v1174, 96
        %v1728 = vpop.permute.xlu0 %1727
        %1729 = vrot.lane.b32.xlu0 %v1186, 96
        %v1730 = vpop.permute.xlu0 %1729
        %v1732 = vsel %vm1200, %v1728, 0
        %v1735 = vsel %vm1200, %v1730, 0
        %1737 = vmatprep.subr.bf16.mxu0 0
        %1738 = vmatpush1.bf16.xpose.msra.mxu0 %v1735
        %1739 = vmatprep.subr.bf16.mxu0 0
        %1740 = vmatpush1.bf16.xpose.msra.mxu0 0
        %1741 = vmatprep.subr.bf16.mxu0 0
        %1742 = vmatpush1.bf16.xpose.msra.mxu0 0
        %1743 = vmatprep.subr.bf16.mxu0 0
        %1744 = vmatpush1.bf16.xpose.msra.mxu0 0
        %1745 = vmatprep.subr.bf16.mxu0 0
        %1746 = vmatpush1.bf16.xpose.msra.mxu0 0
        %1747 = vmatprep.subr.bf16.mxu0 0
        %1748 = vmatpush1.bf16.xpose.msra.mxu0 0
        %1749 = vmatprep.subr.bf16.mxu0 0
        %1750 = vmatpush1.bf16.xpose.msra.mxu0 0
        %1751 = vmatprep.subr.bf16.mxu0 0
        %1752 = vmatpush1.bf16.xpose.msra.mxu0 0
        %1753 = vmatprep.subr.bf16.mxu0 0
        %1754 = vmatpush1.bf16.xpose.msra.mxu0 0
        %1755 = vmatprep.subr.bf16.mxu0 0
        %1756 = vmatpush1.bf16.xpose.msra.mxu0 0
        %1757 = vmatprep.subr.bf16.mxu0 0
        %1758 = vmatpush1.bf16.xpose.msra.mxu0 0
        %1759 = vmatprep.subr.bf16.mxu0 0
        %1760 = vmatpush1.bf16.xpose.msra.mxu0 0
        %1761 = vmatprep.subr.bf16.mxu0 0
        %1762 = vmatpush1.bf16.xpose.msra.mxu0 0
        %1763 = vmatprep.subr.bf16.mxu0 0
        %1764 = vmatpush1.bf16.xpose.msra.mxu0 0
        %1765 = vmatprep.subr.bf16.mxu0 0
        %1766 = vmatpush1.bf16.xpose.msra.mxu0 0
        %1767 = vmatprep.subr.bf16.mxu0 0
        %1768 = vmatpush1.bf16.xpose.msra.mxu0 0
        %1769 = vmatprep.mubr.bf16.mxu0 0
        %1770 = vmatmul.mubr.bf16.gmra.mrb[0].mxu0 %v1732
        %v1771 = vpop.f32.mrb[0].mxu0
        %v1772 = vadd.f32 0.0, %v1771
        %v1773 = vpop.f32.mrb[0].mxu0
        %v1774 = vpop.f32.mrb[0].mxu0
        %v1775 = vpop.f32.mrb[0].mxu0
        %1776 = vdwg.mxu0
        %1777 = vrot.lane.b32.xlu0 %v1175, 96
        %v1778 = vpop.permute.xlu0 %1777
        %1779 = vrot.lane.b32.xlu0 %v1187, 96
        %v1780 = vpop.permute.xlu0 %1779
        %v1782 = vsel %vm1200, %v1778, 0
        %v1785 = vsel %vm1200, %v1780, 0
        %1787 = vmatprep.subr.bf16.mxu0 0
        %1788 = vmatpush1.bf16.xpose.msra.mxu0 %v1785
        %1789 = vmatprep.subr.bf16.mxu0 0
        %1790 = vmatpush1.bf16.xpose.msra.mxu0 0
        %1791 = vmatprep.subr.bf16.mxu0 0
        %1792 = vmatpush1.bf16.xpose.msra.mxu0 0
        %1793 = vmatprep.subr.bf16.mxu0 0
        %1794 = vmatpush1.bf16.xpose.msra.mxu0 0
        %1795 = vmatprep.subr.bf16.mxu0 0
        %1796 = vmatpush1.bf16.xpose.msra.mxu0 0
        %1797 = vmatprep.subr.bf16.mxu0 0
        %1798 = vmatpush1.bf16.xpose.msra.mxu0 0
        %1799 = vmatprep.subr.bf16.mxu0 0
        %1800 = vmatpush1.bf16.xpose.msra.mxu0 0
        %1801 = vmatprep.subr.bf16.mxu0 0
        %1802 = vmatpush1.bf16.xpose.msra.mxu0 0
        %1803 = vmatprep.subr.bf16.mxu0 0
        %1804 = vmatpush1.bf16.xpose.msra.mxu0 0
        %1805 = vmatprep.subr.bf16.mxu0 0
        %1806 = vmatpush1.bf16.xpose.msra.mxu0 0
        %1807 = vmatprep.subr.bf16.mxu0 0
        %1808 = vmatpush1.bf16.xpose.msra.mxu0 0
        %1809 = vmatprep.subr.bf16.mxu0 0
        %1810 = vmatpush1.bf16.xpose.msra.mxu0 0
        %1811 = vmatprep.subr.bf16.mxu0 0
        %1812 = vmatpush1.bf16.xpose.msra.mxu0 0
        %1813 = vmatprep.subr.bf16.mxu0 0
        %1814 = vmatpush1.bf16.xpose.msra.mxu0 0
        %1815 = vmatprep.subr.bf16.mxu0 0
        %1816 = vmatpush1.bf16.xpose.msra.mxu0 0
        %1817 = vmatprep.subr.bf16.mxu0 0
        %1818 = vmatpush1.bf16.xpose.msra.mxu0 0
        %1819 = vmatprep.mubr.bf16.mxu0 0
        %1820 = vmatmul.mubr.bf16.gmra.mrb[0].mxu0 %v1782
        %v1821 = vpop.f32.mrb[0].mxu0
        %v1822 = vadd.f32 0.0, %v1821
        %v1823 = vpop.f32.mrb[0].mxu0
        %v1824 = vpop.f32.mrb[0].mxu0
        %v1825 = vpop.f32.mrb[0].mxu0
        %1826 = vdwg.mxu0
        %v1827 = vmul.f32 %v1672, 0.17677669
        %v1828 = vmul.f32 %v1722, 0.17677669
        %v1829 = vmul.f32 %v1772, 0.17677669
        %v1830 = vmul.f32 %v1822, 0.17677669
        %v1831 = vadd.f32 %v1827, %v1160
        %v1832 = vadd.f32 %v1828, %v1161
        %v1833 = vadd.f32 %v1829, %v1162
        %v1834 = vadd.f32 %v1830, %v1163
        %v1835 = vsel %vm1393, %v1831, -inf
        %1836 = vmax.xlane.f32.xlu0 %v1835
        %v1837 = vpop.xlane.xlu0 %1836
        %v1838 = vsel %vm1393, %v1832, -inf
        %1839 = vmax.xlane.f32.xlu0 %v1838
        %v1840 = vpop.xlane.xlu0 %1839
        %v1841 = vsel %vm1393, %v1833, -inf
        %1842 = vmax.xlane.f32.xlu0 %v1841
        %v1843 = vpop.xlane.xlu0 %1842
        %v1844 = vsel %vm1393, %v1834, -inf
        %1845 = vmax.xlane.f32.xlu0 %v1844
        %v1846 = vpop.xlane.xlu0 %1845
        %v1847 = vsub.f32 %v1831, %v1837
        %v1848 = vsub.f32 %v1832, %v1840
        %v1849 = vsub.f32 %v1833, %v1843
        %v1850 = vsub.f32 %v1834, %v1846
        %v1851 = vmul.f32 %v1847, 1.442695
        %v1852 = vpow.pop %v1851
        %v1853 = vmul.f32 %v1848, 1.442695
        %v1854 = vpow.pop %v1853
        %v1855 = vmul.f32 %v1849, 1.442695
        %v1856 = vpow.pop %v1855
        %v1857 = vmul.f32 %v1850, 1.442695
        %v1858 = vpow.pop %v1857
        %v1859 = vsel %vm1393, %v1852, 0.0
        %1860 = vadd.xlane.f32.xlu0 %v1859
        %v1861 = vpop.xlane.xlu0 %1860
        %v1862 = vsel %vm1393, %v1854, 0.0
        %1863 = vadd.xlane.f32.xlu0 %v1862
        %v1864 = vpop.xlane.xlu0 %1863
        %v1865 = vsel %vm1393, %v1856, 0.0
        %1866 = vadd.xlane.f32.xlu0 %v1865
        %v1867 = vpop.xlane.xlu0 %1866
        %v1868 = vsel %vm1393, %v1858, 0.0
        %1869 = vadd.xlane.f32.xlu0 %v1868
        %v1870 = vpop.xlane.xlu0 %1869
        %v1871 = vrcp.pop %v1861
        %v1872 = vrcp.pop %v1864
        %v1873 = vrcp.pop %v1867
        %v1874 = vrcp.pop %v1870
        %v1875 = vmul.f32 %v1852, %v1871
        %v1876 = vmul.f32 %v1854, %v1872
        %v1877 = vmul.f32 %v1856, %v1873
        %v1878 = vmul.f32 %v1858, %v1874
        %v1879 = vpack.c.bf16 %v1875, %v1875
        %v1880 = vpack.c.bf16 %v1876, %v1876
        %v1881 = vpack.c.bf16 %v1877, %v1877
        %v1882 = vpack.c.bf16 %v1878, %v1878
        %1883 = vrot.lane.b32.xlu0 %v1196, 96
        %v1884 = vpop.permute.xlu0 %1883
        %v1886 = vsel %vm1393, %v1879, 0
        %v1889 = vsel %vm1445, %v1884, 0
        %1891 = vmatprep.subr.bf16.mxu0 0
        %1892 = vmatpush1.bf16.msra.mxu0 %v1889
        %1893 = vmatprep.subr.bf16.mxu0 0
        %1894 = vmatpush1.bf16.msra.mxu0 0
        %1895 = vmatprep.subr.bf16.mxu0 0
        %1896 = vmatpush1.bf16.msra.mxu0 0
        %1897 = vmatprep.subr.bf16.mxu0 0
        %1898 = vmatpush1.bf16.msra.mxu0 0
        %1899 = vmatprep.subr.bf16.mxu0 0
        %1900 = vmatpush1.bf16.msra.mxu0 0
        %1901 = vmatprep.subr.bf16.mxu0 0
        %1902 = vmatpush1.bf16.msra.mxu0 0
        %1903 = vmatprep.subr.bf16.mxu0 0
        %1904 = vmatpush1.bf16.msra.mxu0 0
        %1905 = vmatprep.subr.bf16.mxu0 0
        %1906 = vmatpush1.bf16.msra.mxu0 0
        %1907 = vmatprep.subr.bf16.mxu0 0
        %1908 = vmatpush1.bf16.msra.mxu0 0
        %1909 = vmatprep.subr.bf16.mxu0 0
        %1910 = vmatpush1.bf16.msra.mxu0 0
        %1911 = vmatprep.subr.bf16.mxu0 0
        %1912 = vmatpush1.bf16.msra.mxu0 0
        %1913 = vmatprep.subr.bf16.mxu0 0
        %1914 = vmatpush1.bf16.msra.mxu0 0
        %1915 = vmatprep.subr.bf16.mxu0 0
        %1916 = vmatpush1.bf16.msra.mxu0 0
        %1917 = vmatprep.subr.bf16.mxu0 0
        %1918 = vmatpush1.bf16.msra.mxu0 0
        %1919 = vmatprep.subr.bf16.mxu0 0
        %1920 = vmatpush1.bf16.msra.mxu0 0
        %1921 = vmatprep.subr.bf16.mxu0 0
        %1922 = vmatpush1.bf16.msra.mxu0 0
        %1923 = vmatprep.mubr.bf16.mxu0 0
        %1924 = vmatmul.mubr.bf16.gmra.mrb[0].mxu0 %v1886
        %v1925 = vpop.f32.mrb[0].mxu0
        %v1926 = vadd.f32 0.0, %v1925
        %v1927 = vpop.f32.mrb[0].mxu0
        %v1928 = vpop.f32.mrb[0].mxu0
        %v1929 = vpop.f32.mrb[0].mxu0
        %1930 = vdwg.mxu0
        %1931 = vrot.lane.b32.xlu0 %v1197, 96
        %v1932 = vpop.permute.xlu0 %1931
        %v1934 = vsel %vm1393, %v1880, 0
        %v1937 = vsel %vm1445, %v1932, 0
        %1939 = vmatprep.subr.bf16.mxu0 0
        %1940 = vmatpush1.bf16.msra.mxu0 %v1937
        %1941 = vmatprep.subr.bf16.mxu0 0
        %1942 = vmatpush1.bf16.msra.mxu0 0
        %1943 = vmatprep.subr.bf16.mxu0 0
        %1944 = vmatpush1.bf16.msra.mxu0 0
        %1945 = vmatprep.subr.bf16.mxu0 0
        %1946 = vmatpush1.bf16.msra.mxu0 0
        %1947 = vmatprep.subr.bf16.mxu0 0
        %1948 = vmatpush1.bf16.msra.mxu0 0
        %1949 = vmatprep.subr.bf16.mxu0 0
        %1950 = vmatpush1.bf16.msra.mxu0 0
        %1951 = vmatprep.subr.bf16.mxu0 0
        %1952 = vmatpush1.bf16.msra.mxu0 0
        %1953 = vmatprep.subr.bf16.mxu0 0
        %1954 = vmatpush1.bf16.msra.mxu0 0
        %1955 = vmatprep.subr.bf16.mxu0 0
        %1956 = vmatpush1.bf16.msra.mxu0 0
        %1957 = vmatprep.subr.bf16.mxu0 0
        %1958 = vmatpush1.bf16.msra.mxu0 0
        %1959 = vmatprep.subr.bf16.mxu0 0
        %1960 = vmatpush1.bf16.msra.mxu0 0
        %1961 = vmatprep.subr.bf16.mxu0 0
        %1962 = vmatpush1.bf16.msra.mxu0 0
        %1963 = vmatprep.subr.bf16.mxu0 0
        %1964 = vmatpush1.bf16.msra.mxu0 0
        %1965 = vmatprep.subr.bf16.mxu0 0
        %1966 = vmatpush1.bf16.msra.mxu0 0
        %1967 = vmatprep.subr.bf16.mxu0 0
        %1968 = vmatpush1.bf16.msra.mxu0 0
        %1969 = vmatprep.subr.bf16.mxu0 0
        %1970 = vmatpush1.bf16.msra.mxu0 0
        %1971 = vmatprep.mubr.bf16.mxu0 0
        %1972 = vmatmul.mubr.bf16.gmra.mrb[0].mxu0 %v1934
        %v1973 = vpop.f32.mrb[0].mxu0
        %v1974 = vadd.f32 0.0, %v1973
        %v1975 = vpop.f32.mrb[0].mxu0
        %v1976 = vpop.f32.mrb[0].mxu0
        %v1977 = vpop.f32.mrb[0].mxu0
        %1978 = vdwg.mxu0
        %1979 = vrot.lane.b32.xlu0 %v1198, 96
        %v1980 = vpop.permute.xlu0 %1979
        %v1982 = vsel %vm1393, %v1881, 0
        %v1985 = vsel %vm1445, %v1980, 0
        %1987 = vmatprep.subr.bf16.mxu0 0
        %1988 = vmatpush1.bf16.msra.mxu0 %v1985
        %1989 = vmatprep.subr.bf16.mxu0 0
        %1990 = vmatpush1.bf16.msra.mxu0 0
        %1991 = vmatprep.subr.bf16.mxu0 0
        %1992 = vmatpush1.bf16.msra.mxu0 0
        %1993 = vmatprep.subr.bf16.mxu0 0
        %1994 = vmatpush1.bf16.msra.mxu0 0
        %1995 = vmatprep.subr.bf16.mxu0 0
        %1996 = vmatpush1.bf16.msra.mxu0 0
        %1997 = vmatprep.subr.bf16.mxu0 0
        %1998 = vmatpush1.bf16.msra.mxu0 0
        %1999 = vmatprep.subr.bf16.mxu0 0
        %2000 = vmatpush1.bf16.msra.mxu0 0
        %2001 = vmatprep.subr.bf16.mxu0 0
        %2002 = vmatpush1.bf16.msra.mxu0 0
        %2003 = vmatprep.subr.bf16.mxu0 0
        %2004 = vmatpush1.bf16.msra.mxu0 0
        %2005 = vmatprep.subr.bf16.mxu0 0
        %2006 = vmatpush1.bf16.msra.mxu0 0
        %2007 = vmatprep.subr.bf16.mxu0 0
        %2008 = vmatpush1.bf16.msra.mxu0 0
        %2009 = vmatprep.subr.bf16.mxu0 0
        %2010 = vmatpush1.bf16.msra.mxu0 0
        %2011 = vmatprep.subr.bf16.mxu0 0
        %2012 = vmatpush1.bf16.msra.mxu0 0
        %2013 = vmatprep.subr.bf16.mxu0 0
        %2014 = vmatpush1.bf16.msra.mxu0 0
        %2015 = vmatprep.subr.bf16.mxu0 0
        %2016 = vmatpush1.bf16.msra.mxu0 0
        %2017 = vmatprep.subr.bf16.mxu0 0
        %2018 = vmatpush1.bf16.msra.mxu0 0
        %2019 = vmatprep.mubr.bf16.mxu0 0
        %2020 = vmatmul.mubr.bf16.gmra.mrb[0].mxu0 %v1982
        %v2021 = vpop.f32.mrb[0].mxu0
        %v2022 = vadd.f32 0.0, %v2021
        %v2023 = vpop.f32.mrb[0].mxu0
        %v2024 = vpop.f32.mrb[0].mxu0
        %v2025 = vpop.f32.mrb[0].mxu0
        %2026 = vdwg.mxu0
        %2027 = vrot.lane.b32.xlu0 %v1199, 96
        %v2028 = vpop.permute.xlu0 %2027
        %v2030 = vsel %vm1393, %v1882, 0
        %v2033 = vsel %vm1445, %v2028, 0
        %2035 = vmatprep.subr.bf16.mxu0 0
        %2036 = vmatpush1.bf16.msra.mxu0 %v2033
        %2037 = vmatprep.subr.bf16.mxu0 0
        %2038 = vmatpush1.bf16.msra.mxu0 0
        %2039 = vmatprep.subr.bf16.mxu0 0
        %2040 = vmatpush1.bf16.msra.mxu0 0
        %2041 = vmatprep.subr.bf16.mxu0 0
        %2042 = vmatpush1.bf16.msra.mxu0 0
        %2043 = vmatprep.subr.bf16.mxu0 0
        %2044 = vmatpush1.bf16.msra.mxu0 0
        %2045 = vmatprep.subr.bf16.mxu0 0
        %2046 = vmatpush1.bf16.msra.mxu0 0
        %2047 = vmatprep.subr.bf16.mxu0 0
        %2048 = vmatpush1.bf16.msra.mxu0 0
        %2049 = vmatprep.subr.bf16.mxu0 0
        %2050 = vmatpush1.bf16.msra.mxu0 0
        %2051 = vmatprep.subr.bf16.mxu0 0
        %2052 = vmatpush1.bf16.msra.mxu0 0
        %2053 = vmatprep.subr.bf16.mxu0 0
        %2054 = vmatpush1.bf16.msra.mxu0 0
        %2055 = vmatprep.subr.bf16.mxu0 0
        %2056 = vmatpush1.bf16.msra.mxu0 0
        %2057 = vmatprep.subr.bf16.mxu0 0
        %2058 = vmatpush1.bf16.msra.mxu0 0
        %2059 = vmatprep.subr.bf16.mxu0 0
        %2060 = vmatpush1.bf16.msra.mxu0 0
        %2061 = vmatprep.subr.bf16.mxu0 0
        %2062 = vmatpush1.bf16.msra.mxu0 0
        %2063 = vmatprep.subr.bf16.mxu0 0
        %2064 = vmatpush1.bf16.msra.mxu0 0
        %2065 = vmatprep.subr.bf16.mxu0 0
        %2066 = vmatpush1.bf16.msra.mxu0 0
        %2067 = vmatprep.mubr.bf16.mxu0 0
        %2068 = vmatmul.mubr.bf16.gmra.mrb[0].mxu0 %v2030
        %v2069 = vpop.f32.mrb[0].mxu0
        %v2070 = vadd.f32 0.0, %v2069
        %v2071 = vpop.f32.mrb[0].mxu0
        %v2072 = vpop.f32.mrb[0].mxu0
        %v2073 = vpop.f32.mrb[0].mxu0
        %2074 = vdwg.mxu0
        %2075 = vrot.lane.b32.xlu0 %v1172, 64
        %v2076 = vpop.permute.xlu0 %2075
        %2077 = vrot.lane.b32.xlu0 %v1184, 64
        %v2078 = vpop.permute.xlu0 %2077
        %v2080 = vsel %vm1200, %v2076, 0
        %v2083 = vsel %vm1200, %v2078, 0
        %2085 = vmatprep.subr.bf16.mxu0 0
        %2086 = vmatpush1.bf16.xpose.msra.mxu0 %v2083
        %2087 = vmatprep.subr.bf16.mxu0 0
        %2088 = vmatpush1.bf16.xpose.msra.mxu0 0
        %2089 = vmatprep.subr.bf16.mxu0 0
        %2090 = vmatpush1.bf16.xpose.msra.mxu0 0
        %2091 = vmatprep.subr.bf16.mxu0 0
        %2092 = vmatpush1.bf16.xpose.msra.mxu0 0
        %2093 = vmatprep.subr.bf16.mxu0 0
        %2094 = vmatpush1.bf16.xpose.msra.mxu0 0
        %2095 = vmatprep.subr.bf16.mxu0 0
        %2096 = vmatpush1.bf16.xpose.msra.mxu0 0
        %2097 = vmatprep.subr.bf16.mxu0 0
        %2098 = vmatpush1.bf16.xpose.msra.mxu0 0
        %2099 = vmatprep.subr.bf16.mxu0 0
        %2100 = vmatpush1.bf16.xpose.msra.mxu0 0
        %2101 = vmatprep.subr.bf16.mxu0 0
        %2102 = vmatpush1.bf16.xpose.msra.mxu0 0
        %2103 = vmatprep.subr.bf16.mxu0 0
        %2104 = vmatpush1.bf16.xpose.msra.mxu0 0
        %2105 = vmatprep.subr.bf16.mxu0 0
        %2106 = vmatpush1.bf16.xpose.msra.mxu0 0
        %2107 = vmatprep.subr.bf16.mxu0 0
        %2108 = vmatpush1.bf16.xpose.msra.mxu0 0
        %2109 = vmatprep.subr.bf16.mxu0 0
        %2110 = vmatpush1.bf16.xpose.msra.mxu0 0
        %2111 = vmatprep.subr.bf16.mxu0 0
        %2112 = vmatpush1.bf16.xpose.msra.mxu0 0
        %2113 = vmatprep.subr.bf16.mxu0 0
        %2114 = vmatpush1.bf16.xpose.msra.mxu0 0
        %2115 = vmatprep.subr.bf16.mxu0 0
        %2116 = vmatpush1.bf16.xpose.msra.mxu0 0
        %2117 = vmatprep.mubr.bf16.mxu0 0
        %2118 = vmatmul.mubr.bf16.gmra.mrb[0].mxu0 %v2080
        %v2119 = vpop.f32.mrb[0].mxu0
        %v2120 = vadd.f32 0.0, %v2119
        %v2121 = vpop.f32.mrb[0].mxu0
        %v2122 = vpop.f32.mrb[0].mxu0
        %v2123 = vpop.f32.mrb[0].mxu0
        %2124 = vdwg.mxu0
        %2125 = vrot.lane.b32.xlu0 %v1173, 64
        %v2126 = vpop.permute.xlu0 %2125
        %2127 = vrot.lane.b32.xlu0 %v1185, 64
        %v2128 = vpop.permute.xlu0 %2127
        %v2130 = vsel %vm1200, %v2126, 0
        %v2133 = vsel %vm1200, %v2128, 0
        %2135 = vmatprep.subr.bf16.mxu0 0
        %2136 = vmatpush1.bf16.xpose.msra.mxu0 %v2133
        %2137 = vmatprep.subr.bf16.mxu0 0
        %2138 = vmatpush1.bf16.xpose.msra.mxu0 0
        %2139 = vmatprep.subr.bf16.mxu0 0
        %2140 = vmatpush1.bf16.xpose.msra.mxu0 0
        %2141 = vmatprep.subr.bf16.mxu0 0
        %2142 = vmatpush1.bf16.xpose.msra.mxu0 0
        %2143 = vmatprep.subr.bf16.mxu0 0
        %2144 = vmatpush1.bf16.xpose.msra.mxu0 0
        %2145 = vmatprep.subr.bf16.mxu0 0
        %2146 = vmatpush1.bf16.xpose.msra.mxu0 0
        %2147 = vmatprep.subr.bf16.mxu0 0
        %2148 = vmatpush1.bf16.xpose.msra.mxu0 0
        %2149 = vmatprep.subr.bf16.mxu0 0
        %2150 = vmatpush1.bf16.xpose.msra.mxu0 0
        %2151 = vmatprep.subr.bf16.mxu0 0
        %2152 = vmatpush1.bf16.xpose.msra.mxu0 0
        %2153 = vmatprep.subr.bf16.mxu0 0
        %2154 = vmatpush1.bf16.xpose.msra.mxu0 0
        %2155 = vmatprep.subr.bf16.mxu0 0
        %2156 = vmatpush1.bf16.xpose.msra.mxu0 0
        %2157 = vmatprep.subr.bf16.mxu0 0
        %2158 = vmatpush1.bf16.xpose.msra.mxu0 0
        %2159 = vmatprep.subr.bf16.mxu0 0
        %2160 = vmatpush1.bf16.xpose.msra.mxu0 0
        %2161 = vmatprep.subr.bf16.mxu0 0
        %2162 = vmatpush1.bf16.xpose.msra.mxu0 0
        %2163 = vmatprep.subr.bf16.mxu0 0
        %2164 = vmatpush1.bf16.xpose.msra.mxu0 0
        %2165 = vmatprep.subr.bf16.mxu0 0
        %2166 = vmatpush1.bf16.xpose.msra.mxu0 0
        %2167 = vmatprep.mubr.bf16.mxu0 0
        %2168 = vmatmul.mubr.bf16.gmra.mrb[0].mxu0 %v2130
        %v2169 = vpop.f32.mrb[0].mxu0
        %v2170 = vadd.f32 0.0, %v2169
        %v2171 = vpop.f32.mrb[0].mxu0
        %v2172 = vpop.f32.mrb[0].mxu0
        %v2173 = vpop.f32.mrb[0].mxu0
        %2174 = vdwg.mxu0
        %2175 = vrot.lane.b32.xlu0 %v1174, 64
        %v2176 = vpop.permute.xlu0 %2175
        %2177 = vrot.lane.b32.xlu0 %v1186, 64
        %v2178 = vpop.permute.xlu0 %2177
        %v2180 = vsel %vm1200, %v2176, 0
        %v2183 = vsel %vm1200, %v2178, 0
        %2185 = vmatprep.subr.bf16.mxu0 0
        %2186 = vmatpush1.bf16.xpose.msra.mxu0 %v2183
        %2187 = vmatprep.subr.bf16.mxu0 0
        %2188 = vmatpush1.bf16.xpose.msra.mxu0 0
        %2189 = vmatprep.subr.bf16.mxu0 0
        %2190 = vmatpush1.bf16.xpose.msra.mxu0 0
        %2191 = vmatprep.subr.bf16.mxu0 0
        %2192 = vmatpush1.bf16.xpose.msra.mxu0 0
        %2193 = vmatprep.subr.bf16.mxu0 0
        %2194 = vmatpush1.bf16.xpose.msra.mxu0 0
        %2195 = vmatprep.subr.bf16.mxu0 0
        %2196 = vmatpush1.bf16.xpose.msra.mxu0 0
        %2197 = vmatprep.subr.bf16.mxu0 0
        %2198 = vmatpush1.bf16.xpose.msra.mxu0 0
        %2199 = vmatprep.subr.bf16.mxu0 0
        %2200 = vmatpush1.bf16.xpose.msra.mxu0 0
        %2201 = vmatprep.subr.bf16.mxu0 0
        %2202 = vmatpush1.bf16.xpose.msra.mxu0 0
        %2203 = vmatprep.subr.bf16.mxu0 0
        %2204 = vmatpush1.bf16.xpose.msra.mxu0 0
        %2205 = vmatprep.subr.bf16.mxu0 0
        %2206 = vmatpush1.bf16.xpose.msra.mxu0 0
        %2207 = vmatprep.subr.bf16.mxu0 0
        %2208 = vmatpush1.bf16.xpose.msra.mxu0 0
        %2209 = vmatprep.subr.bf16.mxu0 0
        %2210 = vmatpush1.bf16.xpose.msra.mxu0 0
        %2211 = vmatprep.subr.bf16.mxu0 0
        %2212 = vmatpush1.bf16.xpose.msra.mxu0 0
        %2213 = vmatprep.subr.bf16.mxu0 0
        %2214 = vmatpush1.bf16.xpose.msra.mxu0 0
        %2215 = vmatprep.subr.bf16.mxu0 0
        %2216 = vmatpush1.bf16.xpose.msra.mxu0 0
        %2217 = vmatprep.mubr.bf16.mxu0 0
        %2218 = vmatmul.mubr.bf16.gmra.mrb[0].mxu0 %v2180
        %v2219 = vpop.f32.mrb[0].mxu0
        %v2220 = vadd.f32 0.0, %v2219
        %v2221 = vpop.f32.mrb[0].mxu0
        %v2222 = vpop.f32.mrb[0].mxu0
        %v2223 = vpop.f32.mrb[0].mxu0
        %2224 = vdwg.mxu0
        %2225 = vrot.lane.b32.xlu0 %v1175, 64
        %v2226 = vpop.permute.xlu0 %2225
        %2227 = vrot.lane.b32.xlu0 %v1187, 64
        %v2228 = vpop.permute.xlu0 %2227
        %v2230 = vsel %vm1200, %v2226, 0
        %v2233 = vsel %vm1200, %v2228, 0
        %2235 = vmatprep.subr.bf16.mxu0 0
        %2236 = vmatpush1.bf16.xpose.msra.mxu0 %v2233
        %2237 = vmatprep.subr.bf16.mxu0 0
        %2238 = vmatpush1.bf16.xpose.msra.mxu0 0
        %2239 = vmatprep.subr.bf16.mxu0 0
        %2240 = vmatpush1.bf16.xpose.msra.mxu0 0
        %2241 = vmatprep.subr.bf16.mxu0 0
        %2242 = vmatpush1.bf16.xpose.msra.mxu0 0
        %2243 = vmatprep.subr.bf16.mxu0 0
        %2244 = vmatpush1.bf16.xpose.msra.mxu0 0
        %2245 = vmatprep.subr.bf16.mxu0 0
        %2246 = vmatpush1.bf16.xpose.msra.mxu0 0
        %2247 = vmatprep.subr.bf16.mxu0 0
        %2248 = vmatpush1.bf16.xpose.msra.mxu0 0
        %2249 = vmatprep.subr.bf16.mxu0 0
        %2250 = vmatpush1.bf16.xpose.msra.mxu0 0
        %2251 = vmatprep.subr.bf16.mxu0 0
        %2252 = vmatpush1.bf16.xpose.msra.mxu0 0
        %2253 = vmatprep.subr.bf16.mxu0 0
        %2254 = vmatpush1.bf16.xpose.msra.mxu0 0
        %2255 = vmatprep.subr.bf16.mxu0 0
        %2256 = vmatpush1.bf16.xpose.msra.mxu0 0
        %2257 = vmatprep.subr.bf16.mxu0 0
        %2258 = vmatpush1.bf16.xpose.msra.mxu0 0
        %2259 = vmatprep.subr.bf16.mxu0 0
        %2260 = vmatpush1.bf16.xpose.msra.mxu0 0
        %2261 = vmatprep.subr.bf16.mxu0 0
        %2262 = vmatpush1.bf16.xpose.msra.mxu0 0
        %2263 = vmatprep.subr.bf16.mxu0 0
        %2264 = vmatpush1.bf16.xpose.msra.mxu0 0
        %2265 = vmatprep.subr.bf16.mxu0 0
        %2266 = vmatpush1.bf16.xpose.msra.mxu0 0
        %2267 = vmatprep.mubr.bf16.mxu0 0
        %2268 = vmatmul.mubr.bf16.gmra.mrb[0].mxu0 %v2230
        %v2269 = vpop.f32.mrb[0].mxu0
        %v2270 = vadd.f32 0.0, %v2269
        %v2271 = vpop.f32.mrb[0].mxu0
        %v2272 = vpop.f32.mrb[0].mxu0
        %v2273 = vpop.f32.mrb[0].mxu0
        %2274 = vdwg.mxu0
        %v2275 = vmul.f32 %v2120, 0.17677669
        %v2276 = vmul.f32 %v2170, 0.17677669
        %v2277 = vmul.f32 %v2220, 0.17677669
        %v2278 = vmul.f32 %v2270, 0.17677669
        %v2279 = vadd.f32 %v2275, %v1160
        %v2280 = vadd.f32 %v2276, %v1161
        %v2281 = vadd.f32 %v2277, %v1162
        %v2282 = vadd.f32 %v2278, %v1163
        %v2283 = vsel %vm1393, %v2279, -inf
        %2284 = vmax.xlane.f32.xlu0 %v2283
        %v2285 = vpop.xlane.xlu0 %2284
        %v2286 = vsel %vm1393, %v2280, -inf
        %2287 = vmax.xlane.f32.xlu0 %v2286
        %v2288 = vpop.xlane.xlu0 %2287
        %v2289 = vsel %vm1393, %v2281, -inf
        %2290 = vmax.xlane.f32.xlu0 %v2289
        %v2291 = vpop.xlane.xlu0 %2290
        %v2292 = vsel %vm1393, %v2282, -inf
        %2293 = vmax.xlane.f32.xlu0 %v2292
        %v2294 = vpop.xlane.xlu0 %2293
        %v2295 = vsub.f32 %v2279, %v2285
        %v2296 = vsub.f32 %v2280, %v2288
        %v2297 = vsub.f32 %v2281, %v2291
        %v2298 = vsub.f32 %v2282, %v2294
        %v2299 = vmul.f32 %v2295, 1.442695
        %v2300 = vpow.pop %v2299
        %v2301 = vmul.f32 %v2296, 1.442695
        %v2302 = vpow.pop %v2301
        %v2303 = vmul.f32 %v2297, 1.442695
        %v2304 = vpow.pop %v2303
        %v2305 = vmul.f32 %v2298, 1.442695
        %v2306 = vpow.pop %v2305
        %v2307 = vsel %vm1393, %v2300, 0.0
        %2308 = vadd.xlane.f32.xlu0 %v2307
        %v2309 = vpop.xlane.xlu0 %2308
        %v2310 = vsel %vm1393, %v2302, 0.0
        %2311 = vadd.xlane.f32.xlu0 %v2310
        %v2312 = vpop.xlane.xlu0 %2311
        %v2313 = vsel %vm1393, %v2304, 0.0
        %2314 = vadd.xlane.f32.xlu0 %v2313
        %v2315 = vpop.xlane.xlu0 %2314
        %v2316 = vsel %vm1393, %v2306, 0.0
        %2317 = vadd.xlane.f32.xlu0 %v2316
        %v2318 = vpop.xlane.xlu0 %2317
        %v2319 = vrcp.pop %v2309
        %v2320 = vrcp.pop %v2312
        %v2321 = vrcp.pop %v2315
        %v2322 = vrcp.pop %v2318
        %v2323 = vmul.f32 %v2300, %v2319
        %v2324 = vmul.f32 %v2302, %v2320
        %v2325 = vmul.f32 %v2304, %v2321
        %v2326 = vmul.f32 %v2306, %v2322
        %v2327 = vpack.c.bf16 %v2323, %v2323
        %v2328 = vpack.c.bf16 %v2324, %v2324
        %v2329 = vpack.c.bf16 %v2325, %v2325
        %v2330 = vpack.c.bf16 %v2326, %v2326
        %2331 = vrot.lane.b32.xlu0 %v1196, 64
        %v2332 = vpop.permute.xlu0 %2331
        %v2334 = vsel %vm1393, %v2327, 0
        %v2337 = vsel %vm1445, %v2332, 0
        %2339 = vmatprep.subr.bf16.mxu0 0
        %2340 = vmatpush1.bf16.msra.mxu0 %v2337
        %2341 = vmatprep.subr.bf16.mxu0 0
        %2342 = vmatpush1.bf16.msra.mxu0 0
        %2343 = vmatprep.subr.bf16.mxu0 0
        %2344 = vmatpush1.bf16.msra.mxu0 0
        %2345 = vmatprep.subr.bf16.mxu0 0
        %2346 = vmatpush1.bf16.msra.mxu0 0
        %2347 = vmatprep.subr.bf16.mxu0 0
        %2348 = vmatpush1.bf16.msra.mxu0 0
        %2349 = vmatprep.subr.bf16.mxu0 0
        %2350 = vmatpush1.bf16.msra.mxu0 0
        %2351 = vmatprep.subr.bf16.mxu0 0
        %2352 = vmatpush1.bf16.msra.mxu0 0
        %2353 = vmatprep.subr.bf16.mxu0 0
        %2354 = vmatpush1.bf16.msra.mxu0 0
        %2355 = vmatprep.subr.bf16.mxu0 0
        %2356 = vmatpush1.bf16.msra.mxu0 0
        %2357 = vmatprep.subr.bf16.mxu0 0
        %2358 = vmatpush1.bf16.msra.mxu0 0
        %2359 = vmatprep.subr.bf16.mxu0 0
        %2360 = vmatpush1.bf16.msra.mxu0 0
        %2361 = vmatprep.subr.bf16.mxu0 0
        %2362 = vmatpush1.bf16.msra.mxu0 0
        %2363 = vmatprep.subr.bf16.mxu0 0
        %2364 = vmatpush1.bf16.msra.mxu0 0
        %2365 = vmatprep.subr.bf16.mxu0 0
        %2366 = vmatpush1.bf16.msra.mxu0 0
        %2367 = vmatprep.subr.bf16.mxu0 0
        %2368 = vmatpush1.bf16.msra.mxu0 0
        %2369 = vmatprep.subr.bf16.mxu0 0
        %2370 = vmatpush1.bf16.msra.mxu0 0
        %2371 = vmatprep.mubr.bf16.mxu0 0
        %2372 = vmatmul.mubr.bf16.gmra.mrb[0].mxu0 %v2334
        %v2373 = vpop.f32.mrb[0].mxu0
        %v2374 = vadd.f32 0.0, %v2373
        %v2375 = vpop.f32.mrb[0].mxu0
        %v2376 = vpop.f32.mrb[0].mxu0
        %v2377 = vpop.f32.mrb[0].mxu0
        %2378 = vdwg.mxu0
        %2379 = vrot.lane.b32.xlu0 %v1197, 64
        %v2380 = vpop.permute.xlu0 %2379
        %v2382 = vsel %vm1393, %v2328, 0
        %v2385 = vsel %vm1445, %v2380, 0
        %2387 = vmatprep.subr.bf16.mxu0 0
        %2388 = vmatpush1.bf16.msra.mxu0 %v2385
        %2389 = vmatprep.subr.bf16.mxu0 0
        %2390 = vmatpush1.bf16.msra.mxu0 0
        %2391 = vmatprep.subr.bf16.mxu0 0
        %2392 = vmatpush1.bf16.msra.mxu0 0
        %2393 = vmatprep.subr.bf16.mxu0 0
        %2394 = vmatpush1.bf16.msra.mxu0 0
        %2395 = vmatprep.subr.bf16.mxu0 0
        %2396 = vmatpush1.bf16.msra.mxu0 0
        %2397 = vmatprep.subr.bf16.mxu0 0
        %2398 = vmatpush1.bf16.msra.mxu0 0
        %2399 = vmatprep.subr.bf16.mxu0 0
        %2400 = vmatpush1.bf16.msra.mxu0 0
        %2401 = vmatprep.subr.bf16.mxu0 0
        %2402 = vmatpush1.bf16.msra.mxu0 0
        %2403 = vmatprep.subr.bf16.mxu0 0
        %2404 = vmatpush1.bf16.msra.mxu0 0
        %2405 = vmatprep.subr.bf16.mxu0 0
        %2406 = vmatpush1.bf16.msra.mxu0 0
        %2407 = vmatprep.subr.bf16.mxu0 0
        %2408 = vmatpush1.bf16.msra.mxu0 0
        %2409 = vmatprep.subr.bf16.mxu0 0
        %2410 = vmatpush1.bf16.msra.mxu0 0
        %2411 = vmatprep.subr.bf16.mxu0 0
        %2412 = vmatpush1.bf16.msra.mxu0 0
        %2413 = vmatprep.subr.bf16.mxu0 0
        %2414 = vmatpush1.bf16.msra.mxu0 0
        %2415 = vmatprep.subr.bf16.mxu0 0
        %2416 = vmatpush1.bf16.msra.mxu0 0
        %2417 = vmatprep.subr.bf16.mxu0 0
        %2418 = vmatpush1.bf16.msra.mxu0 0
        %2419 = vmatprep.mubr.bf16.mxu0 0
        %2420 = vmatmul.mubr.bf16.gmra.mrb[0].mxu0 %v2382
        %v2421 = vpop.f32.mrb[0].mxu0
        %v2422 = vadd.f32 0.0, %v2421
        %v2423 = vpop.f32.mrb[0].mxu0
        %v2424 = vpop.f32.mrb[0].mxu0
        %v2425 = vpop.f32.mrb[0].mxu0
        %2426 = vdwg.mxu0
        %2427 = vrot.lane.b32.xlu0 %v1198, 64
        %v2428 = vpop.permute.xlu0 %2427
        %v2430 = vsel %vm1393, %v2329, 0
        %v2433 = vsel %vm1445, %v2428, 0
        %2435 = vmatprep.subr.bf16.mxu0 0
        %2436 = vmatpush1.bf16.msra.mxu0 %v2433
        %2437 = vmatprep.subr.bf16.mxu0 0
        %2438 = vmatpush1.bf16.msra.mxu0 0
        %2439 = vmatprep.subr.bf16.mxu0 0
        %2440 = vmatpush1.bf16.msra.mxu0 0
        %2441 = vmatprep.subr.bf16.mxu0 0
        %2442 = vmatpush1.bf16.msra.mxu0 0
        %2443 = vmatprep.subr.bf16.mxu0 0
        %2444 = vmatpush1.bf16.msra.mxu0 0
        %2445 = vmatprep.subr.bf16.mxu0 0
        %2446 = vmatpush1.bf16.msra.mxu0 0
        %2447 = vmatprep.subr.bf16.mxu0 0
        %2448 = vmatpush1.bf16.msra.mxu0 0
        %2449 = vmatprep.subr.bf16.mxu0 0
        %2450 = vmatpush1.bf16.msra.mxu0 0
        %2451 = vmatprep.subr.bf16.mxu0 0
        %2452 = vmatpush1.bf16.msra.mxu0 0
        %2453 = vmatprep.subr.bf16.mxu0 0
        %2454 = vmatpush1.bf16.msra.mxu0 0
        %2455 = vmatprep.subr.bf16.mxu0 0
        %2456 = vmatpush1.bf16.msra.mxu0 0
        %2457 = vmatprep.subr.bf16.mxu0 0
        %2458 = vmatpush1.bf16.msra.mxu0 0
        %2459 = vmatprep.subr.bf16.mxu0 0
        %2460 = vmatpush1.bf16.msra.mxu0 0
        %2461 = vmatprep.subr.bf16.mxu0 0
        %2462 = vmatpush1.bf16.msra.mxu0 0
        %2463 = vmatprep.subr.bf16.mxu0 0
        %2464 = vmatpush1.bf16.msra.mxu0 0
        %2465 = vmatprep.subr.bf16.mxu0 0
        %2466 = vmatpush1.bf16.msra.mxu0 0
        %2467 = vmatprep.mubr.bf16.mxu0 0
        %2468 = vmatmul.mubr.bf16.gmra.mrb[0].mxu0 %v2430
        %v2469 = vpop.f32.mrb[0].mxu0
        %v2470 = vadd.f32 0.0, %v2469
        %v2471 = vpop.f32.mrb[0].mxu0
        %v2472 = vpop.f32.mrb[0].mxu0
        %v2473 = vpop.f32.mrb[0].mxu0
        %2474 = vdwg.mxu0
        %2475 = vrot.lane.b32.xlu0 %v1199, 64
        %v2476 = vpop.permute.xlu0 %2475
        %v2478 = vsel %vm1393, %v2330, 0
        %v2481 = vsel %vm1445, %v2476, 0
        %2483 = vmatprep.subr.bf16.mxu0 0
        %2484 = vmatpush1.bf16.msra.mxu0 %v2481
        %2485 = vmatprep.subr.bf16.mxu0 0
        %2486 = vmatpush1.bf16.msra.mxu0 0
        %2487 = vmatprep.subr.bf16.mxu0 0
        %2488 = vmatpush1.bf16.msra.mxu0 0
        %2489 = vmatprep.subr.bf16.mxu0 0
        %2490 = vmatpush1.bf16.msra.mxu0 0
        %2491 = vmatprep.subr.bf16.mxu0 0
        %2492 = vmatpush1.bf16.msra.mxu0 0
        %2493 = vmatprep.subr.bf16.mxu0 0
        %2494 = vmatpush1.bf16.msra.mxu0 0
        %2495 = vmatprep.subr.bf16.mxu0 0
        %2496 = vmatpush1.bf16.msra.mxu0 0
        %2497 = vmatprep.subr.bf16.mxu0 0
        %2498 = vmatpush1.bf16.msra.mxu0 0
        %2499 = vmatprep.subr.bf16.mxu0 0
        %2500 = vmatpush1.bf16.msra.mxu0 0
        %2501 = vmatprep.subr.bf16.mxu0 0
        %2502 = vmatpush1.bf16.msra.mxu0 0
        %2503 = vmatprep.subr.bf16.mxu0 0
        %2504 = vmatpush1.bf16.msra.mxu0 0
        %2505 = vmatprep.subr.bf16.mxu0 0
        %2506 = vmatpush1.bf16.msra.mxu0 0
        %2507 = vmatprep.subr.bf16.mxu0 0
        %2508 = vmatpush1.bf16.msra.mxu0 0
        %2509 = vmatprep.subr.bf16.mxu0 0
        %2510 = vmatpush1.bf16.msra.mxu0 0
        %2511 = vmatprep.subr.bf16.mxu0 0
        %2512 = vmatpush1.bf16.msra.mxu0 0
        %2513 = vmatprep.subr.bf16.mxu0 0
        %2514 = vmatpush1.bf16.msra.mxu0 0
        %2515 = vmatprep.mubr.bf16.mxu0 0
        %2516 = vmatmul.mubr.bf16.gmra.mrb[0].mxu0 %v2478
        %v2517 = vpop.f32.mrb[0].mxu0
        %v2518 = vadd.f32 0.0, %v2517
        %v2519 = vpop.f32.mrb[0].mxu0
        %v2520 = vpop.f32.mrb[0].mxu0
        %v2521 = vpop.f32.mrb[0].mxu0
        %2522 = vdwg.mxu0
        %2523 = vrot.lane.b32.xlu0 %v1172, 32
        %v2524 = vpop.permute.xlu0 %2523
        %2525 = vrot.lane.b32.xlu0 %v1184, 32
        %v2526 = vpop.permute.xlu0 %2525
        %v2528 = vsel %vm1200, %v2524, 0
        %v2531 = vsel %vm1200, %v2526, 0
        %2533 = vmatprep.subr.bf16.mxu0 0
        %2534 = vmatpush1.bf16.xpose.msra.mxu0 %v2531
        %2535 = vmatprep.subr.bf16.mxu0 0
        %2536 = vmatpush1.bf16.xpose.msra.mxu0 0
        %2537 = vmatprep.subr.bf16.mxu0 0
        %2538 = vmatpush1.bf16.xpose.msra.mxu0 0
        %2539 = vmatprep.subr.bf16.mxu0 0
        %2540 = vmatpush1.bf16.xpose.msra.mxu0 0
        %2541 = vmatprep.subr.bf16.mxu0 0
        %2542 = vmatpush1.bf16.xpose.msra.mxu0 0
        %2543 = vmatprep.subr.bf16.mxu0 0
        %2544 = vmatpush1.bf16.xpose.msra.mxu0 0
        %2545 = vmatprep.subr.bf16.mxu0 0
        %2546 = vmatpush1.bf16.xpose.msra.mxu0 0
        %2547 = vmatprep.subr.bf16.mxu0 0
        %2548 = vmatpush1.bf16.xpose.msra.mxu0 0
        %2549 = vmatprep.subr.bf16.mxu0 0
        %2550 = vmatpush1.bf16.xpose.msra.mxu0 0
        %2551 = vmatprep.subr.bf16.mxu0 0
        %2552 = vmatpush1.bf16.xpose.msra.mxu0 0
        %2553 = vmatprep.subr.bf16.mxu0 0
        %2554 = vmatpush1.bf16.xpose.msra.mxu0 0
        %2555 = vmatprep.subr.bf16.mxu0 0
        %2556 = vmatpush1.bf16.xpose.msra.mxu0 0
        %2557 = vmatprep.subr.bf16.mxu0 0
        %2558 = vmatpush1.bf16.xpose.msra.mxu0 0
        %2559 = vmatprep.subr.bf16.mxu0 0
        %2560 = vmatpush1.bf16.xpose.msra.mxu0 0
        %2561 = vmatprep.subr.bf16.mxu0 0
        %2562 = vmatpush1.bf16.xpose.msra.mxu0 0
        %2563 = vmatprep.subr.bf16.mxu0 0
        %2564 = vmatpush1.bf16.xpose.msra.mxu0 0
        %2565 = vmatprep.mubr.bf16.mxu0 0
        %2566 = vmatmul.mubr.bf16.gmra.mrb[0].mxu0 %v2528
        %v2567 = vpop.f32.mrb[0].mxu0
        %v2568 = vadd.f32 0.0, %v2567
        %v2569 = vpop.f32.mrb[0].mxu0
        %v2570 = vpop.f32.mrb[0].mxu0
        %v2571 = vpop.f32.mrb[0].mxu0
        %2572 = vdwg.mxu0
        %2573 = vrot.lane.b32.xlu0 %v1173, 32
        %v2574 = vpop.permute.xlu0 %2573
        %2575 = vrot.lane.b32.xlu0 %v1185, 32
        %v2576 = vpop.permute.xlu0 %2575
        %v2578 = vsel %vm1200, %v2574, 0
        %v2581 = vsel %vm1200, %v2576, 0
        %2583 = vmatprep.subr.bf16.mxu0 0
        %2584 = vmatpush1.bf16.xpose.msra.mxu0 %v2581
        %2585 = vmatprep.subr.bf16.mxu0 0
        %2586 = vmatpush1.bf16.xpose.msra.mxu0 0
        %2587 = vmatprep.subr.bf16.mxu0 0
        %2588 = vmatpush1.bf16.xpose.msra.mxu0 0
        %2589 = vmatprep.subr.bf16.mxu0 0
        %2590 = vmatpush1.bf16.xpose.msra.mxu0 0
        %2591 = vmatprep.subr.bf16.mxu0 0
        %2592 = vmatpush1.bf16.xpose.msra.mxu0 0
        %2593 = vmatprep.subr.bf16.mxu0 0
        %2594 = vmatpush1.bf16.xpose.msra.mxu0 0
        %2595 = vmatprep.subr.bf16.mxu0 0
        %2596 = vmatpush1.bf16.xpose.msra.mxu0 0
        %2597 = vmatprep.subr.bf16.mxu0 0
        %2598 = vmatpush1.bf16.xpose.msra.mxu0 0
        %2599 = vmatprep.subr.bf16.mxu0 0
        %2600 = vmatpush1.bf16.xpose.msra.mxu0 0
        %2601 = vmatprep.subr.bf16.mxu0 0
        %2602 = vmatpush1.bf16.xpose.msra.mxu0 0
        %2603 = vmatprep.subr.bf16.mxu0 0
        %2604 = vmatpush1.bf16.xpose.msra.mxu0 0
        %2605 = vmatprep.subr.bf16.mxu0 0
        %2606 = vmatpush1.bf16.xpose.msra.mxu0 0
        %2607 = vmatprep.subr.bf16.mxu0 0
        %2608 = vmatpush1.bf16.xpose.msra.mxu0 0
        %2609 = vmatprep.subr.bf16.mxu0 0
        %2610 = vmatpush1.bf16.xpose.msra.mxu0 0
        %2611 = vmatprep.subr.bf16.mxu0 0
        %2612 = vmatpush1.bf16.xpose.msra.mxu0 0
        %2613 = vmatprep.subr.bf16.mxu0 0
        %2614 = vmatpush1.bf16.xpose.msra.mxu0 0
        %2615 = vmatprep.mubr.bf16.mxu0 0
        %2616 = vmatmul.mubr.bf16.gmra.mrb[0].mxu0 %v2578
        %v2617 = vpop.f32.mrb[0].mxu0
        %v2618 = vadd.f32 0.0, %v2617
        %v2619 = vpop.f32.mrb[0].mxu0
        %v2620 = vpop.f32.mrb[0].mxu0
        %v2621 = vpop.f32.mrb[0].mxu0
        %2622 = vdwg.mxu0
        %2623 = vrot.lane.b32.xlu0 %v1174, 32
        %v2624 = vpop.permute.xlu0 %2623
        %2625 = vrot.lane.b32.xlu0 %v1186, 32
        %v2626 = vpop.permute.xlu0 %2625
        %v2628 = vsel %vm1200, %v2624, 0
        %v2631 = vsel %vm1200, %v2626, 0
        %2633 = vmatprep.subr.bf16.mxu0 0
        %2634 = vmatpush1.bf16.xpose.msra.mxu0 %v2631
        %2635 = vmatprep.subr.bf16.mxu0 0
        %2636 = vmatpush1.bf16.xpose.msra.mxu0 0
        %2637 = vmatprep.subr.bf16.mxu0 0
        %2638 = vmatpush1.bf16.xpose.msra.mxu0 0
        %2639 = vmatprep.subr.bf16.mxu0 0
        %2640 = vmatpush1.bf16.xpose.msra.mxu0 0
        %2641 = vmatprep.subr.bf16.mxu0 0
        %2642 = vmatpush1.bf16.xpose.msra.mxu0 0
        %2643 = vmatprep.subr.bf16.mxu0 0
        %2644 = vmatpush1.bf16.xpose.msra.mxu0 0
        %2645 = vmatprep.subr.bf16.mxu0 0
        %2646 = vmatpush1.bf16.xpose.msra.mxu0 0
        %2647 = vmatprep.subr.bf16.mxu0 0
        %2648 = vmatpush1.bf16.xpose.msra.mxu0 0
        %2649 = vmatprep.subr.bf16.mxu0 0
        %2650 = vmatpush1.bf16.xpose.msra.mxu0 0
        %2651 = vmatprep.subr.bf16.mxu0 0
        %2652 = vmatpush1.bf16.xpose.msra.mxu0 0
        %2653 = vmatprep.subr.bf16.mxu0 0
        %2654 = vmatpush1.bf16.xpose.msra.mxu0 0
        %2655 = vmatprep.subr.bf16.mxu0 0
        %2656 = vmatpush1.bf16.xpose.msra.mxu0 0
        %2657 = vmatprep.subr.bf16.mxu0 0
        %2658 = vmatpush1.bf16.xpose.msra.mxu0 0
        %2659 = vmatprep.subr.bf16.mxu0 0
        %2660 = vmatpush1.bf16.xpose.msra.mxu0 0
        %2661 = vmatprep.subr.bf16.mxu0 0
        %2662 = vmatpush1.bf16.xpose.msra.mxu0 0
        %2663 = vmatprep.subr.bf16.mxu0 0
        %2664 = vmatpush1.bf16.xpose.msra.mxu0 0
        %2665 = vmatprep.mubr.bf16.mxu0 0
        %2666 = vmatmul.mubr.bf16.gmra.mrb[0].mxu0 %v2628
        %v2667 = vpop.f32.mrb[0].mxu0
        %v2668 = vadd.f32 0.0, %v2667
        %v2669 = vpop.f32.mrb[0].mxu0
        %v2670 = vpop.f32.mrb[0].mxu0
        %v2671 = vpop.f32.mrb[0].mxu0
        %2672 = vdwg.mxu0
        %2673 = vrot.lane.b32.xlu0 %v1175, 32
        %v2674 = vpop.permute.xlu0 %2673
        %2675 = vrot.lane.b32.xlu0 %v1187, 32
        %v2676 = vpop.permute.xlu0 %2675
        %v2678 = vsel %vm1200, %v2674, 0
        %v2681 = vsel %vm1200, %v2676, 0
        %2683 = vmatprep.subr.bf16.mxu0 0
        %2684 = vmatpush1.bf16.xpose.msra.mxu0 %v2681
        %2685 = vmatprep.subr.bf16.mxu0 0
        %2686 = vmatpush1.bf16.xpose.msra.mxu0 0
        %2687 = vmatprep.subr.bf16.mxu0 0
        %2688 = vmatpush1.bf16.xpose.msra.mxu0 0
        %2689 = vmatprep.subr.bf16.mxu0 0
        %2690 = vmatpush1.bf16.xpose.msra.mxu0 0
        %2691 = vmatprep.subr.bf16.mxu0 0
        %2692 = vmatpush1.bf16.xpose.msra.mxu0 0
        %2693 = vmatprep.subr.bf16.mxu0 0
        %2694 = vmatpush1.bf16.xpose.msra.mxu0 0
        %2695 = vmatprep.subr.bf16.mxu0 0
        %2696 = vmatpush1.bf16.xpose.msra.mxu0 0
        %2697 = vmatprep.subr.bf16.mxu0 0
        %2698 = vmatpush1.bf16.xpose.msra.mxu0 0
        %2699 = vmatprep.subr.bf16.mxu0 0
        %2700 = vmatpush1.bf16.xpose.msra.mxu0 0
        %2701 = vmatprep.subr.bf16.mxu0 0
        %2702 = vmatpush1.bf16.xpose.msra.mxu0 0
        %2703 = vmatprep.subr.bf16.mxu0 0
        %2704 = vmatpush1.bf16.xpose.msra.mxu0 0
        %2705 = vmatprep.subr.bf16.mxu0 0
        %2706 = vmatpush1.bf16.xpose.msra.mxu0 0
        %2707 = vmatprep.subr.bf16.mxu0 0
        %2708 = vmatpush1.bf16.xpose.msra.mxu0 0
        %2709 = vmatprep.subr.bf16.mxu0 0
        %2710 = vmatpush1.bf16.xpose.msra.mxu0 0
        %2711 = vmatprep.subr.bf16.mxu0 0
        %2712 = vmatpush1.bf16.xpose.msra.mxu0 0
        %2713 = vmatprep.subr.bf16.mxu0 0
        %2714 = vmatpush1.bf16.xpose.msra.mxu0 0
        %2715 = vmatprep.mubr.bf16.mxu0 0
        %2716 = vmatmul.mubr.bf16.gmra.mrb[0].mxu0 %v2678
        %v2717 = vpop.f32.mrb[0].mxu0
        %v2718 = vadd.f32 0.0, %v2717
        %v2719 = vpop.f32.mrb[0].mxu0
        %v2720 = vpop.f32.mrb[0].mxu0
        %v2721 = vpop.f32.mrb[0].mxu0
        %2722 = vdwg.mxu0
        %v2723 = vmul.f32 %v2568, 0.17677669
        %v2724 = vmul.f32 %v2618, 0.17677669
        %v2725 = vmul.f32 %v2668, 0.17677669
        %v2726 = vmul.f32 %v2718, 0.17677669
        %v2727 = vadd.f32 %v2723, %v1160
        %v2728 = vadd.f32 %v2724, %v1161
        %v2729 = vadd.f32 %v2725, %v1162
        %v2730 = vadd.f32 %v2726, %v1163
        %v2731 = vsel %vm1393, %v2727, -inf
        %2732 = vmax.xlane.f32.xlu0 %v2731
        %v2733 = vpop.xlane.xlu0 %2732
        %v2734 = vsel %vm1393, %v2728, -inf
        %2735 = vmax.xlane.f32.xlu0 %v2734
        %v2736 = vpop.xlane.xlu0 %2735
        %v2737 = vsel %vm1393, %v2729, -inf
        %2738 = vmax.xlane.f32.xlu0 %v2737
        %v2739 = vpop.xlane.xlu0 %2738
        %v2740 = vsel %vm1393, %v2730, -inf
        %2741 = vmax.xlane.f32.xlu0 %v2740
        %v2742 = vpop.xlane.xlu0 %2741
        %v2743 = vsub.f32 %v2727, %v2733
        %v2744 = vsub.f32 %v2728, %v2736
        %v2745 = vsub.f32 %v2729, %v2739
        %v2746 = vsub.f32 %v2730, %v2742
        %v2747 = vmul.f32 %v2743, 1.442695
        %v2748 = vpow.pop %v2747
        %v2749 = vmul.f32 %v2744, 1.442695
        %v2750 = vpow.pop %v2749
        %v2751 = vmul.f32 %v2745, 1.442695
        %v2752 = vpow.pop %v2751
        %v2753 = vmul.f32 %v2746, 1.442695
        %v2754 = vpow.pop %v2753
        %v2755 = vsel %vm1393, %v2748, 0.0
        %2756 = vadd.xlane.f32.xlu0 %v2755
        %v2757 = vpop.xlane.xlu0 %2756
        %v2758 = vsel %vm1393, %v2750, 0.0
        %2759 = vadd.xlane.f32.xlu0 %v2758
        %v2760 = vpop.xlane.xlu0 %2759
        %v2761 = vsel %vm1393, %v2752, 0.0
        %2762 = vadd.xlane.f32.xlu0 %v2761
        %v2763 = vpop.xlane.xlu0 %2762
        %v2764 = vsel %vm1393, %v2754, 0.0
        %2765 = vadd.xlane.f32.xlu0 %v2764
        %v2766 = vpop.xlane.xlu0 %2765
        %v2767 = vrcp.pop %v2757
        %v2768 = vrcp.pop %v2760
        %v2769 = vrcp.pop %v2763
        %v2770 = vrcp.pop %v2766
        %v2771 = vmul.f32 %v2748, %v2767
        %v2772 = vmul.f32 %v2750, %v2768
        %v2773 = vmul.f32 %v2752, %v2769
        %v2774 = vmul.f32 %v2754, %v2770
        %v2775 = vpack.c.bf16 %v2771, %v2771
        %v2776 = vpack.c.bf16 %v2772, %v2772
        %v2777 = vpack.c.bf16 %v2773, %v2773
        %v2778 = vpack.c.bf16 %v2774, %v2774
        %2779 = vrot.lane.b32.xlu0 %v1196, 32
        %v2780 = vpop.permute.xlu0 %2779
        %v2782 = vsel %vm1393, %v2775, 0
        %v2785 = vsel %vm1445, %v2780, 0
        %2787 = vmatprep.subr.bf16.mxu0 0
        %2788 = vmatpush1.bf16.msra.mxu0 %v2785
        %2789 = vmatprep.subr.bf16.mxu0 0
        %2790 = vmatpush1.bf16.msra.mxu0 0
        %2791 = vmatprep.subr.bf16.mxu0 0
        %2792 = vmatpush1.bf16.msra.mxu0 0
        %2793 = vmatprep.subr.bf16.mxu0 0
        %2794 = vmatpush1.bf16.msra.mxu0 0
        %2795 = vmatprep.subr.bf16.mxu0 0
        %2796 = vmatpush1.bf16.msra.mxu0 0
        %2797 = vmatprep.subr.bf16.mxu0 0
        %2798 = vmatpush1.bf16.msra.mxu0 0
        %2799 = vmatprep.subr.bf16.mxu0 0
        %2800 = vmatpush1.bf16.msra.mxu0 0
        %2801 = vmatprep.subr.bf16.mxu0 0
        %2802 = vmatpush1.bf16.msra.mxu0 0
        %2803 = vmatprep.subr.bf16.mxu0 0
        %2804 = vmatpush1.bf16.msra.mxu0 0
        %2805 = vmatprep.subr.bf16.mxu0 0
        %2806 = vmatpush1.bf16.msra.mxu0 0
        %2807 = vmatprep.subr.bf16.mxu0 0
        %2808 = vmatpush1.bf16.msra.mxu0 0
        %2809 = vmatprep.subr.bf16.mxu0 0
        %2810 = vmatpush1.bf16.msra.mxu0 0
        %2811 = vmatprep.subr.bf16.mxu0 0
        %2812 = vmatpush1.bf16.msra.mxu0 0
        %2813 = vmatprep.subr.bf16.mxu0 0
        %2814 = vmatpush1.bf16.msra.mxu0 0
        %2815 = vmatprep.subr.bf16.mxu0 0
        %2816 = vmatpush1.bf16.msra.mxu0 0
        %2817 = vmatprep.subr.bf16.mxu0 0
        %2818 = vmatpush1.bf16.msra.mxu0 0
        %2819 = vmatprep.mubr.bf16.mxu0 0
        %2820 = vmatmul.mubr.bf16.gmra.mrb[0].mxu0 %v2782
        %v2821 = vpop.f32.mrb[0].mxu0
        %v2822 = vadd.f32 0.0, %v2821
        %v2823 = vpop.f32.mrb[0].mxu0
        %v2824 = vpop.f32.mrb[0].mxu0
        %v2825 = vpop.f32.mrb[0].mxu0
        %2826 = vdwg.mxu0
        %2827 = vrot.lane.b32.xlu0 %v1197, 32
        %v2828 = vpop.permute.xlu0 %2827
        %v2830 = vsel %vm1393, %v2776, 0
        %v2833 = vsel %vm1445, %v2828, 0
        %2835 = vmatprep.subr.bf16.mxu0 0
        %2836 = vmatpush1.bf16.msra.mxu0 %v2833
        %2837 = vmatprep.subr.bf16.mxu0 0
        %2838 = vmatpush1.bf16.msra.mxu0 0
        %2839 = vmatprep.subr.bf16.mxu0 0
        %2840 = vmatpush1.bf16.msra.mxu0 0
        %2841 = vmatprep.subr.bf16.mxu0 0
        %2842 = vmatpush1.bf16.msra.mxu0 0
        %2843 = vmatprep.subr.bf16.mxu0 0
        %2844 = vmatpush1.bf16.msra.mxu0 0
        %2845 = vmatprep.subr.bf16.mxu0 0
        %2846 = vmatpush1.bf16.msra.mxu0 0
        %2847 = vmatprep.subr.bf16.mxu0 0
        %2848 = vmatpush1.bf16.msra.mxu0 0
        %2849 = vmatprep.subr.bf16.mxu0 0
        %2850 = vmatpush1.bf16.msra.mxu0 0
        %2851 = vmatprep.subr.bf16.mxu0 0
        %2852 = vmatpush1.bf16.msra.mxu0 0
        %2853 = vmatprep.subr.bf16.mxu0 0
        %2854 = vmatpush1.bf16.msra.mxu0 0
        %2855 = vmatprep.subr.bf16.mxu0 0
        %2856 = vmatpush1.bf16.msra.mxu0 0
        %2857 = vmatprep.subr.bf16.mxu0 0
        %2858 = vmatpush1.bf16.msra.mxu0 0
        %2859 = vmatprep.subr.bf16.mxu0 0
        %2860 = vmatpush1.bf16.msra.mxu0 0
        %2861 = vmatprep.subr.bf16.mxu0 0
        %2862 = vmatpush1.bf16.msra.mxu0 0
        %2863 = vmatprep.subr.bf16.mxu0 0
        %2864 = vmatpush1.bf16.msra.mxu0 0
        %2865 = vmatprep.subr.bf16.mxu0 0
        %2866 = vmatpush1.bf16.msra.mxu0 0
        %2867 = vmatprep.mubr.bf16.mxu0 0
        %2868 = vmatmul.mubr.bf16.gmra.mrb[0].mxu0 %v2830
        %v2869 = vpop.f32.mrb[0].mxu0
        %v2870 = vadd.f32 0.0, %v2869
        %v2871 = vpop.f32.mrb[0].mxu0
        %v2872 = vpop.f32.mrb[0].mxu0
        %v2873 = vpop.f32.mrb[0].mxu0
        %2874 = vdwg.mxu0
        %2875 = vrot.lane.b32.xlu0 %v1198, 32
        %v2876 = vpop.permute.xlu0 %2875
        %v2878 = vsel %vm1393, %v2777, 0
        %v2881 = vsel %vm1445, %v2876, 0
        %2883 = vmatprep.subr.bf16.mxu0 0
        %2884 = vmatpush1.bf16.msra.mxu0 %v2881
        %2885 = vmatprep.subr.bf16.mxu0 0
        %2886 = vmatpush1.bf16.msra.mxu0 0
        %2887 = vmatprep.subr.bf16.mxu0 0
        %2888 = vmatpush1.bf16.msra.mxu0 0
        %2889 = vmatprep.subr.bf16.mxu0 0
        %2890 = vmatpush1.bf16.msra.mxu0 0
        %2891 = vmatprep.subr.bf16.mxu0 0
        %2892 = vmatpush1.bf16.msra.mxu0 0
        %2893 = vmatprep.subr.bf16.mxu0 0
        %2894 = vmatpush1.bf16.msra.mxu0 0
        %2895 = vmatprep.subr.bf16.mxu0 0
        %2896 = vmatpush1.bf16.msra.mxu0 0
        %2897 = vmatprep.subr.bf16.mxu0 0
        %2898 = vmatpush1.bf16.msra.mxu0 0
        %2899 = vmatprep.subr.bf16.mxu0 0
        %2900 = vmatpush1.bf16.msra.mxu0 0
        %2901 = vmatprep.subr.bf16.mxu0 0
        %2902 = vmatpush1.bf16.msra.mxu0 0
        %2903 = vmatprep.subr.bf16.mxu0 0
        %2904 = vmatpush1.bf16.msra.mxu0 0
        %2905 = vmatprep.subr.bf16.mxu0 0
        %2906 = vmatpush1.bf16.msra.mxu0 0
        %2907 = vmatprep.subr.bf16.mxu0 0
        %2908 = vmatpush1.bf16.msra.mxu0 0
        %2909 = vmatprep.subr.bf16.mxu0 0
        %2910 = vmatpush1.bf16.msra.mxu0 0
        %2911 = vmatprep.subr.bf16.mxu0 0
        %2912 = vmatpush1.bf16.msra.mxu0 0
        %2913 = vmatprep.subr.bf16.mxu0 0
        %2914 = vmatpush1.bf16.msra.mxu0 0
        %2915 = vmatprep.mubr.bf16.mxu0 0
        %2916 = vmatmul.mubr.bf16.gmra.mrb[0].mxu0 %v2878
        %v2917 = vpop.f32.mrb[0].mxu0
        %v2918 = vadd.f32 0.0, %v2917
        %v2919 = vpop.f32.mrb[0].mxu0
        %v2920 = vpop.f32.mrb[0].mxu0
        %v2921 = vpop.f32.mrb[0].mxu0
        %2922 = vdwg.mxu0
        %2923 = vrot.lane.b32.xlu0 %v1199, 32
        %v2924 = vpop.permute.xlu0 %2923
        %v2926 = vsel %vm1393, %v2778, 0
        %v2929 = vsel %vm1445, %v2924, 0
        %2931 = vmatprep.subr.bf16.mxu0 0
        %2932 = vmatpush1.bf16.msra.mxu0 %v2929
        %2933 = vmatprep.subr.bf16.mxu0 0
        %2934 = vmatpush1.bf16.msra.mxu0 0
        %2935 = vmatprep.subr.bf16.mxu0 0
        %2936 = vmatpush1.bf16.msra.mxu0 0
        %2937 = vmatprep.subr.bf16.mxu0 0
        %2938 = vmatpush1.bf16.msra.mxu0 0
        %2939 = vmatprep.subr.bf16.mxu0 0
        %2940 = vmatpush1.bf16.msra.mxu0 0
        %2941 = vmatprep.subr.bf16.mxu0 0
        %2942 = vmatpush1.bf16.msra.mxu0 0
        %2943 = vmatprep.subr.bf16.mxu0 0
        %2944 = vmatpush1.bf16.msra.mxu0 0
        %2945 = vmatprep.subr.bf16.mxu0 0
        %2946 = vmatpush1.bf16.msra.mxu0 0
        %2947 = vmatprep.subr.bf16.mxu0 0
        %2948 = vmatpush1.bf16.msra.mxu0 0
        %2949 = vmatprep.subr.bf16.mxu0 0
        %2950 = vmatpush1.bf16.msra.mxu0 0
        %2951 = vmatprep.subr.bf16.mxu0 0
        %2952 = vmatpush1.bf16.msra.mxu0 0
        %2953 = vmatprep.subr.bf16.mxu0 0
        %2954 = vmatpush1.bf16.msra.mxu0 0
        %2955 = vmatprep.subr.bf16.mxu0 0
        %2956 = vmatpush1.bf16.msra.mxu0 0
        %2957 = vmatprep.subr.bf16.mxu0 0
        %2958 = vmatpush1.bf16.msra.mxu0 0
        %2959 = vmatprep.subr.bf16.mxu0 0
        %2960 = vmatpush1.bf16.msra.mxu0 0
        %2961 = vmatprep.subr.bf16.mxu0 0
        %2962 = vmatpush1.bf16.msra.mxu0 0
        %2963 = vmatprep.mubr.bf16.mxu0 0
        %2964 = vmatmul.mubr.bf16.gmra.mrb[0].mxu0 %v2926
        %v2965 = vpop.f32.mrb[0].mxu0
        %v2966 = vadd.f32 0.0, %v2965
        %v2967 = vpop.f32.mrb[0].mxu0
        %v2968 = vpop.f32.mrb[0].mxu0
        %v2969 = vpop.f32.mrb[0].mxu0
        %2970 = vdwg.mxu0
        %2975 = vrot.lane.b32.xlu0 %v1926, 32
        %v2976 = vpop.permute.xlu0 %2975
        %2977 = vrot.lane.b32.xlu0 %v1974, 32
        %v2978 = vpop.permute.xlu0 %2977
        %2979 = vrot.lane.b32.xlu0 %v2022, 32
        %v2980 = vpop.permute.xlu0 %2979
        %2981 = vrot.lane.b32.xlu0 %v2070, 32
        %v2982 = vpop.permute.xlu0 %2981
        %2991 = vrot.lane.b32.xlu0 %v2374, 64
        %v2992 = vpop.permute.xlu0 %2991
        %2993 = vrot.lane.b32.xlu0 %v2422, 64
        %v2994 = vpop.permute.xlu0 %2993
        %2995 = vrot.lane.b32.xlu0 %v2470, 64
        %v2996 = vpop.permute.xlu0 %2995
        %2997 = vrot.lane.b32.xlu0 %v2518, 64
        %v2998 = vpop.permute.xlu0 %2997
        %3007 = vrot.lane.b32.xlu0 %v2822, 96
        %v3008 = vpop.permute.xlu0 %3007
        %3009 = vrot.lane.b32.xlu0 %v2870, 96
        %v3010 = vpop.permute.xlu0 %3009
        %3011 = vrot.lane.b32.xlu0 %v2918, 96
        %v3012 = vpop.permute.xlu0 %3011
        %3013 = vrot.lane.b32.xlu0 %v2966, 96
        %v3014 = vpop.permute.xlu0 %3013
        %v3019 = vsel %vm1200, %v1484, %v2976
        %v3020 = vsel %vm1200, %v1530, %v2978
        %v3021 = vsel %vm1200, %v1576, %v2980
        %v3022 = vsel %vm1200, %v1622, %v2982
        %vm3023 = vcmask 523264
        %v3024 = vsel %vm3023, %v3019, %v2992
        %v3025 = vsel %vm3023, %v3020, %v2994
        %v3026 = vsel %vm3023, %v3021, %v2996
        %v3027 = vsel %vm3023, %v3022, %v2998
        %vm3028 = vcmask 785408
        %v3029 = vsel %vm3028, %v3024, %v3008
        %v3030 = vsel %vm3028, %v3025, %v3010
        %v3031 = vsel %vm3028, %v3026, %v3012
        %v3032 = vsel %vm3028, %v3027, %v3014
        %v3033 = vld [vmem:[#allocation16] sm:$0xf]
        %v3034 = vld [vmem:[#allocation16 + $0x4] sm:$0xf]
        %v3035 = vld [vmem:[#allocation16 + $0x8] sm:$0xf]
        %v3036 = vld [vmem:[#allocation16 + $0xc] sm:$0xf]
        %v3037 = vld [vmem:[#allocation16 + $0x10] sm:$0xf]
        %v3038 = vld [vmem:[#allocation16 + $0x14] sm:$0xf]
        %v3039 = vld [vmem:[#allocation16 + $0x18] sm:$0xf]
        %v3040 = vld [vmem:[#allocation16 + $0x1c] sm:$0xf]
        %v3041 = vld [vmem:[#allocation16 + $0x20] sm:$0xf]
        %v3042 = vld [vmem:[#allocation16 + $0x24] sm:$0xf]
        %v3043 = vld [vmem:[#allocation16 + $0x28] sm:$0xf]
        %v3044 = vld [vmem:[#allocation16 + $0x2c] sm:$0xf]
        %v3045 = vld [vmem:[#allocation16 + $0x30] sm:$0xf]
        %v3046 = vld [vmem:[#allocation16 + $0x34] sm:$0xf]
        %v3047 = vld [vmem:[#allocation16 + $0x38] sm:$0xf]
        %v3048 = vld [vmem:[#allocation16 + $0x3c] sm:$0xf]
        %v3049 = vpack.c.bf16 %v3030, %v3029
        %v3050 = vpack.c.bf16 %v3032, %v3031
        %v3051 = vld [vmem:[#allocation17] sm:$0x1]
        %v3053 = vlaneseq
        %v3054 = vshrl.u32 %v3053, 7
        %v3055 = vsub.s32 0, %v3054
        %v3056 = vrot.slane %v3051, %v3055
        %v3074 = vunpack.c.l.b16 %v3033
        %v3075 = vunpack.c.l.b16 %v3034
        %v3076 = vunpack.c.l.b16 %v3035
        %v3077 = vunpack.c.l.b16 %v3036
        %v3078 = vunpack.c.l.b16 %v3037
        %v3079 = vunpack.c.l.b16 %v3038
        %v3080 = vunpack.c.l.b16 %v3039
        %v3081 = vunpack.c.l.b16 %v3040
        %v3082 = vunpack.c.l.b16 %v3041
        %v3083 = vunpack.c.l.b16 %v3042
        %v3084 = vunpack.c.l.b16 %v3043
        %v3085 = vunpack.c.l.b16 %v3044
        %v3086 = vunpack.c.l.b16 %v3045
        %v3087 = vunpack.c.l.b16 %v3046
        %v3088 = vunpack.c.l.b16 %v3047
        %v3089 = vunpack.c.l.b16 %v3048
        %v3090 = vpack.c.b16 %v3075, %v3074
        %v3091 = vpack.c.b16 %v3077, %v3076
        %v3092 = vpack.c.b16 %v3079, %v3078
        %v3093 = vpack.c.b16 %v3081, %v3080
        %v3094 = vpack.c.b16 %v3083, %v3082
        %v3095 = vpack.c.b16 %v3085, %v3084
        %v3096 = vpack.c.b16 %v3087, %v3086
        %v3097 = vpack.c.b16 %v3089, %v3088
        %3106 = vmatprep.subr.bf16.mxu0 0
        %3107 = vmatpush1.bf16.msra.mxu0 %v3090
        %3108 = vmatprep.subr.bf16.mxu0 0
        %3109 = vmatpush1.bf16.msra.mxu0 %v3091
        %3110 = vmatprep.subr.bf16.mxu0 0
        %3111 = vmatpush1.bf16.msra.mxu0 %v3092
        %3112 = vmatprep.subr.bf16.mxu0 0
        %3113 = vmatpush1.bf16.msra.mxu0 %v3093
        %3114 = vmatprep.subr.bf16.mxu0 0
        %3115 = vmatpush1.bf16.msra.mxu0 %v3094
        %3116 = vmatprep.subr.bf16.mxu0 0
        %3117 = vmatpush1.bf16.msra.mxu0 %v3095
        %3118 = vmatprep.subr.bf16.mxu0 0
        %3119 = vmatpush1.bf16.msra.mxu0 %v3096
        %3120 = vmatprep.subr.bf16.mxu0 0
        %3121 = vmatpush1.bf16.msra.mxu0 %v3097
        %3122 = vmatprep.subr.bf16.mxu0 0
        %3123 = vmatpush1.bf16.msra.mxu0 0
        %3124 = vmatprep.subr.bf16.mxu0 0
        %3125 = vmatpush1.bf16.msra.mxu0 0
        %3126 = vmatprep.subr.bf16.mxu0 0
        %3127 = vmatpush1.bf16.msra.mxu0 0
        %3128 = vmatprep.subr.bf16.mxu0 0
        %3129 = vmatpush1.bf16.msra.mxu0 0
        %3130 = vmatprep.subr.bf16.mxu0 0
        %3131 = vmatpush1.bf16.msra.mxu0 0
        %3132 = vmatprep.subr.bf16.mxu0 0
        %3133 = vmatpush1.bf16.msra.mxu0 0
        %3134 = vmatprep.subr.bf16.mxu0 0
        %3135 = vmatpush1.bf16.msra.mxu0 0
        %3136 = vmatprep.subr.bf16.mxu0 0
        %3137 = vmatpush1.bf16.msra.mxu0 0
        %3138 = vmatprep.mubr.bf16.mxu0 0
        %3139 = vmatmul.mubr.bf16.gmra.mrb[0].mxu0 %v3049
        %v3140 = vpop.f32.mrb[0].mxu0
        %v3141 = vadd.f32 %v3056, %v3140
        %v3142 = vpop.f32.mrb[0].mxu0
        %v3143 = vpop.f32.mrb[0].mxu0
        %v3144 = vadd.f32 %v3056, %v3143
        %v3145 = vpop.f32.mrb[0].mxu0
        %3146 = vmatprep.mubr.bf16.mxu0 0
        %3147 = vmatmul.mubr.bf16.gmra.mrb[0].mxu0 %v3050
        %v3148 = vpop.f32.mrb[0].mxu0
        %v3149 = vadd.f32 %v3056, %v3148
        %v3150 = vpop.f32.mrb[0].mxu0
        %v3151 = vpop.f32.mrb[0].mxu0
        %v3152 = vadd.f32 %v3056, %v3151
        %v3153 = vpop.f32.mrb[0].mxu0
        %3154 = vdwg.mxu0
        %v3155 = vadd.f32 %v863, %v3141
        %v3156 = vadd.f32 %v864, %v3144
        %v3157 = vadd.f32 %v865, %v3149
        %v3158 = vadd.f32 %v866, %v3152
        %3159 = vadd.xlane.f32.xlu0 %v3155
        %v3160 = vpop.xlane.xlu0 %3159
        %3161 = vadd.xlane.f32.xlu0 %v3156
        %v3162 = vpop.xlane.xlu0 %3161
        %3163 = vadd.xlane.f32.xlu0 %v3157
        %v3164 = vpop.xlane.xlu0 %3163
        %3165 = vadd.xlane.f32.xlu0 %v3158
        %v3166 = vpop.xlane.xlu0 %3165
        %v3167 = vrcp.pop 128.0
        %v3168 = vmul.f32 %v3160, %v3167
        %v3169 = vmul.f32 %v3162, %v3167
        %v3170 = vmul.f32 %v3164, %v3167
        %v3171 = vmul.f32 %v3166, %v3167
        %v3172 = vsub.f32 %v3155, %v3168
        %v3173 = vsub.f32 %v3156, %v3169
        %v3174 = vsub.f32 %v3157, %v3170
        %v3175 = vsub.f32 %v3158, %v3171
        %v3176 = vmul.f32 %v3172, %v3172
        %v3177 = vmul.f32 %v3173, %v3173
        %v3178 = vmul.f32 %v3174, %v3174
        %v3179 = vmul.f32 %v3175, %v3175
        %3180 = vadd.xlane.f32.xlu0 %v3176
        %v3181 = vpop.xlane.xlu0 %3180
        %3182 = vadd.xlane.f32.xlu0 %v3177
        %v3183 = vpop.xlane.xlu0 %3182
        %3184 = vadd.xlane.f32.xlu0 %v3178
        %v3185 = vpop.xlane.xlu0 %3184
        %3186 = vadd.xlane.f32.xlu0 %v3179
        %v3187 = vpop.xlane.xlu0 %3186
        %v3188 = vmul.f32 %v3181, %v3167
        %v3189 = vmul.f32 %v3183, %v3167
        %v3190 = vmul.f32 %v3185, %v3167
        %v3191 = vmul.f32 %v3187, %v3167
        %v3192 = vadd.f32 %v3188, 1e-05
        %v3193 = vadd.f32 %v3189, 1e-05
        %v3194 = vadd.f32 %v3190, 1e-05
        %v3195 = vadd.f32 %v3191, 1e-05
        %v3196 = vrsqrt.pop %v3192
        %v3197 = vrsqrt.pop %v3193
        %v3198 = vrsqrt.pop %v3194
        %v3199 = vrsqrt.pop %v3195
        %v3200 = vmul.f32 %v3172, %v3196
        %v3201 = vmul.f32 %v3173, %v3197
        %v3202 = vmul.f32 %v3174, %v3198
        %v3203 = vmul.f32 %v3175, %v3199
        %v3204 = vld [vmem:[%s16] sm:$0x1]
        %v3205 = vlaneseq
        %v3206 = vshrl.u32 %v3205, 7
        %v3207 = vsub.s32 0, %v3206
        %v3208 = vrot.slane %v3204, %v3207
        %v3209 = vmul.f32 %v3200, %v3208
        %v3210 = vmul.f32 %v3201, %v3208
        %v3211 = vmul.f32 %v3202, %v3208
        %v3212 = vmul.f32 %v3203, %v3208
        %v3213 = vld [vmem:[#allocation25] sm:$0x1]
        %v3214 = vlaneseq
        %v3215 = vshrl.u32 %v3214, 7
        %v3216 = vsub.s32 0, %v3215
        %v3217 = vrot.slane %v3213, %v3216
        %v3218 = vadd.f32 %v3209, %v3217
        %v3219 = vadd.f32 %v3210, %v3217
        %v3220 = vadd.f32 %v3211, %v3217
        %v3221 = vadd.f32 %v3212, %v3217
        %v3222 = vld [vmem:[#allocation10] sm:$0xf]
        %v3223 = vld [vmem:[#allocation10 + $0x4] sm:$0xf]
        %v3224 = vld [vmem:[#allocation10 + $0x8] sm:$0xf]
        %v3225 = vld [vmem:[#allocation10 + $0xc] sm:$0xf]
        %v3226 = vld [vmem:[#allocation10 + $0x10] sm:$0xf]
        %v3227 = vld [vmem:[#allocation10 + $0x14] sm:$0xf]
        %v3228 = vld [vmem:[#allocation10 + $0x18] sm:$0xf]
        %v3229 = vld [vmem:[#allocation10 + $0x1c] sm:$0xf]
        %v3230 = vld [vmem:[#allocation10 + $0x20] sm:$0xf]
        %v3231 = vld [vmem:[#allocation10 + $0x24] sm:$0xf]
        %v3232 = vld [vmem:[#allocation10 + $0x28] sm:$0xf]
        %v3233 = vld [vmem:[#allocation10 + $0x2c] sm:$0xf]
        %v3234 = vld [vmem:[#allocation10 + $0x30] sm:$0xf]
        %v3235 = vld [vmem:[#allocation10 + $0x34] sm:$0xf]
        %v3236 = vld [vmem:[#allocation10 + $0x38] sm:$0xf]
        %v3237 = vld [vmem:[#allocation10 + $0x3c] sm:$0xf]
        %v3238 = vpack.c.bf16 %v3219, %v3218
        %v3239 = vpack.c.bf16 %v3221, %v3220
        %v3240 = vld [vmem:[#allocation11] sm:$0x1]
        %v3242 = vlaneseq
        %v3243 = vshrl.u32 %v3242, 7
        %v3244 = vsub.s32 0, %v3243
        %v3245 = vrot.slane %v3240, %v3244
        %v3263 = vunpack.c.l.b16 %v3222
        %v3264 = vunpack.c.l.b16 %v3223
        %v3265 = vunpack.c.l.b16 %v3224
        %v3266 = vunpack.c.l.b16 %v3225
        %v3267 = vunpack.c.l.b16 %v3226
        %v3268 = vunpack.c.l.b16 %v3227
        %v3269 = vunpack.c.l.b16 %v3228
        %v3270 = vunpack.c.l.b16 %v3229
        %v3271 = vunpack.c.l.b16 %v3230
        %v3272 = vunpack.c.l.b16 %v3231
        %v3273 = vunpack.c.l.b16 %v3232
        %v3274 = vunpack.c.l.b16 %v3233
        %v3275 = vunpack.c.l.b16 %v3234
        %v3276 = vunpack.c.l.b16 %v3235
        %v3277 = vunpack.c.l.b16 %v3236
        %v3278 = vunpack.c.l.b16 %v3237
        %v3279 = vpack.c.b16 %v3264, %v3263
        %v3280 = vpack.c.b16 %v3266, %v3265
        %v3281 = vpack.c.b16 %v3268, %v3267
        %v3282 = vpack.c.b16 %v3270, %v3269
        %v3283 = vpack.c.b16 %v3272, %v3271
        %v3284 = vpack.c.b16 %v3274, %v3273
        %v3285 = vpack.c.b16 %v3276, %v3275
        %v3286 = vpack.c.b16 %v3278, %v3277
        %3295 = vmatprep.subr.bf16.mxu0 0
        %3296 = vmatpush1.bf16.msra.mxu0 %v3279
        %3297 = vmatprep.subr.bf16.mxu0 0
        %3298 = vmatpush1.bf16.msra.mxu0 %v3280
        %3299 = vmatprep.subr.bf16.mxu0 0
        %3300 = vmatpush1.bf16.msra.mxu0 %v3281
        %3301 = vmatprep.subr.bf16.mxu0 0
        %3302 = vmatpush1.bf16.msra.mxu0 %v3282
        %3303 = vmatprep.subr.bf16.mxu0 0
        %3304 = vmatpush1.bf16.msra.mxu0 %v3283
        %3305 = vmatprep.subr.bf16.mxu0 0
        %3306 = vmatpush1.bf16.msra.mxu0 %v3284
        %3307 = vmatprep.subr.bf16.mxu0 0
        %3308 = vmatpush1.bf16.msra.mxu0 %v3285
        %3309 = vmatprep.subr.bf16.mxu0 0
        %3310 = vmatpush1.bf16.msra.mxu0 %v3286
        %3311 = vmatprep.subr.bf16.mxu0 0
        %3312 = vmatpush1.bf16.msra.mxu0 0
        %3313 = vmatprep.subr.bf16.mxu0 0
        %3314 = vmatpush1.bf16.msra.mxu0 0
        %3315 = vmatprep.subr.bf16.mxu0 0
        %3316 = vmatpush1.bf16.msra.mxu0 0
        %3317 = vmatprep.subr.bf16.mxu0 0
        %3318 = vmatpush1.bf16.msra.mxu0 0
        %3319 = vmatprep.subr.bf16.mxu0 0
        %3320 = vmatpush1.bf16.msra.mxu0 0
        %3321 = vmatprep.subr.bf16.mxu0 0
        %3322 = vmatpush1.bf16.msra.mxu0 0
        %3323 = vmatprep.subr.bf16.mxu0 0
        %3324 = vmatpush1.bf16.msra.mxu0 0
        %3325 = vmatprep.subr.bf16.mxu0 0
        %3326 = vmatpush1.bf16.msra.mxu0 0
        %3327 = vmatprep.mubr.bf16.mxu0 0
        %3328 = vmatmul.mubr.bf16.gmra.mrb[0].mxu0 %v3238
        %v3329 = vpop.f32.mrb[0].mxu0
        %v3330 = vadd.f32 %v3245, %v3329
        %v3331 = vpop.f32.mrb[0].mxu0
        %v3332 = vpop.f32.mrb[0].mxu0
        %v3333 = vadd.f32 %v3245, %v3332
        %v3334 = vpop.f32.mrb[0].mxu0
        %3335 = vmatprep.mubr.bf16.mxu0 0
        %3336 = vmatmul.mubr.bf16.gmra.mrb[0].mxu0 %v3239
        %v3337 = vpop.f32.mrb[0].mxu0
        %v3338 = vadd.f32 %v3245, %v3337
        %v3339 = vpop.f32.mrb[0].mxu0
        %v3340 = vpop.f32.mrb[0].mxu0
        %v3341 = vadd.f32 %v3245, %v3340
        %v3342 = vpop.f32.mrb[0].mxu0
        %3343 = vdwg.mxu0
        %v3344 = vld [vmem:[#allocation13] sm:$0xff]
        %v3345 = vld [vmem:[#allocation13 + $0x8] sm:$0xff]
        %v3346 = vld [vmem:[#allocation13 + $0x10] sm:$0xff]
        %v3347 = vld [vmem:[#allocation13 + $0x18] sm:$0xff]
        %v3348 = vld [vmem:[#allocation13 + $0x20] sm:$0xff]
        %v3349 = vld [vmem:[#allocation13 + $0x28] sm:$0xff]
        %v3350 = vld [vmem:[#allocation13 + $0x30] sm:$0xff]
        %v3351 = vld [vmem:[#allocation13 + $0x38] sm:$0xff]
        %v3352 = vld [vmem:[#allocation13 + $0x40] sm:$0xff]
        %v3353 = vld [vmem:[#allocation13 + $0x48] sm:$0xff]
        %v3354 = vld [vmem:[#allocation13 + $0x50] sm:$0xff]
        %v3355 = vld [vmem:[#allocation13 + $0x58] sm:$0xff]
        %v3356 = vld [vmem:[#allocation13 + $0x60] sm:$0xff]
        %v3357 = vld [vmem:[#allocation13 + $0x68] sm:$0xff]
        %v3358 = vld [vmem:[#allocation13 + $0x70] sm:$0xff]
        %v3359 = vld [vmem:[#allocation13 + $0x78] sm:$0xff]
        %v3360 = vpack.c.bf16 %v868, %v867
        %v3361 = vpack.c.bf16 %v870, %v869
        %v3362 = vpack.c.bf16 %v872, %v871
        %v3363 = vpack.c.bf16 %v874, %v873
        %v3364 = vld [vmem:[#allocation14] sm:$0x3]
        %v3366 = vlaneseq
        %v3367 = vshrl.u32 %v3366, 7
        %v3368 = vsub.s32 0, %v3367
        %v3369 = vrot.slane %v3364, %v3368
        %v3370 = vlaneseq
        %v3371 = vshrl.u32 %v3370, 7
        %v3372 = vsub.s32 1, %v3371
        %v3373 = vrot.slane %v3364, %v3372
        %v3392 = vunpack.c.l.b16 %v3344
        %v3393 = vunpack.c.h.b16 %v3344
        %v3394 = vunpack.c.l.b16 %v3345
        %v3395 = vunpack.c.h.b16 %v3345
        %v3396 = vunpack.c.l.b16 %v3346
        %v3397 = vunpack.c.h.b16 %v3346
        %v3398 = vunpack.c.l.b16 %v3347
        %v3399 = vunpack.c.h.b16 %v3347
        %v3400 = vunpack.c.l.b16 %v3348
        %v3401 = vunpack.c.h.b16 %v3348
        %v3402 = vunpack.c.l.b16 %v3349
        %v3403 = vunpack.c.h.b16 %v3349
        %v3404 = vunpack.c.l.b16 %v3350
        %v3405 = vunpack.c.h.b16 %v3350
        %v3406 = vunpack.c.l.b16 %v3351
        %v3407 = vunpack.c.h.b16 %v3351
        %v3408 = vunpack.c.l.b16 %v3352
        %v3409 = vunpack.c.h.b16 %v3352
        %v3410 = vunpack.c.l.b16 %v3353
        %v3411 = vunpack.c.h.b16 %v3353
        %v3412 = vunpack.c.l.b16 %v3354
        %v3413 = vunpack.c.h.b16 %v3354
        %v3414 = vunpack.c.l.b16 %v3355
        %v3415 = vunpack.c.h.b16 %v3355
        %v3416 = vunpack.c.l.b16 %v3356
        %v3417 = vunpack.c.h.b16 %v3356
        %v3418 = vunpack.c.l.b16 %v3357
        %v3419 = vunpack.c.h.b16 %v3357
        %v3420 = vunpack.c.l.b16 %v3358
        %v3421 = vunpack.c.h.b16 %v3358
        %v3422 = vunpack.c.l.b16 %v3359
        %v3423 = vunpack.c.h.b16 %v3359
        %v3424 = vpack.c.b16 %v3394, %v3392
        %v3425 = vpack.c.b16 %v3395, %v3393
        %v3426 = vpack.c.b16 %v3398, %v3396
        %v3427 = vpack.c.b16 %v3399, %v3397
        %v3428 = vpack.c.b16 %v3402, %v3400
        %v3429 = vpack.c.b16 %v3403, %v3401
        %v3430 = vpack.c.b16 %v3406, %v3404
        %v3431 = vpack.c.b16 %v3407, %v3405
        %v3432 = vpack.c.b16 %v3410, %v3408
        %v3433 = vpack.c.b16 %v3411, %v3409
        %v3434 = vpack.c.b16 %v3414, %v3412
        %v3435 = vpack.c.b16 %v3415, %v3413
        %v3436 = vpack.c.b16 %v3418, %v3416
        %v3437 = vpack.c.b16 %v3419, %v3417
        %v3438 = vpack.c.b16 %v3422, %v3420
        %v3439 = vpack.c.b16 %v3423, %v3421
        %3456 = vmatprep.subr.bf16.mxu0 %v3425
        %3457 = vmatpush1.bf16.msra.mxu0 %v3424
        %3458 = vmatprep.subr.bf16.mxu0 %v3427
        %3459 = vmatpush1.bf16.msra.mxu0 %v3426
        %3460 = vmatprep.subr.bf16.mxu0 %v3429
        %3461 = vmatpush1.bf16.msra.mxu0 %v3428
        %3462 = vmatprep.subr.bf16.mxu0 %v3431
        %3463 = vmatpush1.bf16.msra.mxu0 %v3430
        %3464 = vmatprep.subr.bf16.mxu0 %v3433
        %3465 = vmatpush1.bf16.msra.mxu0 %v3432
        %3466 = vmatprep.subr.bf16.mxu0 %v3435
        %3467 = vmatpush1.bf16.msra.mxu0 %v3434
        %3468 = vmatprep.subr.bf16.mxu0 %v3437
        %3469 = vmatpush1.bf16.msra.mxu0 %v3436
        %3470 = vmatprep.subr.bf16.mxu0 %v3439
        %3471 = vmatpush1.bf16.msra.mxu0 %v3438
        %3472 = vmatprep.subr.bf16.mxu0 0
        %3473 = vmatpush1.bf16.msra.mxu0 0
        %3474 = vmatprep.subr.bf16.mxu0 0
        %3475 = vmatpush1.bf16.msra.mxu0 0
        %3476 = vmatprep.subr.bf16.mxu0 0
        %3477 = vmatpush1.bf16.msra.mxu0 0
        %3478 = vmatprep.subr.bf16.mxu0 0
        %3479 = vmatpush1.bf16.msra.mxu0 0
        %3480 = vmatprep.subr.bf16.mxu0 0
        %3481 = vmatpush1.bf16.msra.mxu0 0
        %3482 = vmatprep.subr.bf16.mxu0 0
        %3483 = vmatpush1.bf16.msra.mxu0 0
        %3484 = vmatprep.subr.bf16.mxu0 0
        %3485 = vmatpush1.bf16.msra.mxu0 0
        %3486 = vmatprep.subr.bf16.mxu0 0
        %3487 = vmatpush1.bf16.msra.mxu0 0
        %3488 = vmatprep.mubr.bf16.mxu0 0
        %3489 = vmatmul.mubr.bf16.gmra.mrb[0].mxu0 %v3360
        %v3490 = vpop.f32.mrb[0].mxu0
        %v3491 = vadd.f32 %v3369, %v3490
        %v3492 = vpop.f32.mrb[0].mxu0
        %v3493 = vadd.f32 %v3373, %v3492
        %v3494 = vpop.f32.mrb[0].mxu0
        %v3495 = vadd.f32 %v3369, %v3494
        %v3496 = vpop.f32.mrb[0].mxu0
        %v3497 = vadd.f32 %v3373, %v3496
        %3498 = vmatprep.mubr.bf16.mxu0 0
        %3499 = vmatmul.mubr.bf16.gmra.mrb[0].mxu0 %v3361
        %v3500 = vpop.f32.mrb[0].mxu0
        %v3501 = vadd.f32 %v3369, %v3500
        %v3502 = vpop.f32.mrb[0].mxu0
        %v3503 = vadd.f32 %v3373, %v3502
        %v3504 = vpop.f32.mrb[0].mxu0
        %v3505 = vadd.f32 %v3369, %v3504
        %v3506 = vpop.f32.mrb[0].mxu0
        %v3507 = vadd.f32 %v3373, %v3506
        %3508 = vmatprep.mubr.bf16.mxu0 0
        %3509 = vmatmul.mubr.bf16.gmra.mrb[0].mxu0 %v3362
        %v3510 = vpop.f32.mrb[0].mxu0
        %v3511 = vadd.f32 %v3369, %v3510
        %v3512 = vpop.f32.mrb[0].mxu0
        %v3513 = vadd.f32 %v3373, %v3512
        %v3514 = vpop.f32.mrb[0].mxu0
        %v3515 = vadd.f32 %v3369, %v3514
        %v3516 = vpop.f32.mrb[0].mxu0
        %v3517 = vadd.f32 %v3373, %v3516
        %3518 = vmatprep.mubr.bf16.mxu0 0
        %3519 = vmatmul.mubr.bf16.gmra.mrb[0].mxu0 %v3363
        %v3520 = vpop.f32.mrb[0].mxu0
        %v3521 = vadd.f32 %v3369, %v3520
        %v3522 = vpop.f32.mrb[0].mxu0
        %v3523 = vadd.f32 %v3373, %v3522
        %v3524 = vpop.f32.mrb[0].mxu0
        %v3525 = vadd.f32 %v3369, %v3524
        %v3526 = vpop.f32.mrb[0].mxu0
        %v3527 = vadd.f32 %v3373, %v3526
        %3528 = vdwg.mxu0
        %v3529 = vld [vmem:[%s736] sm:$0x1]
        %v3530 = vld [vmem:[%s736 + $0x1] sm:$0x1]
        %v3531 = vld [vmem:[%s736 + $0x2] sm:$0x1]
        %v3532 = vld [vmem:[%s736 + $0x3] sm:$0x1]
        %v3533 = vmul.f32 %v3529, -1e+09
        %v3534 = vmul.f32 %v3530, -1e+09
        %v3535 = vmul.f32 %v3531, -1e+09
        %v3536 = vmul.f32 %v3532, -1e+09
        %v3537 = vpack.c.bf16 %v3333, %v3330
        %v3538 = vpack.c.bf16 %v3341, %v3338
        %v3541 = vunpack.c.l.b16 %v3537
        %v3542 = vunpack.c.h.b16 %v3537
        %v3543 = vunpack.c.l.b16 %v3538
        %v3544 = vunpack.c.h.b16 %v3538
        %v3545 = vpack.c.b16 %v3541, %v3541
        %v3546 = vpack.c.b16 %v3542, %v3542
        %v3547 = vpack.c.b16 %v3543, %v3543
        %v3548 = vpack.c.b16 %v3544, %v3544
        %v3549 = vpack.c.bf16 %v3495, %v3491
        %v3550 = vpack.c.bf16 %v3505, %v3501
        %v3551 = vpack.c.bf16 %v3515, %v3511
        %v3552 = vpack.c.bf16 %v3525, %v3521
        %v3553 = vpack.c.bf16 %v3497, %v3493
        %v3554 = vpack.c.bf16 %v3507, %v3503
        %v3555 = vpack.c.bf16 %v3517, %v3513
        %v3556 = vpack.c.bf16 %v3527, %v3523
        %v3558 = vsel %vm1200, %v3545, 0
        %v3561 = vsel %vm1200, %v3549, 0
        %3563 = vmatprep.subr.bf16.mxu0 0
        %3564 = vmatpush1.bf16.xpose.msra.mxu0 %v3561
        %3565 = vmatprep.subr.bf16.mxu0 0
        %3566 = vmatpush1.bf16.xpose.msra.mxu0 0
        %3567 = vmatprep.subr.bf16.mxu0 0
        %3568 = vmatpush1.bf16.xpose.msra.mxu0 0
        %3569 = vmatprep.subr.bf16.mxu0 0
        %3570 = vmatpush1.bf16.xpose.msra.mxu0 0
        %3571 = vmatprep.subr.bf16.mxu0 0
        %3572 = vmatpush1.bf16.xpose.msra.mxu0 0
        %3573 = vmatprep.subr.bf16.mxu0 0
        %3574 = vmatpush1.bf16.xpose.msra.mxu0 0
        %3575 = vmatprep.subr.bf16.mxu0 0
        %3576 = vmatpush1.bf16.xpose.msra.mxu0 0
        %3577 = vmatprep.subr.bf16.mxu0 0
        %3578 = vmatpush1.bf16.xpose.msra.mxu0 0
        %3579 = vmatprep.subr.bf16.mxu0 0
        %3580 = vmatpush1.bf16.xpose.msra.mxu0 0
        %3581 = vmatprep.subr.bf16.mxu0 0
        %3582 = vmatpush1.bf16.xpose.msra.mxu0 0
        %3583 = vmatprep.subr.bf16.mxu0 0
        %3584 = vmatpush1.bf16.xpose.msra.mxu0 0
        %3585 = vmatprep.subr.bf16.mxu0 0
        %3586 = vmatpush1.bf16.xpose.msra.mxu0 0
        %3587 = vmatprep.subr.bf16.mxu0 0
        %3588 = vmatpush1.bf16.xpose.msra.mxu0 0
        %3589 = vmatprep.subr.bf16.mxu0 0
        %3590 = vmatpush1.bf16.xpose.msra.mxu0 0
        %3591 = vmatprep.subr.bf16.mxu0 0
        %3592 = vmatpush1.bf16.xpose.msra.mxu0 0
        %3593 = vmatprep.subr.bf16.mxu0 0
        %3594 = vmatpush1.bf16.xpose.msra.mxu0 0
        %3595 = vmatprep.mubr.bf16.mxu0 0
        %3596 = vmatmul.mubr.bf16.gmra.mrb[0].mxu0 %v3558
        %v3597 = vpop.f32.mrb[0].mxu0
        %v3598 = vadd.f32 0.0, %v3597
        %v3599 = vpop.f32.mrb[0].mxu0
        %v3600 = vpop.f32.mrb[0].mxu0
        %v3601 = vpop.f32.mrb[0].mxu0
        %3602 = vdwg.mxu0
        %v3604 = vsel %vm1200, %v3546, 0
        %v3607 = vsel %vm1200, %v3550, 0
        %3609 = vmatprep.subr.bf16.mxu0 0
        %3610 = vmatpush1.bf16.xpose.msra.mxu0 %v3607
        %3611 = vmatprep.subr.bf16.mxu0 0
        %3612 = vmatpush1.bf16.xpose.msra.mxu0 0
        %3613 = vmatprep.subr.bf16.mxu0 0
        %3614 = vmatpush1.bf16.xpose.msra.mxu0 0
        %3615 = vmatprep.subr.bf16.mxu0 0
        %3616 = vmatpush1.bf16.xpose.msra.mxu0 0
        %3617 = vmatprep.subr.bf16.mxu0 0
        %3618 = vmatpush1.bf16.xpose.msra.mxu0 0
        %3619 = vmatprep.subr.bf16.mxu0 0
        %3620 = vmatpush1.bf16.xpose.msra.mxu0 0
        %3621 = vmatprep.subr.bf16.mxu0 0
        %3622 = vmatpush1.bf16.xpose.msra.mxu0 0
        %3623 = vmatprep.subr.bf16.mxu0 0
        %3624 = vmatpush1.bf16.xpose.msra.mxu0 0
        %3625 = vmatprep.subr.bf16.mxu0 0
        %3626 = vmatpush1.bf16.xpose.msra.mxu0 0
        %3627 = vmatprep.subr.bf16.mxu0 0
        %3628 = vmatpush1.bf16.xpose.msra.mxu0 0
        %3629 = vmatprep.subr.bf16.mxu0 0
        %3630 = vmatpush1.bf16.xpose.msra.mxu0 0
        %3631 = vmatprep.subr.bf16.mxu0 0
        %3632 = vmatpush1.bf16.xpose.msra.mxu0 0
        %3633 = vmatprep.subr.bf16.mxu0 0
        %3634 = vmatpush1.bf16.xpose.msra.mxu0 0
        %3635 = vmatprep.subr.bf16.mxu0 0
        %3636 = vmatpush1.bf16.xpose.msra.mxu0 0
        %3637 = vmatprep.subr.bf16.mxu0 0
        %3638 = vmatpush1.bf16.xpose.msra.mxu0 0
        %3639 = vmatprep.subr.bf16.mxu0 0
        %3640 = vmatpush1.bf16.xpose.msra.mxu0 0
        %3641 = vmatprep.mubr.bf16.mxu0 0
        %3642 = vmatmul.mubr.bf16.gmra.mrb[0].mxu0 %v3604
        %v3643 = vpop.f32.mrb[0].mxu0
        %v3644 = vadd.f32 0.0, %v3643
        %v3645 = vpop.f32.mrb[0].mxu0
        %v3646 = vpop.f32.mrb[0].mxu0
        %v3647 = vpop.f32.mrb[0].mxu0
        %3648 = vdwg.mxu0
        %v3650 = vsel %vm1200, %v3547, 0
        %v3653 = vsel %vm1200, %v3551, 0
        %3655 = vmatprep.subr.bf16.mxu0 0
        %3656 = vmatpush1.bf16.xpose.msra.mxu0 %v3653
        %3657 = vmatprep.subr.bf16.mxu0 0
        %3658 = vmatpush1.bf16.xpose.msra.mxu0 0
        %3659 = vmatprep.subr.bf16.mxu0 0
        %3660 = vmatpush1.bf16.xpose.msra.mxu0 0
        %3661 = vmatprep.subr.bf16.mxu0 0
        %3662 = vmatpush1.bf16.xpose.msra.mxu0 0
        %3663 = vmatprep.subr.bf16.mxu0 0
        %3664 = vmatpush1.bf16.xpose.msra.mxu0 0
        %3665 = vmatprep.subr.bf16.mxu0 0
        %3666 = vmatpush1.bf16.xpose.msra.mxu0 0
        %3667 = vmatprep.subr.bf16.mxu0 0
        %3668 = vmatpush1.bf16.xpose.msra.mxu0 0
        %3669 = vmatprep.subr.bf16.mxu0 0
        %3670 = vmatpush1.bf16.xpose.msra.mxu0 0
        %3671 = vmatprep.subr.bf16.mxu0 0
        %3672 = vmatpush1.bf16.xpose.msra.mxu0 0
        %3673 = vmatprep.subr.bf16.mxu0 0
        %3674 = vmatpush1.bf16.xpose.msra.mxu0 0
        %3675 = vmatprep.subr.bf16.mxu0 0
        %3676 = vmatpush1.bf16.xpose.msra.mxu0 0
        %3677 = vmatprep.subr.bf16.mxu0 0
        %3678 = vmatpush1.bf16.xpose.msra.mxu0 0
        %3679 = vmatprep.subr.bf16.mxu0 0
        %3680 = vmatpush1.bf16.xpose.msra.mxu0 0
        %3681 = vmatprep.subr.bf16.mxu0 0
        %3682 = vmatpush1.bf16.xpose.msra.mxu0 0
        %3683 = vmatprep.subr.bf16.mxu0 0
        %3684 = vmatpush1.bf16.xpose.msra.mxu0 0
        %3685 = vmatprep.subr.bf16.mxu0 0
        %3686 = vmatpush1.bf16.xpose.msra.mxu0 0
        %3687 = vmatprep.mubr.bf16.mxu0 0
        %3688 = vmatmul.mubr.bf16.gmra.mrb[0].mxu0 %v3650
        %v3689 = vpop.f32.mrb[0].mxu0
        %v3690 = vadd.f32 0.0, %v3689
        %v3691 = vpop.f32.mrb[0].mxu0
        %v3692 = vpop.f32.mrb[0].mxu0
        %v3693 = vpop.f32.mrb[0].mxu0
        %3694 = vdwg.mxu0
        %v3696 = vsel %vm1200, %v3548, 0
        %v3699 = vsel %vm1200, %v3552, 0
        %3701 = vmatprep.subr.bf16.mxu0 0
        %3702 = vmatpush1.bf16.xpose.msra.mxu0 %v3699
        %3703 = vmatprep.subr.bf16.mxu0 0
        %3704 = vmatpush1.bf16.xpose.msra.mxu0 0
        %3705 = vmatprep.subr.bf16.mxu0 0
        %3706 = vmatpush1.bf16.xpose.msra.mxu0 0
        %3707 = vmatprep.subr.bf16.mxu0 0
        %3708 = vmatpush1.bf16.xpose.msra.mxu0 0
        %3709 = vmatprep.subr.bf16.mxu0 0
        %3710 = vmatpush1.bf16.xpose.msra.mxu0 0
        %3711 = vmatprep.subr.bf16.mxu0 0
        %3712 = vmatpush1.bf16.xpose.msra.mxu0 0
        %3713 = vmatprep.subr.bf16.mxu0 0
        %3714 = vmatpush1.bf16.xpose.msra.mxu0 0
        %3715 = vmatprep.subr.bf16.mxu0 0
        %3716 = vmatpush1.bf16.xpose.msra.mxu0 0
        %3717 = vmatprep.subr.bf16.mxu0 0
        %3718 = vmatpush1.bf16.xpose.msra.mxu0 0
        %3719 = vmatprep.subr.bf16.mxu0 0
        %3720 = vmatpush1.bf16.xpose.msra.mxu0 0
        %3721 = vmatprep.subr.bf16.mxu0 0
        %3722 = vmatpush1.bf16.xpose.msra.mxu0 0
        %3723 = vmatprep.subr.bf16.mxu0 0
        %3724 = vmatpush1.bf16.xpose.msra.mxu0 0
        %3725 = vmatprep.subr.bf16.mxu0 0
        %3726 = vmatpush1.bf16.xpose.msra.mxu0 0
        %3727 = vmatprep.subr.bf16.mxu0 0
        %3728 = vmatpush1.bf16.xpose.msra.mxu0 0
        %3729 = vmatprep.subr.bf16.mxu0 0
        %3730 = vmatpush1.bf16.xpose.msra.mxu0 0
        %3731 = vmatprep.subr.bf16.mxu0 0
        %3732 = vmatpush1.bf16.xpose.msra.mxu0 0
        %3733 = vmatprep.mubr.bf16.mxu0 0
        %3734 = vmatmul.mubr.bf16.gmra.mrb[0].mxu0 %v3696
        %v3735 = vpop.f32.mrb[0].mxu0
        %v3736 = vadd.f32 0.0, %v3735
        %v3737 = vpop.f32.mrb[0].mxu0
        %v3738 = vpop.f32.mrb[0].mxu0
        %v3739 = vpop.f32.mrb[0].mxu0
        %3740 = vdwg.mxu0
        %v3741 = vmul.f32 %v3598, 0.17677669
        %v3742 = vmul.f32 %v3644, 0.17677669
        %v3743 = vmul.f32 %v3690, 0.17677669
        %v3744 = vmul.f32 %v3736, 0.17677669
        %v3749 = vlaneseq
        %v3750 = vshrl.u32 %v3749, 7
        %v3751 = vsub.s32 0, %v3750
        %v3752 = vrot.slane %v3533, %v3751
        %v3753 = vlaneseq
        %v3754 = vshrl.u32 %v3753, 7
        %v3755 = vsub.s32 0, %v3754
        %v3756 = vrot.slane %v3534, %v3755
        %v3757 = vlaneseq
        %v3758 = vshrl.u32 %v3757, 7
        %v3759 = vsub.s32 0, %v3758
        %v3760 = vrot.slane %v3535, %v3759
        %v3761 = vlaneseq
        %v3762 = vshrl.u32 %v3761, 7
        %v3763 = vsub.s32 0, %v3762
        %v3764 = vrot.slane %v3536, %v3763
        %v3769 = vadd.f32 %v3741, %v3752
        %v3770 = vadd.f32 %v3742, %v3756
        %v3771 = vadd.f32 %v3743, %v3760
        %v3772 = vadd.f32 %v3744, %v3764
        %vm3773 = vcmask 130048
        %v3774 = vsel %vm3773, %v3769, -inf
        %3775 = vmax.xlane.f32.xlu0 %v3774
        %v3776 = vpop.xlane.xlu0 %3775
        %v3777 = vsel %vm3773, %v3770, -inf
        %3778 = vmax.xlane.f32.xlu0 %v3777
        %v3779 = vpop.xlane.xlu0 %3778
        %v3780 = vsel %vm3773, %v3771, -inf
        %3781 = vmax.xlane.f32.xlu0 %v3780
        %v3782 = vpop.xlane.xlu0 %3781
        %v3783 = vsel %vm3773, %v3772, -inf
        %3784 = vmax.xlane.f32.xlu0 %v3783
        %v3785 = vpop.xlane.xlu0 %3784
        %v3786 = vsub.f32 %v3769, %v3776
        %v3787 = vsub.f32 %v3770, %v3779
        %v3788 = vsub.f32 %v3771, %v3782
        %v3789 = vsub.f32 %v3772, %v3785
        %v3790 = vmul.f32 %v3786, 1.442695
        %v3791 = vpow.pop %v3790
        %v3792 = vmul.f32 %v3787, 1.442695
        %v3793 = vpow.pop %v3792
        %v3794 = vmul.f32 %v3788, 1.442695
        %v3795 = vpow.pop %v3794
        %v3796 = vmul.f32 %v3789, 1.442695
        %v3797 = vpow.pop %v3796
        %v3798 = vsel %vm3773, %v3791, 0.0
        %3799 = vadd.xlane.f32.xlu0 %v3798
        %v3800 = vpop.xlane.xlu0 %3799
        %v3801 = vsel %vm3773, %v3793, 0.0
        %3802 = vadd.xlane.f32.xlu0 %v3801
        %v3803 = vpop.xlane.xlu0 %3802
        %v3804 = vsel %vm3773, %v3795, 0.0
        %3805 = vadd.xlane.f32.xlu0 %v3804
        %v3806 = vpop.xlane.xlu0 %3805
        %v3807 = vsel %vm3773, %v3797, 0.0
        %3808 = vadd.xlane.f32.xlu0 %v3807
        %v3809 = vpop.xlane.xlu0 %3808
        %v3810 = vrcp.pop %v3800
        %v3811 = vrcp.pop %v3803
        %v3812 = vrcp.pop %v3806
        %v3813 = vrcp.pop %v3809
        %v3814 = vmul.f32 %v3791, %v3810
        %v3815 = vmul.f32 %v3793, %v3811
        %v3816 = vmul.f32 %v3795, %v3812
        %v3817 = vmul.f32 %v3797, %v3813
        %v3818 = vpack.c.bf16 %v3814, %v3814
        %v3819 = vpack.c.bf16 %v3815, %v3815
        %v3820 = vpack.c.bf16 %v3816, %v3816
        %v3821 = vpack.c.bf16 %v3817, %v3817
        %v3823 = vsel %vm3773, %v3818, 0
        %3825 = vmatprep.subr.bf16.mxu0 0
        %3826 = vmatpush1.bf16.msra.mxu0 %v3553
        %3827 = vmatprep.subr.bf16.mxu0 0
        %3828 = vmatpush1.bf16.msra.mxu0 0
        %3829 = vmatprep.subr.bf16.mxu0 0
        %3830 = vmatpush1.bf16.msra.mxu0 0
        %3831 = vmatprep.subr.bf16.mxu0 0
        %3832 = vmatpush1.bf16.msra.mxu0 0
        %3833 = vmatprep.subr.bf16.mxu0 0
        %3834 = vmatpush1.bf16.msra.mxu0 0
        %3835 = vmatprep.subr.bf16.mxu0 0
        %3836 = vmatpush1.bf16.msra.mxu0 0
        %3837 = vmatprep.subr.bf16.mxu0 0
        %3838 = vmatpush1.bf16.msra.mxu0 0
        %3839 = vmatprep.subr.bf16.mxu0 0
        %3840 = vmatpush1.bf16.msra.mxu0 0
        %3841 = vmatprep.subr.bf16.mxu0 0
        %3842 = vmatpush1.bf16.msra.mxu0 0
        %3843 = vmatprep.subr.bf16.mxu0 0
        %3844 = vmatpush1.bf16.msra.mxu0 0
        %3845 = vmatprep.subr.bf16.mxu0 0
        %3846 = vmatpush1.bf16.msra.mxu0 0
        %3847 = vmatprep.subr.bf16.mxu0 0
        %3848 = vmatpush1.bf16.msra.mxu0 0
        %3849 = vmatprep.subr.bf16.mxu0 0
        %3850 = vmatpush1.bf16.msra.mxu0 0
        %3851 = vmatprep.subr.bf16.mxu0 0
        %3852 = vmatpush1.bf16.msra.mxu0 0
        %3853 = vmatprep.subr.bf16.mxu0 0
        %3854 = vmatpush1.bf16.msra.mxu0 0
        %3855 = vmatprep.subr.bf16.mxu0 0
        %3856 = vmatpush1.bf16.msra.mxu0 0
        %3857 = vmatprep.mubr.bf16.mxu0 0
        %3858 = vmatmul.mubr.bf16.gmra.mrb[0].mxu0 %v3823
        %v3859 = vpop.f32.mrb[0].mxu0
        %v3860 = vadd.f32 0.0, %v3859
        %v3861 = vpop.f32.mrb[0].mxu0
        %v3862 = vpop.f32.mrb[0].mxu0
        %v3863 = vpop.f32.mrb[0].mxu0
        %3864 = vdwg.mxu0
        %v3866 = vsel %vm3773, %v3819, 0
        %3868 = vmatprep.subr.bf16.mxu0 0
        %3869 = vmatpush1.bf16.msra.mxu0 %v3554
        %3870 = vmatprep.subr.bf16.mxu0 0
        %3871 = vmatpush1.bf16.msra.mxu0 0
        %3872 = vmatprep.subr.bf16.mxu0 0
        %3873 = vmatpush1.bf16.msra.mxu0 0
        %3874 = vmatprep.subr.bf16.mxu0 0
        %3875 = vmatpush1.bf16.msra.mxu0 0
        %3876 = vmatprep.subr.bf16.mxu0 0
        %3877 = vmatpush1.bf16.msra.mxu0 0
        %3878 = vmatprep.subr.bf16.mxu0 0
        %3879 = vmatpush1.bf16.msra.mxu0 0
        %3880 = vmatprep.subr.bf16.mxu0 0
        %3881 = vmatpush1.bf16.msra.mxu0 0
        %3882 = vmatprep.subr.bf16.mxu0 0
        %3883 = vmatpush1.bf16.msra.mxu0 0
        %3884 = vmatprep.subr.bf16.mxu0 0
        %3885 = vmatpush1.bf16.msra.mxu0 0
        %3886 = vmatprep.subr.bf16.mxu0 0
        %3887 = vmatpush1.bf16.msra.mxu0 0
        %3888 = vmatprep.subr.bf16.mxu0 0
        %3889 = vmatpush1.bf16.msra.mxu0 0
        %3890 = vmatprep.subr.bf16.mxu0 0
        %3891 = vmatpush1.bf16.msra.mxu0 0
        %3892 = vmatprep.subr.bf16.mxu0 0
        %3893 = vmatpush1.bf16.msra.mxu0 0
        %3894 = vmatprep.subr.bf16.mxu0 0
        %3895 = vmatpush1.bf16.msra.mxu0 0
        %3896 = vmatprep.subr.bf16.mxu0 0
        %3897 = vmatpush1.bf16.msra.mxu0 0
        %3898 = vmatprep.subr.bf16.mxu0 0
        %3899 = vmatpush1.bf16.msra.mxu0 0
        %3900 = vmatprep.mubr.bf16.mxu0 0
        %3901 = vmatmul.mubr.bf16.gmra.mrb[0].mxu0 %v3866
        %v3902 = vpop.f32.mrb[0].mxu0
        %v3903 = vadd.f32 0.0, %v3902
        %v3904 = vpop.f32.mrb[0].mxu0
        %v3905 = vpop.f32.mrb[0].mxu0
        %v3906 = vpop.f32.mrb[0].mxu0
        %3907 = vdwg.mxu0
        %v3909 = vsel %vm3773, %v3820, 0
        %3911 = vmatprep.subr.bf16.mxu0 0
        %3912 = vmatpush1.bf16.msra.mxu0 %v3555
        %3913 = vmatprep.subr.bf16.mxu0 0
        %3914 = vmatpush1.bf16.msra.mxu0 0
        %3915 = vmatprep.subr.bf16.mxu0 0
        %3916 = vmatpush1.bf16.msra.mxu0 0
        %3917 = vmatprep.subr.bf16.mxu0 0
        %3918 = vmatpush1.bf16.msra.mxu0 0
        %3919 = vmatprep.subr.bf16.mxu0 0
        %3920 = vmatpush1.bf16.msra.mxu0 0
        %3921 = vmatprep.subr.bf16.mxu0 0
        %3922 = vmatpush1.bf16.msra.mxu0 0
        %3923 = vmatprep.subr.bf16.mxu0 0
        %3924 = vmatpush1.bf16.msra.mxu0 0
        %3925 = vmatprep.subr.bf16.mxu0 0
        %3926 = vmatpush1.bf16.msra.mxu0 0
        %3927 = vmatprep.subr.bf16.mxu0 0
        %3928 = vmatpush1.bf16.msra.mxu0 0
        %3929 = vmatprep.subr.bf16.mxu0 0
        %3930 = vmatpush1.bf16.msra.mxu0 0
        %3931 = vmatprep.subr.bf16.mxu0 0
        %3932 = vmatpush1.bf16.msra.mxu0 0
        %3933 = vmatprep.subr.bf16.mxu0 0
        %3934 = vmatpush1.bf16.msra.mxu0 0
        %3935 = vmatprep.subr.bf16.mxu0 0
        %3936 = vmatpush1.bf16.msra.mxu0 0
        %3937 = vmatprep.subr.bf16.mxu0 0
        %3938 = vmatpush1.bf16.msra.mxu0 0
        %3939 = vmatprep.subr.bf16.mxu0 0
        %3940 = vmatpush1.bf16.msra.mxu0 0
        %3941 = vmatprep.subr.bf16.mxu0 0
        %3942 = vmatpush1.bf16.msra.mxu0 0
        %3943 = vmatprep.mubr.bf16.mxu0 0
        %3944 = vmatmul.mubr.bf16.gmra.mrb[0].mxu0 %v3909
        %v3945 = vpop.f32.mrb[0].mxu0
        %v3946 = vadd.f32 0.0, %v3945
        %v3947 = vpop.f32.mrb[0].mxu0
        %v3948 = vpop.f32.mrb[0].mxu0
        %v3949 = vpop.f32.mrb[0].mxu0
        %3950 = vdwg.mxu0
        %v3952 = vsel %vm3773, %v3821, 0
        %3954 = vmatprep.subr.bf16.mxu0 0
        %3955 = vmatpush1.bf16.msra.mxu0 %v3556
        %3956 = vmatprep.subr.bf16.mxu0 0
        %3957 = vmatpush1.bf16.msra.mxu0 0
        %3958 = vmatprep.subr.bf16.mxu0 0
        %3959 = vmatpush1.bf16.msra.mxu0 0
        %3960 = vmatprep.subr.bf16.mxu0 0
        %3961 = vmatpush1.bf16.msra.mxu0 0
        %3962 = vmatprep.subr.bf16.mxu0 0
        %3963 = vmatpush1.bf16.msra.mxu0 0
        %3964 = vmatprep.subr.bf16.mxu0 0
        %3965 = vmatpush1.bf16.msra.mxu0 0
        %3966 = vmatprep.subr.bf16.mxu0 0
        %3967 = vmatpush1.bf16.msra.mxu0 0
        %3968 = vmatprep.subr.bf16.mxu0 0
        %3969 = vmatpush1.bf16.msra.mxu0 0
        %3970 = vmatprep.subr.bf16.mxu0 0
        %3971 = vmatpush1.bf16.msra.mxu0 0
        %3972 = vmatprep.subr.bf16.mxu0 0
        %3973 = vmatpush1.bf16.msra.mxu0 0
        %3974 = vmatprep.subr.bf16.mxu0 0
        %3975 = vmatpush1.bf16.msra.mxu0 0
        %3976 = vmatprep.subr.bf16.mxu0 0
        %3977 = vmatpush1.bf16.msra.mxu0 0
        %3978 = vmatprep.subr.bf16.mxu0 0
        %3979 = vmatpush1.bf16.msra.mxu0 0
        %3980 = vmatprep.subr.bf16.mxu0 0
        %3981 = vmatpush1.bf16.msra.mxu0 0
        %3982 = vmatprep.subr.bf16.mxu0 0
        %3983 = vmatpush1.bf16.msra.mxu0 0
        %3984 = vmatprep.subr.bf16.mxu0 0
        %3985 = vmatpush1.bf16.msra.mxu0 0
        %3986 = vmatprep.mubr.bf16.mxu0 0
        %3987 = vmatmul.mubr.bf16.gmra.mrb[0].mxu0 %v3952
        %v3988 = vpop.f32.mrb[0].mxu0
        %v3989 = vadd.f32 0.0, %v3988
        %v3990 = vpop.f32.mrb[0].mxu0
        %v3991 = vpop.f32.mrb[0].mxu0
        %v3992 = vpop.f32.mrb[0].mxu0
        %3993 = vdwg.mxu0
        %3994 = vrot.lane.b32.xlu0 %v3545, 96
        %v3995 = vpop.permute.xlu0 %3994
        %3997 = vrot.lane.b32.xlu0 %v3549, 96
        %v3998 = vpop.permute.xlu0 %3997
        %v4000 = vsel %vm1200, %v3995, 0
        %v4003 = vsel %vm1200, %v3998, 0
        %4005 = vmatprep.subr.bf16.mxu0 0
        %4006 = vmatpush1.bf16.xpose.msra.mxu0 %v4003
        %4007 = vmatprep.subr.bf16.mxu0 0
        %4008 = vmatpush1.bf16.xpose.msra.mxu0 0
        %4009 = vmatprep.subr.bf16.mxu0 0
        %4010 = vmatpush1.bf16.xpose.msra.mxu0 0
        %4011 = vmatprep.subr.bf16.mxu0 0
        %4012 = vmatpush1.bf16.xpose.msra.mxu0 0
        %4013 = vmatprep.subr.bf16.mxu0 0
        %4014 = vmatpush1.bf16.xpose.msra.mxu0 0
        %4015 = vmatprep.subr.bf16.mxu0 0
        %4016 = vmatpush1.bf16.xpose.msra.mxu0 0
        %4017 = vmatprep.subr.bf16.mxu0 0
        %4018 = vmatpush1.bf16.xpose.msra.mxu0 0
        %4019 = vmatprep.subr.bf16.mxu0 0
        %4020 = vmatpush1.bf16.xpose.msra.mxu0 0
        %4021 = vmatprep.subr.bf16.mxu0 0
        %4022 = vmatpush1.bf16.xpose.msra.mxu0 0
        %4023 = vmatprep.subr.bf16.mxu0 0
        %4024 = vmatpush1.bf16.xpose.msra.mxu0 0
        %4025 = vmatprep.subr.bf16.mxu0 0
        %4026 = vmatpush1.bf16.xpose.msra.mxu0 0
        %4027 = vmatprep.subr.bf16.mxu0 0
        %4028 = vmatpush1.bf16.xpose.msra.mxu0 0
        %4029 = vmatprep.subr.bf16.mxu0 0
        %4030 = vmatpush1.bf16.xpose.msra.mxu0 0
        %4031 = vmatprep.subr.bf16.mxu0 0
        %4032 = vmatpush1.bf16.xpose.msra.mxu0 0
        %4033 = vmatprep.subr.bf16.mxu0 0
        %4034 = vmatpush1.bf16.xpose.msra.mxu0 0
        %4035 = vmatprep.subr.bf16.mxu0 0
        %4036 = vmatpush1.bf16.xpose.msra.mxu0 0
        %4037 = vmatprep.mubr.bf16.mxu0 0
        %4038 = vmatmul.mubr.bf16.gmra.mrb[0].mxu0 %v4000
        %v4039 = vpop.f32.mrb[0].mxu0
        %v4040 = vadd.f32 0.0, %v4039
        %v4041 = vpop.f32.mrb[0].mxu0
        %v4042 = vpop.f32.mrb[0].mxu0
        %v4043 = vpop.f32.mrb[0].mxu0
        %4044 = vdwg.mxu0
        %4045 = vrot.lane.b32.xlu0 %v3546, 96
        %v4046 = vpop.permute.xlu0 %4045
        %4048 = vrot.lane.b32.xlu0 %v3550, 96
        %v4049 = vpop.permute.xlu0 %4048
        %v4051 = vsel %vm1200, %v4046, 0
        %v4054 = vsel %vm1200, %v4049, 0
        %4056 = vmatprep.subr.bf16.mxu0 0
        %4057 = vmatpush1.bf16.xpose.msra.mxu0 %v4054
        %4058 = vmatprep.subr.bf16.mxu0 0
        %4059 = vmatpush1.bf16.xpose.msra.mxu0 0
        %4060 = vmatprep.subr.bf16.mxu0 0
        %4061 = vmatpush1.bf16.xpose.msra.mxu0 0
        %4062 = vmatprep.subr.bf16.mxu0 0
        %4063 = vmatpush1.bf16.xpose.msra.mxu0 0
        %4064 = vmatprep.subr.bf16.mxu0 0
        %4065 = vmatpush1.bf16.xpose.msra.mxu0 0
        %4066 = vmatprep.subr.bf16.mxu0 0
        %4067 = vmatpush1.bf16.xpose.msra.mxu0 0
        %4068 = vmatprep.subr.bf16.mxu0 0
        %4069 = vmatpush1.bf16.xpose.msra.mxu0 0
        %4070 = vmatprep.subr.bf16.mxu0 0
        %4071 = vmatpush1.bf16.xpose.msra.mxu0 0
        %4072 = vmatprep.subr.bf16.mxu0 0
        %4073 = vmatpush1.bf16.xpose.msra.mxu0 0
        %4074 = vmatprep.subr.bf16.mxu0 0
        %4075 = vmatpush1.bf16.xpose.msra.mxu0 0
        %4076 = vmatprep.subr.bf16.mxu0 0
        %4077 = vmatpush1.bf16.xpose.msra.mxu0 0
        %4078 = vmatprep.subr.bf16.mxu0 0
        %4079 = vmatpush1.bf16.xpose.msra.mxu0 0
        %4080 = vmatprep.subr.bf16.mxu0 0
        %4081 = vmatpush1.bf16.xpose.msra.mxu0 0
        %4082 = vmatprep.subr.bf16.mxu0 0
        %4083 = vmatpush1.bf16.xpose.msra.mxu0 0
        %4084 = vmatprep.subr.bf16.mxu0 0
        %4085 = vmatpush1.bf16.xpose.msra.mxu0 0
        %4086 = vmatprep.subr.bf16.mxu0 0
        %4087 = vmatpush1.bf16.xpose.msra.mxu0 0
        %4088 = vmatprep.mubr.bf16.mxu0 0
        %4089 = vmatmul.mubr.bf16.gmra.mrb[0].mxu0 %v4051
        %v4090 = vpop.f32.mrb[0].mxu0
        %v4091 = vadd.f32 0.0, %v4090
        %v4092 = vpop.f32.mrb[0].mxu0
        %v4093 = vpop.f32.mrb[0].mxu0
        %v4094 = vpop.f32.mrb[0].mxu0
        %4095 = vdwg.mxu0
        %4096 = vrot.lane.b32.xlu0 %v3547, 96
        %v4097 = vpop.permute.xlu0 %4096
        %4099 = vrot.lane.b32.xlu0 %v3551, 96
        %v4100 = vpop.permute.xlu0 %4099
        %v4102 = vsel %vm1200, %v4097, 0
        %v4105 = vsel %vm1200, %v4100, 0
        %4107 = vmatprep.subr.bf16.mxu0 0
        %4108 = vmatpush1.bf16.xpose.msra.mxu0 %v4105
        %4109 = vmatprep.subr.bf16.mxu0 0
        %4110 = vmatpush1.bf16.xpose.msra.mxu0 0
        %4111 = vmatprep.subr.bf16.mxu0 0
        %4112 = vmatpush1.bf16.xpose.msra.mxu0 0
        %4113 = vmatprep.subr.bf16.mxu0 0
        %4114 = vmatpush1.bf16.xpose.msra.mxu0 0
        %4115 = vmatprep.subr.bf16.mxu0 0
        %4116 = vmatpush1.bf16.xpose.msra.mxu0 0
        %4117 = vmatprep.subr.bf16.mxu0 0
        %4118 = vmatpush1.bf16.xpose.msra.mxu0 0
        %4119 = vmatprep.subr.bf16.mxu0 0
        %4120 = vmatpush1.bf16.xpose.msra.mxu0 0
        %4121 = vmatprep.subr.bf16.mxu0 0
        %4122 = vmatpush1.bf16.xpose.msra.mxu0 0
        %4123 = vmatprep.subr.bf16.mxu0 0
        %4124 = vmatpush1.bf16.xpose.msra.mxu0 0
        %4125 = vmatprep.subr.bf16.mxu0 0
        %4126 = vmatpush1.bf16.xpose.msra.mxu0 0
        %4127 = vmatprep.subr.bf16.mxu0 0
        %4128 = vmatpush1.bf16.xpose.msra.mxu0 0
        %4129 = vmatprep.subr.bf16.mxu0 0
        %4130 = vmatpush1.bf16.xpose.msra.mxu0 0
        %4131 = vmatprep.subr.bf16.mxu0 0
        %4132 = vmatpush1.bf16.xpose.msra.mxu0 0
        %4133 = vmatprep.subr.bf16.mxu0 0
        %4134 = vmatpush1.bf16.xpose.msra.mxu0 0
        %4135 = vmatprep.subr.bf16.mxu0 0
        %4136 = vmatpush1.bf16.xpose.msra.mxu0 0
        %4137 = vmatprep.subr.bf16.mxu0 0
        %4138 = vmatpush1.bf16.xpose.msra.mxu0 0
        %4139 = vmatprep.mubr.bf16.mxu0 0
        %4140 = vmatmul.mubr.bf16.gmra.mrb[0].mxu0 %v4102
        %v4141 = vpop.f32.mrb[0].mxu0
        %v4142 = vadd.f32 0.0, %v4141
        %v4143 = vpop.f32.mrb[0].mxu0
        %v4144 = vpop.f32.mrb[0].mxu0
        %v4145 = vpop.f32.mrb[0].mxu0
        %4146 = vdwg.mxu0
        %4147 = vrot.lane.b32.xlu0 %v3548, 96
        %v4148 = vpop.permute.xlu0 %4147
        %4150 = vrot.lane.b32.xlu0 %v3552, 96
        %v4151 = vpop.permute.xlu0 %4150
        %v4153 = vsel %vm1200, %v4148, 0
        %v4156 = vsel %vm1200, %v4151, 0
        %4158 = vmatprep.subr.bf16.mxu0 0
        %4159 = vmatpush1.bf16.xpose.msra.mxu0 %v4156
        %4160 = vmatprep.subr.bf16.mxu0 0
        %4161 = vmatpush1.bf16.xpose.msra.mxu0 0
        %4162 = vmatprep.subr.bf16.mxu0 0
        %4163 = vmatpush1.bf16.xpose.msra.mxu0 0
        %4164 = vmatprep.subr.bf16.mxu0 0
        %4165 = vmatpush1.bf16.xpose.msra.mxu0 0
        %4166 = vmatprep.subr.bf16.mxu0 0
        %4167 = vmatpush1.bf16.xpose.msra.mxu0 0
        %4168 = vmatprep.subr.bf16.mxu0 0
        %4169 = vmatpush1.bf16.xpose.msra.mxu0 0
        %4170 = vmatprep.subr.bf16.mxu0 0
        %4171 = vmatpush1.bf16.xpose.msra.mxu0 0
        %4172 = vmatprep.subr.bf16.mxu0 0
        %4173 = vmatpush1.bf16.xpose.msra.mxu0 0
        %4174 = vmatprep.subr.bf16.mxu0 0
        %4175 = vmatpush1.bf16.xpose.msra.mxu0 0
        %4176 = vmatprep.subr.bf16.mxu0 0
        %4177 = vmatpush1.bf16.xpose.msra.mxu0 0
        %4178 = vmatprep.subr.bf16.mxu0 0
        %4179 = vmatpush1.bf16.xpose.msra.mxu0 0
        %4180 = vmatprep.subr.bf16.mxu0 0
        %4181 = vmatpush1.bf16.xpose.msra.mxu0 0
        %4182 = vmatprep.subr.bf16.mxu0 0
        %4183 = vmatpush1.bf16.xpose.msra.mxu0 0
        %4184 = vmatprep.subr.bf16.mxu0 0
        %4185 = vmatpush1.bf16.xpose.msra.mxu0 0
        %4186 = vmatprep.subr.bf16.mxu0 0
        %4187 = vmatpush1.bf16.xpose.msra.mxu0 0
        %4188 = vmatprep.subr.bf16.mxu0 0
        %4189 = vmatpush1.bf16.xpose.msra.mxu0 0
        %4190 = vmatprep.mubr.bf16.mxu0 0
        %4191 = vmatmul.mubr.bf16.gmra.mrb[0].mxu0 %v4153
        %v4192 = vpop.f32.mrb[0].mxu0
        %v4193 = vadd.f32 0.0, %v4192
        %v4194 = vpop.f32.mrb[0].mxu0
        %v4195 = vpop.f32.mrb[0].mxu0
        %v4196 = vpop.f32.mrb[0].mxu0
        %4197 = vdwg.mxu0
        %v4198 = vmul.f32 %v4040, 0.17677669
        %v4199 = vmul.f32 %v4091, 0.17677669
        %v4200 = vmul.f32 %v4142, 0.17677669
        %v4201 = vmul.f32 %v4193, 0.17677669
        %v4202 = vadd.f32 %v4198, %v3752
        %v4203 = vadd.f32 %v4199, %v3756
        %v4204 = vadd.f32 %v4200, %v3760
        %v4205 = vadd.f32 %v4201, %v3764
        %v4206 = vsel %vm3773, %v4202, -inf
        %4207 = vmax.xlane.f32.xlu0 %v4206
        %v4208 = vpop.xlane.xlu0 %4207
        %v4209 = vsel %vm3773, %v4203, -inf
        %4210 = vmax.xlane.f32.xlu0 %v4209
        %v4211 = vpop.xlane.xlu0 %4210
        %v4212 = vsel %vm3773, %v4204, -inf
        %4213 = vmax.xlane.f32.xlu0 %v4212
        %v4214 = vpop.xlane.xlu0 %4213
        %v4215 = vsel %vm3773, %v4205, -inf
        %4216 = vmax.xlane.f32.xlu0 %v4215
        %v4217 = vpop.xlane.xlu0 %4216
        %v4218 = vsub.f32 %v4202, %v4208
        %v4219 = vsub.f32 %v4203, %v4211
        %v4220 = vsub.f32 %v4204, %v4214
        %v4221 = vsub.f32 %v4205, %v4217
        %v4222 = vmul.f32 %v4218, 1.442695
        %v4223 = vpow.pop %v4222
        %v4224 = vmul.f32 %v4219, 1.442695
        %v4225 = vpow.pop %v4224
        %v4226 = vmul.f32 %v4220, 1.442695
        %v4227 = vpow.pop %v4226
        %v4228 = vmul.f32 %v4221, 1.442695
        %v4229 = vpow.pop %v4228
        %v4230 = vsel %vm3773, %v4223, 0.0
        %4231 = vadd.xlane.f32.xlu0 %v4230
        %v4232 = vpop.xlane.xlu0 %4231
        %v4233 = vsel %vm3773, %v4225, 0.0
        %4234 = vadd.xlane.f32.xlu0 %v4233
        %v4235 = vpop.xlane.xlu0 %4234
        %v4236 = vsel %vm3773, %v4227, 0.0
        %4237 = vadd.xlane.f32.xlu0 %v4236
        %v4238 = vpop.xlane.xlu0 %4237
        %v4239 = vsel %vm3773, %v4229, 0.0
        %4240 = vadd.xlane.f32.xlu0 %v4239
        %v4241 = vpop.xlane.xlu0 %4240
        %v4242 = vrcp.pop %v4232
        %v4243 = vrcp.pop %v4235
        %v4244 = vrcp.pop %v4238
        %v4245 = vrcp.pop %v4241
        %v4246 = vmul.f32 %v4223, %v4242
        %v4247 = vmul.f32 %v4225, %v4243
        %v4248 = vmul.f32 %v4227, %v4244
        %v4249 = vmul.f32 %v4229, %v4245
        %v4250 = vpack.c.bf16 %v4246, %v4246
        %v4251 = vpack.c.bf16 %v4247, %v4247
        %v4252 = vpack.c.bf16 %v4248, %v4248
        %v4253 = vpack.c.bf16 %v4249, %v4249
        %4255 = vrot.lane.b32.xlu0 %v3553, 96
        %v4256 = vpop.permute.xlu0 %4255
        %v4259 = vsel %vm3773, %v4250, 0
        %4261 = vmatprep.subr.bf16.mxu0 0
        %4262 = vmatpush1.bf16.msra.mxu0 %v4256
        %4263 = vmatprep.subr.bf16.mxu0 0
        %4264 = vmatpush1.bf16.msra.mxu0 0
        %4265 = vmatprep.subr.bf16.mxu0 0
        %4266 = vmatpush1.bf16.msra.mxu0 0
        %4267 = vmatprep.subr.bf16.mxu0 0
        %4268 = vmatpush1.bf16.msra.mxu0 0
        %4269 = vmatprep.subr.bf16.mxu0 0
        %4270 = vmatpush1.bf16.msra.mxu0 0
        %4271 = vmatprep.subr.bf16.mxu0 0
        %4272 = vmatpush1.bf16.msra.mxu0 0
        %4273 = vmatprep.subr.bf16.mxu0 0
        %4274 = vmatpush1.bf16.msra.mxu0 0
        %4275 = vmatprep.subr.bf16.mxu0 0
        %4276 = vmatpush1.bf16.msra.mxu0 0
        %4277 = vmatprep.subr.bf16.mxu0 0
        %4278 = vmatpush1.bf16.msra.mxu0 0
        %4279 = vmatprep.subr.bf16.mxu0 0
        %4280 = vmatpush1.bf16.msra.mxu0 0
        %4281 = vmatprep.subr.bf16.mxu0 0
        %4282 = vmatpush1.bf16.msra.mxu0 0
        %4283 = vmatprep.subr.bf16.mxu0 0
        %4284 = vmatpush1.bf16.msra.mxu0 0
        %4285 = vmatprep.subr.bf16.mxu0 0
        %4286 = vmatpush1.bf16.msra.mxu0 0
        %4287 = vmatprep.subr.bf16.mxu0 0
        %4288 = vmatpush1.bf16.msra.mxu0 0
        %4289 = vmatprep.subr.bf16.mxu0 0
        %4290 = vmatpush1.bf16.msra.mxu0 0
        %4291 = vmatprep.subr.bf16.mxu0 0
        %4292 = vmatpush1.bf16.msra.mxu0 0
        %4293 = vmatprep.mubr.bf16.mxu0 0
        %4294 = vmatmul.mubr.bf16.gmra.mrb[0].mxu0 %v4259
        %v4295 = vpop.f32.mrb[0].mxu0
        %v4296 = vadd.f32 0.0, %v4295
        %v4297 = vpop.f32.mrb[0].mxu0
        %v4298 = vpop.f32.mrb[0].mxu0
        %v4299 = vpop.f32.mrb[0].mxu0
        %4300 = vdwg.mxu0
        %4302 = vrot.lane.b32.xlu0 %v3554, 96
        %v4303 = vpop.permute.xlu0 %4302
        %v4306 = vsel %vm3773, %v4251, 0
        %4308 = vmatprep.subr.bf16.mxu0 0
        %4309 = vmatpush1.bf16.msra.mxu0 %v4303
        %4310 = vmatprep.subr.bf16.mxu0 0
        %4311 = vmatpush1.bf16.msra.mxu0 0
        %4312 = vmatprep.subr.bf16.mxu0 0
        %4313 = vmatpush1.bf16.msra.mxu0 0
        %4314 = vmatprep.subr.bf16.mxu0 0
        %4315 = vmatpush1.bf16.msra.mxu0 0
        %4316 = vmatprep.subr.bf16.mxu0 0
        %4317 = vmatpush1.bf16.msra.mxu0 0
        %4318 = vmatprep.subr.bf16.mxu0 0
        %4319 = vmatpush1.bf16.msra.mxu0 0
        %4320 = vmatprep.subr.bf16.mxu0 0
        %4321 = vmatpush1.bf16.msra.mxu0 0
        %4322 = vmatprep.subr.bf16.mxu0 0
        %4323 = vmatpush1.bf16.msra.mxu0 0
        %4324 = vmatprep.subr.bf16.mxu0 0
        %4325 = vmatpush1.bf16.msra.mxu0 0
        %4326 = vmatprep.subr.bf16.mxu0 0
        %4327 = vmatpush1.bf16.msra.mxu0 0
        %4328 = vmatprep.subr.bf16.mxu0 0
        %4329 = vmatpush1.bf16.msra.mxu0 0
        %4330 = vmatprep.subr.bf16.mxu0 0
        %4331 = vmatpush1.bf16.msra.mxu0 0
        %4332 = vmatprep.subr.bf16.mxu0 0
        %4333 = vmatpush1.bf16.msra.mxu0 0
        %4334 = vmatprep.subr.bf16.mxu0 0
        %4335 = vmatpush1.bf16.msra.mxu0 0
        %4336 = vmatprep.subr.bf16.mxu0 0
        %4337 = vmatpush1.bf16.msra.mxu0 0
        %4338 = vmatprep.subr.bf16.mxu0 0
        %4339 = vmatpush1.bf16.msra.mxu0 0
        %4340 = vmatprep.mubr.bf16.mxu0 0
        %4341 = vmatmul.mubr.bf16.gmra.mrb[0].mxu0 %v4306
        %v4342 = vpop.f32.mrb[0].mxu0
        %v4343 = vadd.f32 0.0, %v4342
        %v4344 = vpop.f32.mrb[0].mxu0
        %v4345 = vpop.f32.mrb[0].mxu0
        %v4346 = vpop.f32.mrb[0].mxu0
        %4347 = vdwg.mxu0
        %4349 = vrot.lane.b32.xlu0 %v3555, 96
        %v4350 = vpop.permute.xlu0 %4349
        %v4353 = vsel %vm3773, %v4252, 0
        %4355 = vmatprep.subr.bf16.mxu0 0
        %4356 = vmatpush1.bf16.msra.mxu0 %v4350
        %4357 = vmatprep.subr.bf16.mxu0 0
        %4358 = vmatpush1.bf16.msra.mxu0 0
        %4359 = vmatprep.subr.bf16.mxu0 0
        %4360 = vmatpush1.bf16.msra.mxu0 0
        %4361 = vmatprep.subr.bf16.mxu0 0
        %4362 = vmatpush1.bf16.msra.mxu0 0
        %4363 = vmatprep.subr.bf16.mxu0 0
        %4364 = vmatpush1.bf16.msra.mxu0 0
        %4365 = vmatprep.subr.bf16.mxu0 0
        %4366 = vmatpush1.bf16.msra.mxu0 0
        %4367 = vmatprep.subr.bf16.mxu0 0
        %4368 = vmatpush1.bf16.msra.mxu0 0
        %4369 = vmatprep.subr.bf16.mxu0 0
        %4370 = vmatpush1.bf16.msra.mxu0 0
        %4371 = vmatprep.subr.bf16.mxu0 0
        %4372 = vmatpush1.bf16.msra.mxu0 0
        %4373 = vmatprep.subr.bf16.mxu0 0
        %4374 = vmatpush1.bf16.msra.mxu0 0
        %4375 = vmatprep.subr.bf16.mxu0 0
        %4376 = vmatpush1.bf16.msra.mxu0 0
        %4377 = vmatprep.subr.bf16.mxu0 0
        %4378 = vmatpush1.bf16.msra.mxu0 0
        %4379 = vmatprep.subr.bf16.mxu0 0
        %4380 = vmatpush1.bf16.msra.mxu0 0
        %4381 = vmatprep.subr.bf16.mxu0 0
        %4382 = vmatpush1.bf16.msra.mxu0 0
        %4383 = vmatprep.subr.bf16.mxu0 0
        %4384 = vmatpush1.bf16.msra.mxu0 0
        %4385 = vmatprep.subr.bf16.mxu0 0
        %4386 = vmatpush1.bf16.msra.mxu0 0
        %4387 = vmatprep.mubr.bf16.mxu0 0
        %4388 = vmatmul.mubr.bf16.gmra.mrb[0].mxu0 %v4353
        %v4389 = vpop.f32.mrb[0].mxu0
        %v4390 = vadd.f32 0.0, %v4389
        %v4391 = vpop.f32.mrb[0].mxu0
        %v4392 = vpop.f32.mrb[0].mxu0
        %v4393 = vpop.f32.mrb[0].mxu0
        %4394 = vdwg.mxu0
        %4396 = vrot.lane.b32.xlu0 %v3556, 96
        %v4397 = vpop.permute.xlu0 %4396
        %v4400 = vsel %vm3773, %v4253, 0
        %4402 = vmatprep.subr.bf16.mxu0 0
        %4403 = vmatpush1.bf16.msra.mxu0 %v4397
        %4404 = vmatprep.subr.bf16.mxu0 0
        %4405 = vmatpush1.bf16.msra.mxu0 0
        %4406 = vmatprep.subr.bf16.mxu0 0
        %4407 = vmatpush1.bf16.msra.mxu0 0
        %4408 = vmatprep.subr.bf16.mxu0 0
        %4409 = vmatpush1.bf16.msra.mxu0 0
        %4410 = vmatprep.subr.bf16.mxu0 0
        %4411 = vmatpush1.bf16.msra.mxu0 0
        %4412 = vmatprep.subr.bf16.mxu0 0
        %4413 = vmatpush1.bf16.msra.mxu0 0
        %4414 = vmatprep.subr.bf16.mxu0 0
        %4415 = vmatpush1.bf16.msra.mxu0 0
        %4416 = vmatprep.subr.bf16.mxu0 0
        %4417 = vmatpush1.bf16.msra.mxu0 0
        %4418 = vmatprep.subr.bf16.mxu0 0
        %4419 = vmatpush1.bf16.msra.mxu0 0
        %4420 = vmatprep.subr.bf16.mxu0 0
        %4421 = vmatpush1.bf16.msra.mxu0 0
        %4422 = vmatprep.subr.bf16.mxu0 0
        %4423 = vmatpush1.bf16.msra.mxu0 0
        %4424 = vmatprep.subr.bf16.mxu0 0
        %4425 = vmatpush1.bf16.msra.mxu0 0
        %4426 = vmatprep.subr.bf16.mxu0 0
        %4427 = vmatpush1.bf16.msra.mxu0 0
        %4428 = vmatprep.subr.bf16.mxu0 0
        %4429 = vmatpush1.bf16.msra.mxu0 0
        %4430 = vmatprep.subr.bf16.mxu0 0
        %4431 = vmatpush1.bf16.msra.mxu0 0
        %4432 = vmatprep.subr.bf16.mxu0 0
        %4433 = vmatpush1.bf16.msra.mxu0 0
        %4434 = vmatprep.mubr.bf16.mxu0 0
        %4435 = vmatmul.mubr.bf16.gmra.mrb[0].mxu0 %v4400
        %v4436 = vpop.f32.mrb[0].mxu0
        %v4437 = vadd.f32 0.0, %v4436
        %v4438 = vpop.f32.mrb[0].mxu0
        %v4439 = vpop.f32.mrb[0].mxu0
        %v4440 = vpop.f32.mrb[0].mxu0
        %4441 = vdwg.mxu0
        %4442 = vrot.lane.b32.xlu0 %v3545, 64
        %v4443 = vpop.permute.xlu0 %4442
        %4444 = vrot.lane.b32.xlu0 %v3549, 64
        %v4445 = vpop.permute.xlu0 %4444
        %v4447 = vsel %vm1200, %v4443, 0
        %v4450 = vsel %vm1200, %v4445, 0
        %4452 = vmatprep.subr.bf16.mxu0 0
        %4453 = vmatpush1.bf16.xpose.msra.mxu0 %v4450
        %4454 = vmatprep.subr.bf16.mxu0 0
        %4455 = vmatpush1.bf16.xpose.msra.mxu0 0
        %4456 = vmatprep.subr.bf16.mxu0 0
        %4457 = vmatpush1.bf16.xpose.msra.mxu0 0
        %4458 = vmatprep.subr.bf16.mxu0 0
        %4459 = vmatpush1.bf16.xpose.msra.mxu0 0
        %4460 = vmatprep.subr.bf16.mxu0 0
        %4461 = vmatpush1.bf16.xpose.msra.mxu0 0
        %4462 = vmatprep.subr.bf16.mxu0 0
        %4463 = vmatpush1.bf16.xpose.msra.mxu0 0
        %4464 = vmatprep.subr.bf16.mxu0 0
        %4465 = vmatpush1.bf16.xpose.msra.mxu0 0
        %4466 = vmatprep.subr.bf16.mxu0 0
        %4467 = vmatpush1.bf16.xpose.msra.mxu0 0
        %4468 = vmatprep.subr.bf16.mxu0 0
        %4469 = vmatpush1.bf16.xpose.msra.mxu0 0
        %4470 = vmatprep.subr.bf16.mxu0 0
        %4471 = vmatpush1.bf16.xpose.msra.mxu0 0
        %4472 = vmatprep.subr.bf16.mxu0 0
        %4473 = vmatpush1.bf16.xpose.msra.mxu0 0
        %4474 = vmatprep.subr.bf16.mxu0 0
        %4475 = vmatpush1.bf16.xpose.msra.mxu0 0
        %4476 = vmatprep.subr.bf16.mxu0 0
        %4477 = vmatpush1.bf16.xpose.msra.mxu0 0
        %4478 = vmatprep.subr.bf16.mxu0 0
        %4479 = vmatpush1.bf16.xpose.msra.mxu0 0
        %4480 = vmatprep.subr.bf16.mxu0 0
        %4481 = vmatpush1.bf16.xpose.msra.mxu0 0
        %4482 = vmatprep.subr.bf16.mxu0 0
        %4483 = vmatpush1.bf16.xpose.msra.mxu0 0
        %4484 = vmatprep.mubr.bf16.mxu0 0
        %4485 = vmatmul.mubr.bf16.gmra.mrb[0].mxu0 %v4447
        %v4486 = vpop.f32.mrb[0].mxu0
        %v4487 = vadd.f32 0.0, %v4486
        %v4488 = vpop.f32.mrb[0].mxu0
        %v4489 = vpop.f32.mrb[0].mxu0
        %v4490 = vpop.f32.mrb[0].mxu0
        %4491 = vdwg.mxu0
        %4492 = vrot.lane.b32.xlu0 %v3546, 64
        %v4493 = vpop.permute.xlu0 %4492
        %4494 = vrot.lane.b32.xlu0 %v3550, 64
        %v4495 = vpop.permute.xlu0 %4494
        %v4497 = vsel %vm1200, %v4493, 0
        %v4500 = vsel %vm1200, %v4495, 0
        %4502 = vmatprep.subr.bf16.mxu0 0
        %4503 = vmatpush1.bf16.xpose.msra.mxu0 %v4500
        %4504 = vmatprep.subr.bf16.mxu0 0
        %4505 = vmatpush1.bf16.xpose.msra.mxu0 0
        %4506 = vmatprep.subr.bf16.mxu0 0
        %4507 = vmatpush1.bf16.xpose.msra.mxu0 0
        %4508 = vmatprep.subr.bf16.mxu0 0
        %4509 = vmatpush1.bf16.xpose.msra.mxu0 0
        %4510 = vmatprep.subr.bf16.mxu0 0
        %4511 = vmatpush1.bf16.xpose.msra.mxu0 0
        %4512 = vmatprep.subr.bf16.mxu0 0
        %4513 = vmatpush1.bf16.xpose.msra.mxu0 0
        %4514 = vmatprep.subr.bf16.mxu0 0
        %4515 = vmatpush1.bf16.xpose.msra.mxu0 0
        %4516 = vmatprep.subr.bf16.mxu0 0
        %4517 = vmatpush1.bf16.xpose.msra.mxu0 0
        %4518 = vmatprep.subr.bf16.mxu0 0
        %4519 = vmatpush1.bf16.xpose.msra.mxu0 0
        %4520 = vmatprep.subr.bf16.mxu0 0
        %4521 = vmatpush1.bf16.xpose.msra.mxu0 0
        %4522 = vmatprep.subr.bf16.mxu0 0
        %4523 = vmatpush1.bf16.xpose.msra.mxu0 0
        %4524 = vmatprep.subr.bf16.mxu0 0
        %4525 = vmatpush1.bf16.xpose.msra.mxu0 0
        %4526 = vmatprep.subr.bf16.mxu0 0
        %4527 = vmatpush1.bf16.xpose.msra.mxu0 0
        %4528 = vmatprep.subr.bf16.mxu0 0
        %4529 = vmatpush1.bf16.xpose.msra.mxu0 0
        %4530 = vmatprep.subr.bf16.mxu0 0
        %4531 = vmatpush1.bf16.xpose.msra.mxu0 0
        %4532 = vmatprep.subr.bf16.mxu0 0
        %4533 = vmatpush1.bf16.xpose.msra.mxu0 0
        %4534 = vmatprep.mubr.bf16.mxu0 0
        %4535 = vmatmul.mubr.bf16.gmra.mrb[0].mxu0 %v4497
        %v4536 = vpop.f32.mrb[0].mxu0
        %v4537 = vadd.f32 0.0, %v4536
        %v4538 = vpop.f32.mrb[0].mxu0
        %v4539 = vpop.f32.mrb[0].mxu0
        %v4540 = vpop.f32.mrb[0].mxu0
        %4541 = vdwg.mxu0
        %4542 = vrot.lane.b32.xlu0 %v3547, 64
        %v4543 = vpop.permute.xlu0 %4542
        %4544 = vrot.lane.b32.xlu0 %v3551, 64
        %v4545 = vpop.permute.xlu0 %4544
        %v4547 = vsel %vm1200, %v4543, 0
        %v4550 = vsel %vm1200, %v4545, 0
        %4552 = vmatprep.subr.bf16.mxu0 0
        %4553 = vmatpush1.bf16.xpose.msra.mxu0 %v4550
        %4554 = vmatprep.subr.bf16.mxu0 0
        %4555 = vmatpush1.bf16.xpose.msra.mxu0 0
        %4556 = vmatprep.subr.bf16.mxu0 0
        %4557 = vmatpush1.bf16.xpose.msra.mxu0 0
        %4558 = vmatprep.subr.bf16.mxu0 0
        %4559 = vmatpush1.bf16.xpose.msra.mxu0 0
        %4560 = vmatprep.subr.bf16.mxu0 0
        %4561 = vmatpush1.bf16.xpose.msra.mxu0 0
        %4562 = vmatprep.subr.bf16.mxu0 0
        %4563 = vmatpush1.bf16.xpose.msra.mxu0 0
        %4564 = vmatprep.subr.bf16.mxu0 0
        %4565 = vmatpush1.bf16.xpose.msra.mxu0 0
        %4566 = vmatprep.subr.bf16.mxu0 0
        %4567 = vmatpush1.bf16.xpose.msra.mxu0 0
        %4568 = vmatprep.subr.bf16.mxu0 0
        %4569 = vmatpush1.bf16.xpose.msra.mxu0 0
        %4570 = vmatprep.subr.bf16.mxu0 0
        %4571 = vmatpush1.bf16.xpose.msra.mxu0 0
        %4572 = vmatprep.subr.bf16.mxu0 0
        %4573 = vmatpush1.bf16.xpose.msra.mxu0 0
        %4574 = vmatprep.subr.bf16.mxu0 0
        %4575 = vmatpush1.bf16.xpose.msra.mxu0 0
        %4576 = vmatprep.subr.bf16.mxu0 0
        %4577 = vmatpush1.bf16.xpose.msra.mxu0 0
        %4578 = vmatprep.subr.bf16.mxu0 0
        %4579 = vmatpush1.bf16.xpose.msra.mxu0 0
        %4580 = vmatprep.subr.bf16.mxu0 0
        %4581 = vmatpush1.bf16.xpose.msra.mxu0 0
        %4582 = vmatprep.subr.bf16.mxu0 0
        %4583 = vmatpush1.bf16.xpose.msra.mxu0 0
        %4584 = vmatprep.mubr.bf16.mxu0 0
        %4585 = vmatmul.mubr.bf16.gmra.mrb[0].mxu0 %v4547
        %v4586 = vpop.f32.mrb[0].mxu0
        %v4587 = vadd.f32 0.0, %v4586
        %v4588 = vpop.f32.mrb[0].mxu0
        %v4589 = vpop.f32.mrb[0].mxu0
        %v4590 = vpop.f32.mrb[0].mxu0
        %4591 = vdwg.mxu0
        %4592 = vrot.lane.b32.xlu0 %v3548, 64
        %v4593 = vpop.permute.xlu0 %4592
        %4594 = vrot.lane.b32.xlu0 %v3552, 64
        %v4595 = vpop.permute.xlu0 %4594
        %v4597 = vsel %vm1200, %v4593, 0
        %v4600 = vsel %vm1200, %v4595, 0
        %4602 = vmatprep.subr.bf16.mxu0 0
        %4603 = vmatpush1.bf16.xpose.msra.mxu0 %v4600
        %4604 = vmatprep.subr.bf16.mxu0 0
        %4605 = vmatpush1.bf16.xpose.msra.mxu0 0
        %4606 = vmatprep.subr.bf16.mxu0 0
        %4607 = vmatpush1.bf16.xpose.msra.mxu0 0
        %4608 = vmatprep.subr.bf16.mxu0 0
        %4609 = vmatpush1.bf16.xpose.msra.mxu0 0
        %4610 = vmatprep.subr.bf16.mxu0 0
        %4611 = vmatpush1.bf16.xpose.msra.mxu0 0
        %4612 = vmatprep.subr.bf16.mxu0 0
        %4613 = vmatpush1.bf16.xpose.msra.mxu0 0
        %4614 = vmatprep.subr.bf16.mxu0 0
        %4615 = vmatpush1.bf16.xpose.msra.mxu0 0
        %4616 = vmatprep.subr.bf16.mxu0 0
        %4617 = vmatpush1.bf16.xpose.msra.mxu0 0
        %4618 = vmatprep.subr.bf16.mxu0 0
        %4619 = vmatpush1.bf16.xpose.msra.mxu0 0
        %4620 = vmatprep.subr.bf16.mxu0 0
        %4621 = vmatpush1.bf16.xpose.msra.mxu0 0
        %4622 = vmatprep.subr.bf16.mxu0 0
        %4623 = vmatpush1.bf16.xpose.msra.mxu0 0
        %4624 = vmatprep.subr.bf16.mxu0 0
        %4625 = vmatpush1.bf16.xpose.msra.mxu0 0
        %4626 = vmatprep.subr.bf16.mxu0 0
        %4627 = vmatpush1.bf16.xpose.msra.mxu0 0
        %4628 = vmatprep.subr.bf16.mxu0 0
        %4629 = vmatpush1.bf16.xpose.msra.mxu0 0
        %4630 = vmatprep.subr.bf16.mxu0 0
        %4631 = vmatpush1.bf16.xpose.msra.mxu0 0
        %4632 = vmatprep.subr.bf16.mxu0 0
        %4633 = vmatpush1.bf16.xpose.msra.mxu0 0
        %4634 = vmatprep.mubr.bf16.mxu0 0
        %4635 = vmatmul.mubr.bf16.gmra.mrb[0].mxu0 %v4597
        %v4636 = vpop.f32.mrb[0].mxu0
        %v4637 = vadd.f32 0.0, %v4636
        %v4638 = vpop.f32.mrb[0].mxu0
        %v4639 = vpop.f32.mrb[0].mxu0
        %v4640 = vpop.f32.mrb[0].mxu0
        %4641 = vdwg.mxu0
        %v4642 = vmul.f32 %v4487, 0.17677669
        %v4643 = vmul.f32 %v4537, 0.17677669
        %v4644 = vmul.f32 %v4587, 0.17677669
        %v4645 = vmul.f32 %v4637, 0.17677669
        %v4646 = vadd.f32 %v4642, %v3752
        %v4647 = vadd.f32 %v4643, %v3756
        %v4648 = vadd.f32 %v4644, %v3760
        %v4649 = vadd.f32 %v4645, %v3764
        %v4650 = vsel %vm3773, %v4646, -inf
        %4651 = vmax.xlane.f32.xlu0 %v4650
        %v4652 = vpop.xlane.xlu0 %4651
        %v4653 = vsel %vm3773, %v4647, -inf
        %4654 = vmax.xlane.f32.xlu0 %v4653
        %v4655 = vpop.xlane.xlu0 %4654
        %v4656 = vsel %vm3773, %v4648, -inf
        %4657 = vmax.xlane.f32.xlu0 %v4656
        %v4658 = vpop.xlane.xlu0 %4657
        %v4659 = vsel %vm3773, %v4649, -inf
        %4660 = vmax.xlane.f32.xlu0 %v4659
        %v4661 = vpop.xlane.xlu0 %4660
        %v4662 = vsub.f32 %v4646, %v4652
        %v4663 = vsub.f32 %v4647, %v4655
        %v4664 = vsub.f32 %v4648, %v4658
        %v4665 = vsub.f32 %v4649, %v4661
        %v4666 = vmul.f32 %v4662, 1.442695
        %v4667 = vpow.pop %v4666
        %v4668 = vmul.f32 %v4663, 1.442695
        %v4669 = vpow.pop %v4668
        %v4670 = vmul.f32 %v4664, 1.442695
        %v4671 = vpow.pop %v4670
        %v4672 = vmul.f32 %v4665, 1.442695
        %v4673 = vpow.pop %v4672
        %v4674 = vsel %vm3773, %v4667, 0.0
        %4675 = vadd.xlane.f32.xlu0 %v4674
        %v4676 = vpop.xlane.xlu0 %4675
        %v4677 = vsel %vm3773, %v4669, 0.0
        %4678 = vadd.xlane.f32.xlu0 %v4677
        %v4679 = vpop.xlane.xlu0 %4678
        %v4680 = vsel %vm3773, %v4671, 0.0
        %4681 = vadd.xlane.f32.xlu0 %v4680
        %v4682 = vpop.xlane.xlu0 %4681
        %v4683 = vsel %vm3773, %v4673, 0.0
        %4684 = vadd.xlane.f32.xlu0 %v4683
        %v4685 = vpop.xlane.xlu0 %4684
        %v4686 = vrcp.pop %v4676
        %v4687 = vrcp.pop %v4679
        %v4688 = vrcp.pop %v4682
        %v4689 = vrcp.pop %v4685
        %v4690 = vmul.f32 %v4667, %v4686
        %v4691 = vmul.f32 %v4669, %v4687
        %v4692 = vmul.f32 %v4671, %v4688
        %v4693 = vmul.f32 %v4673, %v4689
        %v4694 = vpack.c.bf16 %v4690, %v4690
        %v4695 = vpack.c.bf16 %v4691, %v4691
        %v4696 = vpack.c.bf16 %v4692, %v4692
        %v4697 = vpack.c.bf16 %v4693, %v4693
        %4698 = vrot.lane.b32.xlu0 %v3553, 64
        %v4699 = vpop.permute.xlu0 %4698
        %v4702 = vsel %vm3773, %v4694, 0
        %4704 = vmatprep.subr.bf16.mxu0 0
        %4705 = vmatpush1.bf16.msra.mxu0 %v4699
        %4706 = vmatprep.subr.bf16.mxu0 0
        %4707 = vmatpush1.bf16.msra.mxu0 0
        %4708 = vmatprep.subr.bf16.mxu0 0
        %4709 = vmatpush1.bf16.msra.mxu0 0
        %4710 = vmatprep.subr.bf16.mxu0 0
        %4711 = vmatpush1.bf16.msra.mxu0 0
        %4712 = vmatprep.subr.bf16.mxu0 0
        %4713 = vmatpush1.bf16.msra.mxu0 0
        %4714 = vmatprep.subr.bf16.mxu0 0
        %4715 = vmatpush1.bf16.msra.mxu0 0
        %4716 = vmatprep.subr.bf16.mxu0 0
        %4717 = vmatpush1.bf16.msra.mxu0 0
        %4718 = vmatprep.subr.bf16.mxu0 0
        %4719 = vmatpush1.bf16.msra.mxu0 0
        %4720 = vmatprep.subr.bf16.mxu0 0
        %4721 = vmatpush1.bf16.msra.mxu0 0
        %4722 = vmatprep.subr.bf16.mxu0 0
        %4723 = vmatpush1.bf16.msra.mxu0 0
        %4724 = vmatprep.subr.bf16.mxu0 0
        %4725 = vmatpush1.bf16.msra.mxu0 0
        %4726 = vmatprep.subr.bf16.mxu0 0
        %4727 = vmatpush1.bf16.msra.mxu0 0
        %4728 = vmatprep.subr.bf16.mxu0 0
        %4729 = vmatpush1.bf16.msra.mxu0 0
        %4730 = vmatprep.subr.bf16.mxu0 0
        %4731 = vmatpush1.bf16.msra.mxu0 0
        %4732 = vmatprep.subr.bf16.mxu0 0
        %4733 = vmatpush1.bf16.msra.mxu0 0
        %4734 = vmatprep.subr.bf16.mxu0 0
        %4735 = vmatpush1.bf16.msra.mxu0 0
        %4736 = vmatprep.mubr.bf16.mxu0 0
        %4737 = vmatmul.mubr.bf16.gmra.mrb[0].mxu0 %v4702
        %v4738 = vpop.f32.mrb[0].mxu0
        %v4739 = vadd.f32 0.0, %v4738
        %v4740 = vpop.f32.mrb[0].mxu0
        %v4741 = vpop.f32.mrb[0].mxu0
        %v4742 = vpop.f32.mrb[0].mxu0
        %4743 = vdwg.mxu0
        %4744 = vrot.lane.b32.xlu0 %v3554, 64
        %v4745 = vpop.permute.xlu0 %4744
        %v4748 = vsel %vm3773, %v4695, 0
        %4750 = vmatprep.subr.bf16.mxu0 0
        %4751 = vmatpush1.bf16.msra.mxu0 %v4745
        %4752 = vmatprep.subr.bf16.mxu0 0
        %4753 = vmatpush1.bf16.msra.mxu0 0
        %4754 = vmatprep.subr.bf16.mxu0 0
        %4755 = vmatpush1.bf16.msra.mxu0 0
        %4756 = vmatprep.subr.bf16.mxu0 0
        %4757 = vmatpush1.bf16.msra.mxu0 0
        %4758 = vmatprep.subr.bf16.mxu0 0
        %4759 = vmatpush1.bf16.msra.mxu0 0
        %4760 = vmatprep.subr.bf16.mxu0 0
        %4761 = vmatpush1.bf16.msra.mxu0 0
        %4762 = vmatprep.subr.bf16.mxu0 0
        %4763 = vmatpush1.bf16.msra.mxu0 0
        %4764 = vmatprep.subr.bf16.mxu0 0
        %4765 = vmatpush1.bf16.msra.mxu0 0
        %4766 = vmatprep.subr.bf16.mxu0 0
        %4767 = vmatpush1.bf16.msra.mxu0 0
        %4768 = vmatprep.subr.bf16.mxu0 0
        %4769 = vmatpush1.bf16.msra.mxu0 0
        %4770 = vmatprep.subr.bf16.mxu0 0
        %4771 = vmatpush1.bf16.msra.mxu0 0
        %4772 = vmatprep.subr.bf16.mxu0 0
        %4773 = vmatpush1.bf16.msra.mxu0 0
        %4774 = vmatprep.subr.bf16.mxu0 0
        %4775 = vmatpush1.bf16.msra.mxu0 0
        %4776 = vmatprep.subr.bf16.mxu0 0
        %4777 = vmatpush1.bf16.msra.mxu0 0
        %4778 = vmatprep.subr.bf16.mxu0 0
        %4779 = vmatpush1.bf16.msra.mxu0 0
        %4780 = vmatprep.subr.bf16.mxu0 0
        %4781 = vmatpush1.bf16.msra.mxu0 0
        %4782 = vmatprep.mubr.bf16.mxu0 0
        %4783 = vmatmul.mubr.bf16.gmra.mrb[0].mxu0 %v4748
        %v4784 = vpop.f32.mrb[0].mxu0
        %v4785 = vadd.f32 0.0, %v4784
        %v4786 = vpop.f32.mrb[0].mxu0
        %v4787 = vpop.f32.mrb[0].mxu0
        %v4788 = vpop.f32.mrb[0].mxu0
        %4789 = vdwg.mxu0
        %4790 = vrot.lane.b32.xlu0 %v3555, 64
        %v4791 = vpop.permute.xlu0 %4790
        %v4794 = vsel %vm3773, %v4696, 0
        %4796 = vmatprep.subr.bf16.mxu0 0
        %4797 = vmatpush1.bf16.msra.mxu0 %v4791
        %4798 = vmatprep.subr.bf16.mxu0 0
        %4799 = vmatpush1.bf16.msra.mxu0 0
        %4800 = vmatprep.subr.bf16.mxu0 0
        %4801 = vmatpush1.bf16.msra.mxu0 0
        %4802 = vmatprep.subr.bf16.mxu0 0
        %4803 = vmatpush1.bf16.msra.mxu0 0
        %4804 = vmatprep.subr.bf16.mxu0 0
        %4805 = vmatpush1.bf16.msra.mxu0 0
        %4806 = vmatprep.subr.bf16.mxu0 0
        %4807 = vmatpush1.bf16.msra.mxu0 0
        %4808 = vmatprep.subr.bf16.mxu0 0
        %4809 = vmatpush1.bf16.msra.mxu0 0
        %4810 = vmatprep.subr.bf16.mxu0 0
        %4811 = vmatpush1.bf16.msra.mxu0 0
        %4812 = vmatprep.subr.bf16.mxu0 0
        %4813 = vmatpush1.bf16.msra.mxu0 0
        %4814 = vmatprep.subr.bf16.mxu0 0
        %4815 = vmatpush1.bf16.msra.mxu0 0
        %4816 = vmatprep.subr.bf16.mxu0 0
        %4817 = vmatpush1.bf16.msra.mxu0 0
        %4818 = vmatprep.subr.bf16.mxu0 0
        %4819 = vmatpush1.bf16.msra.mxu0 0
        %4820 = vmatprep.subr.bf16.mxu0 0
        %4821 = vmatpush1.bf16.msra.mxu0 0
        %4822 = vmatprep.subr.bf16.mxu0 0
        %4823 = vmatpush1.bf16.msra.mxu0 0
        %4824 = vmatprep.subr.bf16.mxu0 0
        %4825 = vmatpush1.bf16.msra.mxu0 0
        %4826 = vmatprep.subr.bf16.mxu0 0
        %4827 = vmatpush1.bf16.msra.mxu0 0
        %4828 = vmatprep.mubr.bf16.mxu0 0
        %4829 = vmatmul.mubr.bf16.gmra.mrb[0].mxu0 %v4794
        %v4830 = vpop.f32.mrb[0].mxu0
        %v4831 = vadd.f32 0.0, %v4830
        %v4832 = vpop.f32.mrb[0].mxu0
        %v4833 = vpop.f32.mrb[0].mxu0
        %v4834 = vpop.f32.mrb[0].mxu0
        %4835 = vdwg.mxu0
        %4836 = vrot.lane.b32.xlu0 %v3556, 64
        %v4837 = vpop.permute.xlu0 %4836
        %v4840 = vsel %vm3773, %v4697, 0
        %4842 = vmatprep.subr.bf16.mxu0 0
        %4843 = vmatpush1.bf16.msra.mxu0 %v4837
        %4844 = vmatprep.subr.bf16.mxu0 0
        %4845 = vmatpush1.bf16.msra.mxu0 0
        %4846 = vmatprep.subr.bf16.mxu0 0
        %4847 = vmatpush1.bf16.msra.mxu0 0
        %4848 = vmatprep.subr.bf16.mxu0 0
        %4849 = vmatpush1.bf16.msra.mxu0 0
        %4850 = vmatprep.subr.bf16.mxu0 0
        %4851 = vmatpush1.bf16.msra.mxu0 0
        %4852 = vmatprep.subr.bf16.mxu0 0
        %4853 = vmatpush1.bf16.msra.mxu0 0
        %4854 = vmatprep.subr.bf16.mxu0 0
        %4855 = vmatpush1.bf16.msra.mxu0 0
        %4856 = vmatprep.subr.bf16.mxu0 0
        %4857 = vmatpush1.bf16.msra.mxu0 0
        %4858 = vmatprep.subr.bf16.mxu0 0
        %4859 = vmatpush1.bf16.msra.mxu0 0
        %4860 = vmatprep.subr.bf16.mxu0 0
        %4861 = vmatpush1.bf16.msra.mxu0 0
        %4862 = vmatprep.subr.bf16.mxu0 0
        %4863 = vmatpush1.bf16.msra.mxu0 0
        %4864 = vmatprep.subr.bf16.mxu0 0
        %4865 = vmatpush1.bf16.msra.mxu0 0
        %4866 = vmatprep.subr.bf16.mxu0 0
        %4867 = vmatpush1.bf16.msra.mxu0 0
        %4868 = vmatprep.subr.bf16.mxu0 0
        %4869 = vmatpush1.bf16.msra.mxu0 0
        %4870 = vmatprep.subr.bf16.mxu0 0
        %4871 = vmatpush1.bf16.msra.mxu0 0
        %4872 = vmatprep.subr.bf16.mxu0 0
        %4873 = vmatpush1.bf16.msra.mxu0 0
        %4874 = vmatprep.mubr.bf16.mxu0 0
        %4875 = vmatmul.mubr.bf16.gmra.mrb[0].mxu0 %v4840
        %v4876 = vpop.f32.mrb[0].mxu0
        %v4877 = vadd.f32 0.0, %v4876
        %v4878 = vpop.f32.mrb[0].mxu0
        %v4879 = vpop.f32.mrb[0].mxu0
        %v4880 = vpop.f32.mrb[0].mxu0
        %4881 = vdwg.mxu0
        %4882 = vrot.lane.b32.xlu0 %v3545, 32
        %v4883 = vpop.permute.xlu0 %4882
        %4884 = vrot.lane.b32.xlu0 %v3549, 32
        %v4885 = vpop.permute.xlu0 %4884
        %v4887 = vsel %vm1200, %v4883, 0
        %v4890 = vsel %vm1200, %v4885, 0
        %4892 = vmatprep.subr.bf16.mxu0 0
        %4893 = vmatpush1.bf16.xpose.msra.mxu0 %v4890
        %4894 = vmatprep.subr.bf16.mxu0 0
        %4895 = vmatpush1.bf16.xpose.msra.mxu0 0
        %4896 = vmatprep.subr.bf16.mxu0 0
        %4897 = vmatpush1.bf16.xpose.msra.mxu0 0
        %4898 = vmatprep.subr.bf16.mxu0 0
        %4899 = vmatpush1.bf16.xpose.msra.mxu0 0
        %4900 = vmatprep.subr.bf16.mxu0 0
        %4901 = vmatpush1.bf16.xpose.msra.mxu0 0
        %4902 = vmatprep.subr.bf16.mxu0 0
        %4903 = vmatpush1.bf16.xpose.msra.mxu0 0
        %4904 = vmatprep.subr.bf16.mxu0 0
        %4905 = vmatpush1.bf16.xpose.msra.mxu0 0
        %4906 = vmatprep.subr.bf16.mxu0 0
        %4907 = vmatpush1.bf16.xpose.msra.mxu0 0
        %4908 = vmatprep.subr.bf16.mxu0 0
        %4909 = vmatpush1.bf16.xpose.msra.mxu0 0
        %4910 = vmatprep.subr.bf16.mxu0 0
        %4911 = vmatpush1.bf16.xpose.msra.mxu0 0
        %4912 = vmatprep.subr.bf16.mxu0 0
        %4913 = vmatpush1.bf16.xpose.msra.mxu0 0
        %4914 = vmatprep.subr.bf16.mxu0 0
        %4915 = vmatpush1.bf16.xpose.msra.mxu0 0
        %4916 = vmatprep.subr.bf16.mxu0 0
        %4917 = vmatpush1.bf16.xpose.msra.mxu0 0
        %4918 = vmatprep.subr.bf16.mxu0 0
        %4919 = vmatpush1.bf16.xpose.msra.mxu0 0
        %4920 = vmatprep.subr.bf16.mxu0 0
        %4921 = vmatpush1.bf16.xpose.msra.mxu0 0
        %4922 = vmatprep.subr.bf16.mxu0 0
        %4923 = vmatpush1.bf16.xpose.msra.mxu0 0
        %4924 = vmatprep.mubr.bf16.mxu0 0
        %4925 = vmatmul.mubr.bf16.gmra.mrb[0].mxu0 %v4887
        %v4926 = vpop.f32.mrb[0].mxu0
        %v4927 = vadd.f32 0.0, %v4926
        %v4928 = vpop.f32.mrb[0].mxu0
        %v4929 = vpop.f32.mrb[0].mxu0
        %v4930 = vpop.f32.mrb[0].mxu0
        %4931 = vdwg.mxu0
        %4932 = vrot.lane.b32.xlu0 %v3546, 32
        %v4933 = vpop.permute.xlu0 %4932
        %4934 = vrot.lane.b32.xlu0 %v3550, 32
        %v4935 = vpop.permute.xlu0 %4934
        %v4937 = vsel %vm1200, %v4933, 0
        %v4940 = vsel %vm1200, %v4935, 0
        %4942 = vmatprep.subr.bf16.mxu0 0
        %4943 = vmatpush1.bf16.xpose.msra.mxu0 %v4940
        %4944 = vmatprep.subr.bf16.mxu0 0
        %4945 = vmatpush1.bf16.xpose.msra.mxu0 0
        %4946 = vmatprep.subr.bf16.mxu0 0
        %4947 = vmatpush1.bf16.xpose.msra.mxu0 0
        %4948 = vmatprep.subr.bf16.mxu0 0
        %4949 = vmatpush1.bf16.xpose.msra.mxu0 0
        %4950 = vmatprep.subr.bf16.mxu0 0
        %4951 = vmatpush1.bf16.xpose.msra.mxu0 0
        %4952 = vmatprep.subr.bf16.mxu0 0
        %4953 = vmatpush1.bf16.xpose.msra.mxu0 0
        %4954 = vmatprep.subr.bf16.mxu0 0
        %4955 = vmatpush1.bf16.xpose.msra.mxu0 0
        %4956 = vmatprep.subr.bf16.mxu0 0
        %4957 = vmatpush1.bf16.xpose.msra.mxu0 0
        %4958 = vmatprep.subr.bf16.mxu0 0
        %4959 = vmatpush1.bf16.xpose.msra.mxu0 0
        %4960 = vmatprep.subr.bf16.mxu0 0
        %4961 = vmatpush1.bf16.xpose.msra.mxu0 0
        %4962 = vmatprep.subr.bf16.mxu0 0
        %4963 = vmatpush1.bf16.xpose.msra.mxu0 0
        %4964 = vmatprep.subr.bf16.mxu0 0
        %4965 = vmatpush1.bf16.xpose.msra.mxu0 0
        %4966 = vmatprep.subr.bf16.mxu0 0
        %4967 = vmatpush1.bf16.xpose.msra.mxu0 0
        %4968 = vmatprep.subr.bf16.mxu0 0
        %4969 = vmatpush1.bf16.xpose.msra.mxu0 0
        %4970 = vmatprep.subr.bf16.mxu0 0
        %4971 = vmatpush1.bf16.xpose.msra.mxu0 0
        %4972 = vmatprep.subr.bf16.mxu0 0
        %4973 = vmatpush1.bf16.xpose.msra.mxu0 0
        %4974 = vmatprep.mubr.bf16.mxu0 0
        %4975 = vmatmul.mubr.bf16.gmra.mrb[0].mxu0 %v4937
        %v4976 = vpop.f32.mrb[0].mxu0
        %v4977 = vadd.f32 0.0, %v4976
        %v4978 = vpop.f32.mrb[0].mxu0
        %v4979 = vpop.f32.mrb[0].mxu0
        %v4980 = vpop.f32.mrb[0].mxu0
        %4981 = vdwg.mxu0
        %4982 = vrot.lane.b32.xlu0 %v3547, 32
        %v4983 = vpop.permute.xlu0 %4982
        %4984 = vrot.lane.b32.xlu0 %v3551, 32
        %v4985 = vpop.permute.xlu0 %4984
        %v4987 = vsel %vm1200, %v4983, 0
        %v4990 = vsel %vm1200, %v4985, 0
        %4992 = vmatprep.subr.bf16.mxu0 0
        %4993 = vmatpush1.bf16.xpose.msra.mxu0 %v4990
        %4994 = vmatprep.subr.bf16.mxu0 0
        %4995 = vmatpush1.bf16.xpose.msra.mxu0 0
        %4996 = vmatprep.subr.bf16.mxu0 0
        %4997 = vmatpush1.bf16.xpose.msra.mxu0 0
        %4998 = vmatprep.subr.bf16.mxu0 0
        %4999 = vmatpush1.bf16.xpose.msra.mxu0 0
        %5000 = vmatprep.subr.bf16.mxu0 0
        %5001 = vmatpush1.bf16.xpose.msra.mxu0 0
        %5002 = vmatprep.subr.bf16.mxu0 0
        %5003 = vmatpush1.bf16.xpose.msra.mxu0 0
        %5004 = vmatprep.subr.bf16.mxu0 0
        %5005 = vmatpush1.bf16.xpose.msra.mxu0 0
        %5006 = vmatprep.subr.bf16.mxu0 0
        %5007 = vmatpush1.bf16.xpose.msra.mxu0 0
        %5008 = vmatprep.subr.bf16.mxu0 0
        %5009 = vmatpush1.bf16.xpose.msra.mxu0 0
        %5010 = vmatprep.subr.bf16.mxu0 0
        %5011 = vmatpush1.bf16.xpose.msra.mxu0 0
        %5012 = vmatprep.subr.bf16.mxu0 0
        %5013 = vmatpush1.bf16.xpose.msra.mxu0 0
        %5014 = vmatprep.subr.bf16.mxu0 0
        %5015 = vmatpush1.bf16.xpose.msra.mxu0 0
        %5016 = vmatprep.subr.bf16.mxu0 0
        %5017 = vmatpush1.bf16.xpose.msra.mxu0 0
        %5018 = vmatprep.subr.bf16.mxu0 0
        %5019 = vmatpush1.bf16.xpose.msra.mxu0 0
        %5020 = vmatprep.subr.bf16.mxu0 0
        %5021 = vmatpush1.bf16.xpose.msra.mxu0 0
        %5022 = vmatprep.subr.bf16.mxu0 0
        %5023 = vmatpush1.bf16.xpose.msra.mxu0 0
        %5024 = vmatprep.mubr.bf16.mxu0 0
        %5025 = vmatmul.mubr.bf16.gmra.mrb[0].mxu0 %v4987
        %v5026 = vpop.f32.mrb[0].mxu0
        %v5027 = vadd.f32 0.0, %v5026
        %v5028 = vpop.f32.mrb[0].mxu0
        %v5029 = vpop.f32.mrb[0].mxu0
        %v5030 = vpop.f32.mrb[0].mxu0
        %5031 = vdwg.mxu0
        %5032 = vrot.lane.b32.xlu0 %v3548, 32
        %v5033 = vpop.permute.xlu0 %5032
        %5034 = vrot.lane.b32.xlu0 %v3552, 32
        %v5035 = vpop.permute.xlu0 %5034
        %v5037 = vsel %vm1200, %v5033, 0
        %v5040 = vsel %vm1200, %v5035, 0
        %5042 = vmatprep.subr.bf16.mxu0 0
        %5043 = vmatpush1.bf16.xpose.msra.mxu0 %v5040
        %5044 = vmatprep.subr.bf16.mxu0 0
        %5045 = vmatpush1.bf16.xpose.msra.mxu0 0
        %5046 = vmatprep.subr.bf16.mxu0 0
        %5047 = vmatpush1.bf16.xpose.msra.mxu0 0
        %5048 = vmatprep.subr.bf16.mxu0 0
        %5049 = vmatpush1.bf16.xpose.msra.mxu0 0
        %5050 = vmatprep.subr.bf16.mxu0 0
        %5051 = vmatpush1.bf16.xpose.msra.mxu0 0
        %5052 = vmatprep.subr.bf16.mxu0 0
        %5053 = vmatpush1.bf16.xpose.msra.mxu0 0
        %5054 = vmatprep.subr.bf16.mxu0 0
        %5055 = vmatpush1.bf16.xpose.msra.mxu0 0
        %5056 = vmatprep.subr.bf16.mxu0 0
        %5057 = vmatpush1.bf16.xpose.msra.mxu0 0
        %5058 = vmatprep.subr.bf16.mxu0 0
        %5059 = vmatpush1.bf16.xpose.msra.mxu0 0
        %5060 = vmatprep.subr.bf16.mxu0 0
        %5061 = vmatpush1.bf16.xpose.msra.mxu0 0
        %5062 = vmatprep.subr.bf16.mxu0 0
        %5063 = vmatpush1.bf16.xpose.msra.mxu0 0
        %5064 = vmatprep.subr.bf16.mxu0 0
        %5065 = vmatpush1.bf16.xpose.msra.mxu0 0
        %5066 = vmatprep.subr.bf16.mxu0 0
        %5067 = vmatpush1.bf16.xpose.msra.mxu0 0
        %5068 = vmatprep.subr.bf16.mxu0 0
        %5069 = vmatpush1.bf16.xpose.msra.mxu0 0
        %5070 = vmatprep.subr.bf16.mxu0 0
        %5071 = vmatpush1.bf16.xpose.msra.mxu0 0
        %5072 = vmatprep.subr.bf16.mxu0 0
        %5073 = vmatpush1.bf16.xpose.msra.mxu0 0
        %5074 = vmatprep.mubr.bf16.mxu0 0
        %5075 = vmatmul.mubr.bf16.gmra.mrb[0].mxu0 %v5037
        %v5076 = vpop.f32.mrb[0].mxu0
        %v5077 = vadd.f32 0.0, %v5076
        %v5078 = vpop.f32.mrb[0].mxu0
        %v5079 = vpop.f32.mrb[0].mxu0
        %v5080 = vpop.f32.mrb[0].mxu0
        %5081 = vdwg.mxu0
        %v5082 = vmul.f32 %v4927, 0.17677669
        %v5083 = vmul.f32 %v4977, 0.17677669
        %v5084 = vmul.f32 %v5027, 0.17677669
        %v5085 = vmul.f32 %v5077, 0.17677669
        %v5086 = vadd.f32 %v5082, %v3752
        %v5087 = vadd.f32 %v5083, %v3756
        %v5088 = vadd.f32 %v5084, %v3760
        %v5089 = vadd.f32 %v5085, %v3764
        %v5090 = vsel %vm3773, %v5086, -inf
        %5091 = vmax.xlane.f32.xlu0 %v5090
        %v5092 = vpop.xlane.xlu0 %5091
        %v5093 = vsel %vm3773, %v5087, -inf
        %5094 = vmax.xlane.f32.xlu0 %v5093
        %v5095 = vpop.xlane.xlu0 %5094
        %v5096 = vsel %vm3773, %v5088, -inf
        %5097 = vmax.xlane.f32.xlu0 %v5096
        %v5098 = vpop.xlane.xlu0 %5097
        %v5099 = vsel %vm3773, %v5089, -inf
        %5100 = vmax.xlane.f32.xlu0 %v5099
        %v5101 = vpop.xlane.xlu0 %5100
        %v5102 = vsub.f32 %v5086, %v5092
        %v5103 = vsub.f32 %v5087, %v5095
        %v5104 = vsub.f32 %v5088, %v5098
        %v5105 = vsub.f32 %v5089, %v5101
        %v5106 = vmul.f32 %v5102, 1.442695
        %v5107 = vpow.pop %v5106
        %v5108 = vmul.f32 %v5103, 1.442695
        %v5109 = vpow.pop %v5108
        %v5110 = vmul.f32 %v5104, 1.442695
        %v5111 = vpow.pop %v5110
        %v5112 = vmul.f32 %v5105, 1.442695
        %v5113 = vpow.pop %v5112
        %v5114 = vsel %vm3773, %v5107, 0.0
        %5115 = vadd.xlane.f32.xlu0 %v5114
        %v5116 = vpop.xlane.xlu0 %5115
        %v5117 = vsel %vm3773, %v5109, 0.0
        %5118 = vadd.xlane.f32.xlu0 %v5117
        %v5119 = vpop.xlane.xlu0 %5118
        %v5120 = vsel %vm3773, %v5111, 0.0
        %5121 = vadd.xlane.f32.xlu0 %v5120
        %v5122 = vpop.xlane.xlu0 %5121
        %v5123 = vsel %vm3773, %v5113, 0.0
        %5124 = vadd.xlane.f32.xlu0 %v5123
        %v5125 = vpop.xlane.xlu0 %5124
        %v5126 = vrcp.pop %v5116
        %v5127 = vrcp.pop %v5119
        %v5128 = vrcp.pop %v5122
        %v5129 = vrcp.pop %v5125
        %v5130 = vmul.f32 %v5107, %v5126
        %v5131 = vmul.f32 %v5109, %v5127
        %v5132 = vmul.f32 %v5111, %v5128
        %v5133 = vmul.f32 %v5113, %v5129
        %v5134 = vpack.c.bf16 %v5130, %v5130
        %v5135 = vpack.c.bf16 %v5131, %v5131
        %v5136 = vpack.c.bf16 %v5132, %v5132
        %v5137 = vpack.c.bf16 %v5133, %v5133
        %5138 = vrot.lane.b32.xlu0 %v3553, 32
        %v5139 = vpop.permute.xlu0 %5138
        %v5142 = vsel %vm3773, %v5134, 0
        %5144 = vmatprep.subr.bf16.mxu0 0
        %5145 = vmatpush1.bf16.msra.mxu0 %v5139
        %5146 = vmatprep.subr.bf16.mxu0 0
        %5147 = vmatpush1.bf16.msra.mxu0 0
        %5148 = vmatprep.subr.bf16.mxu0 0
        %5149 = vmatpush1.bf16.msra.mxu0 0
        %5150 = vmatprep.subr.bf16.mxu0 0
        %5151 = vmatpush1.bf16.msra.mxu0 0
        %5152 = vmatprep.subr.bf16.mxu0 0
        %5153 = vmatpush1.bf16.msra.mxu0 0
        %5154 = vmatprep.subr.bf16.mxu0 0
        %5155 = vmatpush1.bf16.msra.mxu0 0
        %5156 = vmatprep.subr.bf16.mxu0 0
        %5157 = vmatpush1.bf16.msra.mxu0 0
        %5158 = vmatprep.subr.bf16.mxu0 0
        %5159 = vmatpush1.bf16.msra.mxu0 0
        %5160 = vmatprep.subr.bf16.mxu0 0
        %5161 = vmatpush1.bf16.msra.mxu0 0
        %5162 = vmatprep.subr.bf16.mxu0 0
        %5163 = vmatpush1.bf16.msra.mxu0 0
        %5164 = vmatprep.subr.bf16.mxu0 0
        %5165 = vmatpush1.bf16.msra.mxu0 0
        %5166 = vmatprep.subr.bf16.mxu0 0
        %5167 = vmatpush1.bf16.msra.mxu0 0
        %5168 = vmatprep.subr.bf16.mxu0 0
        %5169 = vmatpush1.bf16.msra.mxu0 0
        %5170 = vmatprep.subr.bf16.mxu0 0
        %5171 = vmatpush1.bf16.msra.mxu0 0
        %5172 = vmatprep.subr.bf16.mxu0 0
        %5173 = vmatpush1.bf16.msra.mxu0 0
        %5174 = vmatprep.subr.bf16.mxu0 0
        %5175 = vmatpush1.bf16.msra.mxu0 0
        %5176 = vmatprep.mubr.bf16.mxu0 0
        %5177 = vmatmul.mubr.bf16.gmra.mrb[0].mxu0 %v5142
        %v5178 = vpop.f32.mrb[0].mxu0
        %v5179 = vadd.f32 0.0, %v5178
        %v5180 = vpop.f32.mrb[0].mxu0
        %v5181 = vpop.f32.mrb[0].mxu0
        %v5182 = vpop.f32.mrb[0].mxu0
        %5183 = vdwg.mxu0
        %5184 = vrot.lane.b32.xlu0 %v3554, 32
        %v5185 = vpop.permute.xlu0 %5184
        %v5188 = vsel %vm3773, %v5135, 0
        %5190 = vmatprep.subr.bf16.mxu0 0
        %5191 = vmatpush1.bf16.msra.mxu0 %v5185
        %5192 = vmatprep.subr.bf16.mxu0 0
        %5193 = vmatpush1.bf16.msra.mxu0 0
        %5194 = vmatprep.subr.bf16.mxu0 0
        %5195 = vmatpush1.bf16.msra.mxu0 0
        %5196 = vmatprep.subr.bf16.mxu0 0
        %5197 = vmatpush1.bf16.msra.mxu0 0
        %5198 = vmatprep.subr.bf16.mxu0 0
        %5199 = vmatpush1.bf16.msra.mxu0 0
        %5200 = vmatprep.subr.bf16.mxu0 0
        %5201 = vmatpush1.bf16.msra.mxu0 0
        %5202 = vmatprep.subr.bf16.mxu0 0
        %5203 = vmatpush1.bf16.msra.mxu0 0
        %5204 = vmatprep.subr.bf16.mxu0 0
        %5205 = vmatpush1.bf16.msra.mxu0 0
        %5206 = vmatprep.subr.bf16.mxu0 0
        %5207 = vmatpush1.bf16.msra.mxu0 0
        %5208 = vmatprep.subr.bf16.mxu0 0
        %5209 = vmatpush1.bf16.msra.mxu0 0
        %5210 = vmatprep.subr.bf16.mxu0 0
        %5211 = vmatpush1.bf16.msra.mxu0 0
        %5212 = vmatprep.subr.bf16.mxu0 0
        %5213 = vmatpush1.bf16.msra.mxu0 0
        %5214 = vmatprep.subr.bf16.mxu0 0
        %5215 = vmatpush1.bf16.msra.mxu0 0
        %5216 = vmatprep.subr.bf16.mxu0 0
        %5217 = vmatpush1.bf16.msra.mxu0 0
        %5218 = vmatprep.subr.bf16.mxu0 0
        %5219 = vmatpush1.bf16.msra.mxu0 0
        %5220 = vmatprep.subr.bf16.mxu0 0
        %5221 = vmatpush1.bf16.msra.mxu0 0
        %5222 = vmatprep.mubr.bf16.mxu0 0
        %5223 = vmatmul.mubr.bf16.gmra.mrb[0].mxu0 %v5188
        %v5224 = vpop.f32.mrb[0].mxu0
        %v5225 = vadd.f32 0.0, %v5224
        %v5226 = vpop.f32.mrb[0].mxu0
        %v5227 = vpop.f32.mrb[0].mxu0
        %v5228 = vpop.f32.mrb[0].mxu0
        %5229 = vdwg.mxu0
        %5230 = vrot.lane.b32.xlu0 %v3555, 32
        %v5231 = vpop.permute.xlu0 %5230
        %v5234 = vsel %vm3773, %v5136, 0
        %5236 = vmatprep.subr.bf16.mxu0 0
        %5237 = vmatpush1.bf16.msra.mxu0 %v5231
        %5238 = vmatprep.subr.bf16.mxu0 0
        %5239 = vmatpush1.bf16.msra.mxu0 0
        %5240 = vmatprep.subr.bf16.mxu0 0
        %5241 = vmatpush1.bf16.msra.mxu0 0
        %5242 = vmatprep.subr.bf16.mxu0 0
        %5243 = vmatpush1.bf16.msra.mxu0 0
        %5244 = vmatprep.subr.bf16.mxu0 0
        %5245 = vmatpush1.bf16.msra.mxu0 0
        %5246 = vmatprep.subr.bf16.mxu0 0
        %5247 = vmatpush1.bf16.msra.mxu0 0
        %5248 = vmatprep.subr.bf16.mxu0 0
        %5249 = vmatpush1.bf16.msra.mxu0 0
        %5250 = vmatprep.subr.bf16.mxu0 0
        %5251 = vmatpush1.bf16.msra.mxu0 0
        %5252 = vmatprep.subr.bf16.mxu0 0
        %5253 = vmatpush1.bf16.msra.mxu0 0
        %5254 = vmatprep.subr.bf16.mxu0 0
        %5255 = vmatpush1.bf16.msra.mxu0 0
        %5256 = vmatprep.subr.bf16.mxu0 0
        %5257 = vmatpush1.bf16.msra.mxu0 0
        %5258 = vmatprep.subr.bf16.mxu0 0
        %5259 = vmatpush1.bf16.msra.mxu0 0
        %5260 = vmatprep.subr.bf16.mxu0 0
        %5261 = vmatpush1.bf16.msra.mxu0 0
        %5262 = vmatprep.subr.bf16.mxu0 0
        %5263 = vmatpush1.bf16.msra.mxu0 0
        %5264 = vmatprep.subr.bf16.mxu0 0
        %5265 = vmatpush1.bf16.msra.mxu0 0
        %5266 = vmatprep.subr.bf16.mxu0 0
        %5267 = vmatpush1.bf16.msra.mxu0 0
        %5268 = vmatprep.mubr.bf16.mxu0 0
        %5269 = vmatmul.mubr.bf16.gmra.mrb[0].mxu0 %v5234
        %v5270 = vpop.f32.mrb[0].mxu0
        %v5271 = vadd.f32 0.0, %v5270
        %v5272 = vpop.f32.mrb[0].mxu0
        %v5273 = vpop.f32.mrb[0].mxu0
        %v5274 = vpop.f32.mrb[0].mxu0
        %5275 = vdwg.mxu0
        %5276 = vrot.lane.b32.xlu0 %v3556, 32
        %v5277 = vpop.permute.xlu0 %5276
        %v5280 = vsel %vm3773, %v5137, 0
        %5282 = vmatprep.subr.bf16.mxu0 0
        %5283 = vmatpush1.bf16.msra.mxu0 %v5277
        %5284 = vmatprep.subr.bf16.mxu0 0
        %5285 = vmatpush1.bf16.msra.mxu0 0
        %5286 = vmatprep.subr.bf16.mxu0 0
        %5287 = vmatpush1.bf16.msra.mxu0 0
        %5288 = vmatprep.subr.bf16.mxu0 0
        %5289 = vmatpush1.bf16.msra.mxu0 0
        %5290 = vmatprep.subr.bf16.mxu0 0
        %5291 = vmatpush1.bf16.msra.mxu0 0
        %5292 = vmatprep.subr.bf16.mxu0 0
        %5293 = vmatpush1.bf16.msra.mxu0 0
        %5294 = vmatprep.subr.bf16.mxu0 0
        %5295 = vmatpush1.bf16.msra.mxu0 0
        %5296 = vmatprep.subr.bf16.mxu0 0
        %5297 = vmatpush1.bf16.msra.mxu0 0
        %5298 = vmatprep.subr.bf16.mxu0 0
        %5299 = vmatpush1.bf16.msra.mxu0 0
        %5300 = vmatprep.subr.bf16.mxu0 0
        %5301 = vmatpush1.bf16.msra.mxu0 0
        %5302 = vmatprep.subr.bf16.mxu0 0
        %5303 = vmatpush1.bf16.msra.mxu0 0
        %5304 = vmatprep.subr.bf16.mxu0 0
        %5305 = vmatpush1.bf16.msra.mxu0 0
        %5306 = vmatprep.subr.bf16.mxu0 0
        %5307 = vmatpush1.bf16.msra.mxu0 0
        %5308 = vmatprep.subr.bf16.mxu0 0
        %5309 = vmatpush1.bf16.msra.mxu0 0
        %5310 = vmatprep.subr.bf16.mxu0 0
        %5311 = vmatpush1.bf16.msra.mxu0 0
        %5312 = vmatprep.subr.bf16.mxu0 0
        %5313 = vmatpush1.bf16.msra.mxu0 0
        %5314 = vmatprep.mubr.bf16.mxu0 0
        %5315 = vmatmul.mubr.bf16.gmra.mrb[0].mxu0 %v5280
        %v5316 = vpop.f32.mrb[0].mxu0
        %v5317 = vadd.f32 0.0, %v5316
        %v5318 = vpop.f32.mrb[0].mxu0
        %v5319 = vpop.f32.mrb[0].mxu0
        %v5320 = vpop.f32.mrb[0].mxu0
        %5321 = vdwg.mxu0
        %5326 = vrot.lane.b32.xlu0 %v4296, 32
        %v5327 = vpop.permute.xlu0 %5326
        %5328 = vrot.lane.b32.xlu0 %v4343, 32
        %v5329 = vpop.permute.xlu0 %5328
        %5330 = vrot.lane.b32.xlu0 %v4390, 32
        %v5331 = vpop.permute.xlu0 %5330
        %5332 = vrot.lane.b32.xlu0 %v4437, 32
        %v5333 = vpop.permute.xlu0 %5332
        %5342 = vrot.lane.b32.xlu0 %v4739, 64
        %v5343 = vpop.permute.xlu0 %5342
        %5344 = vrot.lane.b32.xlu0 %v4785, 64
        %v5345 = vpop.permute.xlu0 %5344
        %5346 = vrot.lane.b32.xlu0 %v4831, 64
        %v5347 = vpop.permute.xlu0 %5346
        %5348 = vrot.lane.b32.xlu0 %v4877, 64
        %v5349 = vpop.permute.xlu0 %5348
        %5358 = vrot.lane.b32.xlu0 %v5179, 96
        %v5359 = vpop.permute.xlu0 %5358
        %5360 = vrot.lane.b32.xlu0 %v5225, 96
        %v5361 = vpop.permute.xlu0 %5360
        %5362 = vrot.lane.b32.xlu0 %v5271, 96
        %v5363 = vpop.permute.xlu0 %5362
        %5364 = vrot.lane.b32.xlu0 %v5317, 96
        %v5365 = vpop.permute.xlu0 %5364
        %v5370 = vsel %vm1200, %v3860, %v5327
        %v5371 = vsel %vm1200, %v3903, %v5329
        %v5372 = vsel %vm1200, %v3946, %v5331
        %v5373 = vsel %vm1200, %v3989, %v5333
        %v5374 = vsel %vm3023, %v5370, %v5343
        %v5375 = vsel %vm3023, %v5371, %v5345
        %v5376 = vsel %vm3023, %v5372, %v5347
        %v5377 = vsel %vm3023, %v5373, %v5349
        %v5378 = vsel %vm3028, %v5374, %v5359
        %v5379 = vsel %vm3028, %v5375, %v5361
        %v5380 = vsel %vm3028, %v5376, %v5363
        %v5381 = vsel %vm3028, %v5377, %v5365
        %s5382 = scalar_lea.vmem [#allocation16], 64
        %v5383 = vld [vmem:[%s5382] sm:$0xf]
        %v5384 = vld [vmem:[%s5382 + $0x4] sm:$0xf]
        %v5385 = vld [vmem:[%s5382 + $0x8] sm:$0xf]
        %v5386 = vld [vmem:[%s5382 + $0xc] sm:$0xf]
        %v5387 = vld [vmem:[%s5382 + $0x10] sm:$0xf]
        %v5388 = vld [vmem:[%s5382 + $0x14] sm:$0xf]
        %v5389 = vld [vmem:[%s5382 + $0x18] sm:$0xf]
        %v5390 = vld [vmem:[%s5382 + $0x1c] sm:$0xf]
        %v5391 = vld [vmem:[%s5382 + $0x20] sm:$0xf]
        %v5392 = vld [vmem:[%s5382 + $0x24] sm:$0xf]
        %v5393 = vld [vmem:[%s5382 + $0x28] sm:$0xf]
        %v5394 = vld [vmem:[%s5382 + $0x2c] sm:$0xf]
        %v5395 = vld [vmem:[%s5382 + $0x30] sm:$0xf]
        %v5396 = vld [vmem:[%s5382 + $0x34] sm:$0xf]
        %v5397 = vld [vmem:[%s5382 + $0x38] sm:$0xf]
        %v5398 = vld [vmem:[%s5382 + $0x3c] sm:$0xf]
        %v5399 = vpack.c.bf16 %v5379, %v5378
        %v5400 = vpack.c.bf16 %v5381, %v5380
        %s5401 = scalar_lea.vmem [#allocation17], 1
        %v5402 = vld [vmem:[%s5401] sm:$0x1]
        %v5404 = vlaneseq
        %v5405 = vshrl.u32 %v5404, 7
        %v5406 = vsub.s32 0, %v5405
        %v5407 = vrot.slane %v5402, %v5406
        %v5425 = vunpack.c.l.b16 %v5383
        %v5426 = vunpack.c.l.b16 %v5384
        %v5427 = vunpack.c.l.b16 %v5385
        %v5428 = vunpack.c.l.b16 %v5386
        %v5429 = vunpack.c.l.b16 %v5387
        %v5430 = vunpack.c.l.b16 %v5388
        %v5431 = vunpack.c.l.b16 %v5389
        %v5432 = vunpack.c.l.b16 %v5390
        %v5433 = vunpack.c.l.b16 %v5391
        %v5434 = vunpack.c.l.b16 %v5392
        %v5435 = vunpack.c.l.b16 %v5393
        %v5436 = vunpack.c.l.b16 %v5394
        %v5437 = vunpack.c.l.b16 %v5395
        %v5438 = vunpack.c.l.b16 %v5396
        %v5439 = vunpack.c.l.b16 %v5397
        %v5440 = vunpack.c.l.b16 %v5398
        %v5441 = vpack.c.b16 %v5426, %v5425
        %v5442 = vpack.c.b16 %v5428, %v5427
        %v5443 = vpack.c.b16 %v5430, %v5429
        %v5444 = vpack.c.b16 %v5432, %v5431
        %v5445 = vpack.c.b16 %v5434, %v5433
        %v5446 = vpack.c.b16 %v5436, %v5435
        %v5447 = vpack.c.b16 %v5438, %v5437
        %v5448 = vpack.c.b16 %v5440, %v5439
        %5457 = vmatprep.subr.bf16.mxu0 0
        %5458 = vmatpush1.bf16.msra.mxu0 %v5441
        %5459 = vmatprep.subr.bf16.mxu0 0
        %5460 = vmatpush1.bf16.msra.mxu0 %v5442
        %5461 = vmatprep.subr.bf16.mxu0 0
        %5462 = vmatpush1.bf16.msra.mxu0 %v5443
        %5463 = vmatprep.subr.bf16.mxu0 0
        %5464 = vmatpush1.bf16.msra.mxu0 %v5444
        %5465 = vmatprep.subr.bf16.mxu0 0
        %5466 = vmatpush1.bf16.msra.mxu0 %v5445
        %5467 = vmatprep.subr.bf16.mxu0 0
        %5468 = vmatpush1.bf16.msra.mxu0 %v5446
        %5469 = vmatprep.subr.bf16.mxu0 0
        %5470 = vmatpush1.bf16.msra.mxu0 %v5447
        %5471 = vmatprep.subr.bf16.mxu0 0
        %5472 = vmatpush1.bf16.msra.mxu0 %v5448
        %5473 = vmatprep.subr.bf16.mxu0 0
        %5474 = vmatpush1.bf16.msra.mxu0 0
        %5475 = vmatprep.subr.bf16.mxu0 0
        %5476 = vmatpush1.bf16.msra.mxu0 0
        %5477 = vmatprep.subr.bf16.mxu0 0
        %5478 = vmatpush1.bf16.msra.mxu0 0
        %5479 = vmatprep.subr.bf16.mxu0 0
        %5480 = vmatpush1.bf16.msra.mxu0 0
        %5481 = vmatprep.subr.bf16.mxu0 0
        %5482 = vmatpush1.bf16.msra.mxu0 0
        %5483 = vmatprep.subr.bf16.mxu0 0
        %5484 = vmatpush1.bf16.msra.mxu0 0
        %5485 = vmatprep.subr.bf16.mxu0 0
        %5486 = vmatpush1.bf16.msra.mxu0 0
        %5487 = vmatprep.subr.bf16.mxu0 0
        %5488 = vmatpush1.bf16.msra.mxu0 0
        %5489 = vmatprep.mubr.bf16.mxu0 0
        %5490 = vmatmul.mubr.bf16.gmra.mrb[0].mxu0 %v5399
        %v5491 = vpop.f32.mrb[0].mxu0
        %v5492 = vadd.f32 %v5407, %v5491
        %v5493 = vpop.f32.mrb[0].mxu0
        %v5494 = vpop.f32.mrb[0].mxu0
        %v5495 = vadd.f32 %v5407, %v5494
        %v5496 = vpop.f32.mrb[0].mxu0
        %5497 = vmatprep.mubr.bf16.mxu0 0
        %5498 = vmatmul.mubr.bf16.gmra.mrb[0].mxu0 %v5400
        %v5499 = vpop.f32.mrb[0].mxu0
        %v5500 = vadd.f32 %v5407, %v5499
        %v5501 = vpop.f32.mrb[0].mxu0
        %v5502 = vpop.f32.mrb[0].mxu0
        %v5503 = vadd.f32 %v5407, %v5502
        %v5504 = vpop.f32.mrb[0].mxu0
        %5505 = vdwg.mxu0
        %v5506 = vadd.f32 %v3218, %v5492
        %v5507 = vadd.f32 %v3219, %v5495
        %v5508 = vadd.f32 %v3220, %v5500
        %v5509 = vadd.f32 %v3221, %v5503
        %5510 = vadd.xlane.f32.xlu0 %v5506
        %v5511 = vpop.xlane.xlu0 %5510
        %5512 = vadd.xlane.f32.xlu0 %v5507
        %v5513 = vpop.xlane.xlu0 %5512
        %5514 = vadd.xlane.f32.xlu0 %v5508
        %v5515 = vpop.xlane.xlu0 %5514
        %5516 = vadd.xlane.f32.xlu0 %v5509
        %v5517 = vpop.xlane.xlu0 %5516
        %v5518 = vmul.f32 %v5511, %v3167
        %v5519 = vmul.f32 %v5513, %v3167
        %v5520 = vmul.f32 %v5515, %v3167
        %v5521 = vmul.f32 %v5517, %v3167
        %v5522 = vsub.f32 %v5506, %v5518
        %v5523 = vsub.f32 %v5507, %v5519
        %v5524 = vsub.f32 %v5508, %v5520
        %v5525 = vsub.f32 %v5509, %v5521
        %v5526 = vmul.f32 %v5522, %v5522
        %v5527 = vmul.f32 %v5523, %v5523
        %v5528 = vmul.f32 %v5524, %v5524
        %v5529 = vmul.f32 %v5525, %v5525
        %5530 = vadd.xlane.f32.xlu0 %v5526
        %v5531 = vpop.xlane.xlu0 %5530
        %5532 = vadd.xlane.f32.xlu0 %v5527
        %v5533 = vpop.xlane.xlu0 %5532
        %5534 = vadd.xlane.f32.xlu0 %v5528
        %v5535 = vpop.xlane.xlu0 %5534
        %5536 = vadd.xlane.f32.xlu0 %v5529
        %v5537 = vpop.xlane.xlu0 %5536
        %v5538 = vmul.f32 %v5531, %v3167
        %v5539 = vmul.f32 %v5533, %v3167
        %v5540 = vmul.f32 %v5535, %v3167
        %v5541 = vmul.f32 %v5537, %v3167
        %v5542 = vadd.f32 %v5538, 1e-05
        %v5543 = vadd.f32 %v5539, 1e-05
        %v5544 = vadd.f32 %v5540, 1e-05
        %v5545 = vadd.f32 %v5541, 1e-05
        %v5546 = vrsqrt.pop %v5542
        %v5547 = vrsqrt.pop %v5543
        %v5548 = vrsqrt.pop %v5544
        %v5549 = vrsqrt.pop %v5545
        %v5550 = vmul.f32 %v5522, %v5546
        %v5551 = vmul.f32 %v5523, %v5547
        %v5552 = vmul.f32 %v5524, %v5548
        %v5553 = vmul.f32 %v5525, %v5549
        %v5554 = vld [vmem:[%s16 + $0x1] sm:$0x1]
        %v5555 = vlaneseq
        %v5556 = vshrl.u32 %v5555, 7
        %v5557 = vsub.s32 0, %v5556
        %v5558 = vrot.slane %v5554, %v5557
        %v5559 = vmul.f32 %v5550, %v5558
        %v5560 = vmul.f32 %v5551, %v5558
        %v5561 = vmul.f32 %v5552, %v5558
        %v5562 = vmul.f32 %v5553, %v5558
        %v5563 = vld [vmem:[#allocation25 + $0x1] sm:$0x1]
        %v5564 = vlaneseq
        %v5565 = vshrl.u32 %v5564, 7
        %v5566 = vsub.s32 0, %v5565
        %v5567 = vrot.slane %v5563, %v5566
        %v5568 = vadd.f32 %v5559, %v5567
        %v5569 = vadd.f32 %v5560, %v5567
        %v5570 = vadd.f32 %v5561, %v5567
        %v5571 = vadd.f32 %v5562, %v5567
        %v5572 = vld [vmem:[#allocation19] sm:$0xff]
        %v5573 = vld [vmem:[#allocation19 + $0x8] sm:$0xff]
        %v5574 = vld [vmem:[#allocation19 + $0x10] sm:$0xff]
        %v5575 = vld [vmem:[#allocation19 + $0x18] sm:$0xff]
        %v5576 = vld [vmem:[#allocation19 + $0x20] sm:$0xff]
        %v5577 = vld [vmem:[#allocation19 + $0x28] sm:$0xff]
        %v5578 = vld [vmem:[#allocation19 + $0x30] sm:$0xff]
        %v5579 = vld [vmem:[#allocation19 + $0x38] sm:$0xff]
        %v5580 = vld [vmem:[#allocation19 + $0x40] sm:$0xff]
        %v5581 = vld [vmem:[#allocation19 + $0x48] sm:$0xff]
        %v5582 = vld [vmem:[#allocation19 + $0x50] sm:$0xff]
        %v5583 = vld [vmem:[#allocation19 + $0x58] sm:$0xff]
        %v5584 = vld [vmem:[#allocation19 + $0x60] sm:$0xff]
        %v5585 = vld [vmem:[#allocation19 + $0x68] sm:$0xff]
        %v5586 = vld [vmem:[#allocation19 + $0x70] sm:$0xff]
        %v5587 = vld [vmem:[#allocation19 + $0x78] sm:$0xff]
        %v5588 = vpack.c.bf16 %v5569, %v5568
        %v5589 = vpack.c.bf16 %v5571, %v5570
        %v5590 = vld [vmem:[#allocation20] sm:$0x3]
        %v5592 = vlaneseq
        %v5593 = vshrl.u32 %v5592, 7
        %v5594 = vsub.s32 0, %v5593
        %v5595 = vrot.slane %v5590, %v5594
        %v5596 = vlaneseq
        %v5597 = vshrl.u32 %v5596, 7
        %v5598 = vsub.s32 1, %v5597
        %v5599 = vrot.slane %v5590, %v5598
        %v5618 = vunpack.c.l.b16 %v5572
        %v5619 = vunpack.c.h.b16 %v5572
        %v5620 = vunpack.c.l.b16 %v5573
        %v5621 = vunpack.c.h.b16 %v5573
        %v5622 = vunpack.c.l.b16 %v5574
        %v5623 = vunpack.c.h.b16 %v5574
        %v5624 = vunpack.c.l.b16 %v5575
        %v5625 = vunpack.c.h.b16 %v5575
        %v5626 = vunpack.c.l.b16 %v5576
        %v5627 = vunpack.c.h.b16 %v5576
        %v5628 = vunpack.c.l.b16 %v5577
        %v5629 = vunpack.c.h.b16 %v5577
        %v5630 = vunpack.c.l.b16 %v5578
        %v5631 = vunpack.c.h.b16 %v5578
        %v5632 = vunpack.c.l.b16 %v5579
        %v5633 = vunpack.c.h.b16 %v5579
        %v5634 = vunpack.c.l.b16 %v5580
        %v5635 = vunpack.c.h.b16 %v5580
        %v5636 = vunpack.c.l.b16 %v5581
        %v5637 = vunpack.c.h.b16 %v5581
        %v5638 = vunpack.c.l.b16 %v5582
        %v5639 = vunpack.c.h.b16 %v5582
        %v5640 = vunpack.c.l.b16 %v5583
        %v5641 = vunpack.c.h.b16 %v5583
        %v5642 = vunpack.c.l.b16 %v5584
        %v5643 = vunpack.c.h.b16 %v5584
        %v5644 = vunpack.c.l.b16 %v5585
        %v5645 = vunpack.c.h.b16 %v5585
        %v5646 = vunpack.c.l.b16 %v5586
        %v5647 = vunpack.c.h.b16 %v5586
        %v5648 = vunpack.c.l.b16 %v5587
        %v5649 = vunpack.c.h.b16 %v5587
        %v5650 = vpack.c.b16 %v5620, %v5618
        %v5651 = vpack.c.b16 %v5621, %v5619
        %v5652 = vpack.c.b16 %v5624, %v5622
        %v5653 = vpack.c.b16 %v5625, %v5623
        %v5654 = vpack.c.b16 %v5628, %v5626
        %v5655 = vpack.c.b16 %v5629, %v5627
        %v5656 = vpack.c.b16 %v5632, %v5630
        %v5657 = vpack.c.b16 %v5633, %v5631
        %v5658 = vpack.c.b16 %v5636, %v5634
        %v5659 = vpack.c.b16 %v5637, %v5635
        %v5660 = vpack.c.b16 %v5640, %v5638
        %v5661 = vpack.c.b16 %v5641, %v5639
        %v5662 = vpack.c.b16 %v5644, %v5642
        %v5663 = vpack.c.b16 %v5645, %v5643
        %v5664 = vpack.c.b16 %v5648, %v5646
        %v5665 = vpack.c.b16 %v5649, %v5647
        %5682 = vmatprep.subr.bf16.mxu0 %v5651
        %5683 = vmatpush1.bf16.msra.mxu0 %v5650
        %5684 = vmatprep.subr.bf16.mxu0 %v5653
        %5685 = vmatpush1.bf16.msra.mxu0 %v5652
        %5686 = vmatprep.subr.bf16.mxu0 %v5655
        %5687 = vmatpush1.bf16.msra.mxu0 %v5654
        %5688 = vmatprep.subr.bf16.mxu0 %v5657
        %5689 = vmatpush1.bf16.msra.mxu0 %v5656
        %5690 = vmatprep.subr.bf16.mxu0 %v5659
        %5691 = vmatpush1.bf16.msra.mxu0 %v5658
        %5692 = vmatprep.subr.bf16.mxu0 %v5661
        %5693 = vmatpush1.bf16.msra.mxu0 %v5660
        %5694 = vmatprep.subr.bf16.mxu0 %v5663
        %5695 = vmatpush1.bf16.msra.mxu0 %v5662
        %5696 = vmatprep.subr.bf16.mxu0 %v5665
        %5697 = vmatpush1.bf16.msra.mxu0 %v5664
        %5698 = vmatprep.subr.bf16.mxu0 0
        %5699 = vmatpush1.bf16.msra.mxu0 0
        %5700 = vmatprep.subr.bf16.mxu0 0
        %5701 = vmatpush1.bf16.msra.mxu0 0
        %5702 = vmatprep.subr.bf16.mxu0 0
        %5703 = vmatpush1.bf16.msra.mxu0 0
        %5704 = vmatprep.subr.bf16.mxu0 0
        %5705 = vmatpush1.bf16.msra.mxu0 0
        %5706 = vmatprep.subr.bf16.mxu0 0
        %5707 = vmatpush1.bf16.msra.mxu0 0
        %5708 = vmatprep.subr.bf16.mxu0 0
        %5709 = vmatpush1.bf16.msra.mxu0 0
        %5710 = vmatprep.subr.bf16.mxu0 0
        %5711 = vmatpush1.bf16.msra.mxu0 0
        %5712 = vmatprep.subr.bf16.mxu0 0
        %5713 = vmatpush1.bf16.msra.mxu0 0
        %5714 = vmatprep.mubr.bf16.mxu0 0
        %5715 = vmatmul.mubr.bf16.gmra.mrb[0].mxu0 %v5588
        %v5716 = vpop.f32.mrb[0].mxu0
        %v5717 = vadd.f32 %v5595, %v5716
        %v5718 = vpop.f32.mrb[0].mxu0
        %v5719 = vadd.f32 %v5599, %v5718
        %v5720 = vpop.f32.mrb[0].mxu0
        %v5721 = vadd.f32 %v5595, %v5720
        %v5722 = vpop.f32.mrb[0].mxu0
        %v5723 = vadd.f32 %v5599, %v5722
        %5724 = vmatprep.mubr.bf16.mxu0 0
        %5725 = vmatmul.mubr.bf16.gmra.mrb[0].mxu0 %v5589
        %v5726 = vpop.f32.mrb[0].mxu0
        %v5727 = vadd.f32 %v5595, %v5726
        %v5728 = vpop.f32.mrb[0].mxu0
        %v5729 = vadd.f32 %v5599, %v5728
        %v5730 = vpop.f32.mrb[0].mxu0
        %v5731 = vadd.f32 %v5595, %v5730
        %v5732 = vpop.f32.mrb[0].mxu0
        %v5733 = vadd.f32 %v5599, %v5732
        %5734 = vdwg.mxu0
        %v5735 = vmax.f32 %v5717, 0.0
        %v5736 = vmax.f32 %v5719, 0.0
        %v5737 = vmax.f32 %v5721, 0.0
        %v5738 = vmax.f32 %v5723, 0.0
        %v5739 = vmax.f32 %v5727, 0.0
        %v5740 = vmax.f32 %v5729, 0.0
        %v5741 = vmax.f32 %v5731, 0.0
        %v5742 = vmax.f32 %v5733, 0.0
        %v5743 = vld [vmem:[#allocation22] sm:$0xf]
        %v5744 = vld [vmem:[#allocation22 + $0x4] sm:$0xf]
        %v5745 = vld [vmem:[#allocation22 + $0x8] sm:$0xf]
        %v5746 = vld [vmem:[#allocation22 + $0xc] sm:$0xf]
        %v5747 = vld [vmem:[#allocation22 + $0x10] sm:$0xf]
        %v5748 = vld [vmem:[#allocation22 + $0x14] sm:$0xf]
        %v5749 = vld [vmem:[#allocation22 + $0x18] sm:$0xf]
        %v5750 = vld [vmem:[#allocation22 + $0x1c] sm:$0xf]
        %v5751 = vld [vmem:[#allocation22 + $0x20] sm:$0xf]
        %v5752 = vld [vmem:[#allocation22 + $0x24] sm:$0xf]
        %v5753 = vld [vmem:[#allocation22 + $0x28] sm:$0xf]
        %v5754 = vld [vmem:[#allocation22 + $0x2c] sm:$0xf]
        %v5755 = vld [vmem:[#allocation22 + $0x30] sm:$0xf]
        %v5756 = vld [vmem:[#allocation22 + $0x34] sm:$0xf]
        %v5757 = vld [vmem:[#allocation22 + $0x38] sm:$0xf]
        %v5758 = vld [vmem:[#allocation22 + $0x3c] sm:$0xf]
        %v5759 = vld [vmem:[#allocation22 + $0x40] sm:$0xf]
        %v5760 = vld [vmem:[#allocation22 + $0x44] sm:$0xf]
        %v5761 = vld [vmem:[#allocation22 + $0x48] sm:$0xf]
        %v5762 = vld [vmem:[#allocation22 + $0x4c] sm:$0xf]
        %v5763 = vld [vmem:[#allocation22 + $0x50] sm:$0xf]
        %v5764 = vld [vmem:[#allocation22 + $0x54] sm:$0xf]
        %v5765 = vld [vmem:[#allocation22 + $0x58] sm:$0xf]
        %v5766 = vld [vmem:[#allocation22 + $0x5c] sm:$0xf]
        %v5767 = vld [vmem:[#allocation22 + $0x60] sm:$0xf]
        %v5768 = vld [vmem:[#allocation22 + $0x64] sm:$0xf]
        %v5769 = vld [vmem:[#allocation22 + $0x68] sm:$0xf]
        %v5770 = vld [vmem:[#allocation22 + $0x6c] sm:$0xf]
        %v5771 = vld [vmem:[#allocation22 + $0x70] sm:$0xf]
        %v5772 = vld [vmem:[#allocation22 + $0x74] sm:$0xf]
        %v5773 = vld [vmem:[#allocation22 + $0x78] sm:$0xf]
        %v5774 = vld [vmem:[#allocation22 + $0x7c] sm:$0xf]
        %v5775 = vpack.c.bf16 %v5737, %v5735
        %v5776 = vpack.c.bf16 %v5738, %v5736
        %v5777 = vpack.c.bf16 %v5741, %v5739
        %v5778 = vpack.c.bf16 %v5742, %v5740
        %v5779 = vld [vmem:[#allocation23] sm:$0x1]
        %v5781 = vlaneseq
        %v5782 = vshrl.u32 %v5781, 7
        %v5783 = vsub.s32 0, %v5782
        %v5784 = vrot.slane %v5779, %v5783
        %v5818 = vunpack.c.l.b16 %v5743
        %v5819 = vunpack.c.l.b16 %v5744
        %v5820 = vunpack.c.l.b16 %v5745
        %v5821 = vunpack.c.l.b16 %v5746
        %v5822 = vunpack.c.l.b16 %v5747
        %v5823 = vunpack.c.l.b16 %v5748
        %v5824 = vunpack.c.l.b16 %v5749
        %v5825 = vunpack.c.l.b16 %v5750
        %v5826 = vunpack.c.l.b16 %v5751
        %v5827 = vunpack.c.l.b16 %v5752
        %v5828 = vunpack.c.l.b16 %v5753
        %v5829 = vunpack.c.l.b16 %v5754
        %v5830 = vunpack.c.l.b16 %v5755
        %v5831 = vunpack.c.l.b16 %v5756
        %v5832 = vunpack.c.l.b16 %v5757
        %v5833 = vunpack.c.l.b16 %v5758
        %v5834 = vunpack.c.l.b16 %v5759
        %v5835 = vunpack.c.l.b16 %v5760
        %v5836 = vunpack.c.l.b16 %v5761
        %v5837 = vunpack.c.l.b16 %v5762
        %v5838 = vunpack.c.l.b16 %v5763
        %v5839 = vunpack.c.l.b16 %v5764
        %v5840 = vunpack.c.l.b16 %v5765
        %v5841 = vunpack.c.l.b16 %v5766
        %v5842 = vunpack.c.l.b16 %v5767
        %v5843 = vunpack.c.l.b16 %v5768
        %v5844 = vunpack.c.l.b16 %v5769
        %v5845 = vunpack.c.l.b16 %v5770
        %v5846 = vunpack.c.l.b16 %v5771
        %v5847 = vunpack.c.l.b16 %v5772
        %v5848 = vunpack.c.l.b16 %v5773
        %v5849 = vunpack.c.l.b16 %v5774
        %v5850 = vpack.c.b16 %v5819, %v5818
        %v5851 = vpack.c.b16 %v5821, %v5820
        %v5852 = vpack.c.b16 %v5823, %v5822
        %v5853 = vpack.c.b16 %v5825, %v5824
        %v5854 = vpack.c.b16 %v5827, %v5826
        %v5855 = vpack.c.b16 %v5829, %v5828
        %v5856 = vpack.c.b16 %v5831, %v5830
        %v5857 = vpack.c.b16 %v5833, %v5832
        %v5858 = vpack.c.b16 %v5835, %v5834
        %v5859 = vpack.c.b16 %v5837, %v5836
        %v5860 = vpack.c.b16 %v5839, %v5838
        %v5861 = vpack.c.b16 %v5841, %v5840
        %v5862 = vpack.c.b16 %v5843, %v5842
        %v5863 = vpack.c.b16 %v5845, %v5844
        %v5864 = vpack.c.b16 %v5847, %v5846
        %v5865 = vpack.c.b16 %v5849, %v5848
        %5882 = vmatprep.subr.bf16.mxu0 0
        %5883 = vmatpush1.bf16.msra.mxu0 %v5850
        %5884 = vmatprep.subr.bf16.mxu0 0
        %5885 = vmatpush1.bf16.msra.mxu0 %v5851
        %5886 = vmatprep.subr.bf16.mxu0 0
        %5887 = vmatpush1.bf16.msra.mxu0 %v5852
        %5888 = vmatprep.subr.bf16.mxu0 0
        %5889 = vmatpush1.bf16.msra.mxu0 %v5853
        %5890 = vmatprep.subr.bf16.mxu0 0
        %5891 = vmatpush1.bf16.msra.mxu0 %v5854
        %5892 = vmatprep.subr.bf16.mxu0 0
        %5893 = vmatpush1.bf16.msra.mxu0 %v5855
        %5894 = vmatprep.subr.bf16.mxu0 0
        %5895 = vmatpush1.bf16.msra.mxu0 %v5856
        %5896 = vmatprep.subr.bf16.mxu0 0
        %5897 = vmatpush1.bf16.msra.mxu0 %v5857
        %5898 = vmatprep.subr.bf16.mxu0 0
        %5899 = vmatpush1.bf16.msra.mxu0 %v5858
        %5900 = vmatprep.subr.bf16.mxu0 0
        %5901 = vmatpush1.bf16.msra.mxu0 %v5859
        %5902 = vmatprep.subr.bf16.mxu0 0
        %5903 = vmatpush1.bf16.msra.mxu0 %v5860
        %5904 = vmatprep.subr.bf16.mxu0 0
        %5905 = vmatpush1.bf16.msra.mxu0 %v5861
        %5906 = vmatprep.subr.bf16.mxu0 0
        %5907 = vmatpush1.bf16.msra.mxu0 %v5862
        %5908 = vmatprep.subr.bf16.mxu0 0
        %5909 = vmatpush1.bf16.msra.mxu0 %v5863
        %5910 = vmatprep.subr.bf16.mxu0 0
        %5911 = vmatpush1.bf16.msra.mxu0 %v5864
        %5912 = vmatprep.subr.bf16.mxu0 0
        %5913 = vmatpush1.bf16.msra.mxu0 %v5865
        %5914 = vmatprep.mubr.bf16.mxu0 %v5776
        %5915 = vmatmul.mubr.bf16.gmra.mrb[0].mxu0 %v5775
        %v5916 = vpop.f32.mrb[0].mxu0
        %v5917 = vadd.f32 %v5784, %v5916
        %v5918 = vpop.f32.mrb[0].mxu0
        %v5919 = vpop.f32.mrb[0].mxu0
        %v5920 = vadd.f32 %v5784, %v5919
        %v5921 = vpop.f32.mrb[0].mxu0
        %5922 = vmatprep.mubr.bf16.mxu0 %v5778
        %5923 = vmatmul.mubr.bf16.gmra.mrb[0].mxu0 %v5777
        %v5924 = vpop.f32.mrb[0].mxu0
        %v5925 = vadd.f32 %v5784, %v5924
        %v5926 = vpop.f32.mrb[0].mxu0
        %v5927 = vpop.f32.mrb[0].mxu0
        %v5928 = vadd.f32 %v5784, %v5927
        %v5929 = vpop.f32.mrb[0].mxu0
        %5930 = vdwg.mxu0
        %v5931 = vadd.f32 %v5568, %v5917
        %v5932 = vadd.f32 %v5569, %v5920
        %v5933 = vadd.f32 %v5570, %v5925
        %v5934 = vadd.f32 %v5571, %v5928
        %5935 = vadd.xlane.f32.xlu0 %v5931
        %v5936 = vpop.xlane.xlu0 %5935
        %5937 = vadd.xlane.f32.xlu0 %v5932
        %v5938 = vpop.xlane.xlu0 %5937
        %5939 = vadd.xlane.f32.xlu0 %v5933
        %v5940 = vpop.xlane.xlu0 %5939
        %5941 = vadd.xlane.f32.xlu0 %v5934
        %v5942 = vpop.xlane.xlu0 %5941
        %v5943 = vmul.f32 %v5936, %v3167
        %v5944 = vmul.f32 %v5938, %v3167
        %v5945 = vmul.f32 %v5940, %v3167
        %v5946 = vmul.f32 %v5942, %v3167
        %v5947 = vsub.f32 %v5931, %v5943
        %v5948 = vsub.f32 %v5932, %v5944
        %v5949 = vsub.f32 %v5933, %v5945
        %v5950 = vsub.f32 %v5934, %v5946
        %v5951 = vmul.f32 %v5947, %v5947
        %v5952 = vmul.f32 %v5948, %v5948
        %v5953 = vmul.f32 %v5949, %v5949
        %v5954 = vmul.f32 %v5950, %v5950
        %5955 = vadd.xlane.f32.xlu0 %v5951
        %v5956 = vpop.xlane.xlu0 %5955
        %5957 = vadd.xlane.f32.xlu0 %v5952
        %v5958 = vpop.xlane.xlu0 %5957
        %5959 = vadd.xlane.f32.xlu0 %v5953
        %v5960 = vpop.xlane.xlu0 %5959
        %5961 = vadd.xlane.f32.xlu0 %v5954
        %v5962 = vpop.xlane.xlu0 %5961
        %v5963 = vmul.f32 %v5956, %v3167
        %v5964 = vmul.f32 %v5958, %v3167
        %v5965 = vmul.f32 %v5960, %v3167
        %v5966 = vmul.f32 %v5962, %v3167
        %v5967 = vadd.f32 %v5963, 1e-05
        %v5968 = vadd.f32 %v5964, 1e-05
        %v5969 = vadd.f32 %v5965, 1e-05
        %v5970 = vadd.f32 %v5966, 1e-05
        %v5971 = vrsqrt.pop %v5967
        %v5972 = vrsqrt.pop %v5968
        %v5973 = vrsqrt.pop %v5969
        %v5974 = vrsqrt.pop %v5970
        %v5975 = vmul.f32 %v5947, %v5971
        %v5976 = vmul.f32 %v5948, %v5972
        %v5977 = vmul.f32 %v5949, %v5973
        %v5978 = vmul.f32 %v5950, %v5974
        %v5979 = vld [vmem:[%s16 + $0x2] sm:$0x1]
        %v5980 = vlaneseq
        %v5981 = vshrl.u32 %v5980, 7
        %v5982 = vsub.s32 0, %v5981
        %v5983 = vrot.slane %v5979, %v5982
        %v5984 = vmul.f32 %v5975, %v5983
        %v5985 = vmul.f32 %v5976, %v5983
        %v5986 = vmul.f32 %v5977, %v5983
        %v5987 = vmul.f32 %v5978, %v5983
        %v5988 = vld [vmem:[#allocation25 + $0x2] sm:$0x1]
        %v5989 = vlaneseq
        %v5990 = vshrl.u32 %v5989, 7
        %v5991 = vsub.s32 0, %v5990
        %v5992 = vrot.slane %v5988, %v5991
        %v5993 = vadd.f32 %v5984, %v5992
        %v5994 = vadd.f32 %v5985, %v5992
        %v5995 = vadd.f32 %v5986, %v5992
        %v5996 = vadd.f32 %v5987, %v5992
        %5997 = vst [vmem:[%s851] sm:$0xff] %v5993
        %5998 = vst [vmem:[%s851 + $0x8] sm:$0xff] %v5994
        %5999 = vst [vmem:[%s851 + $0x10] sm:$0xff] %v5995
        %6000 = vst [vmem:[%s851 + $0x18] sm:$0xff] %v5996
        %s6001 = sand.u32 %s450, 1
        %s6002 = scalar_lea.sflag [#allocation4], %s6001
        %s6003 = sand.u32 %s450, 1
        %s6004 = smul.addr %s6003, 32
        %s6005 = scalar_lea.vmem [#allocation26], %s6004
        // Predicated region
        $region153: #{decoder_block_forward.1} parent=91 // pred_check
          %p6006 = pneg %p460
        $region154: #{decoder_block_forward.1} parent=91 // pred_check_branch
          %6008 = sbr.rel (%p6006) target = $region156
        $region155: #{decoder_block_forward.1} parent=91 // pred_region
          %s6009 = smul.u32 4, %s44
          %s6011 = ssub.s32 512, 512
          %6012 = vsyncadd %s6002, %s6011
          %s6013 = smul.addr %s6009, 128
          %s6014 = scalar_lea.hbm %s18, %s6013
          %s6015 = sshll.u32 %s6005, 4
          %s6016 = int_to_ptr.vmem [resolvable:$true] %s6015
          %6021 = dma.vmem_to_hbm [thread:$0]  %s6016, 512, %s6014, %s6002, 128, 128, 8
        $region156: #{decoder_block_forward.1} parent=91 // pred_fallthru
          _
      $region92: #{decoder_block_forward.1} parent=5 // pred_fallthru
        _
      %p6022 = scmp.le.s32.totalorder 2, %s39
      // Predicated region
      $region157: #{decoder_block_forward.1} parent=5 // pred_check
        %p6023 = pneg %p6022
      $region158: #{decoder_block_forward.1} parent=5 // pred_check_branch
        %6025 = sbr.rel (%p6023) target = $region160
      $region159: #{decoder_block_forward.1} parent=5 // pred_region
        %s6026 = ssub.s32 %s39, 2
        // Predicated region
        $region161: #{decoder_block_forward.1} parent=159 // pred_check
          %p6027 = pneg %p466
        $region162: #{decoder_block_forward.1} parent=159 // pred_check_branch
          %6029 = sbr.rel (%p6027) target = $region164
        $region163: #{decoder_block_forward.1} parent=159 // pred_region
          %s6030 = sand.u32 %s451, 1
          %s6031 = scalar_lea.sflag [#allocation4], %s6030
          %s6032 = sand.u32 %s451, 1
          %s6033 = smul.addr %s6032, 32
          %s6034 = scalar_lea.vmem [#allocation26], %s6033
          %6035 = dma.done %s6031, 512
        $region164: #{decoder_block_forward.1} parent=159 // pred_fallthru
          _
      $region160: #{decoder_block_forward.1} parent=5 // pred_fallthru
        _
    $region6: #{decoder_block_forward.1} parent=1 // loop_footer
      %s43 = sadd.s32 1, %s39
    $region7: #{decoder_block_forward.1} parent=1 // loop_footer_branch
      %38 = sbr.rel target = $region3
    $region8: #{decoder_block_forward.1} parent=1 // loop_exit
      _
    %6036 = vsyncpa [#allocation3], 1
    %s6037 = scalar_lea.sflag [#allocation3], 1
    %6038 = vsyncpa %s6037, 1
    %6039 = vsyncpa [#allocation6], 1
    %s6040 = scalar_lea.sflag [#allocation6], 1
    %6041 = vsyncpa %s6040, 1
    %6042 = vsyncpa [#allocation9], 1
    %6043 = vsyncpa [#allocation12], 1
    %6044 = vsyncpa [#allocation15], 1
    %6045 = vsyncpa [#allocation18], 1
    %6046 = vsyncpa [#allocation21], 1
    %6047 = vsyncpa [#allocation24], 1
    %6048 = vsyncpa [#allocation4], 1
    %s6049 = scalar_lea.sflag [#allocation4], 1
    %6050 = vsyncpa %s6049, 1

</llo_original>
